<compile_context>
chip_gen: v7x
topology: tpu7x:2x2x1
jax: 0.10.0
libtpu: 0.0.40
codegen_flags: <defaults>
</compile_context>

<pallas_src>
import jax
import jax.numpy as jnp
from jax import lax
from jax.experimental import pallas as pl
from jax.experimental.pallas import tpu as pltpu

NUM_CLASSES = 15
NUM_FRAMES = 48
NUM_IN_CHANNELS = 34            # motion_info=False
BN_EPS = 1e-5
LANES = 128                     # all channel axes padded to full lane width


# ------------------------------ fused kernel --------------------------------

def fused_kernel(x_ref, mp_ref, mn_ref,
                 w1_ref, s1_ref, b1_ref,
                 w2_ref, s2_ref, b2_ref,
                 wf1_ref, bf1_ref, wf2_ref, bf2_ref,
                 out_ref):
    """One grid step = BB batch rows, stacked along the sublane (M) axis.

    x_ref  : (BB*T, 34)        time-major rows (row = b_local*T + t)
    mp_ref : (BB*T, 1)         1.0 except 0.0 at t == 0      (left-halo mask)
    mn_ref : (BB*T, 1)         1.0 except 0.0 at t == T-1    (right-halo mask)
    w1_ref : (3, 34, 128)      conv1 taps, Cout zero-padded 32 -> 128
    w2_ref : (3, 128, 128)     conv2 taps, Cin/Cout zero-padded to 128
    wf1_ref: (T, 128, 128)     fc1 weight re-indexed to [t, c, h] (c zero-padded)
    wf2_ref: (128, 128)        fc2 weight, out zero-padded 15 -> 128
    out_ref: (1, BB, 128)      lane-padded logits
    """
    T = NUM_FRAMES
    rows = x_ref.shape[0]
    BB = rows // T
    cdt = w1_ref.dtype                          # matmul input dtype (f32 or bf16)

    mp = mp_ref[...]                            # (rows, 1)
    mn = mn_ref[...]                            # (rows, 1)

    def shift_prev(v):
        # row r gets v[r-1]; zero at block start and at every t==0 boundary.
        z = jnp.zeros((1, v.shape[1]), v.dtype)
        return jnp.concatenate([z, v[:-1, :]], axis=0) * mp

    def shift_next(v):
        # row r gets v[r+1]; zero at block end and at every t==T-1 boundary.
        z = jnp.zeros((1, v.shape[1]), v.dtype)
        return jnp.concatenate([v[1:, :], z], axis=0) * mn

    def conv_bn_relu(v, w_ref, s_ref, b_ref):
        acc = jnp.dot(shift_prev(v).astype(cdt), w_ref[0],
                      preferred_element_type=jnp.float32)
        acc = acc + jnp.dot(v.astype(cdt), w_ref[1],
                            preferred_element_type=jnp.float32)
        acc = acc + jnp.dot(shift_next(v).astype(cdt), w_ref[2],
                            preferred_element_type=jnp.float32)
        # folded BN + ReLU in f32 on the VPU
        return jnp.maximum(acc * s_ref[...] + b_ref[...], 0.0)

    x = x_ref[...]                                           # (rows, 34) f32
    h1 = conv_bn_relu(x, w1_ref, s1_ref, b1_ref)             # (rows, 128) f32
    h2 = conv_bn_relu(h1, w2_ref, s2_ref, b2_ref)            # (rows, 128) f32
    h2 = h2.astype(cdt)

    outs = []
    for b in range(BB):                                      # unrolled, BB <= 8
        seg = h2[b * T:(b + 1) * T, :]                       # (T, 128)
        acc = jnp.zeros((1, LANES), jnp.float32)
        for t in range(T):                                   # fc1 contraction over time
            acc = acc + jnp.dot(seg[t:t + 1, :], wf1_ref[t],
                                preferred_element_type=jnp.float32)
        hidden = jnp.maximum(acc + bf1_ref[...], 0.0)        # (1, 128)
        logits = jnp.dot(hidden.astype(cdt), wf2_ref[...],
                         preferred_element_type=jnp.float32) + bf2_ref[...]
        outs.append(logits)

    res = outs[0] if BB == 1 else jnp.concatenate(outs, axis=0)
    out_ref[0] = res.astype(out_ref.dtype)


# --------------------------- parameter preparation ---------------------------

def fold_bn(conv_bias, gamma, beta, mean, var):
    scale = gamma / jnp.sqrt(var + BN_EPS)
    bias = (conv_bias - mean) * scale + beta
    return scale, bias


def prepare_params(p, compute_dtype=jnp.float32):
    """One-time weight prep: BN folding, layout permutes, zero lane-padding.

    compute_dtype=jnp.bfloat16 is the v6e/v7x option (keep f32 accumulation in the
    kernel); it needs a looser tolerance than 1e-4 vs. an f32 reference.
    """
    T = NUM_FRAMES

    def pad_lane(a, width=LANES):
        return jnp.pad(a, [(0, 0)] * (a.ndim - 1) + [(0, width - a.shape[-1])])

    s1, b1 = fold_bn(p["conv1_b"], p["bn1_gamma"], p["bn1_beta"],
                     p["bn1_mean"], p["bn1_var"])
    s2, b2 = fold_bn(p["conv2_b"], p["bn2_gamma"], p["bn2_beta"],
                     p["bn2_mean"], p["bn2_var"])

    # conv1: (32, 34, 3) -> (3, 34, 128)  [tap, cin, cout_padded]
    w1 = pad_lane(jnp.transpose(p["conv1_w"], (2, 1, 0)))
    # conv2: (64, 32, 3) -> (3, 128, 128) [tap, cin_padded, cout_padded]
    w2 = pad_lane(jnp.transpose(p["conv2_w"], (2, 1, 0)))
    w2 = jnp.pad(w2, ((0, 0), (0, LANES - w2.shape[1]), (0, 0)))

    # fc1: PyTorch flattens (B, 64, T) channel-major (j = c*T + t). Re-index the
    # weight to [t, c, h] once so the kernel's time-major features contract directly.
    wf1 = p["fc1_w"].reshape(128, 64, T)           # [h, c, t]
    wf1 = jnp.transpose(wf1, (2, 1, 0))            # [t, c, h]
    wf1 = jnp.pad(wf1, ((0, 0), (0, LANES - 64), (0, 0)))   # (T, 128, 128)

    wf2 = pad_lane(p["fc2_w"].T)                   # (128, 128), out 15 -> 128

    return {
        "w1": w1.astype(compute_dtype),
        "s1": pad_lane(s1[None, :]),
        "b1": pad_lane(b1[None, :]),
        "w2": w2.astype(compute_dtype),
        "s2": pad_lane(s2[None, :]),
        "b2": pad_lane(b2[None, :]),
        "wf1": wf1.astype(compute_dtype),
        "bf1": p["fc1_b"][None, :],                # (1, 128)
        "wf2": wf2.astype(compute_dtype),
        "bf2": pad_lane(p["fc2_b"][None, :]),      # (1, 128)
    }


# --------------------------------- wrapper -----------------------------------

def _pick_batch_block(B, cap=8):
    """Rows per grid step: >=2 parallel steps when B>=2 (v7x 2 TCs), <= cap rows
    per step (fc head is unrolled per row), and an exact divisor of B."""
    best = 1
    for bb in range(1, min(cap, max(1, B // 2)) + 1):
        if B % bb == 0:
            best = bb
    return best


def keypoint_cnn1d_forward(prepped, x_ncl):
    """x_ncl: (B, 34, T) — same layout as the PyTorch module input."""
    B, Cin, T = x_ncl.shape
    BB = _pick_batch_block(B)
    G = B // BB
    R = BB * T

    # Layout plumbing only: (B, C, T) -> (B*T, C), rows ordered (batch, time).
    x2d = jnp.transpose(x_ncl, (0, 2, 1)).reshape(B * T, Cin)
    t_idx = jnp.tile(jnp.arange(T, dtype=jnp.int32), B)[:, None]     # (B*T, 1)
    mask_prev = (t_idx != 0).astype(jnp.float32)
    mask_next = (t_idx != T - 1).astype(jnp.float32)

    out = pl.pallas_call(
        fused_kernel,
        out_shape=jax.ShapeDtypeStruct((G, BB, LANES), jnp.float32),
        grid=(G,),
        in_specs=[
            pl.BlockSpec((R, Cin), lambda i: (i, 0)),
            pl.BlockSpec((R, 1), lambda i: (i, 0)),
            pl.BlockSpec((R, 1), lambda i: (i, 0)),
            pl.BlockSpec((3, Cin, LANES), lambda i: (0, 0, 0)),
            pl.BlockSpec((1, LANES), lambda i: (0, 0)),
            pl.BlockSpec((1, LANES), lambda i: (0, 0)),
            pl.BlockSpec((3, LANES, LANES), lambda i: (0, 0, 0)),
            pl.BlockSpec((1, LANES), lambda i: (0, 0)),
            pl.BlockSpec((1, LANES), lambda i: (0, 0)),
            pl.BlockSpec((T, LANES, LANES), lambda i: (0, 0, 0)),
            pl.BlockSpec((1, LANES), lambda i: (0, 0)),
            pl.BlockSpec((LANES, LANES), lambda i: (0, 0)),
            pl.BlockSpec((1, LANES), lambda i: (0, 0)),
        ],
        out_specs=pl.BlockSpec((1, BB, LANES), lambda i: (i, 0, 0)),
        compiler_params=pltpu.CompilerParams(
            dimension_semantics=("parallel",)),
    )(x2d, mask_prev, mask_next,
      prepped["w1"], prepped["s1"], prepped["b1"],
      prepped["w2"], prepped["s2"], prepped["b2"],
      prepped["wf1"], prepped["bf1"], prepped["wf2"], prepped["bf2"])

    return out.reshape(B, LANES)[:, :NUM_CLASSES]


# ------------------------- deterministic parameters -------------------------

def init_params(key):
    ks = jax.random.split(key, 20)

    def u(k, shape, scale=0.1):
        return (jax.random.uniform(k, shape, jnp.float32) - 0.5) * 2.0 * scale

    p = {}
    p["conv1_w"] = u(ks[0], (32, NUM_IN_CHANNELS, 3))
    p["conv1_b"] = u(ks[1], (32,))
    p["bn1_gamma"] = 1.0 + u(ks[2], (32,))
    p["bn1_beta"] = u(ks[3], (32,))
    p["bn1_mean"] = u(ks[4], (32,))
    p["bn1_var"] = jax.random.uniform(ks[5], (32,), jnp.float32, 0.5, 1.5)
    p["conv2_w"] = u(ks[6], (64, 32, 3))
    p["conv2_b"] = u(ks[7], (64,))
    p["bn2_gamma"] = 1.0 + u(ks[8], (64,))
    p["bn2_beta"] = u(ks[9], (64,))
    p["bn2_mean"] = u(ks[10], (64,))
    p["bn2_var"] = jax.random.uniform(ks[11], (64,), jnp.float32, 0.5, 1.5)
    p["fc1_w"] = u(ks[12], (128, 64 * NUM_FRAMES), 0.02)
    p["fc1_b"] = u(ks[13], (128,))
    p["fc2_w"] = u(ks[14], (NUM_CLASSES, 128))
    p["fc2_b"] = u(ks[15], (NUM_CLASSES,))
    return p


# ------------------------------ JAX reference --------------------------------

def reference_forward(params, x_ncl):
    def conv1d(x, w, b):
        y = lax.conv_general_dilated(x, w, (1,), [(1, 1)],
                                     dimension_numbers=("NCH", "OIH", "NCH"))
        return y + b[None, :, None]

    def bn(x, gamma, beta, mean, var):
        return ((x - mean[None, :, None]) /
                jnp.sqrt(var[None, :, None] + BN_EPS) *
                gamma[None, :, None] + beta[None, :, None])

    h = jax.nn.relu(bn(conv1d(x_ncl, params["conv1_w"], params["conv1_b"]),
                       params["bn1_gamma"], params["bn1_beta"],
                       params["bn1_mean"], params["bn1_var"]))
    h = jax.nn.relu(bn(conv1d(h, params["conv2_w"], params["conv2_b"]),
                       params["bn2_gamma"], params["bn2_beta"],
                       params["bn2_mean"], params["bn2_var"]))
    flat = h.reshape(h.shape[0], -1)
    h = jax.nn.relu(flat @ params["fc1_w"].T + params["fc1_b"])
    return h @ params["fc2_w"].T + params["fc2_b"]


# ---------------------------------- main -------------------------------------

if __name__ == "__main__":
    key = jax.random.PRNGKey(0)
    k_param, k_x = jax.random.split(key)
    params = init_params(k_param)
    prepped = prepare_params(params)       # one-time prep (f32; bf16 opt for v6e/v7x)

    B = 2
    x = jax.random.normal(k_x, (B, NUM_IN_CHANNELS, NUM_FRAMES), jnp.float32)

    fwd = jax.jit(keypoint_cnn1d_forward)
    out = jax.block_until_ready(fwd(prepped, x))

    ref = reference_forward(params, x)
    assert out.shape == (B, NUM_CLASSES), out.shape
    assert jnp.allclose(out, ref, rtol=1e-4, atol=1e-4), \
        f"max err {jnp.max(jnp.abs(out - ref))}"

    print("KERNEL_OK")
</pallas_src>

<mosaic_0001>
module attributes {stable_mosaic.version = 11 : i64} {
  func.func @fused_kernel(%arg0: i32, %arg1: memref<48x34xf32, #tpu.memory_space<vmem>>, %arg2: memref<48x1xf32, #tpu.memory_space<vmem>>, %arg3: memref<48x1xf32, #tpu.memory_space<vmem>>, %arg4: memref<3x34x128xf32, #tpu.memory_space<vmem>>, %arg5: memref<1x128xf32, #tpu.memory_space<vmem>>, %arg6: memref<1x128xf32, #tpu.memory_space<vmem>>, %arg7: memref<3x128x128xf32, #tpu.memory_space<vmem>>, %arg8: memref<1x128xf32, #tpu.memory_space<vmem>>, %arg9: memref<1x128xf32, #tpu.memory_space<vmem>>, %arg10: memref<48x128x128xf32, #tpu.memory_space<vmem>>, %arg11: memref<1x128xf32, #tpu.memory_space<vmem>>, %arg12: memref<128x128xf32, #tpu.memory_space<vmem>>, %arg13: memref<1x128xf32, #tpu.memory_space<vmem>>, %arg14: memref<1x1x128xf32, #tpu.memory_space<vmem>>) attributes {dimension_semantics = [#tpu.dimension_semantics<parallel>], iteration_bounds = array<i64: 2>, scalar_prefetch = 0 : i64, scratch_operands = 0 : i64, tpu.core_type = #tpu.core_type<tc>, window_params = [{transform_indices = @transform_0, window_bounds = array<i64: 48, 34>}, {transform_indices = @transform_1, window_bounds = array<i64: 48, 1>}, {transform_indices = @transform_2, window_bounds = array<i64: 48, 1>}, {pipeline_mode = #tpu.pipeline_mode<synchronous>, transform_indices = @transform_3, window_bounds = array<i64: 3, 34, 128>}, {pipeline_mode = #tpu.pipeline_mode<synchronous>, transform_indices = @transform_4, window_bounds = array<i64: 1, 128>}, {pipeline_mode = #tpu.pipeline_mode<synchronous>, transform_indices = @transform_5, window_bounds = array<i64: 1, 128>}, {pipeline_mode = #tpu.pipeline_mode<synchronous>, transform_indices = @transform_6, window_bounds = array<i64: 3, 128, 128>}, {pipeline_mode = #tpu.pipeline_mode<synchronous>, transform_indices = @transform_7, window_bounds = array<i64: 1, 128>}, {pipeline_mode = #tpu.pipeline_mode<synchronous>, transform_indices = @transform_8, window_bounds = array<i64: 1, 128>}, {pipeline_mode = #tpu.pipeline_mode<synchronous>, transform_indices = @transform_9, window_bounds = array<i64: 48, 128, 128>}, {pipeline_mode = #tpu.pipeline_mode<synchronous>, transform_indices = @transform_10, window_bounds = array<i64: 1, 128>}, {pipeline_mode = #tpu.pipeline_mode<synchronous>, transform_indices = @transform_11, window_bounds = array<i64: 128, 128>}, {pipeline_mode = #tpu.pipeline_mode<synchronous>, transform_indices = @transform_12, window_bounds = array<i64: 1, 128>}, {transform_indices = @transform_13, window_bounds = array<i64: 1, 1, 128>}]} {
    %c0 = arith.constant 0 : index
    %c0_0 = arith.constant 0 : index
    %0 = vector.load %arg2[%c0, %c0_0] : memref<48x1xf32, #tpu.memory_space<vmem>>, vector<48x1xf32>
    %c0_1 = arith.constant 0 : index
    %c0_2 = arith.constant 0 : index
    %1 = vector.load %arg3[%c0_1, %c0_2] : memref<48x1xf32, #tpu.memory_space<vmem>>, vector<48x1xf32>
    %c0_3 = arith.constant 0 : index
    %c0_4 = arith.constant 0 : index
    %2 = vector.load %arg1[%c0_3, %c0_4] : memref<48x34xf32, #tpu.memory_space<vmem>>, vector<48x34xf32>
    %cst = arith.constant 0.000000e+00 : f32
    %3 = vector.broadcast %cst : f32 to vector<1x34xf32>
    %4 = vector.extract_strided_slice %2 {offsets = [0, 0], sizes = [47, 34], strides = [1, 1]} : vector<48x34xf32> to vector<47x34xf32>
    %5 = tpu.concatenate %3, %4 in 0 : vector<1x34xf32>, vector<47x34xf32> -> vector<48x34xf32>
    %6 = vector.broadcast %0 : vector<48x1xf32> to vector<48x34xf32>
    %7 = arith.mulf %5, %6 : vector<48x34xf32>
    %c0_5 = arith.constant 0 : index
    %c0_6 = arith.constant 0 : index
    %c0_7 = arith.constant 0 : index
    %8 = vector.load %arg4[%c0_5, %c0_6, %c0_7] : memref<3x34x128xf32, #tpu.memory_space<vmem>>, vector<1x34x128xf32>
    %9 = vector.shape_cast %8 : vector<1x34x128xf32> to vector<34x128xf32>
    %cst_8 = arith.constant dense<0.000000e+00> : vector<48x128xf32>
    %10 = tpu.matmul %7, %9, %cst_8 {dimension_numbers = #tpu.dot_dimension_numbers<[1], [0], [0], [1], [0, 0, 1, 1], [], []>} : vector<48x34xf32>, vector<34x128xf32>, vector<48x128xf32> -> vector<48x128xf32>
    %c1 = arith.constant 1 : index
    %c0_9 = arith.constant 0 : index
    %c0_10 = arith.constant 0 : index
    %11 = vector.load %arg4[%c1, %c0_9, %c0_10] : memref<3x34x128xf32, #tpu.memory_space<vmem>>, vector<1x34x128xf32>
    %12 = vector.shape_cast %11 : vector<1x34x128xf32> to vector<34x128xf32>
    %cst_11 = arith.constant dense<0.000000e+00> : vector<48x128xf32>
    %13 = tpu.matmul %2, %12, %cst_11 {dimension_numbers = #tpu.dot_dimension_numbers<[1], [0], [0], [1], [0, 0, 1, 1], [], []>} : vector<48x34xf32>, vector<34x128xf32>, vector<48x128xf32> -> vector<48x128xf32>
    %14 = arith.addf %10, %13 : vector<48x128xf32>
    %cst_12 = arith.constant 0.000000e+00 : f32
    %15 = vector.broadcast %cst_12 : f32 to vector<1x34xf32>
    %16 = vector.extract_strided_slice %2 {offsets = [1, 0], sizes = [47, 34], strides = [1, 1]} : vector<48x34xf32> to vector<47x34xf32>
    %17 = tpu.concatenate %16, %15 in 0 : vector<47x34xf32>, vector<1x34xf32> -> vector<48x34xf32>
    %18 = vector.broadcast %1 : vector<48x1xf32> to vector<48x34xf32>
    %19 = arith.mulf %17, %18 : vector<48x34xf32>
    %c2 = arith.constant 2 : index
    %c0_13 = arith.constant 0 : index
    %c0_14 = arith.constant 0 : index
    %20 = vector.load %arg4[%c2, %c0_13, %c0_14] : memref<3x34x128xf32, #tpu.memory_space<vmem>>, vector<1x34x128xf32>
    %21 = vector.shape_cast %20 : vector<1x34x128xf32> to vector<34x128xf32>
    %cst_15 = arith.constant dense<0.000000e+00> : vector<48x128xf32>
    %22 = tpu.matmul %19, %21, %cst_15 {dimension_numbers = #tpu.dot_dimension_numbers<[1], [0], [0], [1], [0, 0, 1, 1], [], []>} : vector<48x34xf32>, vector<34x128xf32>, vector<48x128xf32> -> vector<48x128xf32>
    %23 = arith.addf %14, %22 : vector<48x128xf32>
    %c0_16 = arith.constant 0 : index
    %c0_17 = arith.constant 0 : index
    %24 = vector.load %arg5[%c0_16, %c0_17] : memref<1x128xf32, #tpu.memory_space<vmem>>, vector<1x128xf32>
    %25 = vector.broadcast %24 : vector<1x128xf32> to vector<48x128xf32>
    %26 = arith.mulf %23, %25 : vector<48x128xf32>
    %c0_18 = arith.constant 0 : index
    %c0_19 = arith.constant 0 : index
    %27 = vector.load %arg6[%c0_18, %c0_19] : memref<1x128xf32, #tpu.memory_space<vmem>>, vector<1x128xf32>
    %28 = vector.broadcast %27 : vector<1x128xf32> to vector<48x128xf32>
    %29 = arith.addf %26, %28 : vector<48x128xf32>
    %cst_20 = arith.constant 0.000000e+00 : f32
    %30 = vector.broadcast %cst_20 : f32 to vector<48x128xf32>
    %31 = arith.maximumf %29, %30 : vector<48x128xf32>
    %cst_21 = arith.constant 0.000000e+00 : f32
    %32 = vector.broadcast %cst_21 : f32 to vector<1x128xf32>
    %33 = vector.extract_strided_slice %31 {offsets = [0, 0], sizes = [47, 128], strides = [1, 1]} : vector<48x128xf32> to vector<47x128xf32>
    %34 = tpu.concatenate %32, %33 in 0 : vector<1x128xf32>, vector<47x128xf32> -> vector<48x128xf32>
    %35 = vector.broadcast %0 : vector<48x1xf32> to vector<48x128xf32>
    %36 = arith.mulf %34, %35 : vector<48x128xf32>
    %c0_22 = arith.constant 0 : index
    %c0_23 = arith.constant 0 : index
    %c0_24 = arith.constant 0 : index
    %37 = vector.load %arg7[%c0_22, %c0_23, %c0_24] : memref<3x128x128xf32, #tpu.memory_space<vmem>>, vector<1x128x128xf32>
    %38 = vector.shape_cast %37 : vector<1x128x128xf32> to vector<128x128xf32>
    %cst_25 = arith.constant dense<0.000000e+00> : vector<48x128xf32>
    %39 = tpu.matmul %36, %38, %cst_25 {dimension_numbers = #tpu.dot_dimension_numbers<[1], [0], [0], [1], [0, 0, 1, 1], [], []>} : vector<48x128xf32>, vector<128x128xf32>, vector<48x128xf32> -> vector<48x128xf32>
    %c1_26 = arith.constant 1 : index
    %c0_27 = arith.constant 0 : index
    %c0_28 = arith.constant 0 : index
    %40 = vector.load %arg7[%c1_26, %c0_27, %c0_28] : memref<3x128x128xf32, #tpu.memory_space<vmem>>, vector<1x128x128xf32>
    %41 = vector.shape_cast %40 : vector<1x128x128xf32> to vector<128x128xf32>
    %cst_29 = arith.constant dense<0.000000e+00> : vector<48x128xf32>
    %42 = tpu.matmul %31, %41, %cst_29 {dimension_numbers = #tpu.dot_dimension_numbers<[1], [0], [0], [1], [0, 0, 1, 1], [], []>} : vector<48x128xf32>, vector<128x128xf32>, vector<48x128xf32> -> vector<48x128xf32>
    %43 = arith.addf %39, %42 : vector<48x128xf32>
    %cst_30 = arith.constant 0.000000e+00 : f32
    %44 = vector.broadcast %cst_30 : f32 to vector<1x128xf32>
    %45 = vector.extract_strided_slice %31 {offsets = [1, 0], sizes = [47, 128], strides = [1, 1]} : vector<48x128xf32> to vector<47x128xf32>
    %46 = tpu.concatenate %45, %44 in 0 : vector<47x128xf32>, vector<1x128xf32> -> vector<48x128xf32>
    %47 = vector.broadcast %1 : vector<48x1xf32> to vector<48x128xf32>
    %48 = arith.mulf %46, %47 : vector<48x128xf32>
    %c2_31 = arith.constant 2 : index
    %c0_32 = arith.constant 0 : index
    %c0_33 = arith.constant 0 : index
    %49 = vector.load %arg7[%c2_31, %c0_32, %c0_33] : memref<3x128x128xf32, #tpu.memory_space<vmem>>, vector<1x128x128xf32>
    %50 = vector.shape_cast %49 : vector<1x128x128xf32> to vector<128x128xf32>
    %cst_34 = arith.constant dense<0.000000e+00> : vector<48x128xf32>
    %51 = tpu.matmul %48, %50, %cst_34 {dimension_numbers = #tpu.dot_dimension_numbers<[1], [0], [0], [1], [0, 0, 1, 1], [], []>} : vector<48x128xf32>, vector<128x128xf32>, vector<48x128xf32> -> vector<48x128xf32>
    %52 = arith.addf %43, %51 : vector<48x128xf32>
    %c0_35 = arith.constant 0 : index
    %c0_36 = arith.constant 0 : index
    %53 = vector.load %arg8[%c0_35, %c0_36] : memref<1x128xf32, #tpu.memory_space<vmem>>, vector<1x128xf32>
    %54 = vector.broadcast %53 : vector<1x128xf32> to vector<48x128xf32>
    %55 = arith.mulf %52, %54 : vector<48x128xf32>
    %c0_37 = arith.constant 0 : index
    %c0_38 = arith.constant 0 : index
    %56 = vector.load %arg9[%c0_37, %c0_38] : memref<1x128xf32, #tpu.memory_space<vmem>>, vector<1x128xf32>
    %57 = vector.broadcast %56 : vector<1x128xf32> to vector<48x128xf32>
    %58 = arith.addf %55, %57 : vector<48x128xf32>
    %cst_39 = arith.constant 0.000000e+00 : f32
    %59 = vector.broadcast %cst_39 : f32 to vector<48x128xf32>
    %60 = arith.maximumf %58, %59 : vector<48x128xf32>
    %cst_40 = arith.constant 0.000000e+00 : f32
    %61 = vector.broadcast %cst_40 : f32 to vector<1x128xf32>
    %62 = vector.extract_strided_slice %60 {offsets = [0, 0], sizes = [1, 128], strides = [1, 1]} : vector<48x128xf32> to vector<1x128xf32>
    %c0_41 = arith.constant 0 : index
    %c0_42 = arith.constant 0 : index
    %c0_43 = arith.constant 0 : index
    %63 = vector.load %arg10[%c0_41, %c0_42, %c0_43] : memref<48x128x128xf32, #tpu.memory_space<vmem>>, vector<1x128x128xf32>
    %64 = vector.shape_cast %63 : vector<1x128x128xf32> to vector<128x128xf32>
    %cst_44 = arith.constant dense<0.000000e+00> : vector<1x128xf32>
    %65 = tpu.matmul %62, %64, %cst_44 {dimension_numbers = #tpu.dot_dimension_numbers<[1], [0], [0], [1], [0, 0, 1, 1], [], []>} : vector<1x128xf32>, vector<128x128xf32>, vector<1x128xf32> -> vector<1x128xf32>
    %66 = arith.addf %61, %65 : vector<1x128xf32>
    %67 = vector.extract_strided_slice %60 {offsets = [1, 0], sizes = [1, 128], strides = [1, 1]} : vector<48x128xf32> to vector<1x128xf32>
    %c1_45 = arith.constant 1 : index
    %c0_46 = arith.constant 0 : index
    %c0_47 = arith.constant 0 : index
    %68 = vector.load %arg10[%c1_45, %c0_46, %c0_47] : memref<48x128x128xf32, #tpu.memory_space<vmem>>, vector<1x128x128xf32>
    %69 = vector.shape_cast %68 : vector<1x128x128xf32> to vector<128x128xf32>
    %cst_48 = arith.constant dense<0.000000e+00> : vector<1x128xf32>
    %70 = tpu.matmul %67, %69, %cst_48 {dimension_numbers = #tpu.dot_dimension_numbers<[1], [0], [0], [1], [0, 0, 1, 1], [], []>} : vector<1x128xf32>, vector<128x128xf32>, vector<1x128xf32> -> vector<1x128xf32>
    %71 = arith.addf %66, %70 : vector<1x128xf32>
    %72 = vector.extract_strided_slice %60 {offsets = [2, 0], sizes = [1, 128], strides = [1, 1]} : vector<48x128xf32> to vector<1x128xf32>
    %c2_49 = arith.constant 2 : index
    %c0_50 = arith.constant 0 : index
    %c0_51 = arith.constant 0 : index
    %73 = vector.load %arg10[%c2_49, %c0_50, %c0_51] : memref<48x128x128xf32, #tpu.memory_space<vmem>>, vector<1x128x128xf32>
    %74 = vector.shape_cast %73 : vector<1x128x128xf32> to vector<128x128xf32>
    %cst_52 = arith.constant dense<0.000000e+00> : vector<1x128xf32>
    %75 = tpu.matmul %72, %74, %cst_52 {dimension_numbers = #tpu.dot_dimension_numbers<[1], [0], [0], [1], [0, 0, 1, 1], [], []>} : vector<1x128xf32>, vector<128x128xf32>, vector<1x128xf32> -> vector<1x128xf32>
    %76 = arith.addf %71, %75 : vector<1x128xf32>
    %77 = vector.extract_strided_slice %60 {offsets = [3, 0], sizes = [1, 128], strides = [1, 1]} : vector<48x128xf32> to vector<1x128xf32>
    %c3 = arith.constant 3 : index
    %c0_53 = arith.constant 0 : index
    %c0_54 = arith.constant 0 : index
    %78 = vector.load %arg10[%c3, %c0_53, %c0_54] : memref<48x128x128xf32, #tpu.memory_space<vmem>>, vector<1x128x128xf32>
    %79 = vector.shape_cast %78 : vector<1x128x128xf32> to vector<128x128xf32>
    %cst_55 = arith.constant dense<0.000000e+00> : vector<1x128xf32>
    %80 = tpu.matmul %77, %79, %cst_55 {dimension_numbers = #tpu.dot_dimension_numbers<[1], [0], [0], [1], [0, 0, 1, 1], [], []>} : vector<1x128xf32>, vector<128x128xf32>, vector<1x128xf32> -> vector<1x128xf32>
    %81 = arith.addf %76, %80 : vector<1x128xf32>
    %82 = vector.extract_strided_slice %60 {offsets = [4, 0], sizes = [1, 128], strides = [1, 1]} : vector<48x128xf32> to vector<1x128xf32>
    %c4 = arith.constant 4 : index
    %c0_56 = arith.constant 0 : index
    %c0_57 = arith.constant 0 : index
    %83 = vector.load %arg10[%c4, %c0_56, %c0_57] : memref<48x128x128xf32, #tpu.memory_space<vmem>>, vector<1x128x128xf32>
    %84 = vector.shape_cast %83 : vector<1x128x128xf32> to vector<128x128xf32>
    %cst_58 = arith.constant dense<0.000000e+00> : vector<1x128xf32>
    %85 = tpu.matmul %82, %84, %cst_58 {dimension_numbers = #tpu.dot_dimension_numbers<[1], [0], [0], [1], [0, 0, 1, 1], [], []>} : vector<1x128xf32>, vector<128x128xf32>, vector<1x128xf32> -> vector<1x128xf32>
    %86 = arith.addf %81, %85 : vector<1x128xf32>
    %87 = vector.extract_strided_slice %60 {offsets = [5, 0], sizes = [1, 128], strides = [1, 1]} : vector<48x128xf32> to vector<1x128xf32>
    %c5 = arith.constant 5 : index
    %c0_59 = arith.constant 0 : index
    %c0_60 = arith.constant 0 : index
    %88 = vector.load %arg10[%c5, %c0_59, %c0_60] : memref<48x128x128xf32, #tpu.memory_space<vmem>>, vector<1x128x128xf32>
    %89 = vector.shape_cast %88 : vector<1x128x128xf32> to vector<128x128xf32>
    %cst_61 = arith.constant dense<0.000000e+00> : vector<1x128xf32>
    %90 = tpu.matmul %87, %89, %cst_61 {dimension_numbers = #tpu.dot_dimension_numbers<[1], [0], [0], [1], [0, 0, 1, 1], [], []>} : vector<1x128xf32>, vector<128x128xf32>, vector<1x128xf32> -> vector<1x128xf32>
    %91 = arith.addf %86, %90 : vector<1x128xf32>
    %92 = vector.extract_strided_slice %60 {offsets = [6, 0], sizes = [1, 128], strides = [1, 1]} : vector<48x128xf32> to vector<1x128xf32>
    %c6 = arith.constant 6 : index
    %c0_62 = arith.constant 0 : index
    %c0_63 = arith.constant 0 : index
    %93 = vector.load %arg10[%c6, %c0_62, %c0_63] : memref<48x128x128xf32, #tpu.memory_space<vmem>>, vector<1x128x128xf32>
    %94 = vector.shape_cast %93 : vector<1x128x128xf32> to vector<128x128xf32>
    %cst_64 = arith.constant dense<0.000000e+00> : vector<1x128xf32>
    %95 = tpu.matmul %92, %94, %cst_64 {dimension_numbers = #tpu.dot_dimension_numbers<[1], [0], [0], [1], [0, 0, 1, 1], [], []>} : vector<1x128xf32>, vector<128x128xf32>, vector<1x128xf32> -> vector<1x128xf32>
    %96 = arith.addf %91, %95 : vector<1x128xf32>
    %97 = vector.extract_strided_slice %60 {offsets = [7, 0], sizes = [1, 128], strides = [1, 1]} : vector<48x128xf32> to vector<1x128xf32>
    %c7 = arith.constant 7 : index
    %c0_65 = arith.constant 0 : index
    %c0_66 = arith.constant 0 : index
    %98 = vector.load %arg10[%c7, %c0_65, %c0_66] : memref<48x128x128xf32, #tpu.memory_space<vmem>>, vector<1x128x128xf32>
    %99 = vector.shape_cast %98 : vector<1x128x128xf32> to vector<128x128xf32>
    %cst_67 = arith.constant dense<0.000000e+00> : vector<1x128xf32>
    %100 = tpu.matmul %97, %99, %cst_67 {dimension_numbers = #tpu.dot_dimension_numbers<[1], [0], [0], [1], [0, 0, 1, 1], [], []>} : vector<1x128xf32>, vector<128x128xf32>, vector<1x128xf32> -> vector<1x128xf32>
    %101 = arith.addf %96, %100 : vector<1x128xf32>
    %102 = vector.extract_strided_slice %60 {offsets = [8, 0], sizes = [1, 128], strides = [1, 1]} : vector<48x128xf32> to vector<1x128xf32>
    %c8 = arith.constant 8 : index
    %c0_68 = arith.constant 0 : index
    %c0_69 = arith.constant 0 : index
    %103 = vector.load %arg10[%c8, %c0_68, %c0_69] : memref<48x128x128xf32, #tpu.memory_space<vmem>>, vector<1x128x128xf32>
    %104 = vector.shape_cast %103 : vector<1x128x128xf32> to vector<128x128xf32>
    %cst_70 = arith.constant dense<0.000000e+00> : vector<1x128xf32>
    %105 = tpu.matmul %102, %104, %cst_70 {dimension_numbers = #tpu.dot_dimension_numbers<[1], [0], [0], [1], [0, 0, 1, 1], [], []>} : vector<1x128xf32>, vector<128x128xf32>, vector<1x128xf32> -> vector<1x128xf32>
    %106 = arith.addf %101, %105 : vector<1x128xf32>
    %107 = vector.extract_strided_slice %60 {offsets = [9, 0], sizes = [1, 128], strides = [1, 1]} : vector<48x128xf32> to vector<1x128xf32>
    %c9 = arith.constant 9 : index
    %c0_71 = arith.constant 0 : index
    %c0_72 = arith.constant 0 : index
    %108 = vector.load %arg10[%c9, %c0_71, %c0_72] : memref<48x128x128xf32, #tpu.memory_space<vmem>>, vector<1x128x128xf32>
    %109 = vector.shape_cast %108 : vector<1x128x128xf32> to vector<128x128xf32>
    %cst_73 = arith.constant dense<0.000000e+00> : vector<1x128xf32>
    %110 = tpu.matmul %107, %109, %cst_73 {dimension_numbers = #tpu.dot_dimension_numbers<[1], [0], [0], [1], [0, 0, 1, 1], [], []>} : vector<1x128xf32>, vector<128x128xf32>, vector<1x128xf32> -> vector<1x128xf32>
    %111 = arith.addf %106, %110 : vector<1x128xf32>
    %112 = vector.extract_strided_slice %60 {offsets = [10, 0], sizes = [1, 128], strides = [1, 1]} : vector<48x128xf32> to vector<1x128xf32>
    %c10 = arith.constant 10 : index
    %c0_74 = arith.constant 0 : index
    %c0_75 = arith.constant 0 : index
    %113 = vector.load %arg10[%c10, %c0_74, %c0_75] : memref<48x128x128xf32, #tpu.memory_space<vmem>>, vector<1x128x128xf32>
    %114 = vector.shape_cast %113 : vector<1x128x128xf32> to vector<128x128xf32>
    %cst_76 = arith.constant dense<0.000000e+00> : vector<1x128xf32>
    %115 = tpu.matmul %112, %114, %cst_76 {dimension_numbers = #tpu.dot_dimension_numbers<[1], [0], [0], [1], [0, 0, 1, 1], [], []>} : vector<1x128xf32>, vector<128x128xf32>, vector<1x128xf32> -> vector<1x128xf32>
    %116 = arith.addf %111, %115 : vector<1x128xf32>
    %117 = vector.extract_strided_slice %60 {offsets = [11, 0], sizes = [1, 128], strides = [1, 1]} : vector<48x128xf32> to vector<1x128xf32>
    %c11 = arith.constant 11 : index
    %c0_77 = arith.constant 0 : index
    %c0_78 = arith.constant 0 : index
    %118 = vector.load %arg10[%c11, %c0_77, %c0_78] : memref<48x128x128xf32, #tpu.memory_space<vmem>>, vector<1x128x128xf32>
    %119 = vector.shape_cast %118 : vector<1x128x128xf32> to vector<128x128xf32>
    %cst_79 = arith.constant dense<0.000000e+00> : vector<1x128xf32>
    %120 = tpu.matmul %117, %119, %cst_79 {dimension_numbers = #tpu.dot_dimension_numbers<[1], [0], [0], [1], [0, 0, 1, 1], [], []>} : vector<1x128xf32>, vector<128x128xf32>, vector<1x128xf32> -> vector<1x128xf32>
    %121 = arith.addf %116, %120 : vector<1x128xf32>
    %122 = vector.extract_strided_slice %60 {offsets = [12, 0], sizes = [1, 128], strides = [1, 1]} : vector<48x128xf32> to vector<1x128xf32>
    %c12 = arith.constant 12 : index
    %c0_80 = arith.constant 0 : index
    %c0_81 = arith.constant 0 : index
    %123 = vector.load %arg10[%c12, %c0_80, %c0_81] : memref<48x128x128xf32, #tpu.memory_space<vmem>>, vector<1x128x128xf32>
    %124 = vector.shape_cast %123 : vector<1x128x128xf32> to vector<128x128xf32>
    %cst_82 = arith.constant dense<0.000000e+00> : vector<1x128xf32>
    %125 = tpu.matmul %122, %124, %cst_82 {dimension_numbers = #tpu.dot_dimension_numbers<[1], [0], [0], [1], [0, 0, 1, 1], [], []>} : vector<1x128xf32>, vector<128x128xf32>, vector<1x128xf32> -> vector<1x128xf32>
    %126 = arith.addf %121, %125 : vector<1x128xf32>
    %127 = vector.extract_strided_slice %60 {offsets = [13, 0], sizes = [1, 128], strides = [1, 1]} : vector<48x128xf32> to vector<1x128xf32>
    %c13 = arith.constant 13 : index
    %c0_83 = arith.constant 0 : index
    %c0_84 = arith.constant 0 : index
    %128 = vector.load %arg10[%c13, %c0_83, %c0_84] : memref<48x128x128xf32, #tpu.memory_space<vmem>>, vector<1x128x128xf32>
    %129 = vector.shape_cast %128 : vector<1x128x128xf32> to vector<128x128xf32>
    %cst_85 = arith.constant dense<0.000000e+00> : vector<1x128xf32>
    %130 = tpu.matmul %127, %129, %cst_85 {dimension_numbers = #tpu.dot_dimension_numbers<[1], [0], [0], [1], [0, 0, 1, 1], [], []>} : vector<1x128xf32>, vector<128x128xf32>, vector<1x128xf32> -> vector<1x128xf32>
    %131 = arith.addf %126, %130 : vector<1x128xf32>
    %132 = vector.extract_strided_slice %60 {offsets = [14, 0], sizes = [1, 128], strides = [1, 1]} : vector<48x128xf32> to vector<1x128xf32>
    %c14 = arith.constant 14 : index
    %c0_86 = arith.constant 0 : index
    %c0_87 = arith.constant 0 : index
    %133 = vector.load %arg10[%c14, %c0_86, %c0_87] : memref<48x128x128xf32, #tpu.memory_space<vmem>>, vector<1x128x128xf32>
    %134 = vector.shape_cast %133 : vector<1x128x128xf32> to vector<128x128xf32>
    %cst_88 = arith.constant dense<0.000000e+00> : vector<1x128xf32>
    %135 = tpu.matmul %132, %134, %cst_88 {dimension_numbers = #tpu.dot_dimension_numbers<[1], [0], [0], [1], [0, 0, 1, 1], [], []>} : vector<1x128xf32>, vector<128x128xf32>, vector<1x128xf32> -> vector<1x128xf32>
    %136 = arith.addf %131, %135 : vector<1x128xf32>
    %137 = vector.extract_strided_slice %60 {offsets = [15, 0], sizes = [1, 128], strides = [1, 1]} : vector<48x128xf32> to vector<1x128xf32>
    %c15 = arith.constant 15 : index
    %c0_89 = arith.constant 0 : index
    %c0_90 = arith.constant 0 : index
    %138 = vector.load %arg10[%c15, %c0_89, %c0_90] : memref<48x128x128xf32, #tpu.memory_space<vmem>>, vector<1x128x128xf32>
    %139 = vector.shape_cast %138 : vector<1x128x128xf32> to vector<128x128xf32>
    %cst_91 = arith.constant dense<0.000000e+00> : vector<1x128xf32>
    %140 = tpu.matmul %137, %139, %cst_91 {dimension_numbers = #tpu.dot_dimension_numbers<[1], [0], [0], [1], [0, 0, 1, 1], [], []>} : vector<1x128xf32>, vector<128x128xf32>, vector<1x128xf32> -> vector<1x128xf32>
    %141 = arith.addf %136, %140 : vector<1x128xf32>
    %142 = vector.extract_strided_slice %60 {offsets = [16, 0], sizes = [1, 128], strides = [1, 1]} : vector<48x128xf32> to vector<1x128xf32>
    %c16 = arith.constant 16 : index
    %c0_92 = arith.constant 0 : index
    %c0_93 = arith.constant 0 : index
    %143 = vector.load %arg10[%c16, %c0_92, %c0_93] : memref<48x128x128xf32, #tpu.memory_space<vmem>>, vector<1x128x128xf32>
    %144 = vector.shape_cast %143 : vector<1x128x128xf32> to vector<128x128xf32>
    %cst_94 = arith.constant dense<0.000000e+00> : vector<1x128xf32>
    %145 = tpu.matmul %142, %144, %cst_94 {dimension_numbers = #tpu.dot_dimension_numbers<[1], [0], [0], [1], [0, 0, 1, 1], [], []>} : vector<1x128xf32>, vector<128x128xf32>, vector<1x128xf32> -> vector<1x128xf32>
    %146 = arith.addf %141, %145 : vector<1x128xf32>
    %147 = vector.extract_strided_slice %60 {offsets = [17, 0], sizes = [1, 128], strides = [1, 1]} : vector<48x128xf32> to vector<1x128xf32>
    %c17 = arith.constant 17 : index
    %c0_95 = arith.constant 0 : index
    %c0_96 = arith.constant 0 : index
    %148 = vector.load %arg10[%c17, %c0_95, %c0_96] : memref<48x128x128xf32, #tpu.memory_space<vmem>>, vector<1x128x128xf32>
    %149 = vector.shape_cast %148 : vector<1x128x128xf32> to vector<128x128xf32>
    %cst_97 = arith.constant dense<0.000000e+00> : vector<1x128xf32>
    %150 = tpu.matmul %147, %149, %cst_97 {dimension_numbers = #tpu.dot_dimension_numbers<[1], [0], [0], [1], [0, 0, 1, 1], [], []>} : vector<1x128xf32>, vector<128x128xf32>, vector<1x128xf32> -> vector<1x128xf32>
    %151 = arith.addf %146, %150 : vector<1x128xf32>
    %152 = vector.extract_strided_slice %60 {offsets = [18, 0], sizes = [1, 128], strides = [1, 1]} : vector<48x128xf32> to vector<1x128xf32>
    %c18 = arith.constant 18 : index
    %c0_98 = arith.constant 0 : index
    %c0_99 = arith.constant 0 : index
    %153 = vector.load %arg10[%c18, %c0_98, %c0_99] : memref<48x128x128xf32, #tpu.memory_space<vmem>>, vector<1x128x128xf32>
    %154 = vector.shape_cast %153 : vector<1x128x128xf32> to vector<128x128xf32>
    %cst_100 = arith.constant dense<0.000000e+00> : vector<1x128xf32>
    %155 = tpu.matmul %152, %154, %cst_100 {dimension_numbers = #tpu.dot_dimension_numbers<[1], [0], [0], [1], [0, 0, 1, 1], [], []>} : vector<1x128xf32>, vector<128x128xf32>, vector<1x128xf32> -> vector<1x128xf32>
    %156 = arith.addf %151, %155 : vector<1x128xf32>
    %157 = vector.extract_strided_slice %60 {offsets = [19, 0], sizes = [1, 128], strides = [1, 1]} : vector<48x128xf32> to vector<1x128xf32>
    %c19 = arith.constant 19 : index
    %c0_101 = arith.constant 0 : index
    %c0_102 = arith.constant 0 : index
    %158 = vector.load %arg10[%c19, %c0_101, %c0_102] : memref<48x128x128xf32, #tpu.memory_space<vmem>>, vector<1x128x128xf32>
    %159 = vector.shape_cast %158 : vector<1x128x128xf32> to vector<128x128xf32>
    %cst_103 = arith.constant dense<0.000000e+00> : vector<1x128xf32>
    %160 = tpu.matmul %157, %159, %cst_103 {dimension_numbers = #tpu.dot_dimension_numbers<[1], [0], [0], [1], [0, 0, 1, 1], [], []>} : vector<1x128xf32>, vector<128x128xf32>, vector<1x128xf32> -> vector<1x128xf32>
    %161 = arith.addf %156, %160 : vector<1x128xf32>
    %162 = vector.extract_strided_slice %60 {offsets = [20, 0], sizes = [1, 128], strides = [1, 1]} : vector<48x128xf32> to vector<1x128xf32>
    %c20 = arith.constant 20 : index
    %c0_104 = arith.constant 0 : index
    %c0_105 = arith.constant 0 : index
    %163 = vector.load %arg10[%c20, %c0_104, %c0_105] : memref<48x128x128xf32, #tpu.memory_space<vmem>>, vector<1x128x128xf32>
    %164 = vector.shape_cast %163 : vector<1x128x128xf32> to vector<128x128xf32>
    %cst_106 = arith.constant dense<0.000000e+00> : vector<1x128xf32>
    %165 = tpu.matmul %162, %164, %cst_106 {dimension_numbers = #tpu.dot_dimension_numbers<[1], [0], [0], [1], [0, 0, 1, 1], [], []>} : vector<1x128xf32>, vector<128x128xf32>, vector<1x128xf32> -> vector<1x128xf32>
    %166 = arith.addf %161, %165 : vector<1x128xf32>
    %167 = vector.extract_strided_slice %60 {offsets = [21, 0], sizes = [1, 128], strides = [1, 1]} : vector<48x128xf32> to vector<1x128xf32>
    %c21 = arith.constant 21 : index
    %c0_107 = arith.constant 0 : index
    %c0_108 = arith.constant 0 : index
    %168 = vector.load %arg10[%c21, %c0_107, %c0_108] : memref<48x128x128xf32, #tpu.memory_space<vmem>>, vector<1x128x128xf32>
    %169 = vector.shape_cast %168 : vector<1x128x128xf32> to vector<128x128xf32>
    %cst_109 = arith.constant dense<0.000000e+00> : vector<1x128xf32>
    %170 = tpu.matmul %167, %169, %cst_109 {dimension_numbers = #tpu.dot_dimension_numbers<[1], [0], [0], [1], [0, 0, 1, 1], [], []>} : vector<1x128xf32>, vector<128x128xf32>, vector<1x128xf32> -> vector<1x128xf32>
    %171 = arith.addf %166, %170 : vector<1x128xf32>
    %172 = vector.extract_strided_slice %60 {offsets = [22, 0], sizes = [1, 128], strides = [1, 1]} : vector<48x128xf32> to vector<1x128xf32>
    %c22 = arith.constant 22 : index
    %c0_110 = arith.constant 0 : index
    %c0_111 = arith.constant 0 : index
    %173 = vector.load %arg10[%c22, %c0_110, %c0_111] : memref<48x128x128xf32, #tpu.memory_space<vmem>>, vector<1x128x128xf32>
    %174 = vector.shape_cast %173 : vector<1x128x128xf32> to vector<128x128xf32>
    %cst_112 = arith.constant dense<0.000000e+00> : vector<1x128xf32>
    %175 = tpu.matmul %172, %174, %cst_112 {dimension_numbers = #tpu.dot_dimension_numbers<[1], [0], [0], [1], [0, 0, 1, 1], [], []>} : vector<1x128xf32>, vector<128x128xf32>, vector<1x128xf32> -> vector<1x128xf32>
    %176 = arith.addf %171, %175 : vector<1x128xf32>
    %177 = vector.extract_strided_slice %60 {offsets = [23, 0], sizes = [1, 128], strides = [1, 1]} : vector<48x128xf32> to vector<1x128xf32>
    %c23 = arith.constant 23 : index
    %c0_113 = arith.constant 0 : index
    %c0_114 = arith.constant 0 : index
    %178 = vector.load %arg10[%c23, %c0_113, %c0_114] : memref<48x128x128xf32, #tpu.memory_space<vmem>>, vector<1x128x128xf32>
    %179 = vector.shape_cast %178 : vector<1x128x128xf32> to vector<128x128xf32>
    %cst_115 = arith.constant dense<0.000000e+00> : vector<1x128xf32>
    %180 = tpu.matmul %177, %179, %cst_115 {dimension_numbers = #tpu.dot_dimension_numbers<[1], [0], [0], [1], [0, 0, 1, 1], [], []>} : vector<1x128xf32>, vector<128x128xf32>, vector<1x128xf32> -> vector<1x128xf32>
    %181 = arith.addf %176, %180 : vector<1x128xf32>
    %182 = vector.extract_strided_slice %60 {offsets = [24, 0], sizes = [1, 128], strides = [1, 1]} : vector<48x128xf32> to vector<1x128xf32>
    %c24 = arith.constant 24 : index
    %c0_116 = arith.constant 0 : index
    %c0_117 = arith.constant 0 : index
    %183 = vector.load %arg10[%c24, %c0_116, %c0_117] : memref<48x128x128xf32, #tpu.memory_space<vmem>>, vector<1x128x128xf32>
    %184 = vector.shape_cast %183 : vector<1x128x128xf32> to vector<128x128xf32>
    %cst_118 = arith.constant dense<0.000000e+00> : vector<1x128xf32>
    %185 = tpu.matmul %182, %184, %cst_118 {dimension_numbers = #tpu.dot_dimension_numbers<[1], [0], [0], [1], [0, 0, 1, 1], [], []>} : vector<1x128xf32>, vector<128x128xf32>, vector<1x128xf32> -> vector<1x128xf32>
    %186 = arith.addf %181, %185 : vector<1x128xf32>
    %187 = vector.extract_strided_slice %60 {offsets = [25, 0], sizes = [1, 128], strides = [1, 1]} : vector<48x128xf32> to vector<1x128xf32>
    %c25 = arith.constant 25 : index
    %c0_119 = arith.constant 0 : index
    %c0_120 = arith.constant 0 : index
    %188 = vector.load %arg10[%c25, %c0_119, %c0_120] : memref<48x128x128xf32, #tpu.memory_space<vmem>>, vector<1x128x128xf32>
    %189 = vector.shape_cast %188 : vector<1x128x128xf32> to vector<128x128xf32>
    %cst_121 = arith.constant dense<0.000000e+00> : vector<1x128xf32>
    %190 = tpu.matmul %187, %189, %cst_121 {dimension_numbers = #tpu.dot_dimension_numbers<[1], [0], [0], [1], [0, 0, 1, 1], [], []>} : vector<1x128xf32>, vector<128x128xf32>, vector<1x128xf32> -> vector<1x128xf32>
    %191 = arith.addf %186, %190 : vector<1x128xf32>
    %192 = vector.extract_strided_slice %60 {offsets = [26, 0], sizes = [1, 128], strides = [1, 1]} : vector<48x128xf32> to vector<1x128xf32>
    %c26 = arith.constant 26 : index
    %c0_122 = arith.constant 0 : index
    %c0_123 = arith.constant 0 : index
    %193 = vector.load %arg10[%c26, %c0_122, %c0_123] : memref<48x128x128xf32, #tpu.memory_space<vmem>>, vector<1x128x128xf32>
    %194 = vector.shape_cast %193 : vector<1x128x128xf32> to vector<128x128xf32>
    %cst_124 = arith.constant dense<0.000000e+00> : vector<1x128xf32>
    %195 = tpu.matmul %192, %194, %cst_124 {dimension_numbers = #tpu.dot_dimension_numbers<[1], [0], [0], [1], [0, 0, 1, 1], [], []>} : vector<1x128xf32>, vector<128x128xf32>, vector<1x128xf32> -> vector<1x128xf32>
    %196 = arith.addf %191, %195 : vector<1x128xf32>
    %197 = vector.extract_strided_slice %60 {offsets = [27, 0], sizes = [1, 128], strides = [1, 1]} : vector<48x128xf32> to vector<1x128xf32>
    %c27 = arith.constant 27 : index
    %c0_125 = arith.constant 0 : index
    %c0_126 = arith.constant 0 : index
    %198 = vector.load %arg10[%c27, %c0_125, %c0_126] : memref<48x128x128xf32, #tpu.memory_space<vmem>>, vector<1x128x128xf32>
    %199 = vector.shape_cast %198 : vector<1x128x128xf32> to vector<128x128xf32>
    %cst_127 = arith.constant dense<0.000000e+00> : vector<1x128xf32>
    %200 = tpu.matmul %197, %199, %cst_127 {dimension_numbers = #tpu.dot_dimension_numbers<[1], [0], [0], [1], [0, 0, 1, 1], [], []>} : vector<1x128xf32>, vector<128x128xf32>, vector<1x128xf32> -> vector<1x128xf32>
    %201 = arith.addf %196, %200 : vector<1x128xf32>
    %202 = vector.extract_strided_slice %60 {offsets = [28, 0], sizes = [1, 128], strides = [1, 1]} : vector<48x128xf32> to vector<1x128xf32>
    %c28 = arith.constant 28 : index
    %c0_128 = arith.constant 0 : index
    %c0_129 = arith.constant 0 : index
    %203 = vector.load %arg10[%c28, %c0_128, %c0_129] : memref<48x128x128xf32, #tpu.memory_space<vmem>>, vector<1x128x128xf32>
    %204 = vector.shape_cast %203 : vector<1x128x128xf32> to vector<128x128xf32>
    %cst_130 = arith.constant dense<0.000000e+00> : vector<1x128xf32>
    %205 = tpu.matmul %202, %204, %cst_130 {dimension_numbers = #tpu.dot_dimension_numbers<[1], [0], [0], [1], [0, 0, 1, 1], [], []>} : vector<1x128xf32>, vector<128x128xf32>, vector<1x128xf32> -> vector<1x128xf32>
    %206 = arith.addf %201, %205 : vector<1x128xf32>
    %207 = vector.extract_strided_slice %60 {offsets = [29, 0], sizes = [1, 128], strides = [1, 1]} : vector<48x128xf32> to vector<1x128xf32>
    %c29 = arith.constant 29 : index
    %c0_131 = arith.constant 0 : index
    %c0_132 = arith.constant 0 : index
    %208 = vector.load %arg10[%c29, %c0_131, %c0_132] : memref<48x128x128xf32, #tpu.memory_space<vmem>>, vector<1x128x128xf32>
    %209 = vector.shape_cast %208 : vector<1x128x128xf32> to vector<128x128xf32>
    %cst_133 = arith.constant dense<0.000000e+00> : vector<1x128xf32>
    %210 = tpu.matmul %207, %209, %cst_133 {dimension_numbers = #tpu.dot_dimension_numbers<[1], [0], [0], [1], [0, 0, 1, 1], [], []>} : vector<1x128xf32>, vector<128x128xf32>, vector<1x128xf32> -> vector<1x128xf32>
    %211 = arith.addf %206, %210 : vector<1x128xf32>
    %212 = vector.extract_strided_slice %60 {offsets = [30, 0], sizes = [1, 128], strides = [1, 1]} : vector<48x128xf32> to vector<1x128xf32>
    %c30 = arith.constant 30 : index
    %c0_134 = arith.constant 0 : index
    %c0_135 = arith.constant 0 : index
    %213 = vector.load %arg10[%c30, %c0_134, %c0_135] : memref<48x128x128xf32, #tpu.memory_space<vmem>>, vector<1x128x128xf32>
    %214 = vector.shape_cast %213 : vector<1x128x128xf32> to vector<128x128xf32>
    %cst_136 = arith.constant dense<0.000000e+00> : vector<1x128xf32>
    %215 = tpu.matmul %212, %214, %cst_136 {dimension_numbers = #tpu.dot_dimension_numbers<[1], [0], [0], [1], [0, 0, 1, 1], [], []>} : vector<1x128xf32>, vector<128x128xf32>, vector<1x128xf32> -> vector<1x128xf32>
    %216 = arith.addf %211, %215 : vector<1x128xf32>
    %217 = vector.extract_strided_slice %60 {offsets = [31, 0], sizes = [1, 128], strides = [1, 1]} : vector<48x128xf32> to vector<1x128xf32>
    %c31 = arith.constant 31 : index
    %c0_137 = arith.constant 0 : index
    %c0_138 = arith.constant 0 : index
    %218 = vector.load %arg10[%c31, %c0_137, %c0_138] : memref<48x128x128xf32, #tpu.memory_space<vmem>>, vector<1x128x128xf32>
    %219 = vector.shape_cast %218 : vector<1x128x128xf32> to vector<128x128xf32>
    %cst_139 = arith.constant dense<0.000000e+00> : vector<1x128xf32>
    %220 = tpu.matmul %217, %219, %cst_139 {dimension_numbers = #tpu.dot_dimension_numbers<[1], [0], [0], [1], [0, 0, 1, 1], [], []>} : vector<1x128xf32>, vector<128x128xf32>, vector<1x128xf32> -> vector<1x128xf32>
    %221 = arith.addf %216, %220 : vector<1x128xf32>
    %222 = vector.extract_strided_slice %60 {offsets = [32, 0], sizes = [1, 128], strides = [1, 1]} : vector<48x128xf32> to vector<1x128xf32>
    %c32 = arith.constant 32 : index
    %c0_140 = arith.constant 0 : index
    %c0_141 = arith.constant 0 : index
    %223 = vector.load %arg10[%c32, %c0_140, %c0_141] : memref<48x128x128xf32, #tpu.memory_space<vmem>>, vector<1x128x128xf32>
    %224 = vector.shape_cast %223 : vector<1x128x128xf32> to vector<128x128xf32>
    %cst_142 = arith.constant dense<0.000000e+00> : vector<1x128xf32>
    %225 = tpu.matmul %222, %224, %cst_142 {dimension_numbers = #tpu.dot_dimension_numbers<[1], [0], [0], [1], [0, 0, 1, 1], [], []>} : vector<1x128xf32>, vector<128x128xf32>, vector<1x128xf32> -> vector<1x128xf32>
    %226 = arith.addf %221, %225 : vector<1x128xf32>
    %227 = vector.extract_strided_slice %60 {offsets = [33, 0], sizes = [1, 128], strides = [1, 1]} : vector<48x128xf32> to vector<1x128xf32>
    %c33 = arith.constant 33 : index
    %c0_143 = arith.constant 0 : index
    %c0_144 = arith.constant 0 : index
    %228 = vector.load %arg10[%c33, %c0_143, %c0_144] : memref<48x128x128xf32, #tpu.memory_space<vmem>>, vector<1x128x128xf32>
    %229 = vector.shape_cast %228 : vector<1x128x128xf32> to vector<128x128xf32>
    %cst_145 = arith.constant dense<0.000000e+00> : vector<1x128xf32>
    %230 = tpu.matmul %227, %229, %cst_145 {dimension_numbers = #tpu.dot_dimension_numbers<[1], [0], [0], [1], [0, 0, 1, 1], [], []>} : vector<1x128xf32>, vector<128x128xf32>, vector<1x128xf32> -> vector<1x128xf32>
    %231 = arith.addf %226, %230 : vector<1x128xf32>
    %232 = vector.extract_strided_slice %60 {offsets = [34, 0], sizes = [1, 128], strides = [1, 1]} : vector<48x128xf32> to vector<1x128xf32>
    %c34 = arith.constant 34 : index
    %c0_146 = arith.constant 0 : index
    %c0_147 = arith.constant 0 : index
    %233 = vector.load %arg10[%c34, %c0_146, %c0_147] : memref<48x128x128xf32, #tpu.memory_space<vmem>>, vector<1x128x128xf32>
    %234 = vector.shape_cast %233 : vector<1x128x128xf32> to vector<128x128xf32>
    %cst_148 = arith.constant dense<0.000000e+00> : vector<1x128xf32>
    %235 = tpu.matmul %232, %234, %cst_148 {dimension_numbers = #tpu.dot_dimension_numbers<[1], [0], [0], [1], [0, 0, 1, 1], [], []>} : vector<1x128xf32>, vector<128x128xf32>, vector<1x128xf32> -> vector<1x128xf32>
    %236 = arith.addf %231, %235 : vector<1x128xf32>
    %237 = vector.extract_strided_slice %60 {offsets = [35, 0], sizes = [1, 128], strides = [1, 1]} : vector<48x128xf32> to vector<1x128xf32>
    %c35 = arith.constant 35 : index
    %c0_149 = arith.constant 0 : index
    %c0_150 = arith.constant 0 : index
    %238 = vector.load %arg10[%c35, %c0_149, %c0_150] : memref<48x128x128xf32, #tpu.memory_space<vmem>>, vector<1x128x128xf32>
    %239 = vector.shape_cast %238 : vector<1x128x128xf32> to vector<128x128xf32>
    %cst_151 = arith.constant dense<0.000000e+00> : vector<1x128xf32>
    %240 = tpu.matmul %237, %239, %cst_151 {dimension_numbers = #tpu.dot_dimension_numbers<[1], [0], [0], [1], [0, 0, 1, 1], [], []>} : vector<1x128xf32>, vector<128x128xf32>, vector<1x128xf32> -> vector<1x128xf32>
    %241 = arith.addf %236, %240 : vector<1x128xf32>
    %242 = vector.extract_strided_slice %60 {offsets = [36, 0], sizes = [1, 128], strides = [1, 1]} : vector<48x128xf32> to vector<1x128xf32>
    %c36 = arith.constant 36 : index
    %c0_152 = arith.constant 0 : index
    %c0_153 = arith.constant 0 : index
    %243 = vector.load %arg10[%c36, %c0_152, %c0_153] : memref<48x128x128xf32, #tpu.memory_space<vmem>>, vector<1x128x128xf32>
    %244 = vector.shape_cast %243 : vector<1x128x128xf32> to vector<128x128xf32>
    %cst_154 = arith.constant dense<0.000000e+00> : vector<1x128xf32>
    %245 = tpu.matmul %242, %244, %cst_154 {dimension_numbers = #tpu.dot_dimension_numbers<[1], [0], [0], [1], [0, 0, 1, 1], [], []>} : vector<1x128xf32>, vector<128x128xf32>, vector<1x128xf32> -> vector<1x128xf32>
    %246 = arith.addf %241, %245 : vector<1x128xf32>
    %247 = vector.extract_strided_slice %60 {offsets = [37, 0], sizes = [1, 128], strides = [1, 1]} : vector<48x128xf32> to vector<1x128xf32>
    %c37 = arith.constant 37 : index
    %c0_155 = arith.constant 0 : index
    %c0_156 = arith.constant 0 : index
    %248 = vector.load %arg10[%c37, %c0_155, %c0_156] : memref<48x128x128xf32, #tpu.memory_space<vmem>>, vector<1x128x128xf32>
    %249 = vector.shape_cast %248 : vector<1x128x128xf32> to vector<128x128xf32>
    %cst_157 = arith.constant dense<0.000000e+00> : vector<1x128xf32>
    %250 = tpu.matmul %247, %249, %cst_157 {dimension_numbers = #tpu.dot_dimension_numbers<[1], [0], [0], [1], [0, 0, 1, 1], [], []>} : vector<1x128xf32>, vector<128x128xf32>, vector<1x128xf32> -> vector<1x128xf32>
    %251 = arith.addf %246, %250 : vector<1x128xf32>
    %252 = vector.extract_strided_slice %60 {offsets = [38, 0], sizes = [1, 128], strides = [1, 1]} : vector<48x128xf32> to vector<1x128xf32>
    %c38 = arith.constant 38 : index
    %c0_158 = arith.constant 0 : index
    %c0_159 = arith.constant 0 : index
    %253 = vector.load %arg10[%c38, %c0_158, %c0_159] : memref<48x128x128xf32, #tpu.memory_space<vmem>>, vector<1x128x128xf32>
    %254 = vector.shape_cast %253 : vector<1x128x128xf32> to vector<128x128xf32>
    %cst_160 = arith.constant dense<0.000000e+00> : vector<1x128xf32>
    %255 = tpu.matmul %252, %254, %cst_160 {dimension_numbers = #tpu.dot_dimension_numbers<[1], [0], [0], [1], [0, 0, 1, 1], [], []>} : vector<1x128xf32>, vector<128x128xf32>, vector<1x128xf32> -> vector<1x128xf32>
    %256 = arith.addf %251, %255 : vector<1x128xf32>
    %257 = vector.extract_strided_slice %60 {offsets = [39, 0], sizes = [1, 128], strides = [1, 1]} : vector<48x128xf32> to vector<1x128xf32>
    %c39 = arith.constant 39 : index
    %c0_161 = arith.constant 0 : index
    %c0_162 = arith.constant 0 : index
    %258 = vector.load %arg10[%c39, %c0_161, %c0_162] : memref<48x128x128xf32, #tpu.memory_space<vmem>>, vector<1x128x128xf32>
    %259 = vector.shape_cast %258 : vector<1x128x128xf32> to vector<128x128xf32>
    %cst_163 = arith.constant dense<0.000000e+00> : vector<1x128xf32>
    %260 = tpu.matmul %257, %259, %cst_163 {dimension_numbers = #tpu.dot_dimension_numbers<[1], [0], [0], [1], [0, 0, 1, 1], [], []>} : vector<1x128xf32>, vector<128x128xf32>, vector<1x128xf32> -> vector<1x128xf32>
    %261 = arith.addf %256, %260 : vector<1x128xf32>
    %262 = vector.extract_strided_slice %60 {offsets = [40, 0], sizes = [1, 128], strides = [1, 1]} : vector<48x128xf32> to vector<1x128xf32>
    %c40 = arith.constant 40 : index
    %c0_164 = arith.constant 0 : index
    %c0_165 = arith.constant 0 : index
    %263 = vector.load %arg10[%c40, %c0_164, %c0_165] : memref<48x128x128xf32, #tpu.memory_space<vmem>>, vector<1x128x128xf32>
    %264 = vector.shape_cast %263 : vector<1x128x128xf32> to vector<128x128xf32>
    %cst_166 = arith.constant dense<0.000000e+00> : vector<1x128xf32>
    %265 = tpu.matmul %262, %264, %cst_166 {dimension_numbers = #tpu.dot_dimension_numbers<[1], [0], [0], [1], [0, 0, 1, 1], [], []>} : vector<1x128xf32>, vector<128x128xf32>, vector<1x128xf32> -> vector<1x128xf32>
    %266 = arith.addf %261, %265 : vector<1x128xf32>
    %267 = vector.extract_strided_slice %60 {offsets = [41, 0], sizes = [1, 128], strides = [1, 1]} : vector<48x128xf32> to vector<1x128xf32>
    %c41 = arith.constant 41 : index
    %c0_167 = arith.constant 0 : index
    %c0_168 = arith.constant 0 : index
    %268 = vector.load %arg10[%c41, %c0_167, %c0_168] : memref<48x128x128xf32, #tpu.memory_space<vmem>>, vector<1x128x128xf32>
    %269 = vector.shape_cast %268 : vector<1x128x128xf32> to vector<128x128xf32>
    %cst_169 = arith.constant dense<0.000000e+00> : vector<1x128xf32>
    %270 = tpu.matmul %267, %269, %cst_169 {dimension_numbers = #tpu.dot_dimension_numbers<[1], [0], [0], [1], [0, 0, 1, 1], [], []>} : vector<1x128xf32>, vector<128x128xf32>, vector<1x128xf32> -> vector<1x128xf32>
    %271 = arith.addf %266, %270 : vector<1x128xf32>
    %272 = vector.extract_strided_slice %60 {offsets = [42, 0], sizes = [1, 128], strides = [1, 1]} : vector<48x128xf32> to vector<1x128xf32>
    %c42 = arith.constant 42 : index
    %c0_170 = arith.constant 0 : index
    %c0_171 = arith.constant 0 : index
    %273 = vector.load %arg10[%c42, %c0_170, %c0_171] : memref<48x128x128xf32, #tpu.memory_space<vmem>>, vector<1x128x128xf32>
    %274 = vector.shape_cast %273 : vector<1x128x128xf32> to vector<128x128xf32>
    %cst_172 = arith.constant dense<0.000000e+00> : vector<1x128xf32>
    %275 = tpu.matmul %272, %274, %cst_172 {dimension_numbers = #tpu.dot_dimension_numbers<[1], [0], [0], [1], [0, 0, 1, 1], [], []>} : vector<1x128xf32>, vector<128x128xf32>, vector<1x128xf32> -> vector<1x128xf32>
    %276 = arith.addf %271, %275 : vector<1x128xf32>
    %277 = vector.extract_strided_slice %60 {offsets = [43, 0], sizes = [1, 128], strides = [1, 1]} : vector<48x128xf32> to vector<1x128xf32>
    %c43 = arith.constant 43 : index
    %c0_173 = arith.constant 0 : index
    %c0_174 = arith.constant 0 : index
    %278 = vector.load %arg10[%c43, %c0_173, %c0_174] : memref<48x128x128xf32, #tpu.memory_space<vmem>>, vector<1x128x128xf32>
    %279 = vector.shape_cast %278 : vector<1x128x128xf32> to vector<128x128xf32>
    %cst_175 = arith.constant dense<0.000000e+00> : vector<1x128xf32>
    %280 = tpu.matmul %277, %279, %cst_175 {dimension_numbers = #tpu.dot_dimension_numbers<[1], [0], [0], [1], [0, 0, 1, 1], [], []>} : vector<1x128xf32>, vector<128x128xf32>, vector<1x128xf32> -> vector<1x128xf32>
    %281 = arith.addf %276, %280 : vector<1x128xf32>
    %282 = vector.extract_strided_slice %60 {offsets = [44, 0], sizes = [1, 128], strides = [1, 1]} : vector<48x128xf32> to vector<1x128xf32>
    %c44 = arith.constant 44 : index
    %c0_176 = arith.constant 0 : index
    %c0_177 = arith.constant 0 : index
    %283 = vector.load %arg10[%c44, %c0_176, %c0_177] : memref<48x128x128xf32, #tpu.memory_space<vmem>>, vector<1x128x128xf32>
    %284 = vector.shape_cast %283 : vector<1x128x128xf32> to vector<128x128xf32>
    %cst_178 = arith.constant dense<0.000000e+00> : vector<1x128xf32>
    %285 = tpu.matmul %282, %284, %cst_178 {dimension_numbers = #tpu.dot_dimension_numbers<[1], [0], [0], [1], [0, 0, 1, 1], [], []>} : vector<1x128xf32>, vector<128x128xf32>, vector<1x128xf32> -> vector<1x128xf32>
    %286 = arith.addf %281, %285 : vector<1x128xf32>
    %287 = vector.extract_strided_slice %60 {offsets = [45, 0], sizes = [1, 128], strides = [1, 1]} : vector<48x128xf32> to vector<1x128xf32>
    %c45 = arith.constant 45 : index
    %c0_179 = arith.constant 0 : index
    %c0_180 = arith.constant 0 : index
    %288 = vector.load %arg10[%c45, %c0_179, %c0_180] : memref<48x128x128xf32, #tpu.memory_space<vmem>>, vector<1x128x128xf32>
    %289 = vector.shape_cast %288 : vector<1x128x128xf32> to vector<128x128xf32>
    %cst_181 = arith.constant dense<0.000000e+00> : vector<1x128xf32>
    %290 = tpu.matmul %287, %289, %cst_181 {dimension_numbers = #tpu.dot_dimension_numbers<[1], [0], [0], [1], [0, 0, 1, 1], [], []>} : vector<1x128xf32>, vector<128x128xf32>, vector<1x128xf32> -> vector<1x128xf32>
    %291 = arith.addf %286, %290 : vector<1x128xf32>
    %292 = vector.extract_strided_slice %60 {offsets = [46, 0], sizes = [1, 128], strides = [1, 1]} : vector<48x128xf32> to vector<1x128xf32>
    %c46 = arith.constant 46 : index
    %c0_182 = arith.constant 0 : index
    %c0_183 = arith.constant 0 : index
    %293 = vector.load %arg10[%c46, %c0_182, %c0_183] : memref<48x128x128xf32, #tpu.memory_space<vmem>>, vector<1x128x128xf32>
    %294 = vector.shape_cast %293 : vector<1x128x128xf32> to vector<128x128xf32>
    %cst_184 = arith.constant dense<0.000000e+00> : vector<1x128xf32>
    %295 = tpu.matmul %292, %294, %cst_184 {dimension_numbers = #tpu.dot_dimension_numbers<[1], [0], [0], [1], [0, 0, 1, 1], [], []>} : vector<1x128xf32>, vector<128x128xf32>, vector<1x128xf32> -> vector<1x128xf32>
    %296 = arith.addf %291, %295 : vector<1x128xf32>
    %297 = vector.extract_strided_slice %60 {offsets = [47, 0], sizes = [1, 128], strides = [1, 1]} : vector<48x128xf32> to vector<1x128xf32>
    %c47 = arith.constant 47 : index
    %c0_185 = arith.constant 0 : index
    %c0_186 = arith.constant 0 : index
    %298 = vector.load %arg10[%c47, %c0_185, %c0_186] : memref<48x128x128xf32, #tpu.memory_space<vmem>>, vector<1x128x128xf32>
    %299 = vector.shape_cast %298 : vector<1x128x128xf32> to vector<128x128xf32>
    %cst_187 = arith.constant dense<0.000000e+00> : vector<1x128xf32>
    %300 = tpu.matmul %297, %299, %cst_187 {dimension_numbers = #tpu.dot_dimension_numbers<[1], [0], [0], [1], [0, 0, 1, 1], [], []>} : vector<1x128xf32>, vector<128x128xf32>, vector<1x128xf32> -> vector<1x128xf32>
    %301 = arith.addf %296, %300 : vector<1x128xf32>
    %c0_188 = arith.constant 0 : index
    %c0_189 = arith.constant 0 : index
    %302 = vector.load %arg11[%c0_188, %c0_189] : memref<1x128xf32, #tpu.memory_space<vmem>>, vector<1x128xf32>
    %303 = arith.addf %301, %302 : vector<1x128xf32>
    %cst_190 = arith.constant 0.000000e+00 : f32
    %304 = vector.broadcast %cst_190 : f32 to vector<1x128xf32>
    %305 = arith.maximumf %303, %304 : vector<1x128xf32>
    %c0_191 = arith.constant 0 : index
    %c0_192 = arith.constant 0 : index
    %306 = vector.load %arg12[%c0_191, %c0_192] : memref<128x128xf32, #tpu.memory_space<vmem>>, vector<128x128xf32>
    %cst_193 = arith.constant dense<0.000000e+00> : vector<1x128xf32>
    %307 = tpu.matmul %305, %306, %cst_193 {dimension_numbers = #tpu.dot_dimension_numbers<[1], [0], [0], [1], [0, 0, 1, 1], [], []>} : vector<1x128xf32>, vector<128x128xf32>, vector<1x128xf32> -> vector<1x128xf32>
    %c0_194 = arith.constant 0 : index
    %c0_195 = arith.constant 0 : index
    %308 = vector.load %arg13[%c0_194, %c0_195] : memref<1x128xf32, #tpu.memory_space<vmem>>, vector<1x128xf32>
    %309 = arith.addf %307, %308 : vector<1x128xf32>
    %c0_196 = arith.constant 0 : index
    %c0_197 = arith.constant 0 : index
    %c0_198 = arith.constant 0 : index
    %310 = vector.load %arg14[%c0_196, %c0_197, %c0_198] : memref<1x1x128xf32, #tpu.memory_space<vmem>>, vector<1x1x128xf32>
    %311 = vector.shape_cast %310 : vector<1x1x128xf32> to vector<1x128xf32>
    %312 = vector.shape_cast %309 : vector<1x128xf32> to vector<1x1x128xf32>
    tpu.vector_store %arg14[%c0_196, %c0_197, %c0_198], %312 {strides = array<i32>} : memref<1x1x128xf32, #tpu.memory_space<vmem>>, vector<1x1x128xf32>,
    return
  }
  func.func @transform_0(%arg0: i32) -> (i32, i32) {
    %c0_i32 = arith.constant 0 : i32
    %c0_i32_0 = arith.constant 0 : i32
    return %arg0, %c0_i32 : i32, i32
  }
  func.func @transform_1(%arg0: i32) -> (i32, i32) {
    %c0_i32 = arith.constant 0 : i32
    %c0_i32_0 = arith.constant 0 : i32
    return %arg0, %c0_i32 : i32, i32
  }
  func.func @transform_2(%arg0: i32) -> (i32, i32) {
    %c0_i32 = arith.constant 0 : i32
    %c0_i32_0 = arith.constant 0 : i32
    return %arg0, %c0_i32 : i32, i32
  }
  func.func @transform_3(%arg0: i32) -> (i32, i32, i32) {
    %c0_i32 = arith.constant 0 : i32
    %c0_i32_0 = arith.constant 0 : i32
    %c0_i32_1 = arith.constant 0 : i32
    %c0_i32_2 = arith.constant 0 : i32
    return %c0_i32, %c0_i32_0, %c0_i32_1 : i32, i32, i32
  }
  func.func @transform_4(%arg0: i32) -> (i32, i32) {
    %c0_i32 = arith.constant 0 : i32
    %c0_i32_0 = arith.constant 0 : i32
    %c0_i32_1 = arith.constant 0 : i32
    return %c0_i32, %c0_i32_0 : i32, i32
  }
  func.func @transform_5(%arg0: i32) -> (i32, i32) {
    %c0_i32 = arith.constant 0 : i32
    %c0_i32_0 = arith.constant 0 : i32
    %c0_i32_1 = arith.constant 0 : i32
    return %c0_i32, %c0_i32_0 : i32, i32
  }
  func.func @transform_6(%arg0: i32) -> (i32, i32, i32) {
    %c0_i32 = arith.constant 0 : i32
    %c0_i32_0 = arith.constant 0 : i32
    %c0_i32_1 = arith.constant 0 : i32
    %c0_i32_2 = arith.constant 0 : i32
    return %c0_i32, %c0_i32_0, %c0_i32_1 : i32, i32, i32
  }
  func.func @transform_7(%arg0: i32) -> (i32, i32) {
    %c0_i32 = arith.constant 0 : i32
    %c0_i32_0 = arith.constant 0 : i32
    %c0_i32_1 = arith.constant 0 : i32
    return %c0_i32, %c0_i32_0 : i32, i32
  }
  func.func @transform_8(%arg0: i32) -> (i32, i32) {
    %c0_i32 = arith.constant 0 : i32
    %c0_i32_0 = arith.constant 0 : i32
    %c0_i32_1 = arith.constant 0 : i32
    return %c0_i32, %c0_i32_0 : i32, i32
  }
  func.func @transform_9(%arg0: i32) -> (i32, i32, i32) {
    %c0_i32 = arith.constant 0 : i32
    %c0_i32_0 = arith.constant 0 : i32
    %c0_i32_1 = arith.constant 0 : i32
    %c0_i32_2 = arith.constant 0 : i32
    return %c0_i32, %c0_i32_0, %c0_i32_1 : i32, i32, i32
  }
  func.func @transform_10(%arg0: i32) -> (i32, i32) {
    %c0_i32 = arith.constant 0 : i32
    %c0_i32_0 = arith.constant 0 : i32
    %c0_i32_1 = arith.constant 0 : i32
    return %c0_i32, %c0_i32_0 : i32, i32
  }
  func.func @transform_11(%arg0: i32) -> (i32, i32) {
    %c0_i32 = arith.constant 0 : i32
    %c0_i32_0 = arith.constant 0 : i32
    %c0_i32_1 = arith.constant 0 : i32
    return %c0_i32, %c0_i32_0 : i32, i32
  }
  func.func @transform_12(%arg0: i32) -> (i32, i32) {
    %c0_i32 = arith.constant 0 : i32
    %c0_i32_0 = arith.constant 0 : i32
    %c0_i32_1 = arith.constant 0 : i32
    return %c0_i32, %c0_i32_0 : i32, i32
  }
  func.func @transform_13(%arg0: i32) -> (i32, i32, i32) {
    %c0_i32 = arith.constant 0 : i32
    %c0_i32_0 = arith.constant 0 : i32
    %c0_i32_1 = arith.constant 0 : i32
    return %arg0, %c0_i32, %c0_i32_0 : i32, i32, i32
  }
}

</mosaic_0001>

<llo_original>
// kernel: keypoint_cnn1d_forward.1
$region0: #{keypoint_cnn1d_forward.1}
  #allocation0 [shape = 'u32[]', space=smem, size = 0x4, offset = 0x4, fixed_abs, tag = 'smem constant byte address 0x4 - core index']
  #allocation1 [shape = 'u32[144,128]{1,0:T(1,128)}', space=vmem, size = 0x12000, scoped, tag = 'internal scratch']
  %s0 = inlined_call_operand.vmem [shape: f32[96,34], index: 0, kind: input, shape index: {}]
  %s1 = inlined_call_operand.vmem [shape: f32[96,1], index: 1, kind: input, shape index: {}]
  %s2 = inlined_call_operand.vmem [shape: f32[96,1], index: 2, kind: input, shape index: {}]
  %s3 = inlined_call_operand.hbm [shape: f32[3,34,128], index: 3, kind: input, shape index: {}]
  %s4 = inlined_call_operand.hbm [shape: f32[1,128], index: 4, kind: input, shape index: {}]
  %s5 = inlined_call_operand.hbm [shape: f32[1,128], index: 5, kind: input, shape index: {}]
  %s6 = inlined_call_operand.hbm [shape: f32[3,128,128], index: 6, kind: input, shape index: {}]
  %s7 = inlined_call_operand.hbm [shape: f32[1,128], index: 7, kind: input, shape index: {}]
  %s8 = inlined_call_operand.hbm [shape: f32[1,128], index: 8, kind: input, shape index: {}]
  %s9 = inlined_call_operand.hbm [shape: f32[48,128,128], index: 9, kind: input, shape index: {}]
  %s10 = inlined_call_operand.hbm [shape: f32[1,128], index: 10, kind: input, shape index: {}]
  %s11 = inlined_call_operand.hbm [shape: f32[128,128], index: 11, kind: input, shape index: {}]
  %s12 = inlined_call_operand.hbm [shape: f32[1,128], index: 12, kind: input, shape index: {}]
  %s13 = inlined_call_operand.hbm [shape: f32[2,1,128], index: 13, kind: output, shape index: {}]
  %s14 = sld [smem:[#allocation0]]
  $region125: #{keypoint_cnn1d_forward.1} parent=0
    _
  %s16 = ssub.s32 1, %s14
  %s17 = scalar_select 0, %s16, %s14
  $region1: #{keypoint_cnn1d_forward.1} parent=0
    #allocation2 [shape = 'u8[61440]{0}', space=vmem, size = 0xf000, scoped, tag = 'input window, operand 3, single buffered']
    #allocation3 [shape = 's32[2]{0}', space=sflag, size = 0x8, scoped, tag = 'scoped memory for keypoint_cnn1d_forward.1']
    #allocation4 [shape = 's32[2]{0}', space=sflag, size = 0x8, scoped, tag = 'scoped memory for keypoint_cnn1d_forward.1']
    #allocation5 [shape = 'u8[512]{0}', space=vmem, size = 0x400, scoped, tag = 'input window, operand 4, single buffered']
    #allocation6 [shape = 's32[1]{0}', space=sflag, size = 0x4, scoped, tag = 'scoped memory for keypoint_cnn1d_forward.1']
    #allocation7 [shape = 'u8[512]{0}', space=vmem, size = 0x400, scoped, tag = 'input window, operand 5, single buffered']
    #allocation8 [shape = 'u8[196608]{0}', space=vmem, size = 0x30000, scoped, tag = 'input window, operand 6, single buffered']
    #allocation9 [shape = 's32[1]{0}', space=sflag, size = 0x4, scoped, tag = 'scoped memory for keypoint_cnn1d_forward.1']
    #allocation10 [shape = 'u8[512]{0}', space=vmem, size = 0x400, scoped, tag = 'input window, operand 7, single buffered']
    #allocation11 [shape = 'u8[512]{0}', space=vmem, size = 0x400, scoped, tag = 'input window, operand 8, single buffered']
    #allocation12 [shape = 's32[1]{0}', space=sflag, size = 0x4, scoped, tag = 'scoped memory for keypoint_cnn1d_forward.1']
    #allocation13 [shape = 'u8[3145728]{0}', space=vmem, size = 0x300000, scoped, tag = 'input window, operand 9, single buffered']
    #allocation14 [shape = 'u8[512]{0}', space=vmem, size = 0x400, scoped, tag = 'input window, operand 10, single buffered']
    #allocation15 [shape = 's32[1]{0}', space=sflag, size = 0x4, scoped, tag = 'scoped memory for keypoint_cnn1d_forward.1']
    #allocation16 [shape = 'u8[65536]{0}', space=vmem, size = 0x10000, scoped, tag = 'input window, operand 11, single buffered']
    #allocation17 [shape = 'u8[512]{0}', space=vmem, size = 0x400, scoped, tag = 'input window, operand 12, single buffered']
    #allocation18 [shape = 's32[1]{0}', space=sflag, size = 0x4, scoped, tag = 'scoped memory for keypoint_cnn1d_forward.1']
    #allocation19 [shape = 'u8[1024]{0}', space=vmem, size = 0x400, scoped, tag = 'output window, operand 0']
    %18 = vsyncpa [#allocation3], 0
    %19 = vsyncpa [#allocation6], 0
    %20 = vsyncpa [#allocation9], 0
    %21 = vsyncpa [#allocation12], 0
    %22 = vsyncpa [#allocation15], 0
    %23 = vsyncpa [#allocation18], 0
    %24 = vsyncpa [#allocation4], 0
    %s25 = scalar_lea.sflag [#allocation4], 1
    %26 = vsyncpa %s25, 0
    loop: start=0, step=1, limit=4
    $region2: #{keypoint_cnn1d_forward.1} parent=1 // loop_pre_header
      _
    $region3: #{keypoint_cnn1d_forward.1} parent=1 // loop_header
      %s28 = sphi 0, %s32
      %p29 = scmp.ge.s32.totalorder %s28, 4
      %s38 = sphi 0, %s40
      %s41 = sphi 0, %s38
      %s42 = sphi 0, %s41
      %s58 = sphi 0, %s42
      %s64 = sphi 0, %s66
      %s67 = sphi 0, %s64
      %s68 = sphi 0, %s67
      %s84 = sphi 0, %s68
      %s90 = sphi 0, %s92
      %s93 = sphi 0, %s90
      %s94 = sphi 0, %s93
      %s110 = sphi 0, %s94
      %s114 = sphi 0, %s114
      %s116 = sphi 0, %s114
      %s117 = sphi 0, %s116
      %s131 = sphi 0, %s117
      %s135 = sphi 0, %s135
      %s137 = sphi 0, %s135
      %s138 = sphi 0, %s137
      %s152 = sphi 0, %s138
      %s156 = sphi 0, %s156
      %s158 = sphi 0, %s156
      %s159 = sphi 0, %s158
      %s173 = sphi 0, %s159
      %s177 = sphi 0, %s177
      %s179 = sphi 0, %s177
      %s180 = sphi 0, %s179
      %s194 = sphi 0, %s180
      %s198 = sphi 0, %s198
      %s200 = sphi 0, %s198
      %s201 = sphi 0, %s200
      %s215 = sphi 0, %s201
      %s219 = sphi 0, %s219
      %s221 = sphi 0, %s219
      %s222 = sphi 0, %s221
      %s236 = sphi 0, %s222
      %s240 = sphi 0, %s240
      %s242 = sphi 0, %s240
      %s243 = sphi 0, %s242
      %s257 = sphi 0, %s243
      %s261 = sphi 0, %s261
      %s263 = sphi 0, %s261
      %s264 = sphi 0, %s263
      %s278 = sphi 0, %s264
      %s282 = sphi 0, %s282
      %s284 = sphi 0, %s282
      %s285 = sphi 0, %s284
      %s299 = sphi 0, %s285
      %s303 = sphi 0, %s303
      %s305 = sphi 0, %s303
      %s306 = sphi 0, %s305
      %s320 = sphi 0, %s306
      %s326 = sphi 0, %s328
      %s329 = sphi 0, %s326
      %s330 = sphi 0, %s329
      %s346 = sphi 0, %s330
    $region4: #{keypoint_cnn1d_forward.1} parent=1 // loop_header_branch
      %31 = sbr.rel (%p29) target = $region8
    $region5: #{keypoint_cnn1d_forward.1} parent=1 // loop_body
      %s33 = ssub.s32 %s28, 1
      %s34 = ssub.s32 %s28, 2
      %s35 = sadd.s32 %s28, 1
      %s36 = ssub.s32 %s28, %s35
      %p37 = scmp.eq.s32.totalorder %s36, 0
      %s39 = sadd.s32 %s38, 1
      %s40 = scalar_select %p37, %s38, %s39
      %p43 = pneg %p37
      %p44 = scmp.eq.s32.totalorder %s28, 1
      %p45 = por %p43, %p44
      %p46 = scmp.ne.s32.totalorder %s38, %s41
      %p47 = scmp.eq.s32.totalorder %s28, 0
      %p48 = por %p46, %p47
      %p49 = scmp.ne.s32.totalorder %s38, %s41
      %p50 = scmp.eq.s32.totalorder %s33, 1
      %p51 = por %p49, %p50
      %p52 = scmp.ne.s32.totalorder %s41, %s42
      %p53 = scmp.eq.s32.totalorder %s33, 0
      %p54 = por %p52, %p53
      %p55 = scmp.ne.s32.totalorder %s41, %s42
      %p56 = scmp.eq.s32.totalorder %s34, 1
      %p57 = por %p55, %p56
      %p59 = scmp.ne.s32.totalorder %s42, %s58
      %p60 = scmp.eq.s32.totalorder %s34, 0
      %p61 = por %p59, %p60
      %s62 = ssub.s32 %s28, %s35
      %p63 = scmp.eq.s32.totalorder %s62, 0
      %s65 = sadd.s32 %s64, 1
      %s66 = scalar_select %p63, %s64, %s65
      %p69 = pneg %p63
      %p70 = scmp.eq.s32.totalorder %s28, 1
      %p71 = por %p69, %p70
      %p72 = scmp.ne.s32.totalorder %s64, %s67
      %p73 = scmp.eq.s32.totalorder %s28, 0
      %p74 = por %p72, %p73
      %p75 = scmp.ne.s32.totalorder %s64, %s67
      %p76 = scmp.eq.s32.totalorder %s33, 1
      %p77 = por %p75, %p76
      %p78 = scmp.ne.s32.totalorder %s67, %s68
      %p79 = scmp.eq.s32.totalorder %s33, 0
      %p80 = por %p78, %p79
      %p81 = scmp.ne.s32.totalorder %s67, %s68
      %p82 = scmp.eq.s32.totalorder %s34, 1
      %p83 = por %p81, %p82
      %p85 = scmp.ne.s32.totalorder %s68, %s84
      %p86 = scmp.eq.s32.totalorder %s34, 0
      %p87 = por %p85, %p86
      %s88 = ssub.s32 %s28, %s35
      %p89 = scmp.eq.s32.totalorder %s88, 0
      %s91 = sadd.s32 %s90, 1
      %s92 = scalar_select %p89, %s90, %s91
      %p95 = pneg %p89
      %p96 = scmp.eq.s32.totalorder %s28, 1
      %p97 = por %p95, %p96
      %p98 = scmp.ne.s32.totalorder %s90, %s93
      %p99 = scmp.eq.s32.totalorder %s28, 0
      %p100 = por %p98, %p99
      %p101 = scmp.ne.s32.totalorder %s90, %s93
      %p102 = scmp.eq.s32.totalorder %s33, 1
      %p103 = por %p101, %p102
      %p104 = scmp.ne.s32.totalorder %s93, %s94
      %p105 = scmp.eq.s32.totalorder %s33, 0
      %p106 = por %p104, %p105
      %p107 = scmp.ne.s32.totalorder %s93, %s94
      %p108 = scmp.eq.s32.totalorder %s34, 1
      %p109 = por %p107, %p108
      %p111 = scmp.ne.s32.totalorder %s94, %s110
      %p112 = scmp.eq.s32.totalorder %s34, 0
      %p113 = por %p111, %p112
      %s115 = sadd.s32 %s114, 1
      %p118 = scmp.eq.s32.totalorder %s28, 1
      %p119 = scmp.ne.s32.totalorder %s114, %s116
      %p120 = scmp.eq.s32.totalorder %s28, 0
      %p121 = por %p119, %p120
      %p122 = scmp.ne.s32.totalorder %s114, %s116
      %p123 = scmp.eq.s32.totalorder %s33, 1
      %p124 = por %p122, %p123
      %p125 = scmp.ne.s32.totalorder %s116, %s117
      %p126 = scmp.eq.s32.totalorder %s33, 0
      %p127 = por %p125, %p126
      %p128 = scmp.ne.s32.totalorder %s116, %s117
      %p129 = scmp.eq.s32.totalorder %s34, 1
      %p130 = por %p128, %p129
      %p132 = scmp.ne.s32.totalorder %s117, %s131
      %p133 = scmp.eq.s32.totalorder %s34, 0
      %p134 = por %p132, %p133
      %s136 = sadd.s32 %s135, 1
      %p139 = scmp.eq.s32.totalorder %s28, 1
      %p140 = scmp.ne.s32.totalorder %s135, %s137
      %p141 = scmp.eq.s32.totalorder %s28, 0
      %p142 = por %p140, %p141
      %p143 = scmp.ne.s32.totalorder %s135, %s137
      %p144 = scmp.eq.s32.totalorder %s33, 1
      %p145 = por %p143, %p144
      %p146 = scmp.ne.s32.totalorder %s137, %s138
      %p147 = scmp.eq.s32.totalorder %s33, 0
      %p148 = por %p146, %p147
      %p149 = scmp.ne.s32.totalorder %s137, %s138
      %p150 = scmp.eq.s32.totalorder %s34, 1
      %p151 = por %p149, %p150
      %p153 = scmp.ne.s32.totalorder %s138, %s152
      %p154 = scmp.eq.s32.totalorder %s34, 0
      %p155 = por %p153, %p154
      %s157 = sadd.s32 %s156, 1
      %p160 = scmp.eq.s32.totalorder %s28, 1
      %p161 = scmp.ne.s32.totalorder %s156, %s158
      %p162 = scmp.eq.s32.totalorder %s28, 0
      %p163 = por %p161, %p162
      %p164 = scmp.ne.s32.totalorder %s156, %s158
      %p165 = scmp.eq.s32.totalorder %s33, 1
      %p166 = por %p164, %p165
      %p167 = scmp.ne.s32.totalorder %s158, %s159
      %p168 = scmp.eq.s32.totalorder %s33, 0
      %p169 = por %p167, %p168
      %p170 = scmp.ne.s32.totalorder %s158, %s159
      %p171 = scmp.eq.s32.totalorder %s34, 1
      %p172 = por %p170, %p171
      %p174 = scmp.ne.s32.totalorder %s159, %s173
      %p175 = scmp.eq.s32.totalorder %s34, 0
      %p176 = por %p174, %p175
      %s178 = sadd.s32 %s177, 1
      %p181 = scmp.eq.s32.totalorder %s28, 1
      %p182 = scmp.ne.s32.totalorder %s177, %s179
      %p183 = scmp.eq.s32.totalorder %s28, 0
      %p184 = por %p182, %p183
      %p185 = scmp.ne.s32.totalorder %s177, %s179
      %p186 = scmp.eq.s32.totalorder %s33, 1
      %p187 = por %p185, %p186
      %p188 = scmp.ne.s32.totalorder %s179, %s180
      %p189 = scmp.eq.s32.totalorder %s33, 0
      %p190 = por %p188, %p189
      %p191 = scmp.ne.s32.totalorder %s179, %s180
      %p192 = scmp.eq.s32.totalorder %s34, 1
      %p193 = por %p191, %p192
      %p195 = scmp.ne.s32.totalorder %s180, %s194
      %p196 = scmp.eq.s32.totalorder %s34, 0
      %p197 = por %p195, %p196
      %s199 = sadd.s32 %s198, 1
      %p202 = scmp.eq.s32.totalorder %s28, 1
      %p203 = scmp.ne.s32.totalorder %s198, %s200
      %p204 = scmp.eq.s32.totalorder %s28, 0
      %p205 = por %p203, %p204
      %p206 = scmp.ne.s32.totalorder %s198, %s200
      %p207 = scmp.eq.s32.totalorder %s33, 1
      %p208 = por %p206, %p207
      %p209 = scmp.ne.s32.totalorder %s200, %s201
      %p210 = scmp.eq.s32.totalorder %s33, 0
      %p211 = por %p209, %p210
      %p212 = scmp.ne.s32.totalorder %s200, %s201
      %p213 = scmp.eq.s32.totalorder %s34, 1
      %p214 = por %p212, %p213
      %p216 = scmp.ne.s32.totalorder %s201, %s215
      %p217 = scmp.eq.s32.totalorder %s34, 0
      %p218 = por %p216, %p217
      %s220 = sadd.s32 %s219, 1
      %p223 = scmp.eq.s32.totalorder %s28, 1
      %p224 = scmp.ne.s32.totalorder %s219, %s221
      %p225 = scmp.eq.s32.totalorder %s28, 0
      %p226 = por %p224, %p225
      %p227 = scmp.ne.s32.totalorder %s219, %s221
      %p228 = scmp.eq.s32.totalorder %s33, 1
      %p229 = por %p227, %p228
      %p230 = scmp.ne.s32.totalorder %s221, %s222
      %p231 = scmp.eq.s32.totalorder %s33, 0
      %p232 = por %p230, %p231
      %p233 = scmp.ne.s32.totalorder %s221, %s222
      %p234 = scmp.eq.s32.totalorder %s34, 1
      %p235 = por %p233, %p234
      %p237 = scmp.ne.s32.totalorder %s222, %s236
      %p238 = scmp.eq.s32.totalorder %s34, 0
      %p239 = por %p237, %p238
      %s241 = sadd.s32 %s240, 1
      %p244 = scmp.eq.s32.totalorder %s28, 1
      %p245 = scmp.ne.s32.totalorder %s240, %s242
      %p246 = scmp.eq.s32.totalorder %s28, 0
      %p247 = por %p245, %p246
      %p248 = scmp.ne.s32.totalorder %s240, %s242
      %p249 = scmp.eq.s32.totalorder %s33, 1
      %p250 = por %p248, %p249
      %p251 = scmp.ne.s32.totalorder %s242, %s243
      %p252 = scmp.eq.s32.totalorder %s33, 0
      %p253 = por %p251, %p252
      %p254 = scmp.ne.s32.totalorder %s242, %s243
      %p255 = scmp.eq.s32.totalorder %s34, 1
      %p256 = por %p254, %p255
      %p258 = scmp.ne.s32.totalorder %s243, %s257
      %p259 = scmp.eq.s32.totalorder %s34, 0
      %p260 = por %p258, %p259
      %s262 = sadd.s32 %s261, 1
      %p265 = scmp.eq.s32.totalorder %s28, 1
      %p266 = scmp.ne.s32.totalorder %s261, %s263
      %p267 = scmp.eq.s32.totalorder %s28, 0
      %p268 = por %p266, %p267
      %p269 = scmp.ne.s32.totalorder %s261, %s263
      %p270 = scmp.eq.s32.totalorder %s33, 1
      %p271 = por %p269, %p270
      %p272 = scmp.ne.s32.totalorder %s263, %s264
      %p273 = scmp.eq.s32.totalorder %s33, 0
      %p274 = por %p272, %p273
      %p275 = scmp.ne.s32.totalorder %s263, %s264
      %p276 = scmp.eq.s32.totalorder %s34, 1
      %p277 = por %p275, %p276
      %p279 = scmp.ne.s32.totalorder %s264, %s278
      %p280 = scmp.eq.s32.totalorder %s34, 0
      %p281 = por %p279, %p280
      %s283 = sadd.s32 %s282, 1
      %p286 = scmp.eq.s32.totalorder %s28, 1
      %p287 = scmp.ne.s32.totalorder %s282, %s284
      %p288 = scmp.eq.s32.totalorder %s28, 0
      %p289 = por %p287, %p288
      %p290 = scmp.ne.s32.totalorder %s282, %s284
      %p291 = scmp.eq.s32.totalorder %s33, 1
      %p292 = por %p290, %p291
      %p293 = scmp.ne.s32.totalorder %s284, %s285
      %p294 = scmp.eq.s32.totalorder %s33, 0
      %p295 = por %p293, %p294
      %p296 = scmp.ne.s32.totalorder %s284, %s285
      %p297 = scmp.eq.s32.totalorder %s34, 1
      %p298 = por %p296, %p297
      %p300 = scmp.ne.s32.totalorder %s285, %s299
      %p301 = scmp.eq.s32.totalorder %s34, 0
      %p302 = por %p300, %p301
      %s304 = sadd.s32 %s303, 1
      %p307 = scmp.eq.s32.totalorder %s28, 1
      %p308 = scmp.ne.s32.totalorder %s303, %s305
      %p309 = scmp.eq.s32.totalorder %s28, 0
      %p310 = por %p308, %p309
      %p311 = scmp.ne.s32.totalorder %s303, %s305
      %p312 = scmp.eq.s32.totalorder %s33, 1
      %p313 = por %p311, %p312
      %p314 = scmp.ne.s32.totalorder %s305, %s306
      %p315 = scmp.eq.s32.totalorder %s33, 0
      %p316 = por %p314, %p315
      %p317 = scmp.ne.s32.totalorder %s305, %s306
      %p318 = scmp.eq.s32.totalorder %s34, 1
      %p319 = por %p317, %p318
      %p321 = scmp.ne.s32.totalorder %s306, %s320
      %p322 = scmp.eq.s32.totalorder %s34, 0
      %p323 = por %p321, %p322
      %s324 = ssub.s32 %s28, %s35
      %p325 = scmp.eq.s32.totalorder %s324, 0
      %s327 = sadd.s32 %s326, 1
      %s328 = scalar_select %p325, %s326, %s327
      %p331 = pneg %p325
      %p332 = scmp.eq.s32.totalorder %s28, 1
      %p333 = por %p331, %p332
      %p334 = scmp.ne.s32.totalorder %s326, %s329
      %p335 = scmp.eq.s32.totalorder %s28, 0
      %p336 = por %p334, %p335
      %p337 = scmp.ne.s32.totalorder %s326, %s329
      %p338 = scmp.eq.s32.totalorder %s33, 1
      %p339 = por %p337, %p338
      %p340 = scmp.ne.s32.totalorder %s329, %s330
      %p341 = scmp.eq.s32.totalorder %s33, 0
      %p342 = por %p340, %p341
      %p343 = scmp.ne.s32.totalorder %s329, %s330
      %p344 = scmp.eq.s32.totalorder %s34, 1
      %p345 = por %p343, %p344
      %p347 = scmp.ne.s32.totalorder %s330, %s346
      %p348 = scmp.eq.s32.totalorder %s34, 0
      %p349 = por %p347, %p348
      %p350 = scmp.le.s32.totalorder 1, %s28
      %p351 = scmp.lt.s32.totalorder %s28, 3
      %p352 = pnand %p350, %p351
      %p353 = pneg %p352
      // Predicated region
      $region9: #{keypoint_cnn1d_forward.1} parent=5 // pred_check
        _
      $region10: #{keypoint_cnn1d_forward.1} parent=5 // pred_check_branch
        %355 = sbr.rel (%p352) target = $region12
      $region11: #{keypoint_cnn1d_forward.1} parent=5 // pred_region
        %s356 = ssub.s32 %s28, 1
        // Predicated region
        $region13: #{keypoint_cnn1d_forward.1} parent=11 // pred_check
          %p357 = pneg %p127
        $region14: #{keypoint_cnn1d_forward.1} parent=11 // pred_check_branch
          %359 = sbr.rel (%p357) target = $region16
        $region15: #{keypoint_cnn1d_forward.1} parent=11 // pred_region
          %s361 = ssub.s32 1920, 1920
          %362 = vsyncadd [#allocation3], %s361
          %s363 = sshll.u32 [#allocation2], 4
          %s364 = int_to_ptr.vmem [resolvable:$true] %s363
          %369 = dma.hbm_to_vmem [thread:$0]  %s3, 1920, %s364, [#allocation3], 128, 128, 8
        $region16: #{keypoint_cnn1d_forward.1} parent=11 // pred_fallthru
          _
        // Predicated region
        $region17: #{keypoint_cnn1d_forward.1} parent=11 // pred_check
          %p370 = pneg %p148
        $region18: #{keypoint_cnn1d_forward.1} parent=11 // pred_check_branch
          %372 = sbr.rel (%p370) target = $region20
        $region19: #{keypoint_cnn1d_forward.1} parent=11 // pred_region
          %s374 = ssub.s32 16, 16
          %375 = vsyncadd [#allocation6], %s374
          %s377 = sshll.u32 [#allocation5], 4
          %s378 = int_to_ptr.vmem [resolvable:$true] %s377
          %380 = dma.hbm_to_vmem [thread:$0]  %s4, 16, %s378, [#allocation6]
        $region20: #{keypoint_cnn1d_forward.1} parent=11 // pred_fallthru
          _
        // Predicated region
        $region21: #{keypoint_cnn1d_forward.1} parent=11 // pred_check
          %p381 = pneg %p169
        $region22: #{keypoint_cnn1d_forward.1} parent=11 // pred_check_branch
          %383 = sbr.rel (%p381) target = $region24
        $region23: #{keypoint_cnn1d_forward.1} parent=11 // pred_region
          %s385 = ssub.s32 16, 16
          %386 = vsyncadd [#allocation6], %s385
          %s388 = sshll.u32 [#allocation7], 4
          %s389 = int_to_ptr.vmem [resolvable:$true] %s388
          %391 = dma.hbm_to_vmem [thread:$0]  %s5, 16, %s389, [#allocation6]
        $region24: #{keypoint_cnn1d_forward.1} parent=11 // pred_fallthru
          _
        // Predicated region
        $region25: #{keypoint_cnn1d_forward.1} parent=11 // pred_check
          %p392 = pneg %p190
        $region26: #{keypoint_cnn1d_forward.1} parent=11 // pred_check_branch
          %394 = sbr.rel (%p392) target = $region28
        $region27: #{keypoint_cnn1d_forward.1} parent=11 // pred_region
          %s396 = ssub.s32 6144, 6144
          %397 = vsyncadd [#allocation9], %s396
          %s398 = sshll.u32 [#allocation8], 4
          %s399 = int_to_ptr.vmem [resolvable:$true] %s398
          %404 = dma.hbm_to_vmem [thread:$0]  %s6, 6144, %s399, [#allocation9], 128, 128, 8
        $region28: #{keypoint_cnn1d_forward.1} parent=11 // pred_fallthru
          _
        // Predicated region
        $region29: #{keypoint_cnn1d_forward.1} parent=11 // pred_check
          %p405 = pneg %p211
        $region30: #{keypoint_cnn1d_forward.1} parent=11 // pred_check_branch
          %407 = sbr.rel (%p405) target = $region32
        $region31: #{keypoint_cnn1d_forward.1} parent=11 // pred_region
          %s409 = ssub.s32 16, 16
          %410 = vsyncadd [#allocation9], %s409
          %s412 = sshll.u32 [#allocation10], 4
          %s413 = int_to_ptr.vmem [resolvable:$true] %s412
          %415 = dma.hbm_to_vmem [thread:$0]  %s7, 16, %s413, [#allocation9]
        $region32: #{keypoint_cnn1d_forward.1} parent=11 // pred_fallthru
          _
        // Predicated region
        $region33: #{keypoint_cnn1d_forward.1} parent=11 // pred_check
          %p416 = pneg %p232
        $region34: #{keypoint_cnn1d_forward.1} parent=11 // pred_check_branch
          %418 = sbr.rel (%p416) target = $region36
        $region35: #{keypoint_cnn1d_forward.1} parent=11 // pred_region
          %s420 = ssub.s32 16, 16
          %421 = vsyncadd [#allocation12], %s420
          %s423 = sshll.u32 [#allocation11], 4
          %s424 = int_to_ptr.vmem [resolvable:$true] %s423
          %426 = dma.hbm_to_vmem [thread:$0]  %s8, 16, %s424, [#allocation12]
        $region36: #{keypoint_cnn1d_forward.1} parent=11 // pred_fallthru
          _
        // Predicated region
        $region37: #{keypoint_cnn1d_forward.1} parent=11 // pred_check
          %p427 = pneg %p253
        $region38: #{keypoint_cnn1d_forward.1} parent=11 // pred_check_branch
          %429 = sbr.rel (%p427) target = $region40
        $region39: #{keypoint_cnn1d_forward.1} parent=11 // pred_region
          %s431 = ssub.s32 98304, 98304
          %432 = vsyncadd [#allocation12], %s431
          %s433 = sshll.u32 [#allocation13], 4
          %s434 = int_to_ptr.vmem [resolvable:$true] %s433
          %439 = dma.hbm_to_vmem [thread:$0]  %s9, 98304, %s434, [#allocation12], 128, 128, 8
        $region40: #{keypoint_cnn1d_forward.1} parent=11 // pred_fallthru
          _
        // Predicated region
        $region41: #{keypoint_cnn1d_forward.1} parent=11 // pred_check
          %p440 = pneg %p274
        $region42: #{keypoint_cnn1d_forward.1} parent=11 // pred_check_branch
          %442 = sbr.rel (%p440) target = $region44
        $region43: #{keypoint_cnn1d_forward.1} parent=11 // pred_region
          %s444 = ssub.s32 16, 16
          %445 = vsyncadd [#allocation15], %s444
          %s447 = sshll.u32 [#allocation14], 4
          %s448 = int_to_ptr.vmem [resolvable:$true] %s447
          %450 = dma.hbm_to_vmem [thread:$0]  %s10, 16, %s448, [#allocation15]
        $region44: #{keypoint_cnn1d_forward.1} parent=11 // pred_fallthru
          _
        // Predicated region
        $region45: #{keypoint_cnn1d_forward.1} parent=11 // pred_check
          %p451 = pneg %p295
        $region46: #{keypoint_cnn1d_forward.1} parent=11 // pred_check_branch
          %453 = sbr.rel (%p451) target = $region48
        $region47: #{keypoint_cnn1d_forward.1} parent=11 // pred_region
          %s455 = ssub.s32 2048, 2048
          %456 = vsyncadd [#allocation15], %s455
          %s457 = sshll.u32 [#allocation16], 4
          %s458 = int_to_ptr.vmem [resolvable:$true] %s457
          %463 = dma.hbm_to_vmem [thread:$0]  %s11, 2048, %s458, [#allocation15], 128, 128, 8
        $region48: #{keypoint_cnn1d_forward.1} parent=11 // pred_fallthru
          _
        // Predicated region
        $region49: #{keypoint_cnn1d_forward.1} parent=11 // pred_check
          %p464 = pneg %p316
        $region50: #{keypoint_cnn1d_forward.1} parent=11 // pred_check_branch
          %466 = sbr.rel (%p464) target = $region52
        $region51: #{keypoint_cnn1d_forward.1} parent=11 // pred_region
          %s468 = ssub.s32 16, 16
          %469 = vsyncadd [#allocation18], %s468
          %s471 = sshll.u32 [#allocation17], 4
          %s472 = int_to_ptr.vmem [resolvable:$true] %s471
          %474 = dma.hbm_to_vmem [thread:$0]  %s12, 16, %s472, [#allocation18]
        $region52: #{keypoint_cnn1d_forward.1} parent=11 // pred_fallthru
          _
      $region12: #{keypoint_cnn1d_forward.1} parent=5 // pred_fallthru
        _
      %p475 = scmp.lt.s32.totalorder %s28, 2
      // Predicated region
      $region53: #{keypoint_cnn1d_forward.1} parent=5 // pred_check
        %p476 = pneg %p475
      $region54: #{keypoint_cnn1d_forward.1} parent=5 // pred_check_branch
        %478 = sbr.rel (%p476) target = $region56
      $region55: #{keypoint_cnn1d_forward.1} parent=5 // pred_region
        // Predicated region
        $region57: #{keypoint_cnn1d_forward.1} parent=55 // pred_check
          %p479 = pneg %p48
        $region58: #{keypoint_cnn1d_forward.1} parent=55 // pred_check_branch
          %481 = sbr.rel (%p479) target = $region60
        $region59: #{keypoint_cnn1d_forward.1} parent=55 // pred_region
          %s482 = smul.u32 6, %s28
          %p483 = scmp.lt.s32.totalorder %s482, 11
          %s484 = scalar_select %p483, %s482, 11
          %s485 = smul.addr %s484, 8
          %s486 = scalar_lea.vmem %s0, %s485
          %s487 = smul.u32 6, %s28
        $region60: #{keypoint_cnn1d_forward.1} parent=55 // pred_fallthru
          _
        // Predicated region
        $region61: #{keypoint_cnn1d_forward.1} parent=55 // pred_check
          %p488 = pneg %p74
        $region62: #{keypoint_cnn1d_forward.1} parent=55 // pred_check_branch
          %490 = sbr.rel (%p488) target = $region64
        $region63: #{keypoint_cnn1d_forward.1} parent=55 // pred_region
          %s491 = smul.u32 6, %s28
          %p492 = scmp.lt.s32.totalorder %s491, 11
          %s493 = scalar_select %p492, %s491, 11
          %s494 = smul.addr %s493, 8
          %s495 = scalar_lea.vmem %s1, %s494
          %s496 = smul.u32 6, %s28
        $region64: #{keypoint_cnn1d_forward.1} parent=55 // pred_fallthru
          _
        // Predicated region
        $region65: #{keypoint_cnn1d_forward.1} parent=55 // pred_check
          %p497 = pneg %p100
        $region66: #{keypoint_cnn1d_forward.1} parent=55 // pred_check_branch
          %499 = sbr.rel (%p497) target = $region68
        $region67: #{keypoint_cnn1d_forward.1} parent=55 // pred_region
          %s500 = smul.u32 6, %s28
          %p501 = scmp.lt.s32.totalorder %s500, 11
          %s502 = scalar_select %p501, %s500, 11
          %s503 = smul.addr %s502, 8
          %s504 = scalar_lea.vmem %s2, %s503
          %s505 = smul.u32 6, %s28
        $region68: #{keypoint_cnn1d_forward.1} parent=55 // pred_fallthru
          _
      $region56: #{keypoint_cnn1d_forward.1} parent=5 // pred_fallthru
        _
      %p506 = scmp.le.s32.totalorder 1, %s28
      %p507 = scmp.lt.s32.totalorder %s28, 3
      %p508 = pnand %p506, %p507
      %p509 = pneg %p508
      // Predicated region
      $region69: #{keypoint_cnn1d_forward.1} parent=5 // pred_check
        _
      $region70: #{keypoint_cnn1d_forward.1} parent=5 // pred_check_branch
        %511 = sbr.rel (%p508) target = $region72
      $region71: #{keypoint_cnn1d_forward.1} parent=5 // pred_region
        %s512 = ssub.s32 %s28, 1
        // Predicated region
        $region73: #{keypoint_cnn1d_forward.1} parent=71 // pred_check
          %p513 = pneg %p127
        $region74: #{keypoint_cnn1d_forward.1} parent=71 // pred_check_branch
          %515 = sbr.rel (%p513) target = $region76
        $region75: #{keypoint_cnn1d_forward.1} parent=71 // pred_region
          %516 = dma.done [#allocation3], 1920
        $region76: #{keypoint_cnn1d_forward.1} parent=71 // pred_fallthru
          _
        // Predicated region
        $region77: #{keypoint_cnn1d_forward.1} parent=71 // pred_check
          %p517 = pneg %p148
        $region78: #{keypoint_cnn1d_forward.1} parent=71 // pred_check_branch
          %519 = sbr.rel (%p517) target = $region80
        $region79: #{keypoint_cnn1d_forward.1} parent=71 // pred_region
          %520 = dma.done [#allocation6], 16
        $region80: #{keypoint_cnn1d_forward.1} parent=71 // pred_fallthru
          _
        // Predicated region
        $region81: #{keypoint_cnn1d_forward.1} parent=71 // pred_check
          %p521 = pneg %p169
        $region82: #{keypoint_cnn1d_forward.1} parent=71 // pred_check_branch
          %523 = sbr.rel (%p521) target = $region84
        $region83: #{keypoint_cnn1d_forward.1} parent=71 // pred_region
          %524 = dma.done [#allocation6], 16
        $region84: #{keypoint_cnn1d_forward.1} parent=71 // pred_fallthru
          _
        // Predicated region
        $region85: #{keypoint_cnn1d_forward.1} parent=71 // pred_check
          %p525 = pneg %p190
        $region86: #{keypoint_cnn1d_forward.1} parent=71 // pred_check_branch
          %527 = sbr.rel (%p525) target = $region88
        $region87: #{keypoint_cnn1d_forward.1} parent=71 // pred_region
          %528 = dma.done [#allocation9], 6144
        $region88: #{keypoint_cnn1d_forward.1} parent=71 // pred_fallthru
          _
        // Predicated region
        $region89: #{keypoint_cnn1d_forward.1} parent=71 // pred_check
          %p529 = pneg %p211
        $region90: #{keypoint_cnn1d_forward.1} parent=71 // pred_check_branch
          %531 = sbr.rel (%p529) target = $region92
        $region91: #{keypoint_cnn1d_forward.1} parent=71 // pred_region
          %532 = dma.done [#allocation9], 16
        $region92: #{keypoint_cnn1d_forward.1} parent=71 // pred_fallthru
          _
        // Predicated region
        $region93: #{keypoint_cnn1d_forward.1} parent=71 // pred_check
          %p533 = pneg %p232
        $region94: #{keypoint_cnn1d_forward.1} parent=71 // pred_check_branch
          %535 = sbr.rel (%p533) target = $region96
        $region95: #{keypoint_cnn1d_forward.1} parent=71 // pred_region
          %536 = dma.done [#allocation12], 16
        $region96: #{keypoint_cnn1d_forward.1} parent=71 // pred_fallthru
          _
        // Predicated region
        $region97: #{keypoint_cnn1d_forward.1} parent=71 // pred_check
          %p537 = pneg %p253
        $region98: #{keypoint_cnn1d_forward.1} parent=71 // pred_check_branch
          %539 = sbr.rel (%p537) target = $region100
        $region99: #{keypoint_cnn1d_forward.1} parent=71 // pred_region
          %540 = dma.done [#allocation12], 98304
        $region100: #{keypoint_cnn1d_forward.1} parent=71 // pred_fallthru
          _
        // Predicated region
        $region101: #{keypoint_cnn1d_forward.1} parent=71 // pred_check
          %p541 = pneg %p274
        $region102: #{keypoint_cnn1d_forward.1} parent=71 // pred_check_branch
          %543 = sbr.rel (%p541) target = $region104
        $region103: #{keypoint_cnn1d_forward.1} parent=71 // pred_region
          %544 = dma.done [#allocation15], 16
        $region104: #{keypoint_cnn1d_forward.1} parent=71 // pred_fallthru
          _
        // Predicated region
        $region105: #{keypoint_cnn1d_forward.1} parent=71 // pred_check
          %p545 = pneg %p295
        $region106: #{keypoint_cnn1d_forward.1} parent=71 // pred_check_branch
          %547 = sbr.rel (%p545) target = $region108
        $region107: #{keypoint_cnn1d_forward.1} parent=71 // pred_region
          %548 = dma.done [#allocation15], 2048
        $region108: #{keypoint_cnn1d_forward.1} parent=71 // pred_fallthru
          _
        // Predicated region
        $region109: #{keypoint_cnn1d_forward.1} parent=71 // pred_check
          %p549 = pneg %p316
        $region110: #{keypoint_cnn1d_forward.1} parent=71 // pred_check_branch
          %551 = sbr.rel (%p549) target = $region112
        $region111: #{keypoint_cnn1d_forward.1} parent=71 // pred_region
          %552 = dma.done [#allocation18], 16
        $region112: #{keypoint_cnn1d_forward.1} parent=71 // pred_fallthru
          _
        %s553 = smul.u32 6, %s33
        %p554 = scmp.lt.s32.totalorder %s553, 11
        %s555 = scalar_select %p554, %s553, 11
        %s556 = smul.addr %s555, 8
        %s557 = scalar_lea.vmem %s0, %s556
        %p558 = pneg %p54
        %p559 = pneg %p51
        %s560 = smul.u32 6, %s33
        %p561 = scmp.lt.s32.totalorder %s560, 11
        %s562 = scalar_select %p561, %s560, 11
        %s563 = smul.addr %s562, 8
        %s564 = scalar_lea.vmem %s1, %s563
        %p565 = pneg %p80
        %p566 = pneg %p77
        %s567 = smul.u32 6, %s33
        %p568 = scmp.lt.s32.totalorder %s567, 11
        %s569 = scalar_select %p568, %s567, 11
        %s570 = smul.addr %s569, 8
        %s571 = scalar_lea.vmem %s2, %s570
        %p572 = pneg %p106
        %p573 = pneg %p103
        %p574 = pneg %p127
        %p575 = pneg %p124
        %p576 = pneg %p148
        %p577 = pneg %p145
        %p578 = pneg %p169
        %p579 = pneg %p166
        %p580 = pneg %p190
        %p581 = pneg %p187
        %p582 = pneg %p211
        %p583 = pneg %p208
        %p584 = pneg %p232
        %p585 = pneg %p229
        %p586 = pneg %p253
        %p587 = pneg %p250
        %p588 = pneg %p274
        %p589 = pneg %p271
        %p590 = pneg %p295
        %p591 = pneg %p292
        %p592 = pneg %p316
        %p593 = pneg %p313
        %p594 = pneg %p342
        %p595 = pneg %p339
        %s596 = sand.u32 %s329, 1
        %s597 = scalar_lea.sflag [#allocation4], %s596
        %s598 = sand.u32 %s329, 1
        %s599 = scalar_lea.vmem [#allocation19], %s598
        %s600 = smul.u32 6, %s33
        %p601 = scmp.lt.s32.totalorder %s600, 11
        %s602 = scalar_select %p601, %s600, 11
        %s603 = smul.addr %s602, 8
        %s604 = scalar_lea.vmem %s0, %s603
        %s605 = smul.u32 6, %s33
        %s606 = smul.u32 6, %s33
        %p607 = scmp.lt.s32.totalorder %s606, 11
        %s608 = scalar_select %p607, %s606, 11
        %s609 = smul.addr %s608, 8
        %s610 = scalar_lea.vmem %s1, %s609
        %s611 = smul.u32 6, %s33
        %s612 = smul.u32 6, %s33
        %p613 = scmp.lt.s32.totalorder %s612, 11
        %s614 = scalar_select %p613, %s612, 11
        %s615 = smul.addr %s614, 8
        %s616 = scalar_lea.vmem %s2, %s615
        %s617 = smul.u32 6, %s33
        %v618 = vld [vmem:[%s610] sm:$0xff]
        %v619 = vld [vmem:[%s610 + $0x8] sm:$0xff]
        %v620 = vld [vmem:[%s610 + $0x10] sm:$0xff]
        %v621 = vld [vmem:[%s610 + $0x18] sm:$0xff]
        %v622 = vld [vmem:[%s610 + $0x20] sm:$0xff]
        %v623 = vld [vmem:[%s610 + $0x28] sm:$0xff]
        %v624 = vld [vmem:[%s616] sm:$0xff]
        %v625 = vld [vmem:[%s616 + $0x8] sm:$0xff]
        %v626 = vld [vmem:[%s616 + $0x10] sm:$0xff]
        %v627 = vld [vmem:[%s616 + $0x18] sm:$0xff]
        %v628 = vld [vmem:[%s616 + $0x20] sm:$0xff]
        %v629 = vld [vmem:[%s616 + $0x28] sm:$0xff]
        %v630 = vld [vmem:[%s604] sm:$0xff]
        %v631 = vld [vmem:[%s604 + $0x8] sm:$0xff]
        %v632 = vld [vmem:[%s604 + $0x10] sm:$0xff]
        %v633 = vld [vmem:[%s604 + $0x18] sm:$0xff]
        %v634 = vld [vmem:[%s604 + $0x20] sm:$0xff]
        %v635 = vld [vmem:[%s604 + $0x28] sm:$0xff]
        %vm642 = vcmask 1040384
        %v643 = vrot.slane %v630, 7
        %v644 = vrot.slane %v631, 7
        %v645 = vsel %vm642, %v643, %v644
        %v646 = vrot.slane %v632, 7
        %v647 = vsel %vm642, %v644, %v646
        %v648 = vrot.slane %v633, 7
        %v649 = vsel %vm642, %v646, %v648
        %v650 = vrot.slane %v634, 7
        %v651 = vsel %vm642, %v648, %v650
        %v652 = vrot.slane %v635, 7
        %v653 = vsel %vm642, %v650, %v652
        %v660 = vsel %vm642, 0.0, %v643
        %662 = vset.pattern.permute.xlu0 0
        %663 = vperm.xlu0 %662, %v618
        %v664 = vpop.permute.xlu0 %663
        %667 = vset.pattern.permute.xlu0 0
        %668 = vperm.xlu0 %667, %v619
        %v669 = vpop.permute.xlu0 %668
        %672 = vset.pattern.permute.xlu0 0
        %673 = vperm.xlu0 %672, %v620
        %v674 = vpop.permute.xlu0 %673
        %677 = vset.pattern.permute.xlu0 0
        %678 = vperm.xlu0 %677, %v621
        %v679 = vpop.permute.xlu0 %678
        %682 = vset.pattern.permute.xlu0 0
        %683 = vperm.xlu0 %682, %v622
        %v684 = vpop.permute.xlu0 %683
        %687 = vset.pattern.permute.xlu0 0
        %688 = vperm.xlu0 %687, %v623
        %v689 = vpop.permute.xlu0 %688
        %v691 = vmul.f32 %v660, %v664
        %v692 = vmul.f32 %v645, %v669
        %v693 = vmul.f32 %v647, %v674
        %v694 = vmul.f32 %v649, %v679
        %v695 = vmul.f32 %v651, %v684
        %v696 = vmul.f32 %v653, %v689
        %v697 = vld [vmem:[#allocation2] sm:$0xff]
        %v698 = vld [vmem:[#allocation2 + $0x8] sm:$0xff]
        %v699 = vld [vmem:[#allocation2 + $0x10] sm:$0xff]
        %v700 = vld [vmem:[#allocation2 + $0x18] sm:$0xff]
        %v701 = vld [vmem:[#allocation2 + $0x20] sm:$0x3]
        %s702 = scalar_lea.vmem [#allocation2], 40
        %v703 = vld [vmem:[%s702] sm:$0xff]
        %v704 = vld [vmem:[%s702 + $0x8] sm:$0xff]
        %v705 = vld [vmem:[%s702 + $0x10] sm:$0xff]
        %v706 = vld [vmem:[%s702 + $0x18] sm:$0xff]
        %v707 = vld [vmem:[%s702 + $0x20] sm:$0x3]
        %vm708 = vcmask 277504
        %v709 = vsel %vm708, %v630, 0
        %v711 = vsel %vm708, %v631, 0
        %v713 = vsel %vm708, %v632, 0
        %v715 = vsel %vm708, %v633, 0
        %v717 = vsel %vm708, %v634, 0
        %v719 = vsel %vm708, %v635, 0
        %vm721 = vcmask 1041408
        %v723 = vsel %vm721, %v707, 0
        %725 = vmatprep.subr.mxu0 0.0
        %726 = vmatpush1.msra.mxu0 %v703
        %727 = vmatprep.subr.mxu0 0.0
        %728 = vmatpush1.msra.mxu0 %v704
        %729 = vmatprep.subr.mxu0 0.0
        %730 = vmatpush1.msra.mxu0 %v705
        %731 = vmatprep.subr.mxu0 0.0
        %732 = vmatpush1.msra.mxu0 %v706
        %733 = vmatprep.subr.mxu0 0.0
        %734 = vmatpush1.msra.mxu0 %v723
        %735 = vmatprep.subr.mxu0 0.0
        %736 = vmatpush1.msra.mxu0 0.0
        %737 = vmatprep.subr.mxu0 0.0
        %738 = vmatpush1.msra.mxu0 0.0
        %739 = vmatprep.subr.mxu0 0.0
        %740 = vmatpush1.msra.mxu0 0.0
        %741 = vmatprep.subr.mxu0 0.0
        %742 = vmatpush1.msra.mxu0 0.0
        %743 = vmatprep.subr.mxu0 0.0
        %744 = vmatpush1.msra.mxu0 0.0
        %745 = vmatprep.subr.mxu0 0.0
        %746 = vmatpush1.msra.mxu0 0.0
        %747 = vmatprep.subr.mxu0 0.0
        %748 = vmatpush1.msra.mxu0 0.0
        %749 = vmatprep.subr.mxu0 0.0
        %750 = vmatpush1.msra.mxu0 0.0
        %751 = vmatprep.subr.mxu0 0.0
        %752 = vmatpush1.msra.mxu0 0.0
        %753 = vmatprep.subr.mxu0 0.0
        %754 = vmatpush1.msra.mxu0 0.0
        %755 = vmatprep.subr.mxu0 0.0
        %756 = vmatpush1.msra.mxu0 0.0
        %757 = vmatprep.subr.mxu0 0.0
        %758 = vmatpush1.msra.mxu0 0.0
        %759 = vmatprep.subr.mxu0 0.0
        %760 = vmatpush1.msra.mxu0 0.0
        %761 = vmatprep.subr.mxu0 0.0
        %762 = vmatpush1.msra.mxu0 0.0
        %763 = vmatprep.subr.mxu0 0.0
        %764 = vmatpush1.msra.mxu0 0.0
        %765 = vmatprep.subr.mxu0 0.0
        %766 = vmatpush1.msra.mxu0 0.0
        %767 = vmatprep.subr.mxu0 0.0
        %768 = vmatpush1.msra.mxu0 0.0
        %769 = vmatprep.subr.mxu0 0.0
        %770 = vmatpush1.msra.mxu0 0.0
        %771 = vmatprep.subr.mxu0 0.0
        %772 = vmatpush1.msra.mxu0 0.0
        %773 = vmatprep.subr.mxu0 0.0
        %774 = vmatpush1.msra.mxu0 0.0
        %775 = vmatprep.subr.mxu0 0.0
        %776 = vmatpush1.msra.mxu0 0.0
        %777 = vmatprep.subr.mxu0 0.0
        %778 = vmatpush1.msra.mxu0 0.0
        %779 = vmatprep.subr.mxu0 0.0
        %780 = vmatpush1.msra.mxu0 0.0
        %781 = vmatprep.subr.mxu0 0.0
        %782 = vmatpush1.msra.mxu0 0.0
        %783 = vmatprep.subr.mxu0 0.0
        %784 = vmatpush1.msra.mxu0 0.0
        %785 = vmatprep.subr.mxu0 0.0
        %786 = vmatpush1.msra.mxu0 0.0
        %787 = vmatprep.subr.mxu0 0.0
        %788 = vmatpush1.msra.mxu0 0.0
        %789 = vmatprep.mubr.f32.mxu0 0.0
        %790 = vmatmul.mubr.f32.gmra.mrb[0].mxu0 %v709
        %v791 = vpop.f32.mrb[0].mxu0
        %v792 = vadd.f32 0.0, %v791
        %v793 = vpop.f32.mrb[0].mxu0
        %794 = vmatprep.mubr.f32.mxu0 0.0
        %795 = vmatmul.mubr.f32.gmra.mrb[0].mxu0 %v711
        %v796 = vpop.f32.mrb[0].mxu0
        %v797 = vadd.f32 0.0, %v796
        %v798 = vpop.f32.mrb[0].mxu0
        %799 = vmatprep.mubr.f32.mxu0 0.0
        %800 = vmatmul.mubr.f32.gmra.mrb[0].mxu0 %v713
        %v801 = vpop.f32.mrb[0].mxu0
        %v802 = vadd.f32 0.0, %v801
        %v803 = vpop.f32.mrb[0].mxu0
        %804 = vmatprep.mubr.f32.mxu0 0.0
        %805 = vmatmul.mubr.f32.gmra.mrb[0].mxu0 %v715
        %v806 = vpop.f32.mrb[0].mxu0
        %v807 = vadd.f32 0.0, %v806
        %v808 = vpop.f32.mrb[0].mxu0
        %809 = vmatprep.mubr.f32.mxu0 0.0
        %810 = vmatmul.mubr.f32.gmra.mrb[0].mxu0 %v717
        %v811 = vpop.f32.mrb[0].mxu0
        %v812 = vadd.f32 0.0, %v811
        %v813 = vpop.f32.mrb[0].mxu0
        %814 = vmatprep.mubr.f32.mxu0 0.0
        %815 = vmatmul.mubr.f32.gmra.mrb[0].mxu0 %v719
        %v816 = vpop.f32.mrb[0].mxu0
        %v817 = vadd.f32 0.0, %v816
        %v818 = vpop.f32.mrb[0].mxu0
        %819 = vdwg.mxu0
        %v821 = vsel %vm708, %v691, 0
        %v824 = vsel %vm708, %v692, 0
        %v827 = vsel %vm708, %v693, 0
        %v830 = vsel %vm708, %v694, 0
        %v833 = vsel %vm708, %v695, 0
        %v836 = vsel %vm708, %v696, 0
        %v839 = vsel %vm721, %v701, 0
        %841 = vmatprep.subr.mxu0 0.0
        %842 = vmatpush1.msra.mxu0 %v697
        %843 = vmatprep.subr.mxu0 0.0
        %844 = vmatpush1.msra.mxu0 %v698
        %845 = vmatprep.subr.mxu0 0.0
        %846 = vmatpush1.msra.mxu0 %v699
        %847 = vmatprep.subr.mxu0 0.0
        %848 = vmatpush1.msra.mxu0 %v700
        %849 = vmatprep.subr.mxu0 0.0
        %850 = vmatpush1.msra.mxu0 %v839
        %851 = vmatprep.subr.mxu0 0.0
        %852 = vmatpush1.msra.mxu0 0.0
        %853 = vmatprep.subr.mxu0 0.0
        %854 = vmatpush1.msra.mxu0 0.0
        %855 = vmatprep.subr.mxu0 0.0
        %856 = vmatpush1.msra.mxu0 0.0
        %857 = vmatprep.subr.mxu0 0.0
        %858 = vmatpush1.msra.mxu0 0.0
        %859 = vmatprep.subr.mxu0 0.0
        %860 = vmatpush1.msra.mxu0 0.0
        %861 = vmatprep.subr.mxu0 0.0
        %862 = vmatpush1.msra.mxu0 0.0
        %863 = vmatprep.subr.mxu0 0.0
        %864 = vmatpush1.msra.mxu0 0.0
        %865 = vmatprep.subr.mxu0 0.0
        %866 = vmatpush1.msra.mxu0 0.0
        %867 = vmatprep.subr.mxu0 0.0
        %868 = vmatpush1.msra.mxu0 0.0
        %869 = vmatprep.subr.mxu0 0.0
        %870 = vmatpush1.msra.mxu0 0.0
        %871 = vmatprep.subr.mxu0 0.0
        %872 = vmatpush1.msra.mxu0 0.0
        %873 = vmatprep.subr.mxu0 0.0
        %874 = vmatpush1.msra.mxu0 0.0
        %875 = vmatprep.subr.mxu0 0.0
        %876 = vmatpush1.msra.mxu0 0.0
        %877 = vmatprep.subr.mxu0 0.0
        %878 = vmatpush1.msra.mxu0 0.0
        %879 = vmatprep.subr.mxu0 0.0
        %880 = vmatpush1.msra.mxu0 0.0
        %881 = vmatprep.subr.mxu0 0.0
        %882 = vmatpush1.msra.mxu0 0.0
        %883 = vmatprep.subr.mxu0 0.0
        %884 = vmatpush1.msra.mxu0 0.0
        %885 = vmatprep.subr.mxu0 0.0
        %886 = vmatpush1.msra.mxu0 0.0
        %887 = vmatprep.subr.mxu0 0.0
        %888 = vmatpush1.msra.mxu0 0.0
        %889 = vmatprep.subr.mxu0 0.0
        %890 = vmatpush1.msra.mxu0 0.0
        %891 = vmatprep.subr.mxu0 0.0
        %892 = vmatpush1.msra.mxu0 0.0
        %893 = vmatprep.subr.mxu0 0.0
        %894 = vmatpush1.msra.mxu0 0.0
        %895 = vmatprep.subr.mxu0 0.0
        %896 = vmatpush1.msra.mxu0 0.0
        %897 = vmatprep.subr.mxu0 0.0
        %898 = vmatpush1.msra.mxu0 0.0
        %899 = vmatprep.subr.mxu0 0.0
        %900 = vmatpush1.msra.mxu0 0.0
        %901 = vmatprep.subr.mxu0 0.0
        %902 = vmatpush1.msra.mxu0 0.0
        %903 = vmatprep.subr.mxu0 0.0
        %904 = vmatpush1.msra.mxu0 0.0
        %905 = vmatprep.mubr.f32.mxu0 0.0
        %906 = vmatmul.mubr.f32.gmra.mrb[0].mxu0 %v821
        %v907 = vpop.f32.mrb[0].mxu0
        %v908 = vadd.f32 %v792, %v907
        %v909 = vpop.f32.mrb[0].mxu0
        %910 = vmatprep.mubr.f32.mxu0 0.0
        %911 = vmatmul.mubr.f32.gmra.mrb[0].mxu0 %v824
        %v912 = vpop.f32.mrb[0].mxu0
        %v913 = vadd.f32 %v797, %v912
        %v914 = vpop.f32.mrb[0].mxu0
        %915 = vmatprep.mubr.f32.mxu0 0.0
        %916 = vmatmul.mubr.f32.gmra.mrb[0].mxu0 %v827
        %v917 = vpop.f32.mrb[0].mxu0
        %v918 = vadd.f32 %v802, %v917
        %v919 = vpop.f32.mrb[0].mxu0
        %920 = vmatprep.mubr.f32.mxu0 0.0
        %921 = vmatmul.mubr.f32.gmra.mrb[0].mxu0 %v830
        %v922 = vpop.f32.mrb[0].mxu0
        %v923 = vadd.f32 %v807, %v922
        %v924 = vpop.f32.mrb[0].mxu0
        %925 = vmatprep.mubr.f32.mxu0 0.0
        %926 = vmatmul.mubr.f32.gmra.mrb[0].mxu0 %v833
        %v927 = vpop.f32.mrb[0].mxu0
        %v928 = vadd.f32 %v812, %v927
        %v929 = vpop.f32.mrb[0].mxu0
        %930 = vmatprep.mubr.f32.mxu0 0.0
        %931 = vmatmul.mubr.f32.gmra.mrb[0].mxu0 %v836
        %v932 = vpop.f32.mrb[0].mxu0
        %v933 = vadd.f32 %v817, %v932
        %v934 = vpop.f32.mrb[0].mxu0
        %935 = vdwg.mxu0
        %vm936 = vcmask 1046528
        %v937 = vrot.slane %v630, 1
        %v938 = vrot.slane %v631, 1
        %v939 = vsel %vm936, %v937, %v938
        %v940 = vrot.slane %v632, 1
        %v941 = vsel %vm936, %v938, %v940
        %v942 = vrot.slane %v633, 1
        %v943 = vsel %vm936, %v940, %v942
        %v944 = vrot.slane %v634, 1
        %v945 = vsel %vm936, %v942, %v944
        %v946 = vrot.slane %v635, 1
        %v947 = vsel %vm936, %v944, %v946
        %v954 = vsel %vm936, %v946, 0.0
        %956 = vset.pattern.permute.xlu0 0
        %957 = vperm.xlu0 %956, %v624
        %v958 = vpop.permute.xlu0 %957
        %961 = vset.pattern.permute.xlu0 0
        %962 = vperm.xlu0 %961, %v625
        %v963 = vpop.permute.xlu0 %962
        %966 = vset.pattern.permute.xlu0 0
        %967 = vperm.xlu0 %966, %v626
        %v968 = vpop.permute.xlu0 %967
        %971 = vset.pattern.permute.xlu0 0
        %972 = vperm.xlu0 %971, %v627
        %v973 = vpop.permute.xlu0 %972
        %976 = vset.pattern.permute.xlu0 0
        %977 = vperm.xlu0 %976, %v628
        %v978 = vpop.permute.xlu0 %977
        %981 = vset.pattern.permute.xlu0 0
        %982 = vperm.xlu0 %981, %v629
        %v983 = vpop.permute.xlu0 %982
        %v985 = vmul.f32 %v939, %v958
        %v986 = vmul.f32 %v941, %v963
        %v987 = vmul.f32 %v943, %v968
        %v988 = vmul.f32 %v945, %v973
        %v989 = vmul.f32 %v947, %v978
        %v990 = vmul.f32 %v954, %v983
        %s991 = scalar_lea.vmem [#allocation2], 80
        %v992 = vld [vmem:[%s991] sm:$0xff]
        %v993 = vld [vmem:[%s991 + $0x8] sm:$0xff]
        %v994 = vld [vmem:[%s991 + $0x10] sm:$0xff]
        %v995 = vld [vmem:[%s991 + $0x18] sm:$0xff]
        %v996 = vld [vmem:[%s991 + $0x20] sm:$0x3]
        %v998 = vsel %vm708, %v985, 0
        %v1001 = vsel %vm708, %v986, 0
        %v1004 = vsel %vm708, %v987, 0
        %v1007 = vsel %vm708, %v988, 0
        %v1010 = vsel %vm708, %v989, 0
        %v1013 = vsel %vm708, %v990, 0
        %v1016 = vsel %vm721, %v996, 0
        %1018 = vmatprep.subr.mxu0 0.0
        %1019 = vmatpush1.msra.mxu0 %v992
        %1020 = vmatprep.subr.mxu0 0.0
        %1021 = vmatpush1.msra.mxu0 %v993
        %1022 = vmatprep.subr.mxu0 0.0
        %1023 = vmatpush1.msra.mxu0 %v994
        %1024 = vmatprep.subr.mxu0 0.0
        %1025 = vmatpush1.msra.mxu0 %v995
        %1026 = vmatprep.subr.mxu0 0.0
        %1027 = vmatpush1.msra.mxu0 %v1016
        %1028 = vmatprep.subr.mxu0 0.0
        %1029 = vmatpush1.msra.mxu0 0.0
        %1030 = vmatprep.subr.mxu0 0.0
        %1031 = vmatpush1.msra.mxu0 0.0
        %1032 = vmatprep.subr.mxu0 0.0
        %1033 = vmatpush1.msra.mxu0 0.0
        %1034 = vmatprep.subr.mxu0 0.0
        %1035 = vmatpush1.msra.mxu0 0.0
        %1036 = vmatprep.subr.mxu0 0.0
        %1037 = vmatpush1.msra.mxu0 0.0
        %1038 = vmatprep.subr.mxu0 0.0
        %1039 = vmatpush1.msra.mxu0 0.0
        %1040 = vmatprep.subr.mxu0 0.0
        %1041 = vmatpush1.msra.mxu0 0.0
        %1042 = vmatprep.subr.mxu0 0.0
        %1043 = vmatpush1.msra.mxu0 0.0
        %1044 = vmatprep.subr.mxu0 0.0
        %1045 = vmatpush1.msra.mxu0 0.0
        %1046 = vmatprep.subr.mxu0 0.0
        %1047 = vmatpush1.msra.mxu0 0.0
        %1048 = vmatprep.subr.mxu0 0.0
        %1049 = vmatpush1.msra.mxu0 0.0
        %1050 = vmatprep.subr.mxu0 0.0
        %1051 = vmatpush1.msra.mxu0 0.0
        %1052 = vmatprep.subr.mxu0 0.0
        %1053 = vmatpush1.msra.mxu0 0.0
        %1054 = vmatprep.subr.mxu0 0.0
        %1055 = vmatpush1.msra.mxu0 0.0
        %1056 = vmatprep.subr.mxu0 0.0
        %1057 = vmatpush1.msra.mxu0 0.0
        %1058 = vmatprep.subr.mxu0 0.0
        %1059 = vmatpush1.msra.mxu0 0.0
        %1060 = vmatprep.subr.mxu0 0.0
        %1061 = vmatpush1.msra.mxu0 0.0
        %1062 = vmatprep.subr.mxu0 0.0
        %1063 = vmatpush1.msra.mxu0 0.0
        %1064 = vmatprep.subr.mxu0 0.0
        %1065 = vmatpush1.msra.mxu0 0.0
        %1066 = vmatprep.subr.mxu0 0.0
        %1067 = vmatpush1.msra.mxu0 0.0
        %1068 = vmatprep.subr.mxu0 0.0
        %1069 = vmatpush1.msra.mxu0 0.0
        %1070 = vmatprep.subr.mxu0 0.0
        %1071 = vmatpush1.msra.mxu0 0.0
        %1072 = vmatprep.subr.mxu0 0.0
        %1073 = vmatpush1.msra.mxu0 0.0
        %1074 = vmatprep.subr.mxu0 0.0
        %1075 = vmatpush1.msra.mxu0 0.0
        %1076 = vmatprep.subr.mxu0 0.0
        %1077 = vmatpush1.msra.mxu0 0.0
        %1078 = vmatprep.subr.mxu0 0.0
        %1079 = vmatpush1.msra.mxu0 0.0
        %1080 = vmatprep.subr.mxu0 0.0
        %1081 = vmatpush1.msra.mxu0 0.0
        %1082 = vmatprep.mubr.f32.mxu0 0.0
        %1083 = vmatmul.mubr.f32.gmra.mrb[0].mxu0 %v998
        %v1084 = vpop.f32.mrb[0].mxu0
        %v1085 = vadd.f32 0.0, %v1084
        %v1086 = vpop.f32.mrb[0].mxu0
        %1087 = vmatprep.mubr.f32.mxu0 0.0
        %1088 = vmatmul.mubr.f32.gmra.mrb[0].mxu0 %v1001
        %v1089 = vpop.f32.mrb[0].mxu0
        %v1090 = vadd.f32 0.0, %v1089
        %v1091 = vpop.f32.mrb[0].mxu0
        %1092 = vmatprep.mubr.f32.mxu0 0.0
        %1093 = vmatmul.mubr.f32.gmra.mrb[0].mxu0 %v1004
        %v1094 = vpop.f32.mrb[0].mxu0
        %v1095 = vadd.f32 0.0, %v1094
        %v1096 = vpop.f32.mrb[0].mxu0
        %1097 = vmatprep.mubr.f32.mxu0 0.0
        %1098 = vmatmul.mubr.f32.gmra.mrb[0].mxu0 %v1007
        %v1099 = vpop.f32.mrb[0].mxu0
        %v1100 = vadd.f32 0.0, %v1099
        %v1101 = vpop.f32.mrb[0].mxu0
        %1102 = vmatprep.mubr.f32.mxu0 0.0
        %1103 = vmatmul.mubr.f32.gmra.mrb[0].mxu0 %v1010
        %v1104 = vpop.f32.mrb[0].mxu0
        %v1105 = vadd.f32 0.0, %v1104
        %v1106 = vpop.f32.mrb[0].mxu0
        %1107 = vmatprep.mubr.f32.mxu0 0.0
        %1108 = vmatmul.mubr.f32.gmra.mrb[0].mxu0 %v1013
        %v1109 = vpop.f32.mrb[0].mxu0
        %v1110 = vadd.f32 0.0, %v1109
        %v1111 = vpop.f32.mrb[0].mxu0
        %1112 = vdwg.mxu0
        %v1113 = vadd.f32 %v908, %v1085
        %v1114 = vadd.f32 %v913, %v1090
        %v1115 = vadd.f32 %v918, %v1095
        %v1116 = vadd.f32 %v923, %v1100
        %v1117 = vadd.f32 %v928, %v1105
        %v1118 = vadd.f32 %v933, %v1110
        %v1119 = vld [vmem:[#allocation5] sm:$0x1]
        %v1121 = vlaneseq
        %v1122 = vshrl.u32 %v1121, 7
        %v1123 = vsub.s32 0, %v1122
        %v1124 = vrot.slane %v1119, %v1123
        %v1126 = vmul.f32 %v1113, %v1124
        %v1127 = vmul.f32 %v1114, %v1124
        %v1128 = vmul.f32 %v1115, %v1124
        %v1129 = vmul.f32 %v1116, %v1124
        %v1130 = vmul.f32 %v1117, %v1124
        %v1131 = vmul.f32 %v1118, %v1124
        %v1132 = vld [vmem:[#allocation7] sm:$0x1]
        %v1134 = vlaneseq
        %v1135 = vshrl.u32 %v1134, 7
        %v1136 = vsub.s32 0, %v1135
        %v1137 = vrot.slane %v1132, %v1136
        %v1139 = vadd.f32 %v1126, %v1137
        %v1140 = vadd.f32 %v1127, %v1137
        %v1141 = vadd.f32 %v1128, %v1137
        %v1142 = vadd.f32 %v1129, %v1137
        %v1143 = vadd.f32 %v1130, %v1137
        %v1144 = vadd.f32 %v1131, %v1137
        %v1145 = vmax.f32 %v1139, 0.0
        %v1146 = vmax.f32 %v1140, 0.0
        %v1147 = vmax.f32 %v1141, 0.0
        %v1148 = vmax.f32 %v1142, 0.0
        %v1149 = vmax.f32 %v1143, 0.0
        %v1150 = vmax.f32 %v1144, 0.0
        %v1157 = vrot.slane %v1145, 7
        %v1158 = vrot.slane %v1146, 7
        %v1159 = vsel %vm642, %v1157, %v1158
        %v1160 = vrot.slane %v1147, 7
        %v1161 = vsel %vm642, %v1158, %v1160
        %v1162 = vrot.slane %v1148, 7
        %v1163 = vsel %vm642, %v1160, %v1162
        %v1164 = vrot.slane %v1149, 7
        %v1165 = vsel %vm642, %v1162, %v1164
        %v1166 = vrot.slane %v1150, 7
        %v1167 = vsel %vm642, %v1164, %v1166
        %v1174 = vsel %vm642, 0.0, %v1157
        %v1175 = vmul.f32 %v1174, %v664
        %v1176 = vmul.f32 %v1159, %v669
        %v1177 = vmul.f32 %v1161, %v674
        %v1178 = vmul.f32 %v1163, %v679
        %v1179 = vmul.f32 %v1165, %v684
        %v1180 = vmul.f32 %v1167, %v689
        %v1181 = vld [vmem:[#allocation8] sm:$0xff]
        %v1182 = vld [vmem:[#allocation8 + $0x8] sm:$0xff]
        %v1183 = vld [vmem:[#allocation8 + $0x10] sm:$0xff]
        %v1184 = vld [vmem:[#allocation8 + $0x18] sm:$0xff]
        %v1185 = vld [vmem:[#allocation8 + $0x20] sm:$0xff]
        %v1186 = vld [vmem:[#allocation8 + $0x28] sm:$0xff]
        %v1187 = vld [vmem:[#allocation8 + $0x30] sm:$0xff]
        %v1188 = vld [vmem:[#allocation8 + $0x38] sm:$0xff]
        %v1189 = vld [vmem:[#allocation8 + $0x40] sm:$0xff]
        %v1190 = vld [vmem:[#allocation8 + $0x48] sm:$0xff]
        %v1191 = vld [vmem:[#allocation8 + $0x50] sm:$0xff]
        %v1192 = vld [vmem:[#allocation8 + $0x58] sm:$0xff]
        %v1193 = vld [vmem:[#allocation8 + $0x60] sm:$0xff]
        %v1194 = vld [vmem:[#allocation8 + $0x68] sm:$0xff]
        %v1195 = vld [vmem:[#allocation8 + $0x70] sm:$0xff]
        %v1196 = vld [vmem:[#allocation8 + $0x78] sm:$0xff]
        %s1197 = scalar_lea.vmem [#allocation8], 128
        %v1198 = vld [vmem:[%s1197] sm:$0xff]
        %v1199 = vld [vmem:[%s1197 + $0x8] sm:$0xff]
        %v1200 = vld [vmem:[%s1197 + $0x10] sm:$0xff]
        %v1201 = vld [vmem:[%s1197 + $0x18] sm:$0xff]
        %v1202 = vld [vmem:[%s1197 + $0x20] sm:$0xff]
        %v1203 = vld [vmem:[%s1197 + $0x28] sm:$0xff]
        %v1204 = vld [vmem:[%s1197 + $0x30] sm:$0xff]
        %v1205 = vld [vmem:[%s1197 + $0x38] sm:$0xff]
        %v1206 = vld [vmem:[%s1197 + $0x40] sm:$0xff]
        %v1207 = vld [vmem:[%s1197 + $0x48] sm:$0xff]
        %v1208 = vld [vmem:[%s1197 + $0x50] sm:$0xff]
        %v1209 = vld [vmem:[%s1197 + $0x58] sm:$0xff]
        %v1210 = vld [vmem:[%s1197 + $0x60] sm:$0xff]
        %v1211 = vld [vmem:[%s1197 + $0x68] sm:$0xff]
        %v1212 = vld [vmem:[%s1197 + $0x70] sm:$0xff]
        %v1213 = vld [vmem:[%s1197 + $0x78] sm:$0xff]
        %1214 = vmatprep.subr.mxu0 0.0
        %1215 = vmatpush1.msra.mxu0 %v1198
        %1216 = vmatprep.subr.mxu0 0.0
        %1217 = vmatpush1.msra.mxu0 %v1199
        %1218 = vmatprep.subr.mxu0 0.0
        %1219 = vmatpush1.msra.mxu0 %v1200
        %1220 = vmatprep.subr.mxu0 0.0
        %1221 = vmatpush1.msra.mxu0 %v1201
        %1222 = vmatprep.subr.mxu0 0.0
        %1223 = vmatpush1.msra.mxu0 %v1202
        %1224 = vmatprep.subr.mxu0 0.0
        %1225 = vmatpush1.msra.mxu0 %v1203
        %1226 = vmatprep.subr.mxu0 0.0
        %1227 = vmatpush1.msra.mxu0 %v1204
        %1228 = vmatprep.subr.mxu0 0.0
        %1229 = vmatpush1.msra.mxu0 %v1205
        %1230 = vmatprep.subr.mxu0 0.0
        %1231 = vmatpush1.msra.mxu0 %v1206
        %1232 = vmatprep.subr.mxu0 0.0
        %1233 = vmatpush1.msra.mxu0 %v1207
        %1234 = vmatprep.subr.mxu0 0.0
        %1235 = vmatpush1.msra.mxu0 %v1208
        %1236 = vmatprep.subr.mxu0 0.0
        %1237 = vmatpush1.msra.mxu0 %v1209
        %1238 = vmatprep.subr.mxu0 0.0
        %1239 = vmatpush1.msra.mxu0 %v1210
        %1240 = vmatprep.subr.mxu0 0.0
        %1241 = vmatpush1.msra.mxu0 %v1211
        %1242 = vmatprep.subr.mxu0 0.0
        %1243 = vmatpush1.msra.mxu0 %v1212
        %1244 = vmatprep.subr.mxu0 0.0
        %1245 = vmatpush1.msra.mxu0 %v1213
        %1246 = vmatprep.subr.mxu0 0.0
        %1247 = vmatpush1.msra.mxu0 0.0
        %1248 = vmatprep.subr.mxu0 0.0
        %1249 = vmatpush1.msra.mxu0 0.0
        %1250 = vmatprep.subr.mxu0 0.0
        %1251 = vmatpush1.msra.mxu0 0.0
        %1252 = vmatprep.subr.mxu0 0.0
        %1253 = vmatpush1.msra.mxu0 0.0
        %1254 = vmatprep.subr.mxu0 0.0
        %1255 = vmatpush1.msra.mxu0 0.0
        %1256 = vmatprep.subr.mxu0 0.0
        %1257 = vmatpush1.msra.mxu0 0.0
        %1258 = vmatprep.subr.mxu0 0.0
        %1259 = vmatpush1.msra.mxu0 0.0
        %1260 = vmatprep.subr.mxu0 0.0
        %1261 = vmatpush1.msra.mxu0 0.0
        %1262 = vmatprep.subr.mxu0 0.0
        %1263 = vmatpush1.msra.mxu0 0.0
        %1264 = vmatprep.subr.mxu0 0.0
        %1265 = vmatpush1.msra.mxu0 0.0
        %1266 = vmatprep.subr.mxu0 0.0
        %1267 = vmatpush1.msra.mxu0 0.0
        %1268 = vmatprep.subr.mxu0 0.0
        %1269 = vmatpush1.msra.mxu0 0.0
        %1270 = vmatprep.subr.mxu0 0.0
        %1271 = vmatpush1.msra.mxu0 0.0
        %1272 = vmatprep.subr.mxu0 0.0
        %1273 = vmatpush1.msra.mxu0 0.0
        %1274 = vmatprep.subr.mxu0 0.0
        %1275 = vmatpush1.msra.mxu0 0.0
        %1276 = vmatprep.subr.mxu0 0.0
        %1277 = vmatpush1.msra.mxu0 0.0
        %1278 = vmatprep.mubr.f32.mxu0 0.0
        %1279 = vmatmul.mubr.f32.gmra.mrb[0].mxu0 %v1145
        %v1280 = vpop.f32.mrb[0].mxu0
        %v1281 = vadd.f32 0.0, %v1280
        %v1282 = vpop.f32.mrb[0].mxu0
        %1283 = vmatprep.mubr.f32.mxu0 0.0
        %1284 = vmatmul.mubr.f32.gmra.mrb[0].mxu0 %v1146
        %v1285 = vpop.f32.mrb[0].mxu0
        %v1286 = vadd.f32 0.0, %v1285
        %v1287 = vpop.f32.mrb[0].mxu0
        %1288 = vmatprep.mubr.f32.mxu0 0.0
        %1289 = vmatmul.mubr.f32.gmra.mrb[0].mxu0 %v1147
        %v1290 = vpop.f32.mrb[0].mxu0
        %v1291 = vadd.f32 0.0, %v1290
        %v1292 = vpop.f32.mrb[0].mxu0
        %1293 = vmatprep.mubr.f32.mxu0 0.0
        %1294 = vmatmul.mubr.f32.gmra.mrb[0].mxu0 %v1148
        %v1295 = vpop.f32.mrb[0].mxu0
        %v1296 = vadd.f32 0.0, %v1295
        %v1297 = vpop.f32.mrb[0].mxu0
        %1298 = vmatprep.mubr.f32.mxu0 0.0
        %1299 = vmatmul.mubr.f32.gmra.mrb[0].mxu0 %v1149
        %v1300 = vpop.f32.mrb[0].mxu0
        %v1301 = vadd.f32 0.0, %v1300
        %v1302 = vpop.f32.mrb[0].mxu0
        %1303 = vmatprep.mubr.f32.mxu0 0.0
        %1304 = vmatmul.mubr.f32.gmra.mrb[0].mxu0 %v1150
        %v1305 = vpop.f32.mrb[0].mxu0
        %v1306 = vadd.f32 0.0, %v1305
        %v1307 = vpop.f32.mrb[0].mxu0
        %1308 = vdwg.mxu0
        %1309 = vmatprep.subr.mxu0 0.0
        %1310 = vmatpush1.msra.mxu0 %v1181
        %1311 = vmatprep.subr.mxu0 0.0
        %1312 = vmatpush1.msra.mxu0 %v1182
        %1313 = vmatprep.subr.mxu0 0.0
        %1314 = vmatpush1.msra.mxu0 %v1183
        %1315 = vmatprep.subr.mxu0 0.0
        %1316 = vmatpush1.msra.mxu0 %v1184
        %1317 = vmatprep.subr.mxu0 0.0
        %1318 = vmatpush1.msra.mxu0 %v1185
        %1319 = vmatprep.subr.mxu0 0.0
        %1320 = vmatpush1.msra.mxu0 %v1186
        %1321 = vmatprep.subr.mxu0 0.0
        %1322 = vmatpush1.msra.mxu0 %v1187
        %1323 = vmatprep.subr.mxu0 0.0
        %1324 = vmatpush1.msra.mxu0 %v1188
        %1325 = vmatprep.subr.mxu0 0.0
        %1326 = vmatpush1.msra.mxu0 %v1189
        %1327 = vmatprep.subr.mxu0 0.0
        %1328 = vmatpush1.msra.mxu0 %v1190
        %1329 = vmatprep.subr.mxu0 0.0
        %1330 = vmatpush1.msra.mxu0 %v1191
        %1331 = vmatprep.subr.mxu0 0.0
        %1332 = vmatpush1.msra.mxu0 %v1192
        %1333 = vmatprep.subr.mxu0 0.0
        %1334 = vmatpush1.msra.mxu0 %v1193
        %1335 = vmatprep.subr.mxu0 0.0
        %1336 = vmatpush1.msra.mxu0 %v1194
        %1337 = vmatprep.subr.mxu0 0.0
        %1338 = vmatpush1.msra.mxu0 %v1195
        %1339 = vmatprep.subr.mxu0 0.0
        %1340 = vmatpush1.msra.mxu0 %v1196
        %1341 = vmatprep.subr.mxu0 0.0
        %1342 = vmatpush1.msra.mxu0 0.0
        %1343 = vmatprep.subr.mxu0 0.0
        %1344 = vmatpush1.msra.mxu0 0.0
        %1345 = vmatprep.subr.mxu0 0.0
        %1346 = vmatpush1.msra.mxu0 0.0
        %1347 = vmatprep.subr.mxu0 0.0
        %1348 = vmatpush1.msra.mxu0 0.0
        %1349 = vmatprep.subr.mxu0 0.0
        %1350 = vmatpush1.msra.mxu0 0.0
        %1351 = vmatprep.subr.mxu0 0.0
        %1352 = vmatpush1.msra.mxu0 0.0
        %1353 = vmatprep.subr.mxu0 0.0
        %1354 = vmatpush1.msra.mxu0 0.0
        %1355 = vmatprep.subr.mxu0 0.0
        %1356 = vmatpush1.msra.mxu0 0.0
        %1357 = vmatprep.subr.mxu0 0.0
        %1358 = vmatpush1.msra.mxu0 0.0
        %1359 = vmatprep.subr.mxu0 0.0
        %1360 = vmatpush1.msra.mxu0 0.0
        %1361 = vmatprep.subr.mxu0 0.0
        %1362 = vmatpush1.msra.mxu0 0.0
        %1363 = vmatprep.subr.mxu0 0.0
        %1364 = vmatpush1.msra.mxu0 0.0
        %1365 = vmatprep.subr.mxu0 0.0
        %1366 = vmatpush1.msra.mxu0 0.0
        %1367 = vmatprep.subr.mxu0 0.0
        %1368 = vmatpush1.msra.mxu0 0.0
        %1369 = vmatprep.subr.mxu0 0.0
        %1370 = vmatpush1.msra.mxu0 0.0
        %1371 = vmatprep.subr.mxu0 0.0
        %1372 = vmatpush1.msra.mxu0 0.0
        %1373 = vmatprep.mubr.f32.mxu0 0.0
        %1374 = vmatmul.mubr.f32.gmra.mrb[0].mxu0 %v1175
        %v1375 = vpop.f32.mrb[0].mxu0
        %v1376 = vadd.f32 %v1281, %v1375
        %v1377 = vpop.f32.mrb[0].mxu0
        %1378 = vmatprep.mubr.f32.mxu0 0.0
        %1379 = vmatmul.mubr.f32.gmra.mrb[0].mxu0 %v1176
        %v1380 = vpop.f32.mrb[0].mxu0
        %v1381 = vadd.f32 %v1286, %v1380
        %v1382 = vpop.f32.mrb[0].mxu0
        %1383 = vmatprep.mubr.f32.mxu0 0.0
        %1384 = vmatmul.mubr.f32.gmra.mrb[0].mxu0 %v1177
        %v1385 = vpop.f32.mrb[0].mxu0
        %v1386 = vadd.f32 %v1291, %v1385
        %v1387 = vpop.f32.mrb[0].mxu0
        %1388 = vmatprep.mubr.f32.mxu0 0.0
        %1389 = vmatmul.mubr.f32.gmra.mrb[0].mxu0 %v1178
        %v1390 = vpop.f32.mrb[0].mxu0
        %v1391 = vadd.f32 %v1296, %v1390
        %v1392 = vpop.f32.mrb[0].mxu0
        %1393 = vmatprep.mubr.f32.mxu0 0.0
        %1394 = vmatmul.mubr.f32.gmra.mrb[0].mxu0 %v1179
        %v1395 = vpop.f32.mrb[0].mxu0
        %v1396 = vadd.f32 %v1301, %v1395
        %v1397 = vpop.f32.mrb[0].mxu0
        %1398 = vmatprep.mubr.f32.mxu0 0.0
        %1399 = vmatmul.mubr.f32.gmra.mrb[0].mxu0 %v1180
        %v1400 = vpop.f32.mrb[0].mxu0
        %v1401 = vadd.f32 %v1306, %v1400
        %v1402 = vpop.f32.mrb[0].mxu0
        %1403 = vdwg.mxu0
        %v1404 = vrot.slane %v1145, 1
        %v1405 = vrot.slane %v1146, 1
        %v1406 = vsel %vm936, %v1404, %v1405
        %v1407 = vrot.slane %v1147, 1
        %v1408 = vsel %vm936, %v1405, %v1407
        %v1409 = vrot.slane %v1148, 1
        %v1410 = vsel %vm936, %v1407, %v1409
        %v1411 = vrot.slane %v1149, 1
        %v1412 = vsel %vm936, %v1409, %v1411
        %v1413 = vrot.slane %v1150, 1
        %v1414 = vsel %vm936, %v1411, %v1413
        %v1421 = vsel %vm936, %v1413, 0.0
        %v1422 = vmul.f32 %v1406, %v958
        %v1423 = vmul.f32 %v1408, %v963
        %v1424 = vmul.f32 %v1410, %v968
        %v1425 = vmul.f32 %v1412, %v973
        %v1426 = vmul.f32 %v1414, %v978
        %v1427 = vmul.f32 %v1421, %v983
        %s1428 = scalar_lea.vmem [#allocation8], 256
        %v1429 = vld [vmem:[%s1428] sm:$0xff]
        %v1430 = vld [vmem:[%s1428 + $0x8] sm:$0xff]
        %v1431 = vld [vmem:[%s1428 + $0x10] sm:$0xff]
        %v1432 = vld [vmem:[%s1428 + $0x18] sm:$0xff]
        %v1433 = vld [vmem:[%s1428 + $0x20] sm:$0xff]
        %v1434 = vld [vmem:[%s1428 + $0x28] sm:$0xff]
        %v1435 = vld [vmem:[%s1428 + $0x30] sm:$0xff]
        %v1436 = vld [vmem:[%s1428 + $0x38] sm:$0xff]
        %v1437 = vld [vmem:[%s1428 + $0x40] sm:$0xff]
        %v1438 = vld [vmem:[%s1428 + $0x48] sm:$0xff]
        %v1439 = vld [vmem:[%s1428 + $0x50] sm:$0xff]
        %v1440 = vld [vmem:[%s1428 + $0x58] sm:$0xff]
        %v1441 = vld [vmem:[%s1428 + $0x60] sm:$0xff]
        %v1442 = vld [vmem:[%s1428 + $0x68] sm:$0xff]
        %v1443 = vld [vmem:[%s1428 + $0x70] sm:$0xff]
        %v1444 = vld [vmem:[%s1428 + $0x78] sm:$0xff]
        %1445 = vmatprep.subr.mxu0 0.0
        %1446 = vmatpush1.msra.mxu0 %v1429
        %1447 = vmatprep.subr.mxu0 0.0
        %1448 = vmatpush1.msra.mxu0 %v1430
        %1449 = vmatprep.subr.mxu0 0.0
        %1450 = vmatpush1.msra.mxu0 %v1431
        %1451 = vmatprep.subr.mxu0 0.0
        %1452 = vmatpush1.msra.mxu0 %v1432
        %1453 = vmatprep.subr.mxu0 0.0
        %1454 = vmatpush1.msra.mxu0 %v1433
        %1455 = vmatprep.subr.mxu0 0.0
        %1456 = vmatpush1.msra.mxu0 %v1434
        %1457 = vmatprep.subr.mxu0 0.0
        %1458 = vmatpush1.msra.mxu0 %v1435
        %1459 = vmatprep.subr.mxu0 0.0
        %1460 = vmatpush1.msra.mxu0 %v1436
        %1461 = vmatprep.subr.mxu0 0.0
        %1462 = vmatpush1.msra.mxu0 %v1437
        %1463 = vmatprep.subr.mxu0 0.0
        %1464 = vmatpush1.msra.mxu0 %v1438
        %1465 = vmatprep.subr.mxu0 0.0
        %1466 = vmatpush1.msra.mxu0 %v1439
        %1467 = vmatprep.subr.mxu0 0.0
        %1468 = vmatpush1.msra.mxu0 %v1440
        %1469 = vmatprep.subr.mxu0 0.0
        %1470 = vmatpush1.msra.mxu0 %v1441
        %1471 = vmatprep.subr.mxu0 0.0
        %1472 = vmatpush1.msra.mxu0 %v1442
        %1473 = vmatprep.subr.mxu0 0.0
        %1474 = vmatpush1.msra.mxu0 %v1443
        %1475 = vmatprep.subr.mxu0 0.0
        %1476 = vmatpush1.msra.mxu0 %v1444
        %1477 = vmatprep.subr.mxu0 0.0
        %1478 = vmatpush1.msra.mxu0 0.0
        %1479 = vmatprep.subr.mxu0 0.0
        %1480 = vmatpush1.msra.mxu0 0.0
        %1481 = vmatprep.subr.mxu0 0.0
        %1482 = vmatpush1.msra.mxu0 0.0
        %1483 = vmatprep.subr.mxu0 0.0
        %1484 = vmatpush1.msra.mxu0 0.0
        %1485 = vmatprep.subr.mxu0 0.0
        %1486 = vmatpush1.msra.mxu0 0.0
        %1487 = vmatprep.subr.mxu0 0.0
        %1488 = vmatpush1.msra.mxu0 0.0
        %1489 = vmatprep.subr.mxu0 0.0
        %1490 = vmatpush1.msra.mxu0 0.0
        %1491 = vmatprep.subr.mxu0 0.0
        %1492 = vmatpush1.msra.mxu0 0.0
        %1493 = vmatprep.subr.mxu0 0.0
        %1494 = vmatpush1.msra.mxu0 0.0
        %1495 = vmatprep.subr.mxu0 0.0
        %1496 = vmatpush1.msra.mxu0 0.0
        %1497 = vmatprep.subr.mxu0 0.0
        %1498 = vmatpush1.msra.mxu0 0.0
        %1499 = vmatprep.subr.mxu0 0.0
        %1500 = vmatpush1.msra.mxu0 0.0
        %1501 = vmatprep.subr.mxu0 0.0
        %1502 = vmatpush1.msra.mxu0 0.0
        %1503 = vmatprep.subr.mxu0 0.0
        %1504 = vmatpush1.msra.mxu0 0.0
        %1505 = vmatprep.subr.mxu0 0.0
        %1506 = vmatpush1.msra.mxu0 0.0
        %1507 = vmatprep.subr.mxu0 0.0
        %1508 = vmatpush1.msra.mxu0 0.0
        %1509 = vmatprep.mubr.f32.mxu0 0.0
        %1510 = vmatmul.mubr.f32.gmra.mrb[0].mxu0 %v1422
        %v1511 = vpop.f32.mrb[0].mxu0
        %v1512 = vadd.f32 0.0, %v1511
        %v1513 = vpop.f32.mrb[0].mxu0
        %1514 = vmatprep.mubr.f32.mxu0 0.0
        %1515 = vmatmul.mubr.f32.gmra.mrb[0].mxu0 %v1423
        %v1516 = vpop.f32.mrb[0].mxu0
        %v1517 = vadd.f32 0.0, %v1516
        %v1518 = vpop.f32.mrb[0].mxu0
        %1519 = vmatprep.mubr.f32.mxu0 0.0
        %1520 = vmatmul.mubr.f32.gmra.mrb[0].mxu0 %v1424
        %v1521 = vpop.f32.mrb[0].mxu0
        %v1522 = vadd.f32 0.0, %v1521
        %v1523 = vpop.f32.mrb[0].mxu0
        %1524 = vmatprep.mubr.f32.mxu0 0.0
        %1525 = vmatmul.mubr.f32.gmra.mrb[0].mxu0 %v1425
        %v1526 = vpop.f32.mrb[0].mxu0
        %v1527 = vadd.f32 0.0, %v1526
        %v1528 = vpop.f32.mrb[0].mxu0
        %1529 = vmatprep.mubr.f32.mxu0 0.0
        %1530 = vmatmul.mubr.f32.gmra.mrb[0].mxu0 %v1426
        %v1531 = vpop.f32.mrb[0].mxu0
        %v1532 = vadd.f32 0.0, %v1531
        %v1533 = vpop.f32.mrb[0].mxu0
        %1534 = vmatprep.mubr.f32.mxu0 0.0
        %1535 = vmatmul.mubr.f32.gmra.mrb[0].mxu0 %v1427
        %v1536 = vpop.f32.mrb[0].mxu0
        %v1537 = vadd.f32 0.0, %v1536
        %v1538 = vpop.f32.mrb[0].mxu0
        %1539 = vdwg.mxu0
        %v1540 = vadd.f32 %v1376, %v1512
        %v1541 = vadd.f32 %v1381, %v1517
        %v1542 = vadd.f32 %v1386, %v1522
        %v1543 = vadd.f32 %v1391, %v1527
        %v1544 = vadd.f32 %v1396, %v1532
        %v1545 = vadd.f32 %v1401, %v1537
        %v1546 = vld [vmem:[#allocation10] sm:$0x1]
        %v1548 = vlaneseq
        %v1549 = vshrl.u32 %v1548, 7
        %v1550 = vsub.s32 0, %v1549
        %v1551 = vrot.slane %v1546, %v1550
        %v1553 = vmul.f32 %v1540, %v1551
        %v1554 = vmul.f32 %v1541, %v1551
        %v1555 = vmul.f32 %v1542, %v1551
        %v1556 = vmul.f32 %v1543, %v1551
        %v1557 = vmul.f32 %v1544, %v1551
        %v1558 = vmul.f32 %v1545, %v1551
        %v1559 = vld [vmem:[#allocation11] sm:$0x1]
        %v1561 = vlaneseq
        %v1562 = vshrl.u32 %v1561, 7
        %v1563 = vsub.s32 0, %v1562
        %v1564 = vrot.slane %v1559, %v1563
        %v1566 = vadd.f32 %v1553, %v1564
        %v1567 = vadd.f32 %v1554, %v1564
        %v1568 = vadd.f32 %v1555, %v1564
        %v1569 = vadd.f32 %v1556, %v1564
        %v1570 = vadd.f32 %v1557, %v1564
        %v1571 = vadd.f32 %v1558, %v1564
        %v1572 = vmax.f32 %v1566, 0.0
        %v1573 = vmax.f32 %v1567, 0.0
        %v1574 = vmax.f32 %v1568, 0.0
        %v1575 = vmax.f32 %v1569, 0.0
        %v1576 = vmax.f32 %v1570, 0.0
        %v1577 = vmax.f32 %v1571, 0.0
        %v1578 = vld [vmem:[#allocation13] sm:$0xff]
        %v1579 = vld [vmem:[#allocation13 + $0x8] sm:$0xff]
        %v1580 = vld [vmem:[#allocation13 + $0x10] sm:$0xff]
        %v1581 = vld [vmem:[#allocation13 + $0x18] sm:$0xff]
        %v1582 = vld [vmem:[#allocation13 + $0x20] sm:$0xff]
        %v1583 = vld [vmem:[#allocation13 + $0x28] sm:$0xff]
        %v1584 = vld [vmem:[#allocation13 + $0x30] sm:$0xff]
        %v1585 = vld [vmem:[#allocation13 + $0x38] sm:$0xff]
        %v1586 = vld [vmem:[#allocation13 + $0x40] sm:$0xff]
        %v1587 = vld [vmem:[#allocation13 + $0x48] sm:$0xff]
        %v1588 = vld [vmem:[#allocation13 + $0x50] sm:$0xff]
        %v1589 = vld [vmem:[#allocation13 + $0x58] sm:$0xff]
        %v1590 = vld [vmem:[#allocation13 + $0x60] sm:$0xff]
        %v1591 = vld [vmem:[#allocation13 + $0x68] sm:$0xff]
        %v1592 = vld [vmem:[#allocation13 + $0x70] sm:$0xff]
        %v1593 = vld [vmem:[#allocation13 + $0x78] sm:$0xff]
        %s1594 = scalar_lea.vmem [#allocation13], 128
        %v1595 = vld [vmem:[%s1594] sm:$0xff]
        %v1596 = vld [vmem:[%s1594 + $0x8] sm:$0xff]
        %v1597 = vld [vmem:[%s1594 + $0x10] sm:$0xff]
        %v1598 = vld [vmem:[%s1594 + $0x18] sm:$0xff]
        %v1599 = vld [vmem:[%s1594 + $0x20] sm:$0xff]
        %v1600 = vld [vmem:[%s1594 + $0x28] sm:$0xff]
        %v1601 = vld [vmem:[%s1594 + $0x30] sm:$0xff]
        %v1602 = vld [vmem:[%s1594 + $0x38] sm:$0xff]
        %v1603 = vld [vmem:[%s1594 + $0x40] sm:$0xff]
        %v1604 = vld [vmem:[%s1594 + $0x48] sm:$0xff]
        %v1605 = vld [vmem:[%s1594 + $0x50] sm:$0xff]
        %v1606 = vld [vmem:[%s1594 + $0x58] sm:$0xff]
        %v1607 = vld [vmem:[%s1594 + $0x60] sm:$0xff]
        %v1608 = vld [vmem:[%s1594 + $0x68] sm:$0xff]
        %v1609 = vld [vmem:[%s1594 + $0x70] sm:$0xff]
        %v1610 = vld [vmem:[%s1594 + $0x78] sm:$0xff]
        %v1612 = vrot.slane %v1572, 1
        %1614 = vmatprep.subr.mxu0 0.0
        %1615 = vmatpush1.msra.mxu0 %v1595
        %1616 = vmatprep.subr.mxu0 0.0
        %1617 = vmatpush1.msra.mxu0 %v1596
        %1618 = vmatprep.subr.mxu0 0.0
        %1619 = vmatpush1.msra.mxu0 %v1597
        %1620 = vmatprep.subr.mxu0 0.0
        %1621 = vmatpush1.msra.mxu0 %v1598
        %1622 = vmatprep.subr.mxu0 0.0
        %1623 = vmatpush1.msra.mxu0 %v1599
        %1624 = vmatprep.subr.mxu0 0.0
        %1625 = vmatpush1.msra.mxu0 %v1600
        %1626 = vmatprep.subr.mxu0 0.0
        %1627 = vmatpush1.msra.mxu0 %v1601
        %1628 = vmatprep.subr.mxu0 0.0
        %1629 = vmatpush1.msra.mxu0 %v1602
        %1630 = vmatprep.subr.mxu0 0.0
        %1631 = vmatpush1.msra.mxu0 %v1603
        %1632 = vmatprep.subr.mxu0 0.0
        %1633 = vmatpush1.msra.mxu0 %v1604
        %1634 = vmatprep.subr.mxu0 0.0
        %1635 = vmatpush1.msra.mxu0 %v1605
        %1636 = vmatprep.subr.mxu0 0.0
        %1637 = vmatpush1.msra.mxu0 %v1606
        %1638 = vmatprep.subr.mxu0 0.0
        %1639 = vmatpush1.msra.mxu0 %v1607
        %1640 = vmatprep.subr.mxu0 0.0
        %1641 = vmatpush1.msra.mxu0 %v1608
        %1642 = vmatprep.subr.mxu0 0.0
        %1643 = vmatpush1.msra.mxu0 %v1609
        %1644 = vmatprep.subr.mxu0 0.0
        %1645 = vmatpush1.msra.mxu0 %v1610
        %1646 = vmatprep.subr.mxu0 0.0
        %1647 = vmatpush1.msra.mxu0 0.0
        %1648 = vmatprep.subr.mxu0 0.0
        %1649 = vmatpush1.msra.mxu0 0.0
        %1650 = vmatprep.subr.mxu0 0.0
        %1651 = vmatpush1.msra.mxu0 0.0
        %1652 = vmatprep.subr.mxu0 0.0
        %1653 = vmatpush1.msra.mxu0 0.0
        %1654 = vmatprep.subr.mxu0 0.0
        %1655 = vmatpush1.msra.mxu0 0.0
        %1656 = vmatprep.subr.mxu0 0.0
        %1657 = vmatpush1.msra.mxu0 0.0
        %1658 = vmatprep.subr.mxu0 0.0
        %1659 = vmatpush1.msra.mxu0 0.0
        %1660 = vmatprep.subr.mxu0 0.0
        %1661 = vmatpush1.msra.mxu0 0.0
        %1662 = vmatprep.subr.mxu0 0.0
        %1663 = vmatpush1.msra.mxu0 0.0
        %1664 = vmatprep.subr.mxu0 0.0
        %1665 = vmatpush1.msra.mxu0 0.0
        %1666 = vmatprep.subr.mxu0 0.0
        %1667 = vmatpush1.msra.mxu0 0.0
        %1668 = vmatprep.subr.mxu0 0.0
        %1669 = vmatpush1.msra.mxu0 0.0
        %1670 = vmatprep.subr.mxu0 0.0
        %1671 = vmatpush1.msra.mxu0 0.0
        %1672 = vmatprep.subr.mxu0 0.0
        %1673 = vmatpush1.msra.mxu0 0.0
        %1674 = vmatprep.subr.mxu0 0.0
        %1675 = vmatpush1.msra.mxu0 0.0
        %1676 = vmatprep.subr.mxu0 0.0
        %1677 = vmatpush1.msra.mxu0 0.0
        %1678 = vmatprep.mubr.f32.mxu0 0.0
        %1679 = vmatmul.mubr.f32.gmra.mrb[0].mxu0 %v1612
        %v1680 = vpop.f32.mrb[0].mxu0
        %v1681 = vadd.f32 0.0, %v1680
        %v1682 = vpop.f32.mrb[0].mxu0
        %1683 = vdwg.mxu0
        %1684 = vmatprep.subr.mxu0 0.0
        %1685 = vmatpush1.msra.mxu0 %v1578
        %1686 = vmatprep.subr.mxu0 0.0
        %1687 = vmatpush1.msra.mxu0 %v1579
        %1688 = vmatprep.subr.mxu0 0.0
        %1689 = vmatpush1.msra.mxu0 %v1580
        %1690 = vmatprep.subr.mxu0 0.0
        %1691 = vmatpush1.msra.mxu0 %v1581
        %1692 = vmatprep.subr.mxu0 0.0
        %1693 = vmatpush1.msra.mxu0 %v1582
        %1694 = vmatprep.subr.mxu0 0.0
        %1695 = vmatpush1.msra.mxu0 %v1583
        %1696 = vmatprep.subr.mxu0 0.0
        %1697 = vmatpush1.msra.mxu0 %v1584
        %1698 = vmatprep.subr.mxu0 0.0
        %1699 = vmatpush1.msra.mxu0 %v1585
        %1700 = vmatprep.subr.mxu0 0.0
        %1701 = vmatpush1.msra.mxu0 %v1586
        %1702 = vmatprep.subr.mxu0 0.0
        %1703 = vmatpush1.msra.mxu0 %v1587
        %1704 = vmatprep.subr.mxu0 0.0
        %1705 = vmatpush1.msra.mxu0 %v1588
        %1706 = vmatprep.subr.mxu0 0.0
        %1707 = vmatpush1.msra.mxu0 %v1589
        %1708 = vmatprep.subr.mxu0 0.0
        %1709 = vmatpush1.msra.mxu0 %v1590
        %1710 = vmatprep.subr.mxu0 0.0
        %1711 = vmatpush1.msra.mxu0 %v1591
        %1712 = vmatprep.subr.mxu0 0.0
        %1713 = vmatpush1.msra.mxu0 %v1592
        %1714 = vmatprep.subr.mxu0 0.0
        %1715 = vmatpush1.msra.mxu0 %v1593
        %1716 = vmatprep.subr.mxu0 0.0
        %1717 = vmatpush1.msra.mxu0 0.0
        %1718 = vmatprep.subr.mxu0 0.0
        %1719 = vmatpush1.msra.mxu0 0.0
        %1720 = vmatprep.subr.mxu0 0.0
        %1721 = vmatpush1.msra.mxu0 0.0
        %1722 = vmatprep.subr.mxu0 0.0
        %1723 = vmatpush1.msra.mxu0 0.0
        %1724 = vmatprep.subr.mxu0 0.0
        %1725 = vmatpush1.msra.mxu0 0.0
        %1726 = vmatprep.subr.mxu0 0.0
        %1727 = vmatpush1.msra.mxu0 0.0
        %1728 = vmatprep.subr.mxu0 0.0
        %1729 = vmatpush1.msra.mxu0 0.0
        %1730 = vmatprep.subr.mxu0 0.0
        %1731 = vmatpush1.msra.mxu0 0.0
        %1732 = vmatprep.subr.mxu0 0.0
        %1733 = vmatpush1.msra.mxu0 0.0
        %1734 = vmatprep.subr.mxu0 0.0
        %1735 = vmatpush1.msra.mxu0 0.0
        %1736 = vmatprep.subr.mxu0 0.0
        %1737 = vmatpush1.msra.mxu0 0.0
        %1738 = vmatprep.subr.mxu0 0.0
        %1739 = vmatpush1.msra.mxu0 0.0
        %1740 = vmatprep.subr.mxu0 0.0
        %1741 = vmatpush1.msra.mxu0 0.0
        %1742 = vmatprep.subr.mxu0 0.0
        %1743 = vmatpush1.msra.mxu0 0.0
        %1744 = vmatprep.subr.mxu0 0.0
        %1745 = vmatpush1.msra.mxu0 0.0
        %1746 = vmatprep.subr.mxu0 0.0
        %1747 = vmatpush1.msra.mxu0 0.0
        %1748 = vmatprep.mubr.f32.mxu0 0.0
        %1749 = vmatmul.mubr.f32.gmra.mrb[0].mxu0 %v1572
        %v1750 = vpop.f32.mrb[0].mxu0
        %v1751 = vadd.f32 %v1681, %v1750
        %v1752 = vpop.f32.mrb[0].mxu0
        %1753 = vdwg.mxu0
        %s1754 = scalar_lea.vmem [#allocation13], 256
        %v1755 = vld [vmem:[%s1754] sm:$0xff]
        %v1756 = vld [vmem:[%s1754 + $0x8] sm:$0xff]
        %v1757 = vld [vmem:[%s1754 + $0x10] sm:$0xff]
        %v1758 = vld [vmem:[%s1754 + $0x18] sm:$0xff]
        %v1759 = vld [vmem:[%s1754 + $0x20] sm:$0xff]
        %v1760 = vld [vmem:[%s1754 + $0x28] sm:$0xff]
        %v1761 = vld [vmem:[%s1754 + $0x30] sm:$0xff]
        %v1762 = vld [vmem:[%s1754 + $0x38] sm:$0xff]
        %v1763 = vld [vmem:[%s1754 + $0x40] sm:$0xff]
        %v1764 = vld [vmem:[%s1754 + $0x48] sm:$0xff]
        %v1765 = vld [vmem:[%s1754 + $0x50] sm:$0xff]
        %v1766 = vld [vmem:[%s1754 + $0x58] sm:$0xff]
        %v1767 = vld [vmem:[%s1754 + $0x60] sm:$0xff]
        %v1768 = vld [vmem:[%s1754 + $0x68] sm:$0xff]
        %v1769 = vld [vmem:[%s1754 + $0x70] sm:$0xff]
        %v1770 = vld [vmem:[%s1754 + $0x78] sm:$0xff]
        %v1771 = vrot.slane %v1572, 2
        %1773 = vmatprep.subr.mxu0 0.0
        %1774 = vmatpush1.msra.mxu0 %v1755
        %1775 = vmatprep.subr.mxu0 0.0
        %1776 = vmatpush1.msra.mxu0 %v1756
        %1777 = vmatprep.subr.mxu0 0.0
        %1778 = vmatpush1.msra.mxu0 %v1757
        %1779 = vmatprep.subr.mxu0 0.0
        %1780 = vmatpush1.msra.mxu0 %v1758
        %1781 = vmatprep.subr.mxu0 0.0
        %1782 = vmatpush1.msra.mxu0 %v1759
        %1783 = vmatprep.subr.mxu0 0.0
        %1784 = vmatpush1.msra.mxu0 %v1760
        %1785 = vmatprep.subr.mxu0 0.0
        %1786 = vmatpush1.msra.mxu0 %v1761
        %1787 = vmatprep.subr.mxu0 0.0
        %1788 = vmatpush1.msra.mxu0 %v1762
        %1789 = vmatprep.subr.mxu0 0.0
        %1790 = vmatpush1.msra.mxu0 %v1763
        %1791 = vmatprep.subr.mxu0 0.0
        %1792 = vmatpush1.msra.mxu0 %v1764
        %1793 = vmatprep.subr.mxu0 0.0
        %1794 = vmatpush1.msra.mxu0 %v1765
        %1795 = vmatprep.subr.mxu0 0.0
        %1796 = vmatpush1.msra.mxu0 %v1766
        %1797 = vmatprep.subr.mxu0 0.0
        %1798 = vmatpush1.msra.mxu0 %v1767
        %1799 = vmatprep.subr.mxu0 0.0
        %1800 = vmatpush1.msra.mxu0 %v1768
        %1801 = vmatprep.subr.mxu0 0.0
        %1802 = vmatpush1.msra.mxu0 %v1769
        %1803 = vmatprep.subr.mxu0 0.0
        %1804 = vmatpush1.msra.mxu0 %v1770
        %1805 = vmatprep.subr.mxu0 0.0
        %1806 = vmatpush1.msra.mxu0 0.0
        %1807 = vmatprep.subr.mxu0 0.0
        %1808 = vmatpush1.msra.mxu0 0.0
        %1809 = vmatprep.subr.mxu0 0.0
        %1810 = vmatpush1.msra.mxu0 0.0
        %1811 = vmatprep.subr.mxu0 0.0
        %1812 = vmatpush1.msra.mxu0 0.0
        %1813 = vmatprep.subr.mxu0 0.0
        %1814 = vmatpush1.msra.mxu0 0.0
        %1815 = vmatprep.subr.mxu0 0.0
        %1816 = vmatpush1.msra.mxu0 0.0
        %1817 = vmatprep.subr.mxu0 0.0
        %1818 = vmatpush1.msra.mxu0 0.0
        %1819 = vmatprep.subr.mxu0 0.0
        %1820 = vmatpush1.msra.mxu0 0.0
        %1821 = vmatprep.subr.mxu0 0.0
        %1822 = vmatpush1.msra.mxu0 0.0
        %1823 = vmatprep.subr.mxu0 0.0
        %1824 = vmatpush1.msra.mxu0 0.0
        %1825 = vmatprep.subr.mxu0 0.0
        %1826 = vmatpush1.msra.mxu0 0.0
        %1827 = vmatprep.subr.mxu0 0.0
        %1828 = vmatpush1.msra.mxu0 0.0
        %1829 = vmatprep.subr.mxu0 0.0
        %1830 = vmatpush1.msra.mxu0 0.0
        %1831 = vmatprep.subr.mxu0 0.0
        %1832 = vmatpush1.msra.mxu0 0.0
        %1833 = vmatprep.subr.mxu0 0.0
        %1834 = vmatpush1.msra.mxu0 0.0
        %1835 = vmatprep.subr.mxu0 0.0
        %1836 = vmatpush1.msra.mxu0 0.0
        %1837 = vmatprep.mubr.f32.mxu0 0.0
        %1838 = vmatmul.mubr.f32.gmra.mrb[0].mxu0 %v1771
        %v1839 = vpop.f32.mrb[0].mxu0
        %v1840 = vadd.f32 0.0, %v1839
        %v1841 = vpop.f32.mrb[0].mxu0
        %1842 = vdwg.mxu0
        %v1843 = vadd.f32 %v1751, %v1840
        %s1844 = scalar_lea.vmem [#allocation13], 384
        %v1845 = vld [vmem:[%s1844] sm:$0xff]
        %v1846 = vld [vmem:[%s1844 + $0x8] sm:$0xff]
        %v1847 = vld [vmem:[%s1844 + $0x10] sm:$0xff]
        %v1848 = vld [vmem:[%s1844 + $0x18] sm:$0xff]
        %v1849 = vld [vmem:[%s1844 + $0x20] sm:$0xff]
        %v1850 = vld [vmem:[%s1844 + $0x28] sm:$0xff]
        %v1851 = vld [vmem:[%s1844 + $0x30] sm:$0xff]
        %v1852 = vld [vmem:[%s1844 + $0x38] sm:$0xff]
        %v1853 = vld [vmem:[%s1844 + $0x40] sm:$0xff]
        %v1854 = vld [vmem:[%s1844 + $0x48] sm:$0xff]
        %v1855 = vld [vmem:[%s1844 + $0x50] sm:$0xff]
        %v1856 = vld [vmem:[%s1844 + $0x58] sm:$0xff]
        %v1857 = vld [vmem:[%s1844 + $0x60] sm:$0xff]
        %v1858 = vld [vmem:[%s1844 + $0x68] sm:$0xff]
        %v1859 = vld [vmem:[%s1844 + $0x70] sm:$0xff]
        %v1860 = vld [vmem:[%s1844 + $0x78] sm:$0xff]
        %v1861 = vrot.slane %v1572, 3
        %1863 = vmatprep.subr.mxu0 0.0
        %1864 = vmatpush1.msra.mxu0 %v1845
        %1865 = vmatprep.subr.mxu0 0.0
        %1866 = vmatpush1.msra.mxu0 %v1846
        %1867 = vmatprep.subr.mxu0 0.0
        %1868 = vmatpush1.msra.mxu0 %v1847
        %1869 = vmatprep.subr.mxu0 0.0
        %1870 = vmatpush1.msra.mxu0 %v1848
        %1871 = vmatprep.subr.mxu0 0.0
        %1872 = vmatpush1.msra.mxu0 %v1849
        %1873 = vmatprep.subr.mxu0 0.0
        %1874 = vmatpush1.msra.mxu0 %v1850
        %1875 = vmatprep.subr.mxu0 0.0
        %1876 = vmatpush1.msra.mxu0 %v1851
        %1877 = vmatprep.subr.mxu0 0.0
        %1878 = vmatpush1.msra.mxu0 %v1852
        %1879 = vmatprep.subr.mxu0 0.0
        %1880 = vmatpush1.msra.mxu0 %v1853
        %1881 = vmatprep.subr.mxu0 0.0
        %1882 = vmatpush1.msra.mxu0 %v1854
        %1883 = vmatprep.subr.mxu0 0.0
        %1884 = vmatpush1.msra.mxu0 %v1855
        %1885 = vmatprep.subr.mxu0 0.0
        %1886 = vmatpush1.msra.mxu0 %v1856
        %1887 = vmatprep.subr.mxu0 0.0
        %1888 = vmatpush1.msra.mxu0 %v1857
        %1889 = vmatprep.subr.mxu0 0.0
        %1890 = vmatpush1.msra.mxu0 %v1858
        %1891 = vmatprep.subr.mxu0 0.0
        %1892 = vmatpush1.msra.mxu0 %v1859
        %1893 = vmatprep.subr.mxu0 0.0
        %1894 = vmatpush1.msra.mxu0 %v1860
        %1895 = vmatprep.subr.mxu0 0.0
        %1896 = vmatpush1.msra.mxu0 0.0
        %1897 = vmatprep.subr.mxu0 0.0
        %1898 = vmatpush1.msra.mxu0 0.0
        %1899 = vmatprep.subr.mxu0 0.0
        %1900 = vmatpush1.msra.mxu0 0.0
        %1901 = vmatprep.subr.mxu0 0.0
        %1902 = vmatpush1.msra.mxu0 0.0
        %1903 = vmatprep.subr.mxu0 0.0
        %1904 = vmatpush1.msra.mxu0 0.0
        %1905 = vmatprep.subr.mxu0 0.0
        %1906 = vmatpush1.msra.mxu0 0.0
        %1907 = vmatprep.subr.mxu0 0.0
        %1908 = vmatpush1.msra.mxu0 0.0
        %1909 = vmatprep.subr.mxu0 0.0
        %1910 = vmatpush1.msra.mxu0 0.0
        %1911 = vmatprep.subr.mxu0 0.0
        %1912 = vmatpush1.msra.mxu0 0.0
        %1913 = vmatprep.subr.mxu0 0.0
        %1914 = vmatpush1.msra.mxu0 0.0
        %1915 = vmatprep.subr.mxu0 0.0
        %1916 = vmatpush1.msra.mxu0 0.0
        %1917 = vmatprep.subr.mxu0 0.0
        %1918 = vmatpush1.msra.mxu0 0.0
        %1919 = vmatprep.subr.mxu0 0.0
        %1920 = vmatpush1.msra.mxu0 0.0
        %1921 = vmatprep.subr.mxu0 0.0
        %1922 = vmatpush1.msra.mxu0 0.0
        %1923 = vmatprep.subr.mxu0 0.0
        %1924 = vmatpush1.msra.mxu0 0.0
        %1925 = vmatprep.subr.mxu0 0.0
        %1926 = vmatpush1.msra.mxu0 0.0
        %1927 = vmatprep.mubr.f32.mxu0 0.0
        %1928 = vmatmul.mubr.f32.gmra.mrb[0].mxu0 %v1861
        %v1929 = vpop.f32.mrb[0].mxu0
        %v1930 = vadd.f32 0.0, %v1929
        %v1931 = vpop.f32.mrb[0].mxu0
        %1932 = vdwg.mxu0
        %v1933 = vadd.f32 %v1843, %v1930
        %s1934 = scalar_lea.vmem [#allocation13], 512
        %v1935 = vld [vmem:[%s1934] sm:$0xff]
        %v1936 = vld [vmem:[%s1934 + $0x8] sm:$0xff]
        %v1937 = vld [vmem:[%s1934 + $0x10] sm:$0xff]
        %v1938 = vld [vmem:[%s1934 + $0x18] sm:$0xff]
        %v1939 = vld [vmem:[%s1934 + $0x20] sm:$0xff]
        %v1940 = vld [vmem:[%s1934 + $0x28] sm:$0xff]
        %v1941 = vld [vmem:[%s1934 + $0x30] sm:$0xff]
        %v1942 = vld [vmem:[%s1934 + $0x38] sm:$0xff]
        %v1943 = vld [vmem:[%s1934 + $0x40] sm:$0xff]
        %v1944 = vld [vmem:[%s1934 + $0x48] sm:$0xff]
        %v1945 = vld [vmem:[%s1934 + $0x50] sm:$0xff]
        %v1946 = vld [vmem:[%s1934 + $0x58] sm:$0xff]
        %v1947 = vld [vmem:[%s1934 + $0x60] sm:$0xff]
        %v1948 = vld [vmem:[%s1934 + $0x68] sm:$0xff]
        %v1949 = vld [vmem:[%s1934 + $0x70] sm:$0xff]
        %v1950 = vld [vmem:[%s1934 + $0x78] sm:$0xff]
        %v1951 = vrot.slane %v1572, 4
        %1953 = vmatprep.subr.mxu0 0.0
        %1954 = vmatpush1.msra.mxu0 %v1935
        %1955 = vmatprep.subr.mxu0 0.0
        %1956 = vmatpush1.msra.mxu0 %v1936
        %1957 = vmatprep.subr.mxu0 0.0
        %1958 = vmatpush1.msra.mxu0 %v1937
        %1959 = vmatprep.subr.mxu0 0.0
        %1960 = vmatpush1.msra.mxu0 %v1938
        %1961 = vmatprep.subr.mxu0 0.0
        %1962 = vmatpush1.msra.mxu0 %v1939
        %1963 = vmatprep.subr.mxu0 0.0
        %1964 = vmatpush1.msra.mxu0 %v1940
        %1965 = vmatprep.subr.mxu0 0.0
        %1966 = vmatpush1.msra.mxu0 %v1941
        %1967 = vmatprep.subr.mxu0 0.0
        %1968 = vmatpush1.msra.mxu0 %v1942
        %1969 = vmatprep.subr.mxu0 0.0
        %1970 = vmatpush1.msra.mxu0 %v1943
        %1971 = vmatprep.subr.mxu0 0.0
        %1972 = vmatpush1.msra.mxu0 %v1944
        %1973 = vmatprep.subr.mxu0 0.0
        %1974 = vmatpush1.msra.mxu0 %v1945
        %1975 = vmatprep.subr.mxu0 0.0
        %1976 = vmatpush1.msra.mxu0 %v1946
        %1977 = vmatprep.subr.mxu0 0.0
        %1978 = vmatpush1.msra.mxu0 %v1947
        %1979 = vmatprep.subr.mxu0 0.0
        %1980 = vmatpush1.msra.mxu0 %v1948
        %1981 = vmatprep.subr.mxu0 0.0
        %1982 = vmatpush1.msra.mxu0 %v1949
        %1983 = vmatprep.subr.mxu0 0.0
        %1984 = vmatpush1.msra.mxu0 %v1950
        %1985 = vmatprep.subr.mxu0 0.0
        %1986 = vmatpush1.msra.mxu0 0.0
        %1987 = vmatprep.subr.mxu0 0.0
        %1988 = vmatpush1.msra.mxu0 0.0
        %1989 = vmatprep.subr.mxu0 0.0
        %1990 = vmatpush1.msra.mxu0 0.0
        %1991 = vmatprep.subr.mxu0 0.0
        %1992 = vmatpush1.msra.mxu0 0.0
        %1993 = vmatprep.subr.mxu0 0.0
        %1994 = vmatpush1.msra.mxu0 0.0
        %1995 = vmatprep.subr.mxu0 0.0
        %1996 = vmatpush1.msra.mxu0 0.0
        %1997 = vmatprep.subr.mxu0 0.0
        %1998 = vmatpush1.msra.mxu0 0.0
        %1999 = vmatprep.subr.mxu0 0.0
        %2000 = vmatpush1.msra.mxu0 0.0
        %2001 = vmatprep.subr.mxu0 0.0
        %2002 = vmatpush1.msra.mxu0 0.0
        %2003 = vmatprep.subr.mxu0 0.0
        %2004 = vmatpush1.msra.mxu0 0.0
        %2005 = vmatprep.subr.mxu0 0.0
        %2006 = vmatpush1.msra.mxu0 0.0
        %2007 = vmatprep.subr.mxu0 0.0
        %2008 = vmatpush1.msra.mxu0 0.0
        %2009 = vmatprep.subr.mxu0 0.0
        %2010 = vmatpush1.msra.mxu0 0.0
        %2011 = vmatprep.subr.mxu0 0.0
        %2012 = vmatpush1.msra.mxu0 0.0
        %2013 = vmatprep.subr.mxu0 0.0
        %2014 = vmatpush1.msra.mxu0 0.0
        %2015 = vmatprep.subr.mxu0 0.0
        %2016 = vmatpush1.msra.mxu0 0.0
        %2017 = vmatprep.mubr.f32.mxu0 0.0
        %2018 = vmatmul.mubr.f32.gmra.mrb[0].mxu0 %v1951
        %v2019 = vpop.f32.mrb[0].mxu0
        %v2020 = vadd.f32 0.0, %v2019
        %v2021 = vpop.f32.mrb[0].mxu0
        %2022 = vdwg.mxu0
        %v2023 = vadd.f32 %v1933, %v2020
        %s2024 = scalar_lea.vmem [#allocation13], 640
        %v2025 = vld [vmem:[%s2024] sm:$0xff]
        %v2026 = vld [vmem:[%s2024 + $0x8] sm:$0xff]
        %v2027 = vld [vmem:[%s2024 + $0x10] sm:$0xff]
        %v2028 = vld [vmem:[%s2024 + $0x18] sm:$0xff]
        %v2029 = vld [vmem:[%s2024 + $0x20] sm:$0xff]
        %v2030 = vld [vmem:[%s2024 + $0x28] sm:$0xff]
        %v2031 = vld [vmem:[%s2024 + $0x30] sm:$0xff]
        %v2032 = vld [vmem:[%s2024 + $0x38] sm:$0xff]
        %v2033 = vld [vmem:[%s2024 + $0x40] sm:$0xff]
        %v2034 = vld [vmem:[%s2024 + $0x48] sm:$0xff]
        %v2035 = vld [vmem:[%s2024 + $0x50] sm:$0xff]
        %v2036 = vld [vmem:[%s2024 + $0x58] sm:$0xff]
        %v2037 = vld [vmem:[%s2024 + $0x60] sm:$0xff]
        %v2038 = vld [vmem:[%s2024 + $0x68] sm:$0xff]
        %v2039 = vld [vmem:[%s2024 + $0x70] sm:$0xff]
        %v2040 = vld [vmem:[%s2024 + $0x78] sm:$0xff]
        %v2041 = vrot.slane %v1572, 5
        %2043 = vmatprep.subr.mxu0 0.0
        %2044 = vmatpush1.msra.mxu0 %v2025
        %2045 = vmatprep.subr.mxu0 0.0
        %2046 = vmatpush1.msra.mxu0 %v2026
        %2047 = vmatprep.subr.mxu0 0.0
        %2048 = vmatpush1.msra.mxu0 %v2027
        %2049 = vmatprep.subr.mxu0 0.0
        %2050 = vmatpush1.msra.mxu0 %v2028
        %2051 = vmatprep.subr.mxu0 0.0
        %2052 = vmatpush1.msra.mxu0 %v2029
        %2053 = vmatprep.subr.mxu0 0.0
        %2054 = vmatpush1.msra.mxu0 %v2030
        %2055 = vmatprep.subr.mxu0 0.0
        %2056 = vmatpush1.msra.mxu0 %v2031
        %2057 = vmatprep.subr.mxu0 0.0
        %2058 = vmatpush1.msra.mxu0 %v2032
        %2059 = vmatprep.subr.mxu0 0.0
        %2060 = vmatpush1.msra.mxu0 %v2033
        %2061 = vmatprep.subr.mxu0 0.0
        %2062 = vmatpush1.msra.mxu0 %v2034
        %2063 = vmatprep.subr.mxu0 0.0
        %2064 = vmatpush1.msra.mxu0 %v2035
        %2065 = vmatprep.subr.mxu0 0.0
        %2066 = vmatpush1.msra.mxu0 %v2036
        %2067 = vmatprep.subr.mxu0 0.0
        %2068 = vmatpush1.msra.mxu0 %v2037
        %2069 = vmatprep.subr.mxu0 0.0
        %2070 = vmatpush1.msra.mxu0 %v2038
        %2071 = vmatprep.subr.mxu0 0.0
        %2072 = vmatpush1.msra.mxu0 %v2039
        %2073 = vmatprep.subr.mxu0 0.0
        %2074 = vmatpush1.msra.mxu0 %v2040
        %2075 = vmatprep.subr.mxu0 0.0
        %2076 = vmatpush1.msra.mxu0 0.0
        %2077 = vmatprep.subr.mxu0 0.0
        %2078 = vmatpush1.msra.mxu0 0.0
        %2079 = vmatprep.subr.mxu0 0.0
        %2080 = vmatpush1.msra.mxu0 0.0
        %2081 = vmatprep.subr.mxu0 0.0
        %2082 = vmatpush1.msra.mxu0 0.0
        %2083 = vmatprep.subr.mxu0 0.0
        %2084 = vmatpush1.msra.mxu0 0.0
        %2085 = vmatprep.subr.mxu0 0.0
        %2086 = vmatpush1.msra.mxu0 0.0
        %2087 = vmatprep.subr.mxu0 0.0
        %2088 = vmatpush1.msra.mxu0 0.0
        %2089 = vmatprep.subr.mxu0 0.0
        %2090 = vmatpush1.msra.mxu0 0.0
        %2091 = vmatprep.subr.mxu0 0.0
        %2092 = vmatpush1.msra.mxu0 0.0
        %2093 = vmatprep.subr.mxu0 0.0
        %2094 = vmatpush1.msra.mxu0 0.0
        %2095 = vmatprep.subr.mxu0 0.0
        %2096 = vmatpush1.msra.mxu0 0.0
        %2097 = vmatprep.subr.mxu0 0.0
        %2098 = vmatpush1.msra.mxu0 0.0
        %2099 = vmatprep.subr.mxu0 0.0
        %2100 = vmatpush1.msra.mxu0 0.0
        %2101 = vmatprep.subr.mxu0 0.0
        %2102 = vmatpush1.msra.mxu0 0.0
        %2103 = vmatprep.subr.mxu0 0.0
        %2104 = vmatpush1.msra.mxu0 0.0
        %2105 = vmatprep.subr.mxu0 0.0
        %2106 = vmatpush1.msra.mxu0 0.0
        %2107 = vmatprep.mubr.f32.mxu0 0.0
        %2108 = vmatmul.mubr.f32.gmra.mrb[0].mxu0 %v2041
        %v2109 = vpop.f32.mrb[0].mxu0
        %v2110 = vadd.f32 0.0, %v2109
        %v2111 = vpop.f32.mrb[0].mxu0
        %2112 = vdwg.mxu0
        %v2113 = vadd.f32 %v2023, %v2110
        %s2114 = scalar_lea.vmem [#allocation13], 768
        %v2115 = vld [vmem:[%s2114] sm:$0xff]
        %v2116 = vld [vmem:[%s2114 + $0x8] sm:$0xff]
        %v2117 = vld [vmem:[%s2114 + $0x10] sm:$0xff]
        %v2118 = vld [vmem:[%s2114 + $0x18] sm:$0xff]
        %v2119 = vld [vmem:[%s2114 + $0x20] sm:$0xff]
        %v2120 = vld [vmem:[%s2114 + $0x28] sm:$0xff]
        %v2121 = vld [vmem:[%s2114 + $0x30] sm:$0xff]
        %v2122 = vld [vmem:[%s2114 + $0x38] sm:$0xff]
        %v2123 = vld [vmem:[%s2114 + $0x40] sm:$0xff]
        %v2124 = vld [vmem:[%s2114 + $0x48] sm:$0xff]
        %v2125 = vld [vmem:[%s2114 + $0x50] sm:$0xff]
        %v2126 = vld [vmem:[%s2114 + $0x58] sm:$0xff]
        %v2127 = vld [vmem:[%s2114 + $0x60] sm:$0xff]
        %v2128 = vld [vmem:[%s2114 + $0x68] sm:$0xff]
        %v2129 = vld [vmem:[%s2114 + $0x70] sm:$0xff]
        %v2130 = vld [vmem:[%s2114 + $0x78] sm:$0xff]
        %v2131 = vrot.slane %v1572, 6
        %2133 = vmatprep.subr.mxu0 0.0
        %2134 = vmatpush1.msra.mxu0 %v2115
        %2135 = vmatprep.subr.mxu0 0.0
        %2136 = vmatpush1.msra.mxu0 %v2116
        %2137 = vmatprep.subr.mxu0 0.0
        %2138 = vmatpush1.msra.mxu0 %v2117
        %2139 = vmatprep.subr.mxu0 0.0
        %2140 = vmatpush1.msra.mxu0 %v2118
        %2141 = vmatprep.subr.mxu0 0.0
        %2142 = vmatpush1.msra.mxu0 %v2119
        %2143 = vmatprep.subr.mxu0 0.0
        %2144 = vmatpush1.msra.mxu0 %v2120
        %2145 = vmatprep.subr.mxu0 0.0
        %2146 = vmatpush1.msra.mxu0 %v2121
        %2147 = vmatprep.subr.mxu0 0.0
        %2148 = vmatpush1.msra.mxu0 %v2122
        %2149 = vmatprep.subr.mxu0 0.0
        %2150 = vmatpush1.msra.mxu0 %v2123
        %2151 = vmatprep.subr.mxu0 0.0
        %2152 = vmatpush1.msra.mxu0 %v2124
        %2153 = vmatprep.subr.mxu0 0.0
        %2154 = vmatpush1.msra.mxu0 %v2125
        %2155 = vmatprep.subr.mxu0 0.0
        %2156 = vmatpush1.msra.mxu0 %v2126
        %2157 = vmatprep.subr.mxu0 0.0
        %2158 = vmatpush1.msra.mxu0 %v2127
        %2159 = vmatprep.subr.mxu0 0.0
        %2160 = vmatpush1.msra.mxu0 %v2128
        %2161 = vmatprep.subr.mxu0 0.0
        %2162 = vmatpush1.msra.mxu0 %v2129
        %2163 = vmatprep.subr.mxu0 0.0
        %2164 = vmatpush1.msra.mxu0 %v2130
        %2165 = vmatprep.subr.mxu0 0.0
        %2166 = vmatpush1.msra.mxu0 0.0
        %2167 = vmatprep.subr.mxu0 0.0
        %2168 = vmatpush1.msra.mxu0 0.0
        %2169 = vmatprep.subr.mxu0 0.0
        %2170 = vmatpush1.msra.mxu0 0.0
        %2171 = vmatprep.subr.mxu0 0.0
        %2172 = vmatpush1.msra.mxu0 0.0
        %2173 = vmatprep.subr.mxu0 0.0
        %2174 = vmatpush1.msra.mxu0 0.0
        %2175 = vmatprep.subr.mxu0 0.0
        %2176 = vmatpush1.msra.mxu0 0.0
        %2177 = vmatprep.subr.mxu0 0.0
        %2178 = vmatpush1.msra.mxu0 0.0
        %2179 = vmatprep.subr.mxu0 0.0
        %2180 = vmatpush1.msra.mxu0 0.0
        %2181 = vmatprep.subr.mxu0 0.0
        %2182 = vmatpush1.msra.mxu0 0.0
        %2183 = vmatprep.subr.mxu0 0.0
        %2184 = vmatpush1.msra.mxu0 0.0
        %2185 = vmatprep.subr.mxu0 0.0
        %2186 = vmatpush1.msra.mxu0 0.0
        %2187 = vmatprep.subr.mxu0 0.0
        %2188 = vmatpush1.msra.mxu0 0.0
        %2189 = vmatprep.subr.mxu0 0.0
        %2190 = vmatpush1.msra.mxu0 0.0
        %2191 = vmatprep.subr.mxu0 0.0
        %2192 = vmatpush1.msra.mxu0 0.0
        %2193 = vmatprep.subr.mxu0 0.0
        %2194 = vmatpush1.msra.mxu0 0.0
        %2195 = vmatprep.subr.mxu0 0.0
        %2196 = vmatpush1.msra.mxu0 0.0
        %2197 = vmatprep.mubr.f32.mxu0 0.0
        %2198 = vmatmul.mubr.f32.gmra.mrb[0].mxu0 %v2131
        %v2199 = vpop.f32.mrb[0].mxu0
        %v2200 = vadd.f32 0.0, %v2199
        %v2201 = vpop.f32.mrb[0].mxu0
        %2202 = vdwg.mxu0
        %v2203 = vadd.f32 %v2113, %v2200
        %s2204 = scalar_lea.vmem [#allocation13], 896
        %v2205 = vld [vmem:[%s2204] sm:$0xff]
        %v2206 = vld [vmem:[%s2204 + $0x8] sm:$0xff]
        %v2207 = vld [vmem:[%s2204 + $0x10] sm:$0xff]
        %v2208 = vld [vmem:[%s2204 + $0x18] sm:$0xff]
        %v2209 = vld [vmem:[%s2204 + $0x20] sm:$0xff]
        %v2210 = vld [vmem:[%s2204 + $0x28] sm:$0xff]
        %v2211 = vld [vmem:[%s2204 + $0x30] sm:$0xff]
        %v2212 = vld [vmem:[%s2204 + $0x38] sm:$0xff]
        %v2213 = vld [vmem:[%s2204 + $0x40] sm:$0xff]
        %v2214 = vld [vmem:[%s2204 + $0x48] sm:$0xff]
        %v2215 = vld [vmem:[%s2204 + $0x50] sm:$0xff]
        %v2216 = vld [vmem:[%s2204 + $0x58] sm:$0xff]
        %v2217 = vld [vmem:[%s2204 + $0x60] sm:$0xff]
        %v2218 = vld [vmem:[%s2204 + $0x68] sm:$0xff]
        %v2219 = vld [vmem:[%s2204 + $0x70] sm:$0xff]
        %v2220 = vld [vmem:[%s2204 + $0x78] sm:$0xff]
        %v2221 = vrot.slane %v1572, 7
        %2223 = vmatprep.subr.mxu0 0.0
        %2224 = vmatpush1.msra.mxu0 %v2205
        %2225 = vmatprep.subr.mxu0 0.0
        %2226 = vmatpush1.msra.mxu0 %v2206
        %2227 = vmatprep.subr.mxu0 0.0
        %2228 = vmatpush1.msra.mxu0 %v2207
        %2229 = vmatprep.subr.mxu0 0.0
        %2230 = vmatpush1.msra.mxu0 %v2208
        %2231 = vmatprep.subr.mxu0 0.0
        %2232 = vmatpush1.msra.mxu0 %v2209
        %2233 = vmatprep.subr.mxu0 0.0
        %2234 = vmatpush1.msra.mxu0 %v2210
        %2235 = vmatprep.subr.mxu0 0.0
        %2236 = vmatpush1.msra.mxu0 %v2211
        %2237 = vmatprep.subr.mxu0 0.0
        %2238 = vmatpush1.msra.mxu0 %v2212
        %2239 = vmatprep.subr.mxu0 0.0
        %2240 = vmatpush1.msra.mxu0 %v2213
        %2241 = vmatprep.subr.mxu0 0.0
        %2242 = vmatpush1.msra.mxu0 %v2214
        %2243 = vmatprep.subr.mxu0 0.0
        %2244 = vmatpush1.msra.mxu0 %v2215
        %2245 = vmatprep.subr.mxu0 0.0
        %2246 = vmatpush1.msra.mxu0 %v2216
        %2247 = vmatprep.subr.mxu0 0.0
        %2248 = vmatpush1.msra.mxu0 %v2217
        %2249 = vmatprep.subr.mxu0 0.0
        %2250 = vmatpush1.msra.mxu0 %v2218
        %2251 = vmatprep.subr.mxu0 0.0
        %2252 = vmatpush1.msra.mxu0 %v2219
        %2253 = vmatprep.subr.mxu0 0.0
        %2254 = vmatpush1.msra.mxu0 %v2220
        %2255 = vmatprep.subr.mxu0 0.0
        %2256 = vmatpush1.msra.mxu0 0.0
        %2257 = vmatprep.subr.mxu0 0.0
        %2258 = vmatpush1.msra.mxu0 0.0
        %2259 = vmatprep.subr.mxu0 0.0
        %2260 = vmatpush1.msra.mxu0 0.0
        %2261 = vmatprep.subr.mxu0 0.0
        %2262 = vmatpush1.msra.mxu0 0.0
        %2263 = vmatprep.subr.mxu0 0.0
        %2264 = vmatpush1.msra.mxu0 0.0
        %2265 = vmatprep.subr.mxu0 0.0
        %2266 = vmatpush1.msra.mxu0 0.0
        %2267 = vmatprep.subr.mxu0 0.0
        %2268 = vmatpush1.msra.mxu0 0.0
        %2269 = vmatprep.subr.mxu0 0.0
        %2270 = vmatpush1.msra.mxu0 0.0
        %2271 = vmatprep.subr.mxu0 0.0
        %2272 = vmatpush1.msra.mxu0 0.0
        %2273 = vmatprep.subr.mxu0 0.0
        %2274 = vmatpush1.msra.mxu0 0.0
        %2275 = vmatprep.subr.mxu0 0.0
        %2276 = vmatpush1.msra.mxu0 0.0
        %2277 = vmatprep.subr.mxu0 0.0
        %2278 = vmatpush1.msra.mxu0 0.0
        %2279 = vmatprep.subr.mxu0 0.0
        %2280 = vmatpush1.msra.mxu0 0.0
        %2281 = vmatprep.subr.mxu0 0.0
        %2282 = vmatpush1.msra.mxu0 0.0
        %2283 = vmatprep.subr.mxu0 0.0
        %2284 = vmatpush1.msra.mxu0 0.0
        %2285 = vmatprep.subr.mxu0 0.0
        %2286 = vmatpush1.msra.mxu0 0.0
        %2287 = vmatprep.mubr.f32.mxu0 0.0
        %2288 = vmatmul.mubr.f32.gmra.mrb[0].mxu0 %v2221
        %v2289 = vpop.f32.mrb[0].mxu0
        %v2290 = vadd.f32 0.0, %v2289
        %v2291 = vpop.f32.mrb[0].mxu0
        %2292 = vdwg.mxu0
        %v2293 = vadd.f32 %v2203, %v2290
        %s2294 = scalar_lea.vmem [#allocation13], 1024
        %v2295 = vld [vmem:[%s2294] sm:$0xff]
        %v2296 = vld [vmem:[%s2294 + $0x8] sm:$0xff]
        %v2297 = vld [vmem:[%s2294 + $0x10] sm:$0xff]
        %v2298 = vld [vmem:[%s2294 + $0x18] sm:$0xff]
        %v2299 = vld [vmem:[%s2294 + $0x20] sm:$0xff]
        %v2300 = vld [vmem:[%s2294 + $0x28] sm:$0xff]
        %v2301 = vld [vmem:[%s2294 + $0x30] sm:$0xff]
        %v2302 = vld [vmem:[%s2294 + $0x38] sm:$0xff]
        %v2303 = vld [vmem:[%s2294 + $0x40] sm:$0xff]
        %v2304 = vld [vmem:[%s2294 + $0x48] sm:$0xff]
        %v2305 = vld [vmem:[%s2294 + $0x50] sm:$0xff]
        %v2306 = vld [vmem:[%s2294 + $0x58] sm:$0xff]
        %v2307 = vld [vmem:[%s2294 + $0x60] sm:$0xff]
        %v2308 = vld [vmem:[%s2294 + $0x68] sm:$0xff]
        %v2309 = vld [vmem:[%s2294 + $0x70] sm:$0xff]
        %v2310 = vld [vmem:[%s2294 + $0x78] sm:$0xff]
        %2311 = vmatprep.subr.mxu0 0.0
        %2312 = vmatpush1.msra.mxu0 %v2295
        %2313 = vmatprep.subr.mxu0 0.0
        %2314 = vmatpush1.msra.mxu0 %v2296
        %2315 = vmatprep.subr.mxu0 0.0
        %2316 = vmatpush1.msra.mxu0 %v2297
        %2317 = vmatprep.subr.mxu0 0.0
        %2318 = vmatpush1.msra.mxu0 %v2298
        %2319 = vmatprep.subr.mxu0 0.0
        %2320 = vmatpush1.msra.mxu0 %v2299
        %2321 = vmatprep.subr.mxu0 0.0
        %2322 = vmatpush1.msra.mxu0 %v2300
        %2323 = vmatprep.subr.mxu0 0.0
        %2324 = vmatpush1.msra.mxu0 %v2301
        %2325 = vmatprep.subr.mxu0 0.0
        %2326 = vmatpush1.msra.mxu0 %v2302
        %2327 = vmatprep.subr.mxu0 0.0
        %2328 = vmatpush1.msra.mxu0 %v2303
        %2329 = vmatprep.subr.mxu0 0.0
        %2330 = vmatpush1.msra.mxu0 %v2304
        %2331 = vmatprep.subr.mxu0 0.0
        %2332 = vmatpush1.msra.mxu0 %v2305
        %2333 = vmatprep.subr.mxu0 0.0
        %2334 = vmatpush1.msra.mxu0 %v2306
        %2335 = vmatprep.subr.mxu0 0.0
        %2336 = vmatpush1.msra.mxu0 %v2307
        %2337 = vmatprep.subr.mxu0 0.0
        %2338 = vmatpush1.msra.mxu0 %v2308
        %2339 = vmatprep.subr.mxu0 0.0
        %2340 = vmatpush1.msra.mxu0 %v2309
        %2341 = vmatprep.subr.mxu0 0.0
        %2342 = vmatpush1.msra.mxu0 %v2310
        %2343 = vmatprep.subr.mxu0 0.0
        %2344 = vmatpush1.msra.mxu0 0.0
        %2345 = vmatprep.subr.mxu0 0.0
        %2346 = vmatpush1.msra.mxu0 0.0
        %2347 = vmatprep.subr.mxu0 0.0
        %2348 = vmatpush1.msra.mxu0 0.0
        %2349 = vmatprep.subr.mxu0 0.0
        %2350 = vmatpush1.msra.mxu0 0.0
        %2351 = vmatprep.subr.mxu0 0.0
        %2352 = vmatpush1.msra.mxu0 0.0
        %2353 = vmatprep.subr.mxu0 0.0
        %2354 = vmatpush1.msra.mxu0 0.0
        %2355 = vmatprep.subr.mxu0 0.0
        %2356 = vmatpush1.msra.mxu0 0.0
        %2357 = vmatprep.subr.mxu0 0.0
        %2358 = vmatpush1.msra.mxu0 0.0
        %2359 = vmatprep.subr.mxu0 0.0
        %2360 = vmatpush1.msra.mxu0 0.0
        %2361 = vmatprep.subr.mxu0 0.0
        %2362 = vmatpush1.msra.mxu0 0.0
        %2363 = vmatprep.subr.mxu0 0.0
        %2364 = vmatpush1.msra.mxu0 0.0
        %2365 = vmatprep.subr.mxu0 0.0
        %2366 = vmatpush1.msra.mxu0 0.0
        %2367 = vmatprep.subr.mxu0 0.0
        %2368 = vmatpush1.msra.mxu0 0.0
        %2369 = vmatprep.subr.mxu0 0.0
        %2370 = vmatpush1.msra.mxu0 0.0
        %2371 = vmatprep.subr.mxu0 0.0
        %2372 = vmatpush1.msra.mxu0 0.0
        %2373 = vmatprep.subr.mxu0 0.0
        %2374 = vmatpush1.msra.mxu0 0.0
        %2375 = vmatprep.mubr.f32.mxu0 0.0
        %2376 = vmatmul.mubr.f32.gmra.mrb[0].mxu0 %v1573
        %v2377 = vpop.f32.mrb[0].mxu0
        %v2378 = vadd.f32 0.0, %v2377
        %v2379 = vpop.f32.mrb[0].mxu0
        %2380 = vdwg.mxu0
        %v2381 = vadd.f32 %v2293, %v2378
        %s2382 = scalar_lea.vmem [#allocation13], 1152
        %v2383 = vld [vmem:[%s2382] sm:$0xff]
        %v2384 = vld [vmem:[%s2382 + $0x8] sm:$0xff]
        %v2385 = vld [vmem:[%s2382 + $0x10] sm:$0xff]
        %v2386 = vld [vmem:[%s2382 + $0x18] sm:$0xff]
        %v2387 = vld [vmem:[%s2382 + $0x20] sm:$0xff]
        %v2388 = vld [vmem:[%s2382 + $0x28] sm:$0xff]
        %v2389 = vld [vmem:[%s2382 + $0x30] sm:$0xff]
        %v2390 = vld [vmem:[%s2382 + $0x38] sm:$0xff]
        %v2391 = vld [vmem:[%s2382 + $0x40] sm:$0xff]
        %v2392 = vld [vmem:[%s2382 + $0x48] sm:$0xff]
        %v2393 = vld [vmem:[%s2382 + $0x50] sm:$0xff]
        %v2394 = vld [vmem:[%s2382 + $0x58] sm:$0xff]
        %v2395 = vld [vmem:[%s2382 + $0x60] sm:$0xff]
        %v2396 = vld [vmem:[%s2382 + $0x68] sm:$0xff]
        %v2397 = vld [vmem:[%s2382 + $0x70] sm:$0xff]
        %v2398 = vld [vmem:[%s2382 + $0x78] sm:$0xff]
        %v2400 = vrot.slane %v1573, 1
        %2402 = vmatprep.subr.mxu0 0.0
        %2403 = vmatpush1.msra.mxu0 %v2383
        %2404 = vmatprep.subr.mxu0 0.0
        %2405 = vmatpush1.msra.mxu0 %v2384
        %2406 = vmatprep.subr.mxu0 0.0
        %2407 = vmatpush1.msra.mxu0 %v2385
        %2408 = vmatprep.subr.mxu0 0.0
        %2409 = vmatpush1.msra.mxu0 %v2386
        %2410 = vmatprep.subr.mxu0 0.0
        %2411 = vmatpush1.msra.mxu0 %v2387
        %2412 = vmatprep.subr.mxu0 0.0
        %2413 = vmatpush1.msra.mxu0 %v2388
        %2414 = vmatprep.subr.mxu0 0.0
        %2415 = vmatpush1.msra.mxu0 %v2389
        %2416 = vmatprep.subr.mxu0 0.0
        %2417 = vmatpush1.msra.mxu0 %v2390
        %2418 = vmatprep.subr.mxu0 0.0
        %2419 = vmatpush1.msra.mxu0 %v2391
        %2420 = vmatprep.subr.mxu0 0.0
        %2421 = vmatpush1.msra.mxu0 %v2392
        %2422 = vmatprep.subr.mxu0 0.0
        %2423 = vmatpush1.msra.mxu0 %v2393
        %2424 = vmatprep.subr.mxu0 0.0
        %2425 = vmatpush1.msra.mxu0 %v2394
        %2426 = vmatprep.subr.mxu0 0.0
        %2427 = vmatpush1.msra.mxu0 %v2395
        %2428 = vmatprep.subr.mxu0 0.0
        %2429 = vmatpush1.msra.mxu0 %v2396
        %2430 = vmatprep.subr.mxu0 0.0
        %2431 = vmatpush1.msra.mxu0 %v2397
        %2432 = vmatprep.subr.mxu0 0.0
        %2433 = vmatpush1.msra.mxu0 %v2398
        %2434 = vmatprep.subr.mxu0 0.0
        %2435 = vmatpush1.msra.mxu0 0.0
        %2436 = vmatprep.subr.mxu0 0.0
        %2437 = vmatpush1.msra.mxu0 0.0
        %2438 = vmatprep.subr.mxu0 0.0
        %2439 = vmatpush1.msra.mxu0 0.0
        %2440 = vmatprep.subr.mxu0 0.0
        %2441 = vmatpush1.msra.mxu0 0.0
        %2442 = vmatprep.subr.mxu0 0.0
        %2443 = vmatpush1.msra.mxu0 0.0
        %2444 = vmatprep.subr.mxu0 0.0
        %2445 = vmatpush1.msra.mxu0 0.0
        %2446 = vmatprep.subr.mxu0 0.0
        %2447 = vmatpush1.msra.mxu0 0.0
        %2448 = vmatprep.subr.mxu0 0.0
        %2449 = vmatpush1.msra.mxu0 0.0
        %2450 = vmatprep.subr.mxu0 0.0
        %2451 = vmatpush1.msra.mxu0 0.0
        %2452 = vmatprep.subr.mxu0 0.0
        %2453 = vmatpush1.msra.mxu0 0.0
        %2454 = vmatprep.subr.mxu0 0.0
        %2455 = vmatpush1.msra.mxu0 0.0
        %2456 = vmatprep.subr.mxu0 0.0
        %2457 = vmatpush1.msra.mxu0 0.0
        %2458 = vmatprep.subr.mxu0 0.0
        %2459 = vmatpush1.msra.mxu0 0.0
        %2460 = vmatprep.subr.mxu0 0.0
        %2461 = vmatpush1.msra.mxu0 0.0
        %2462 = vmatprep.subr.mxu0 0.0
        %2463 = vmatpush1.msra.mxu0 0.0
        %2464 = vmatprep.subr.mxu0 0.0
        %2465 = vmatpush1.msra.mxu0 0.0
        %2466 = vmatprep.mubr.f32.mxu0 0.0
        %2467 = vmatmul.mubr.f32.gmra.mrb[0].mxu0 %v2400
        %v2468 = vpop.f32.mrb[0].mxu0
        %v2469 = vadd.f32 0.0, %v2468
        %v2470 = vpop.f32.mrb[0].mxu0
        %2471 = vdwg.mxu0
        %v2472 = vadd.f32 %v2381, %v2469
        %s2473 = scalar_lea.vmem [#allocation13], 1280
        %v2474 = vld [vmem:[%s2473] sm:$0xff]
        %v2475 = vld [vmem:[%s2473 + $0x8] sm:$0xff]
        %v2476 = vld [vmem:[%s2473 + $0x10] sm:$0xff]
        %v2477 = vld [vmem:[%s2473 + $0x18] sm:$0xff]
        %v2478 = vld [vmem:[%s2473 + $0x20] sm:$0xff]
        %v2479 = vld [vmem:[%s2473 + $0x28] sm:$0xff]
        %v2480 = vld [vmem:[%s2473 + $0x30] sm:$0xff]
        %v2481 = vld [vmem:[%s2473 + $0x38] sm:$0xff]
        %v2482 = vld [vmem:[%s2473 + $0x40] sm:$0xff]
        %v2483 = vld [vmem:[%s2473 + $0x48] sm:$0xff]
        %v2484 = vld [vmem:[%s2473 + $0x50] sm:$0xff]
        %v2485 = vld [vmem:[%s2473 + $0x58] sm:$0xff]
        %v2486 = vld [vmem:[%s2473 + $0x60] sm:$0xff]
        %v2487 = vld [vmem:[%s2473 + $0x68] sm:$0xff]
        %v2488 = vld [vmem:[%s2473 + $0x70] sm:$0xff]
        %v2489 = vld [vmem:[%s2473 + $0x78] sm:$0xff]
        %v2490 = vrot.slane %v1573, 2
        %2492 = vmatprep.subr.mxu0 0.0
        %2493 = vmatpush1.msra.mxu0 %v2474
        %2494 = vmatprep.subr.mxu0 0.0
        %2495 = vmatpush1.msra.mxu0 %v2475
        %2496 = vmatprep.subr.mxu0 0.0
        %2497 = vmatpush1.msra.mxu0 %v2476
        %2498 = vmatprep.subr.mxu0 0.0
        %2499 = vmatpush1.msra.mxu0 %v2477
        %2500 = vmatprep.subr.mxu0 0.0
        %2501 = vmatpush1.msra.mxu0 %v2478
        %2502 = vmatprep.subr.mxu0 0.0
        %2503 = vmatpush1.msra.mxu0 %v2479
        %2504 = vmatprep.subr.mxu0 0.0
        %2505 = vmatpush1.msra.mxu0 %v2480
        %2506 = vmatprep.subr.mxu0 0.0
        %2507 = vmatpush1.msra.mxu0 %v2481
        %2508 = vmatprep.subr.mxu0 0.0
        %2509 = vmatpush1.msra.mxu0 %v2482
        %2510 = vmatprep.subr.mxu0 0.0
        %2511 = vmatpush1.msra.mxu0 %v2483
        %2512 = vmatprep.subr.mxu0 0.0
        %2513 = vmatpush1.msra.mxu0 %v2484
        %2514 = vmatprep.subr.mxu0 0.0
        %2515 = vmatpush1.msra.mxu0 %v2485
        %2516 = vmatprep.subr.mxu0 0.0
        %2517 = vmatpush1.msra.mxu0 %v2486
        %2518 = vmatprep.subr.mxu0 0.0
        %2519 = vmatpush1.msra.mxu0 %v2487
        %2520 = vmatprep.subr.mxu0 0.0
        %2521 = vmatpush1.msra.mxu0 %v2488
        %2522 = vmatprep.subr.mxu0 0.0
        %2523 = vmatpush1.msra.mxu0 %v2489
        %2524 = vmatprep.subr.mxu0 0.0
        %2525 = vmatpush1.msra.mxu0 0.0
        %2526 = vmatprep.subr.mxu0 0.0
        %2527 = vmatpush1.msra.mxu0 0.0
        %2528 = vmatprep.subr.mxu0 0.0
        %2529 = vmatpush1.msra.mxu0 0.0
        %2530 = vmatprep.subr.mxu0 0.0
        %2531 = vmatpush1.msra.mxu0 0.0
        %2532 = vmatprep.subr.mxu0 0.0
        %2533 = vmatpush1.msra.mxu0 0.0
        %2534 = vmatprep.subr.mxu0 0.0
        %2535 = vmatpush1.msra.mxu0 0.0
        %2536 = vmatprep.subr.mxu0 0.0
        %2537 = vmatpush1.msra.mxu0 0.0
        %2538 = vmatprep.subr.mxu0 0.0
        %2539 = vmatpush1.msra.mxu0 0.0
        %2540 = vmatprep.subr.mxu0 0.0
        %2541 = vmatpush1.msra.mxu0 0.0
        %2542 = vmatprep.subr.mxu0 0.0
        %2543 = vmatpush1.msra.mxu0 0.0
        %2544 = vmatprep.subr.mxu0 0.0
        %2545 = vmatpush1.msra.mxu0 0.0
        %2546 = vmatprep.subr.mxu0 0.0
        %2547 = vmatpush1.msra.mxu0 0.0
        %2548 = vmatprep.subr.mxu0 0.0
        %2549 = vmatpush1.msra.mxu0 0.0
        %2550 = vmatprep.subr.mxu0 0.0
        %2551 = vmatpush1.msra.mxu0 0.0
        %2552 = vmatprep.subr.mxu0 0.0
        %2553 = vmatpush1.msra.mxu0 0.0
        %2554 = vmatprep.subr.mxu0 0.0
        %2555 = vmatpush1.msra.mxu0 0.0
        %2556 = vmatprep.mubr.f32.mxu0 0.0
        %2557 = vmatmul.mubr.f32.gmra.mrb[0].mxu0 %v2490
        %v2558 = vpop.f32.mrb[0].mxu0
        %v2559 = vadd.f32 0.0, %v2558
        %v2560 = vpop.f32.mrb[0].mxu0
        %2561 = vdwg.mxu0
        %v2562 = vadd.f32 %v2472, %v2559
        %s2563 = scalar_lea.vmem [#allocation13], 1408
        %v2564 = vld [vmem:[%s2563] sm:$0xff]
        %v2565 = vld [vmem:[%s2563 + $0x8] sm:$0xff]
        %v2566 = vld [vmem:[%s2563 + $0x10] sm:$0xff]
        %v2567 = vld [vmem:[%s2563 + $0x18] sm:$0xff]
        %v2568 = vld [vmem:[%s2563 + $0x20] sm:$0xff]
        %v2569 = vld [vmem:[%s2563 + $0x28] sm:$0xff]
        %v2570 = vld [vmem:[%s2563 + $0x30] sm:$0xff]
        %v2571 = vld [vmem:[%s2563 + $0x38] sm:$0xff]
        %v2572 = vld [vmem:[%s2563 + $0x40] sm:$0xff]
        %v2573 = vld [vmem:[%s2563 + $0x48] sm:$0xff]
        %v2574 = vld [vmem:[%s2563 + $0x50] sm:$0xff]
        %v2575 = vld [vmem:[%s2563 + $0x58] sm:$0xff]
        %v2576 = vld [vmem:[%s2563 + $0x60] sm:$0xff]
        %v2577 = vld [vmem:[%s2563 + $0x68] sm:$0xff]
        %v2578 = vld [vmem:[%s2563 + $0x70] sm:$0xff]
        %v2579 = vld [vmem:[%s2563 + $0x78] sm:$0xff]
        %v2580 = vrot.slane %v1573, 3
        %2582 = vmatprep.subr.mxu0 0.0
        %2583 = vmatpush1.msra.mxu0 %v2564
        %2584 = vmatprep.subr.mxu0 0.0
        %2585 = vmatpush1.msra.mxu0 %v2565
        %2586 = vmatprep.subr.mxu0 0.0
        %2587 = vmatpush1.msra.mxu0 %v2566
        %2588 = vmatprep.subr.mxu0 0.0
        %2589 = vmatpush1.msra.mxu0 %v2567
        %2590 = vmatprep.subr.mxu0 0.0
        %2591 = vmatpush1.msra.mxu0 %v2568
        %2592 = vmatprep.subr.mxu0 0.0
        %2593 = vmatpush1.msra.mxu0 %v2569
        %2594 = vmatprep.subr.mxu0 0.0
        %2595 = vmatpush1.msra.mxu0 %v2570
        %2596 = vmatprep.subr.mxu0 0.0
        %2597 = vmatpush1.msra.mxu0 %v2571
        %2598 = vmatprep.subr.mxu0 0.0
        %2599 = vmatpush1.msra.mxu0 %v2572
        %2600 = vmatprep.subr.mxu0 0.0
        %2601 = vmatpush1.msra.mxu0 %v2573
        %2602 = vmatprep.subr.mxu0 0.0
        %2603 = vmatpush1.msra.mxu0 %v2574
        %2604 = vmatprep.subr.mxu0 0.0
        %2605 = vmatpush1.msra.mxu0 %v2575
        %2606 = vmatprep.subr.mxu0 0.0
        %2607 = vmatpush1.msra.mxu0 %v2576
        %2608 = vmatprep.subr.mxu0 0.0
        %2609 = vmatpush1.msra.mxu0 %v2577
        %2610 = vmatprep.subr.mxu0 0.0
        %2611 = vmatpush1.msra.mxu0 %v2578
        %2612 = vmatprep.subr.mxu0 0.0
        %2613 = vmatpush1.msra.mxu0 %v2579
        %2614 = vmatprep.subr.mxu0 0.0
        %2615 = vmatpush1.msra.mxu0 0.0
        %2616 = vmatprep.subr.mxu0 0.0
        %2617 = vmatpush1.msra.mxu0 0.0
        %2618 = vmatprep.subr.mxu0 0.0
        %2619 = vmatpush1.msra.mxu0 0.0
        %2620 = vmatprep.subr.mxu0 0.0
        %2621 = vmatpush1.msra.mxu0 0.0
        %2622 = vmatprep.subr.mxu0 0.0
        %2623 = vmatpush1.msra.mxu0 0.0
        %2624 = vmatprep.subr.mxu0 0.0
        %2625 = vmatpush1.msra.mxu0 0.0
        %2626 = vmatprep.subr.mxu0 0.0
        %2627 = vmatpush1.msra.mxu0 0.0
        %2628 = vmatprep.subr.mxu0 0.0
        %2629 = vmatpush1.msra.mxu0 0.0
        %2630 = vmatprep.subr.mxu0 0.0
        %2631 = vmatpush1.msra.mxu0 0.0
        %2632 = vmatprep.subr.mxu0 0.0
        %2633 = vmatpush1.msra.mxu0 0.0
        %2634 = vmatprep.subr.mxu0 0.0
        %2635 = vmatpush1.msra.mxu0 0.0
        %2636 = vmatprep.subr.mxu0 0.0
        %2637 = vmatpush1.msra.mxu0 0.0
        %2638 = vmatprep.subr.mxu0 0.0
        %2639 = vmatpush1.msra.mxu0 0.0
        %2640 = vmatprep.subr.mxu0 0.0
        %2641 = vmatpush1.msra.mxu0 0.0
        %2642 = vmatprep.subr.mxu0 0.0
        %2643 = vmatpush1.msra.mxu0 0.0
        %2644 = vmatprep.subr.mxu0 0.0
        %2645 = vmatpush1.msra.mxu0 0.0
        %2646 = vmatprep.mubr.f32.mxu0 0.0
        %2647 = vmatmul.mubr.f32.gmra.mrb[0].mxu0 %v2580
        %v2648 = vpop.f32.mrb[0].mxu0
        %v2649 = vadd.f32 0.0, %v2648
        %v2650 = vpop.f32.mrb[0].mxu0
        %2651 = vdwg.mxu0
        %v2652 = vadd.f32 %v2562, %v2649
        %s2653 = scalar_lea.vmem [#allocation13], 1536
        %v2654 = vld [vmem:[%s2653] sm:$0xff]
        %v2655 = vld [vmem:[%s2653 + $0x8] sm:$0xff]
        %v2656 = vld [vmem:[%s2653 + $0x10] sm:$0xff]
        %v2657 = vld [vmem:[%s2653 + $0x18] sm:$0xff]
        %v2658 = vld [vmem:[%s2653 + $0x20] sm:$0xff]
        %v2659 = vld [vmem:[%s2653 + $0x28] sm:$0xff]
        %v2660 = vld [vmem:[%s2653 + $0x30] sm:$0xff]
        %v2661 = vld [vmem:[%s2653 + $0x38] sm:$0xff]
        %v2662 = vld [vmem:[%s2653 + $0x40] sm:$0xff]
        %v2663 = vld [vmem:[%s2653 + $0x48] sm:$0xff]
        %v2664 = vld [vmem:[%s2653 + $0x50] sm:$0xff]
        %v2665 = vld [vmem:[%s2653 + $0x58] sm:$0xff]
        %v2666 = vld [vmem:[%s2653 + $0x60] sm:$0xff]
        %v2667 = vld [vmem:[%s2653 + $0x68] sm:$0xff]
        %v2668 = vld [vmem:[%s2653 + $0x70] sm:$0xff]
        %v2669 = vld [vmem:[%s2653 + $0x78] sm:$0xff]
        %v2670 = vrot.slane %v1573, 4
        %2672 = vmatprep.subr.mxu0 0.0
        %2673 = vmatpush1.msra.mxu0 %v2654
        %2674 = vmatprep.subr.mxu0 0.0
        %2675 = vmatpush1.msra.mxu0 %v2655
        %2676 = vmatprep.subr.mxu0 0.0
        %2677 = vmatpush1.msra.mxu0 %v2656
        %2678 = vmatprep.subr.mxu0 0.0
        %2679 = vmatpush1.msra.mxu0 %v2657
        %2680 = vmatprep.subr.mxu0 0.0
        %2681 = vmatpush1.msra.mxu0 %v2658
        %2682 = vmatprep.subr.mxu0 0.0
        %2683 = vmatpush1.msra.mxu0 %v2659
        %2684 = vmatprep.subr.mxu0 0.0
        %2685 = vmatpush1.msra.mxu0 %v2660
        %2686 = vmatprep.subr.mxu0 0.0
        %2687 = vmatpush1.msra.mxu0 %v2661
        %2688 = vmatprep.subr.mxu0 0.0
        %2689 = vmatpush1.msra.mxu0 %v2662
        %2690 = vmatprep.subr.mxu0 0.0
        %2691 = vmatpush1.msra.mxu0 %v2663
        %2692 = vmatprep.subr.mxu0 0.0
        %2693 = vmatpush1.msra.mxu0 %v2664
        %2694 = vmatprep.subr.mxu0 0.0
        %2695 = vmatpush1.msra.mxu0 %v2665
        %2696 = vmatprep.subr.mxu0 0.0
        %2697 = vmatpush1.msra.mxu0 %v2666
        %2698 = vmatprep.subr.mxu0 0.0
        %2699 = vmatpush1.msra.mxu0 %v2667
        %2700 = vmatprep.subr.mxu0 0.0
        %2701 = vmatpush1.msra.mxu0 %v2668
        %2702 = vmatprep.subr.mxu0 0.0
        %2703 = vmatpush1.msra.mxu0 %v2669
        %2704 = vmatprep.subr.mxu0 0.0
        %2705 = vmatpush1.msra.mxu0 0.0
        %2706 = vmatprep.subr.mxu0 0.0
        %2707 = vmatpush1.msra.mxu0 0.0
        %2708 = vmatprep.subr.mxu0 0.0
        %2709 = vmatpush1.msra.mxu0 0.0
        %2710 = vmatprep.subr.mxu0 0.0
        %2711 = vmatpush1.msra.mxu0 0.0
        %2712 = vmatprep.subr.mxu0 0.0
        %2713 = vmatpush1.msra.mxu0 0.0
        %2714 = vmatprep.subr.mxu0 0.0
        %2715 = vmatpush1.msra.mxu0 0.0
        %2716 = vmatprep.subr.mxu0 0.0
        %2717 = vmatpush1.msra.mxu0 0.0
        %2718 = vmatprep.subr.mxu0 0.0
        %2719 = vmatpush1.msra.mxu0 0.0
        %2720 = vmatprep.subr.mxu0 0.0
        %2721 = vmatpush1.msra.mxu0 0.0
        %2722 = vmatprep.subr.mxu0 0.0
        %2723 = vmatpush1.msra.mxu0 0.0
        %2724 = vmatprep.subr.mxu0 0.0
        %2725 = vmatpush1.msra.mxu0 0.0
        %2726 = vmatprep.subr.mxu0 0.0
        %2727 = vmatpush1.msra.mxu0 0.0
        %2728 = vmatprep.subr.mxu0 0.0
        %2729 = vmatpush1.msra.mxu0 0.0
        %2730 = vmatprep.subr.mxu0 0.0
        %2731 = vmatpush1.msra.mxu0 0.0
        %2732 = vmatprep.subr.mxu0 0.0
        %2733 = vmatpush1.msra.mxu0 0.0
        %2734 = vmatprep.subr.mxu0 0.0
        %2735 = vmatpush1.msra.mxu0 0.0
        %2736 = vmatprep.mubr.f32.mxu0 0.0
        %2737 = vmatmul.mubr.f32.gmra.mrb[0].mxu0 %v2670
        %v2738 = vpop.f32.mrb[0].mxu0
        %v2739 = vadd.f32 0.0, %v2738
        %v2740 = vpop.f32.mrb[0].mxu0
        %2741 = vdwg.mxu0
        %v2742 = vadd.f32 %v2652, %v2739
        %s2743 = scalar_lea.vmem [#allocation13], 1664
        %v2744 = vld [vmem:[%s2743] sm:$0xff]
        %v2745 = vld [vmem:[%s2743 + $0x8] sm:$0xff]
        %v2746 = vld [vmem:[%s2743 + $0x10] sm:$0xff]
        %v2747 = vld [vmem:[%s2743 + $0x18] sm:$0xff]
        %v2748 = vld [vmem:[%s2743 + $0x20] sm:$0xff]
        %v2749 = vld [vmem:[%s2743 + $0x28] sm:$0xff]
        %v2750 = vld [vmem:[%s2743 + $0x30] sm:$0xff]
        %v2751 = vld [vmem:[%s2743 + $0x38] sm:$0xff]
        %v2752 = vld [vmem:[%s2743 + $0x40] sm:$0xff]
        %v2753 = vld [vmem:[%s2743 + $0x48] sm:$0xff]
        %v2754 = vld [vmem:[%s2743 + $0x50] sm:$0xff]
        %v2755 = vld [vmem:[%s2743 + $0x58] sm:$0xff]
        %v2756 = vld [vmem:[%s2743 + $0x60] sm:$0xff]
        %v2757 = vld [vmem:[%s2743 + $0x68] sm:$0xff]
        %v2758 = vld [vmem:[%s2743 + $0x70] sm:$0xff]
        %v2759 = vld [vmem:[%s2743 + $0x78] sm:$0xff]
        %v2760 = vrot.slane %v1573, 5
        %2762 = vmatprep.subr.mxu0 0.0
        %2763 = vmatpush1.msra.mxu0 %v2744
        %2764 = vmatprep.subr.mxu0 0.0
        %2765 = vmatpush1.msra.mxu0 %v2745
        %2766 = vmatprep.subr.mxu0 0.0
        %2767 = vmatpush1.msra.mxu0 %v2746
        %2768 = vmatprep.subr.mxu0 0.0
        %2769 = vmatpush1.msra.mxu0 %v2747
        %2770 = vmatprep.subr.mxu0 0.0
        %2771 = vmatpush1.msra.mxu0 %v2748
        %2772 = vmatprep.subr.mxu0 0.0
        %2773 = vmatpush1.msra.mxu0 %v2749
        %2774 = vmatprep.subr.mxu0 0.0
        %2775 = vmatpush1.msra.mxu0 %v2750
        %2776 = vmatprep.subr.mxu0 0.0
        %2777 = vmatpush1.msra.mxu0 %v2751
        %2778 = vmatprep.subr.mxu0 0.0
        %2779 = vmatpush1.msra.mxu0 %v2752
        %2780 = vmatprep.subr.mxu0 0.0
        %2781 = vmatpush1.msra.mxu0 %v2753
        %2782 = vmatprep.subr.mxu0 0.0
        %2783 = vmatpush1.msra.mxu0 %v2754
        %2784 = vmatprep.subr.mxu0 0.0
        %2785 = vmatpush1.msra.mxu0 %v2755
        %2786 = vmatprep.subr.mxu0 0.0
        %2787 = vmatpush1.msra.mxu0 %v2756
        %2788 = vmatprep.subr.mxu0 0.0
        %2789 = vmatpush1.msra.mxu0 %v2757
        %2790 = vmatprep.subr.mxu0 0.0
        %2791 = vmatpush1.msra.mxu0 %v2758
        %2792 = vmatprep.subr.mxu0 0.0
        %2793 = vmatpush1.msra.mxu0 %v2759
        %2794 = vmatprep.subr.mxu0 0.0
        %2795 = vmatpush1.msra.mxu0 0.0
        %2796 = vmatprep.subr.mxu0 0.0
        %2797 = vmatpush1.msra.mxu0 0.0
        %2798 = vmatprep.subr.mxu0 0.0
        %2799 = vmatpush1.msra.mxu0 0.0
        %2800 = vmatprep.subr.mxu0 0.0
        %2801 = vmatpush1.msra.mxu0 0.0
        %2802 = vmatprep.subr.mxu0 0.0
        %2803 = vmatpush1.msra.mxu0 0.0
        %2804 = vmatprep.subr.mxu0 0.0
        %2805 = vmatpush1.msra.mxu0 0.0
        %2806 = vmatprep.subr.mxu0 0.0
        %2807 = vmatpush1.msra.mxu0 0.0
        %2808 = vmatprep.subr.mxu0 0.0
        %2809 = vmatpush1.msra.mxu0 0.0
        %2810 = vmatprep.subr.mxu0 0.0
        %2811 = vmatpush1.msra.mxu0 0.0
        %2812 = vmatprep.subr.mxu0 0.0
        %2813 = vmatpush1.msra.mxu0 0.0
        %2814 = vmatprep.subr.mxu0 0.0
        %2815 = vmatpush1.msra.mxu0 0.0
        %2816 = vmatprep.subr.mxu0 0.0
        %2817 = vmatpush1.msra.mxu0 0.0
        %2818 = vmatprep.subr.mxu0 0.0
        %2819 = vmatpush1.msra.mxu0 0.0
        %2820 = vmatprep.subr.mxu0 0.0
        %2821 = vmatpush1.msra.mxu0 0.0
        %2822 = vmatprep.subr.mxu0 0.0
        %2823 = vmatpush1.msra.mxu0 0.0
        %2824 = vmatprep.subr.mxu0 0.0
        %2825 = vmatpush1.msra.mxu0 0.0
        %2826 = vmatprep.mubr.f32.mxu0 0.0
        %2827 = vmatmul.mubr.f32.gmra.mrb[0].mxu0 %v2760
        %v2828 = vpop.f32.mrb[0].mxu0
        %v2829 = vadd.f32 0.0, %v2828
        %v2830 = vpop.f32.mrb[0].mxu0
        %2831 = vdwg.mxu0
        %v2832 = vadd.f32 %v2742, %v2829
        %s2833 = scalar_lea.vmem [#allocation13], 1792
        %v2834 = vld [vmem:[%s2833] sm:$0xff]
        %v2835 = vld [vmem:[%s2833 + $0x8] sm:$0xff]
        %v2836 = vld [vmem:[%s2833 + $0x10] sm:$0xff]
        %v2837 = vld [vmem:[%s2833 + $0x18] sm:$0xff]
        %v2838 = vld [vmem:[%s2833 + $0x20] sm:$0xff]
        %v2839 = vld [vmem:[%s2833 + $0x28] sm:$0xff]
        %v2840 = vld [vmem:[%s2833 + $0x30] sm:$0xff]
        %v2841 = vld [vmem:[%s2833 + $0x38] sm:$0xff]
        %v2842 = vld [vmem:[%s2833 + $0x40] sm:$0xff]
        %v2843 = vld [vmem:[%s2833 + $0x48] sm:$0xff]
        %v2844 = vld [vmem:[%s2833 + $0x50] sm:$0xff]
        %v2845 = vld [vmem:[%s2833 + $0x58] sm:$0xff]
        %v2846 = vld [vmem:[%s2833 + $0x60] sm:$0xff]
        %v2847 = vld [vmem:[%s2833 + $0x68] sm:$0xff]
        %v2848 = vld [vmem:[%s2833 + $0x70] sm:$0xff]
        %v2849 = vld [vmem:[%s2833 + $0x78] sm:$0xff]
        %v2850 = vrot.slane %v1573, 6
        %2852 = vmatprep.subr.mxu0 0.0
        %2853 = vmatpush1.msra.mxu0 %v2834
        %2854 = vmatprep.subr.mxu0 0.0
        %2855 = vmatpush1.msra.mxu0 %v2835
        %2856 = vmatprep.subr.mxu0 0.0
        %2857 = vmatpush1.msra.mxu0 %v2836
        %2858 = vmatprep.subr.mxu0 0.0
        %2859 = vmatpush1.msra.mxu0 %v2837
        %2860 = vmatprep.subr.mxu0 0.0
        %2861 = vmatpush1.msra.mxu0 %v2838
        %2862 = vmatprep.subr.mxu0 0.0
        %2863 = vmatpush1.msra.mxu0 %v2839
        %2864 = vmatprep.subr.mxu0 0.0
        %2865 = vmatpush1.msra.mxu0 %v2840
        %2866 = vmatprep.subr.mxu0 0.0
        %2867 = vmatpush1.msra.mxu0 %v2841
        %2868 = vmatprep.subr.mxu0 0.0
        %2869 = vmatpush1.msra.mxu0 %v2842
        %2870 = vmatprep.subr.mxu0 0.0
        %2871 = vmatpush1.msra.mxu0 %v2843
        %2872 = vmatprep.subr.mxu0 0.0
        %2873 = vmatpush1.msra.mxu0 %v2844
        %2874 = vmatprep.subr.mxu0 0.0
        %2875 = vmatpush1.msra.mxu0 %v2845
        %2876 = vmatprep.subr.mxu0 0.0
        %2877 = vmatpush1.msra.mxu0 %v2846
        %2878 = vmatprep.subr.mxu0 0.0
        %2879 = vmatpush1.msra.mxu0 %v2847
        %2880 = vmatprep.subr.mxu0 0.0
        %2881 = vmatpush1.msra.mxu0 %v2848
        %2882 = vmatprep.subr.mxu0 0.0
        %2883 = vmatpush1.msra.mxu0 %v2849
        %2884 = vmatprep.subr.mxu0 0.0
        %2885 = vmatpush1.msra.mxu0 0.0
        %2886 = vmatprep.subr.mxu0 0.0
        %2887 = vmatpush1.msra.mxu0 0.0
        %2888 = vmatprep.subr.mxu0 0.0
        %2889 = vmatpush1.msra.mxu0 0.0
        %2890 = vmatprep.subr.mxu0 0.0
        %2891 = vmatpush1.msra.mxu0 0.0
        %2892 = vmatprep.subr.mxu0 0.0
        %2893 = vmatpush1.msra.mxu0 0.0
        %2894 = vmatprep.subr.mxu0 0.0
        %2895 = vmatpush1.msra.mxu0 0.0
        %2896 = vmatprep.subr.mxu0 0.0
        %2897 = vmatpush1.msra.mxu0 0.0
        %2898 = vmatprep.subr.mxu0 0.0
        %2899 = vmatpush1.msra.mxu0 0.0
        %2900 = vmatprep.subr.mxu0 0.0
        %2901 = vmatpush1.msra.mxu0 0.0
        %2902 = vmatprep.subr.mxu0 0.0
        %2903 = vmatpush1.msra.mxu0 0.0
        %2904 = vmatprep.subr.mxu0 0.0
        %2905 = vmatpush1.msra.mxu0 0.0
        %2906 = vmatprep.subr.mxu0 0.0
        %2907 = vmatpush1.msra.mxu0 0.0
        %2908 = vmatprep.subr.mxu0 0.0
        %2909 = vmatpush1.msra.mxu0 0.0
        %2910 = vmatprep.subr.mxu0 0.0
        %2911 = vmatpush1.msra.mxu0 0.0
        %2912 = vmatprep.subr.mxu0 0.0
        %2913 = vmatpush1.msra.mxu0 0.0
        %2914 = vmatprep.subr.mxu0 0.0
        %2915 = vmatpush1.msra.mxu0 0.0
        %2916 = vmatprep.mubr.f32.mxu0 0.0
        %2917 = vmatmul.mubr.f32.gmra.mrb[0].mxu0 %v2850
        %v2918 = vpop.f32.mrb[0].mxu0
        %v2919 = vadd.f32 0.0, %v2918
        %v2920 = vpop.f32.mrb[0].mxu0
        %2921 = vdwg.mxu0
        %v2922 = vadd.f32 %v2832, %v2919
        %s2923 = scalar_lea.vmem [#allocation13], 1920
        %v2924 = vld [vmem:[%s2923] sm:$0xff]
        %v2925 = vld [vmem:[%s2923 + $0x8] sm:$0xff]
        %v2926 = vld [vmem:[%s2923 + $0x10] sm:$0xff]
        %v2927 = vld [vmem:[%s2923 + $0x18] sm:$0xff]
        %v2928 = vld [vmem:[%s2923 + $0x20] sm:$0xff]
        %v2929 = vld [vmem:[%s2923 + $0x28] sm:$0xff]
        %v2930 = vld [vmem:[%s2923 + $0x30] sm:$0xff]
        %v2931 = vld [vmem:[%s2923 + $0x38] sm:$0xff]
        %v2932 = vld [vmem:[%s2923 + $0x40] sm:$0xff]
        %v2933 = vld [vmem:[%s2923 + $0x48] sm:$0xff]
        %v2934 = vld [vmem:[%s2923 + $0x50] sm:$0xff]
        %v2935 = vld [vmem:[%s2923 + $0x58] sm:$0xff]
        %v2936 = vld [vmem:[%s2923 + $0x60] sm:$0xff]
        %v2937 = vld [vmem:[%s2923 + $0x68] sm:$0xff]
        %v2938 = vld [vmem:[%s2923 + $0x70] sm:$0xff]
        %v2939 = vld [vmem:[%s2923 + $0x78] sm:$0xff]
        %v2940 = vrot.slane %v1573, 7
        %2942 = vmatprep.subr.mxu0 0.0
        %2943 = vmatpush1.msra.mxu0 %v2924
        %2944 = vmatprep.subr.mxu0 0.0
        %2945 = vmatpush1.msra.mxu0 %v2925
        %2946 = vmatprep.subr.mxu0 0.0
        %2947 = vmatpush1.msra.mxu0 %v2926
        %2948 = vmatprep.subr.mxu0 0.0
        %2949 = vmatpush1.msra.mxu0 %v2927
        %2950 = vmatprep.subr.mxu0 0.0
        %2951 = vmatpush1.msra.mxu0 %v2928
        %2952 = vmatprep.subr.mxu0 0.0
        %2953 = vmatpush1.msra.mxu0 %v2929
        %2954 = vmatprep.subr.mxu0 0.0
        %2955 = vmatpush1.msra.mxu0 %v2930
        %2956 = vmatprep.subr.mxu0 0.0
        %2957 = vmatpush1.msra.mxu0 %v2931
        %2958 = vmatprep.subr.mxu0 0.0
        %2959 = vmatpush1.msra.mxu0 %v2932
        %2960 = vmatprep.subr.mxu0 0.0
        %2961 = vmatpush1.msra.mxu0 %v2933
        %2962 = vmatprep.subr.mxu0 0.0
        %2963 = vmatpush1.msra.mxu0 %v2934
        %2964 = vmatprep.subr.mxu0 0.0
        %2965 = vmatpush1.msra.mxu0 %v2935
        %2966 = vmatprep.subr.mxu0 0.0
        %2967 = vmatpush1.msra.mxu0 %v2936
        %2968 = vmatprep.subr.mxu0 0.0
        %2969 = vmatpush1.msra.mxu0 %v2937
        %2970 = vmatprep.subr.mxu0 0.0
        %2971 = vmatpush1.msra.mxu0 %v2938
        %2972 = vmatprep.subr.mxu0 0.0
        %2973 = vmatpush1.msra.mxu0 %v2939
        %2974 = vmatprep.subr.mxu0 0.0
        %2975 = vmatpush1.msra.mxu0 0.0
        %2976 = vmatprep.subr.mxu0 0.0
        %2977 = vmatpush1.msra.mxu0 0.0
        %2978 = vmatprep.subr.mxu0 0.0
        %2979 = vmatpush1.msra.mxu0 0.0
        %2980 = vmatprep.subr.mxu0 0.0
        %2981 = vmatpush1.msra.mxu0 0.0
        %2982 = vmatprep.subr.mxu0 0.0
        %2983 = vmatpush1.msra.mxu0 0.0
        %2984 = vmatprep.subr.mxu0 0.0
        %2985 = vmatpush1.msra.mxu0 0.0
        %2986 = vmatprep.subr.mxu0 0.0
        %2987 = vmatpush1.msra.mxu0 0.0
        %2988 = vmatprep.subr.mxu0 0.0
        %2989 = vmatpush1.msra.mxu0 0.0
        %2990 = vmatprep.subr.mxu0 0.0
        %2991 = vmatpush1.msra.mxu0 0.0
        %2992 = vmatprep.subr.mxu0 0.0
        %2993 = vmatpush1.msra.mxu0 0.0
        %2994 = vmatprep.subr.mxu0 0.0
        %2995 = vmatpush1.msra.mxu0 0.0
        %2996 = vmatprep.subr.mxu0 0.0
        %2997 = vmatpush1.msra.mxu0 0.0
        %2998 = vmatprep.subr.mxu0 0.0
        %2999 = vmatpush1.msra.mxu0 0.0
        %3000 = vmatprep.subr.mxu0 0.0
        %3001 = vmatpush1.msra.mxu0 0.0
        %3002 = vmatprep.subr.mxu0 0.0
        %3003 = vmatpush1.msra.mxu0 0.0
        %3004 = vmatprep.subr.mxu0 0.0
        %3005 = vmatpush1.msra.mxu0 0.0
        %3006 = vmatprep.mubr.f32.mxu0 0.0
        %3007 = vmatmul.mubr.f32.gmra.mrb[0].mxu0 %v2940
        %v3008 = vpop.f32.mrb[0].mxu0
        %v3009 = vadd.f32 0.0, %v3008
        %v3010 = vpop.f32.mrb[0].mxu0
        %3011 = vdwg.mxu0
        %v3012 = vadd.f32 %v2922, %v3009
        %s3013 = scalar_lea.vmem [#allocation13], 2048
        %v3014 = vld [vmem:[%s3013] sm:$0xff]
        %v3015 = vld [vmem:[%s3013 + $0x8] sm:$0xff]
        %v3016 = vld [vmem:[%s3013 + $0x10] sm:$0xff]
        %v3017 = vld [vmem:[%s3013 + $0x18] sm:$0xff]
        %v3018 = vld [vmem:[%s3013 + $0x20] sm:$0xff]
        %v3019 = vld [vmem:[%s3013 + $0x28] sm:$0xff]
        %v3020 = vld [vmem:[%s3013 + $0x30] sm:$0xff]
        %v3021 = vld [vmem:[%s3013 + $0x38] sm:$0xff]
        %v3022 = vld [vmem:[%s3013 + $0x40] sm:$0xff]
        %v3023 = vld [vmem:[%s3013 + $0x48] sm:$0xff]
        %v3024 = vld [vmem:[%s3013 + $0x50] sm:$0xff]
        %v3025 = vld [vmem:[%s3013 + $0x58] sm:$0xff]
        %v3026 = vld [vmem:[%s3013 + $0x60] sm:$0xff]
        %v3027 = vld [vmem:[%s3013 + $0x68] sm:$0xff]
        %v3028 = vld [vmem:[%s3013 + $0x70] sm:$0xff]
        %v3029 = vld [vmem:[%s3013 + $0x78] sm:$0xff]
        %3030 = vmatprep.subr.mxu0 0.0
        %3031 = vmatpush1.msra.mxu0 %v3014
        %3032 = vmatprep.subr.mxu0 0.0
        %3033 = vmatpush1.msra.mxu0 %v3015
        %3034 = vmatprep.subr.mxu0 0.0
        %3035 = vmatpush1.msra.mxu0 %v3016
        %3036 = vmatprep.subr.mxu0 0.0
        %3037 = vmatpush1.msra.mxu0 %v3017
        %3038 = vmatprep.subr.mxu0 0.0
        %3039 = vmatpush1.msra.mxu0 %v3018
        %3040 = vmatprep.subr.mxu0 0.0
        %3041 = vmatpush1.msra.mxu0 %v3019
        %3042 = vmatprep.subr.mxu0 0.0
        %3043 = vmatpush1.msra.mxu0 %v3020
        %3044 = vmatprep.subr.mxu0 0.0
        %3045 = vmatpush1.msra.mxu0 %v3021
        %3046 = vmatprep.subr.mxu0 0.0
        %3047 = vmatpush1.msra.mxu0 %v3022
        %3048 = vmatprep.subr.mxu0 0.0
        %3049 = vmatpush1.msra.mxu0 %v3023
        %3050 = vmatprep.subr.mxu0 0.0
        %3051 = vmatpush1.msra.mxu0 %v3024
        %3052 = vmatprep.subr.mxu0 0.0
        %3053 = vmatpush1.msra.mxu0 %v3025
        %3054 = vmatprep.subr.mxu0 0.0
        %3055 = vmatpush1.msra.mxu0 %v3026
        %3056 = vmatprep.subr.mxu0 0.0
        %3057 = vmatpush1.msra.mxu0 %v3027
        %3058 = vmatprep.subr.mxu0 0.0
        %3059 = vmatpush1.msra.mxu0 %v3028
        %3060 = vmatprep.subr.mxu0 0.0
        %3061 = vmatpush1.msra.mxu0 %v3029
        %3062 = vmatprep.subr.mxu0 0.0
        %3063 = vmatpush1.msra.mxu0 0.0
        %3064 = vmatprep.subr.mxu0 0.0
        %3065 = vmatpush1.msra.mxu0 0.0
        %3066 = vmatprep.subr.mxu0 0.0
        %3067 = vmatpush1.msra.mxu0 0.0
        %3068 = vmatprep.subr.mxu0 0.0
        %3069 = vmatpush1.msra.mxu0 0.0
        %3070 = vmatprep.subr.mxu0 0.0
        %3071 = vmatpush1.msra.mxu0 0.0
        %3072 = vmatprep.subr.mxu0 0.0
        %3073 = vmatpush1.msra.mxu0 0.0
        %3074 = vmatprep.subr.mxu0 0.0
        %3075 = vmatpush1.msra.mxu0 0.0
        %3076 = vmatprep.subr.mxu0 0.0
        %3077 = vmatpush1.msra.mxu0 0.0
        %3078 = vmatprep.subr.mxu0 0.0
        %3079 = vmatpush1.msra.mxu0 0.0
        %3080 = vmatprep.subr.mxu0 0.0
        %3081 = vmatpush1.msra.mxu0 0.0
        %3082 = vmatprep.subr.mxu0 0.0
        %3083 = vmatpush1.msra.mxu0 0.0
        %3084 = vmatprep.subr.mxu0 0.0
        %3085 = vmatpush1.msra.mxu0 0.0
        %3086 = vmatprep.subr.mxu0 0.0
        %3087 = vmatpush1.msra.mxu0 0.0
        %3088 = vmatprep.subr.mxu0 0.0
        %3089 = vmatpush1.msra.mxu0 0.0
        %3090 = vmatprep.subr.mxu0 0.0
        %3091 = vmatpush1.msra.mxu0 0.0
        %3092 = vmatprep.subr.mxu0 0.0
        %3093 = vmatpush1.msra.mxu0 0.0
        %3094 = vmatprep.mubr.f32.mxu0 0.0
        %3095 = vmatmul.mubr.f32.gmra.mrb[0].mxu0 %v1574
        %v3096 = vpop.f32.mrb[0].mxu0
        %v3097 = vadd.f32 0.0, %v3096
        %v3098 = vpop.f32.mrb[0].mxu0
        %3099 = vdwg.mxu0
        %v3100 = vadd.f32 %v3012, %v3097
        %s3101 = scalar_lea.vmem [#allocation13], 2176
        %v3102 = vld [vmem:[%s3101] sm:$0xff]
        %v3103 = vld [vmem:[%s3101 + $0x8] sm:$0xff]
        %v3104 = vld [vmem:[%s3101 + $0x10] sm:$0xff]
        %v3105 = vld [vmem:[%s3101 + $0x18] sm:$0xff]
        %v3106 = vld [vmem:[%s3101 + $0x20] sm:$0xff]
        %v3107 = vld [vmem:[%s3101 + $0x28] sm:$0xff]
        %v3108 = vld [vmem:[%s3101 + $0x30] sm:$0xff]
        %v3109 = vld [vmem:[%s3101 + $0x38] sm:$0xff]
        %v3110 = vld [vmem:[%s3101 + $0x40] sm:$0xff]
        %v3111 = vld [vmem:[%s3101 + $0x48] sm:$0xff]
        %v3112 = vld [vmem:[%s3101 + $0x50] sm:$0xff]
        %v3113 = vld [vmem:[%s3101 + $0x58] sm:$0xff]
        %v3114 = vld [vmem:[%s3101 + $0x60] sm:$0xff]
        %v3115 = vld [vmem:[%s3101 + $0x68] sm:$0xff]
        %v3116 = vld [vmem:[%s3101 + $0x70] sm:$0xff]
        %v3117 = vld [vmem:[%s3101 + $0x78] sm:$0xff]
        %v3119 = vrot.slane %v1574, 1
        %3121 = vmatprep.subr.mxu0 0.0
        %3122 = vmatpush1.msra.mxu0 %v3102
        %3123 = vmatprep.subr.mxu0 0.0
        %3124 = vmatpush1.msra.mxu0 %v3103
        %3125 = vmatprep.subr.mxu0 0.0
        %3126 = vmatpush1.msra.mxu0 %v3104
        %3127 = vmatprep.subr.mxu0 0.0
        %3128 = vmatpush1.msra.mxu0 %v3105
        %3129 = vmatprep.subr.mxu0 0.0
        %3130 = vmatpush1.msra.mxu0 %v3106
        %3131 = vmatprep.subr.mxu0 0.0
        %3132 = vmatpush1.msra.mxu0 %v3107
        %3133 = vmatprep.subr.mxu0 0.0
        %3134 = vmatpush1.msra.mxu0 %v3108
        %3135 = vmatprep.subr.mxu0 0.0
        %3136 = vmatpush1.msra.mxu0 %v3109
        %3137 = vmatprep.subr.mxu0 0.0
        %3138 = vmatpush1.msra.mxu0 %v3110
        %3139 = vmatprep.subr.mxu0 0.0
        %3140 = vmatpush1.msra.mxu0 %v3111
        %3141 = vmatprep.subr.mxu0 0.0
        %3142 = vmatpush1.msra.mxu0 %v3112
        %3143 = vmatprep.subr.mxu0 0.0
        %3144 = vmatpush1.msra.mxu0 %v3113
        %3145 = vmatprep.subr.mxu0 0.0
        %3146 = vmatpush1.msra.mxu0 %v3114
        %3147 = vmatprep.subr.mxu0 0.0
        %3148 = vmatpush1.msra.mxu0 %v3115
        %3149 = vmatprep.subr.mxu0 0.0
        %3150 = vmatpush1.msra.mxu0 %v3116
        %3151 = vmatprep.subr.mxu0 0.0
        %3152 = vmatpush1.msra.mxu0 %v3117
        %3153 = vmatprep.subr.mxu0 0.0
        %3154 = vmatpush1.msra.mxu0 0.0
        %3155 = vmatprep.subr.mxu0 0.0
        %3156 = vmatpush1.msra.mxu0 0.0
        %3157 = vmatprep.subr.mxu0 0.0
        %3158 = vmatpush1.msra.mxu0 0.0
        %3159 = vmatprep.subr.mxu0 0.0
        %3160 = vmatpush1.msra.mxu0 0.0
        %3161 = vmatprep.subr.mxu0 0.0
        %3162 = vmatpush1.msra.mxu0 0.0
        %3163 = vmatprep.subr.mxu0 0.0
        %3164 = vmatpush1.msra.mxu0 0.0
        %3165 = vmatprep.subr.mxu0 0.0
        %3166 = vmatpush1.msra.mxu0 0.0
        %3167 = vmatprep.subr.mxu0 0.0
        %3168 = vmatpush1.msra.mxu0 0.0
        %3169 = vmatprep.subr.mxu0 0.0
        %3170 = vmatpush1.msra.mxu0 0.0
        %3171 = vmatprep.subr.mxu0 0.0
        %3172 = vmatpush1.msra.mxu0 0.0
        %3173 = vmatprep.subr.mxu0 0.0
        %3174 = vmatpush1.msra.mxu0 0.0
        %3175 = vmatprep.subr.mxu0 0.0
        %3176 = vmatpush1.msra.mxu0 0.0
        %3177 = vmatprep.subr.mxu0 0.0
        %3178 = vmatpush1.msra.mxu0 0.0
        %3179 = vmatprep.subr.mxu0 0.0
        %3180 = vmatpush1.msra.mxu0 0.0
        %3181 = vmatprep.subr.mxu0 0.0
        %3182 = vmatpush1.msra.mxu0 0.0
        %3183 = vmatprep.subr.mxu0 0.0
        %3184 = vmatpush1.msra.mxu0 0.0
        %3185 = vmatprep.mubr.f32.mxu0 0.0
        %3186 = vmatmul.mubr.f32.gmra.mrb[0].mxu0 %v3119
        %v3187 = vpop.f32.mrb[0].mxu0
        %v3188 = vadd.f32 0.0, %v3187
        %v3189 = vpop.f32.mrb[0].mxu0
        %3190 = vdwg.mxu0
        %v3191 = vadd.f32 %v3100, %v3188
        %s3192 = scalar_lea.vmem [#allocation13], 2304
        %v3193 = vld [vmem:[%s3192] sm:$0xff]
        %v3194 = vld [vmem:[%s3192 + $0x8] sm:$0xff]
        %v3195 = vld [vmem:[%s3192 + $0x10] sm:$0xff]
        %v3196 = vld [vmem:[%s3192 + $0x18] sm:$0xff]
        %v3197 = vld [vmem:[%s3192 + $0x20] sm:$0xff]
        %v3198 = vld [vmem:[%s3192 + $0x28] sm:$0xff]
        %v3199 = vld [vmem:[%s3192 + $0x30] sm:$0xff]
        %v3200 = vld [vmem:[%s3192 + $0x38] sm:$0xff]
        %v3201 = vld [vmem:[%s3192 + $0x40] sm:$0xff]
        %v3202 = vld [vmem:[%s3192 + $0x48] sm:$0xff]
        %v3203 = vld [vmem:[%s3192 + $0x50] sm:$0xff]
        %v3204 = vld [vmem:[%s3192 + $0x58] sm:$0xff]
        %v3205 = vld [vmem:[%s3192 + $0x60] sm:$0xff]
        %v3206 = vld [vmem:[%s3192 + $0x68] sm:$0xff]
        %v3207 = vld [vmem:[%s3192 + $0x70] sm:$0xff]
        %v3208 = vld [vmem:[%s3192 + $0x78] sm:$0xff]
        %v3209 = vrot.slane %v1574, 2
        %3211 = vmatprep.subr.mxu0 0.0
        %3212 = vmatpush1.msra.mxu0 %v3193
        %3213 = vmatprep.subr.mxu0 0.0
        %3214 = vmatpush1.msra.mxu0 %v3194
        %3215 = vmatprep.subr.mxu0 0.0
        %3216 = vmatpush1.msra.mxu0 %v3195
        %3217 = vmatprep.subr.mxu0 0.0
        %3218 = vmatpush1.msra.mxu0 %v3196
        %3219 = vmatprep.subr.mxu0 0.0
        %3220 = vmatpush1.msra.mxu0 %v3197
        %3221 = vmatprep.subr.mxu0 0.0
        %3222 = vmatpush1.msra.mxu0 %v3198
        %3223 = vmatprep.subr.mxu0 0.0
        %3224 = vmatpush1.msra.mxu0 %v3199
        %3225 = vmatprep.subr.mxu0 0.0
        %3226 = vmatpush1.msra.mxu0 %v3200
        %3227 = vmatprep.subr.mxu0 0.0
        %3228 = vmatpush1.msra.mxu0 %v3201
        %3229 = vmatprep.subr.mxu0 0.0
        %3230 = vmatpush1.msra.mxu0 %v3202
        %3231 = vmatprep.subr.mxu0 0.0
        %3232 = vmatpush1.msra.mxu0 %v3203
        %3233 = vmatprep.subr.mxu0 0.0
        %3234 = vmatpush1.msra.mxu0 %v3204
        %3235 = vmatprep.subr.mxu0 0.0
        %3236 = vmatpush1.msra.mxu0 %v3205
        %3237 = vmatprep.subr.mxu0 0.0
        %3238 = vmatpush1.msra.mxu0 %v3206
        %3239 = vmatprep.subr.mxu0 0.0
        %3240 = vmatpush1.msra.mxu0 %v3207
        %3241 = vmatprep.subr.mxu0 0.0
        %3242 = vmatpush1.msra.mxu0 %v3208
        %3243 = vmatprep.subr.mxu0 0.0
        %3244 = vmatpush1.msra.mxu0 0.0
        %3245 = vmatprep.subr.mxu0 0.0
        %3246 = vmatpush1.msra.mxu0 0.0
        %3247 = vmatprep.subr.mxu0 0.0
        %3248 = vmatpush1.msra.mxu0 0.0
        %3249 = vmatprep.subr.mxu0 0.0
        %3250 = vmatpush1.msra.mxu0 0.0
        %3251 = vmatprep.subr.mxu0 0.0
        %3252 = vmatpush1.msra.mxu0 0.0
        %3253 = vmatprep.subr.mxu0 0.0
        %3254 = vmatpush1.msra.mxu0 0.0
        %3255 = vmatprep.subr.mxu0 0.0
        %3256 = vmatpush1.msra.mxu0 0.0
        %3257 = vmatprep.subr.mxu0 0.0
        %3258 = vmatpush1.msra.mxu0 0.0
        %3259 = vmatprep.subr.mxu0 0.0
        %3260 = vmatpush1.msra.mxu0 0.0
        %3261 = vmatprep.subr.mxu0 0.0
        %3262 = vmatpush1.msra.mxu0 0.0
        %3263 = vmatprep.subr.mxu0 0.0
        %3264 = vmatpush1.msra.mxu0 0.0
        %3265 = vmatprep.subr.mxu0 0.0
        %3266 = vmatpush1.msra.mxu0 0.0
        %3267 = vmatprep.subr.mxu0 0.0
        %3268 = vmatpush1.msra.mxu0 0.0
        %3269 = vmatprep.subr.mxu0 0.0
        %3270 = vmatpush1.msra.mxu0 0.0
        %3271 = vmatprep.subr.mxu0 0.0
        %3272 = vmatpush1.msra.mxu0 0.0
        %3273 = vmatprep.subr.mxu0 0.0
        %3274 = vmatpush1.msra.mxu0 0.0
        %3275 = vmatprep.mubr.f32.mxu0 0.0
        %3276 = vmatmul.mubr.f32.gmra.mrb[0].mxu0 %v3209
        %v3277 = vpop.f32.mrb[0].mxu0
        %v3278 = vadd.f32 0.0, %v3277
        %v3279 = vpop.f32.mrb[0].mxu0
        %3280 = vdwg.mxu0
        %v3281 = vadd.f32 %v3191, %v3278
        %s3282 = scalar_lea.vmem [#allocation13], 2432
        %v3283 = vld [vmem:[%s3282] sm:$0xff]
        %v3284 = vld [vmem:[%s3282 + $0x8] sm:$0xff]
        %v3285 = vld [vmem:[%s3282 + $0x10] sm:$0xff]
        %v3286 = vld [vmem:[%s3282 + $0x18] sm:$0xff]
        %v3287 = vld [vmem:[%s3282 + $0x20] sm:$0xff]
        %v3288 = vld [vmem:[%s3282 + $0x28] sm:$0xff]
        %v3289 = vld [vmem:[%s3282 + $0x30] sm:$0xff]
        %v3290 = vld [vmem:[%s3282 + $0x38] sm:$0xff]
        %v3291 = vld [vmem:[%s3282 + $0x40] sm:$0xff]
        %v3292 = vld [vmem:[%s3282 + $0x48] sm:$0xff]
        %v3293 = vld [vmem:[%s3282 + $0x50] sm:$0xff]
        %v3294 = vld [vmem:[%s3282 + $0x58] sm:$0xff]
        %v3295 = vld [vmem:[%s3282 + $0x60] sm:$0xff]
        %v3296 = vld [vmem:[%s3282 + $0x68] sm:$0xff]
        %v3297 = vld [vmem:[%s3282 + $0x70] sm:$0xff]
        %v3298 = vld [vmem:[%s3282 + $0x78] sm:$0xff]
        %v3299 = vrot.slane %v1574, 3
        %3301 = vmatprep.subr.mxu0 0.0
        %3302 = vmatpush1.msra.mxu0 %v3283
        %3303 = vmatprep.subr.mxu0 0.0
        %3304 = vmatpush1.msra.mxu0 %v3284
        %3305 = vmatprep.subr.mxu0 0.0
        %3306 = vmatpush1.msra.mxu0 %v3285
        %3307 = vmatprep.subr.mxu0 0.0
        %3308 = vmatpush1.msra.mxu0 %v3286
        %3309 = vmatprep.subr.mxu0 0.0
        %3310 = vmatpush1.msra.mxu0 %v3287
        %3311 = vmatprep.subr.mxu0 0.0
        %3312 = vmatpush1.msra.mxu0 %v3288
        %3313 = vmatprep.subr.mxu0 0.0
        %3314 = vmatpush1.msra.mxu0 %v3289
        %3315 = vmatprep.subr.mxu0 0.0
        %3316 = vmatpush1.msra.mxu0 %v3290
        %3317 = vmatprep.subr.mxu0 0.0
        %3318 = vmatpush1.msra.mxu0 %v3291
        %3319 = vmatprep.subr.mxu0 0.0
        %3320 = vmatpush1.msra.mxu0 %v3292
        %3321 = vmatprep.subr.mxu0 0.0
        %3322 = vmatpush1.msra.mxu0 %v3293
        %3323 = vmatprep.subr.mxu0 0.0
        %3324 = vmatpush1.msra.mxu0 %v3294
        %3325 = vmatprep.subr.mxu0 0.0
        %3326 = vmatpush1.msra.mxu0 %v3295
        %3327 = vmatprep.subr.mxu0 0.0
        %3328 = vmatpush1.msra.mxu0 %v3296
        %3329 = vmatprep.subr.mxu0 0.0
        %3330 = vmatpush1.msra.mxu0 %v3297
        %3331 = vmatprep.subr.mxu0 0.0
        %3332 = vmatpush1.msra.mxu0 %v3298
        %3333 = vmatprep.subr.mxu0 0.0
        %3334 = vmatpush1.msra.mxu0 0.0
        %3335 = vmatprep.subr.mxu0 0.0
        %3336 = vmatpush1.msra.mxu0 0.0
        %3337 = vmatprep.subr.mxu0 0.0
        %3338 = vmatpush1.msra.mxu0 0.0
        %3339 = vmatprep.subr.mxu0 0.0
        %3340 = vmatpush1.msra.mxu0 0.0
        %3341 = vmatprep.subr.mxu0 0.0
        %3342 = vmatpush1.msra.mxu0 0.0
        %3343 = vmatprep.subr.mxu0 0.0
        %3344 = vmatpush1.msra.mxu0 0.0
        %3345 = vmatprep.subr.mxu0 0.0
        %3346 = vmatpush1.msra.mxu0 0.0
        %3347 = vmatprep.subr.mxu0 0.0
        %3348 = vmatpush1.msra.mxu0 0.0
        %3349 = vmatprep.subr.mxu0 0.0
        %3350 = vmatpush1.msra.mxu0 0.0
        %3351 = vmatprep.subr.mxu0 0.0
        %3352 = vmatpush1.msra.mxu0 0.0
        %3353 = vmatprep.subr.mxu0 0.0
        %3354 = vmatpush1.msra.mxu0 0.0
        %3355 = vmatprep.subr.mxu0 0.0
        %3356 = vmatpush1.msra.mxu0 0.0
        %3357 = vmatprep.subr.mxu0 0.0
        %3358 = vmatpush1.msra.mxu0 0.0
        %3359 = vmatprep.subr.mxu0 0.0
        %3360 = vmatpush1.msra.mxu0 0.0
        %3361 = vmatprep.subr.mxu0 0.0
        %3362 = vmatpush1.msra.mxu0 0.0
        %3363 = vmatprep.subr.mxu0 0.0
        %3364 = vmatpush1.msra.mxu0 0.0
        %3365 = vmatprep.mubr.f32.mxu0 0.0
        %3366 = vmatmul.mubr.f32.gmra.mrb[0].mxu0 %v3299
        %v3367 = vpop.f32.mrb[0].mxu0
        %v3368 = vadd.f32 0.0, %v3367
        %v3369 = vpop.f32.mrb[0].mxu0
        %3370 = vdwg.mxu0
        %v3371 = vadd.f32 %v3281, %v3368
        %s3372 = scalar_lea.vmem [#allocation13], 2560
        %v3373 = vld [vmem:[%s3372] sm:$0xff]
        %v3374 = vld [vmem:[%s3372 + $0x8] sm:$0xff]
        %v3375 = vld [vmem:[%s3372 + $0x10] sm:$0xff]
        %v3376 = vld [vmem:[%s3372 + $0x18] sm:$0xff]
        %v3377 = vld [vmem:[%s3372 + $0x20] sm:$0xff]
        %v3378 = vld [vmem:[%s3372 + $0x28] sm:$0xff]
        %v3379 = vld [vmem:[%s3372 + $0x30] sm:$0xff]
        %v3380 = vld [vmem:[%s3372 + $0x38] sm:$0xff]
        %v3381 = vld [vmem:[%s3372 + $0x40] sm:$0xff]
        %v3382 = vld [vmem:[%s3372 + $0x48] sm:$0xff]
        %v3383 = vld [vmem:[%s3372 + $0x50] sm:$0xff]
        %v3384 = vld [vmem:[%s3372 + $0x58] sm:$0xff]
        %v3385 = vld [vmem:[%s3372 + $0x60] sm:$0xff]
        %v3386 = vld [vmem:[%s3372 + $0x68] sm:$0xff]
        %v3387 = vld [vmem:[%s3372 + $0x70] sm:$0xff]
        %v3388 = vld [vmem:[%s3372 + $0x78] sm:$0xff]
        %v3389 = vrot.slane %v1574, 4
        %3391 = vmatprep.subr.mxu0 0.0
        %3392 = vmatpush1.msra.mxu0 %v3373
        %3393 = vmatprep.subr.mxu0 0.0
        %3394 = vmatpush1.msra.mxu0 %v3374
        %3395 = vmatprep.subr.mxu0 0.0
        %3396 = vmatpush1.msra.mxu0 %v3375
        %3397 = vmatprep.subr.mxu0 0.0
        %3398 = vmatpush1.msra.mxu0 %v3376
        %3399 = vmatprep.subr.mxu0 0.0
        %3400 = vmatpush1.msra.mxu0 %v3377
        %3401 = vmatprep.subr.mxu0 0.0
        %3402 = vmatpush1.msra.mxu0 %v3378
        %3403 = vmatprep.subr.mxu0 0.0
        %3404 = vmatpush1.msra.mxu0 %v3379
        %3405 = vmatprep.subr.mxu0 0.0
        %3406 = vmatpush1.msra.mxu0 %v3380
        %3407 = vmatprep.subr.mxu0 0.0
        %3408 = vmatpush1.msra.mxu0 %v3381
        %3409 = vmatprep.subr.mxu0 0.0
        %3410 = vmatpush1.msra.mxu0 %v3382
        %3411 = vmatprep.subr.mxu0 0.0
        %3412 = vmatpush1.msra.mxu0 %v3383
        %3413 = vmatprep.subr.mxu0 0.0
        %3414 = vmatpush1.msra.mxu0 %v3384
        %3415 = vmatprep.subr.mxu0 0.0
        %3416 = vmatpush1.msra.mxu0 %v3385
        %3417 = vmatprep.subr.mxu0 0.0
        %3418 = vmatpush1.msra.mxu0 %v3386
        %3419 = vmatprep.subr.mxu0 0.0
        %3420 = vmatpush1.msra.mxu0 %v3387
        %3421 = vmatprep.subr.mxu0 0.0
        %3422 = vmatpush1.msra.mxu0 %v3388
        %3423 = vmatprep.subr.mxu0 0.0
        %3424 = vmatpush1.msra.mxu0 0.0
        %3425 = vmatprep.subr.mxu0 0.0
        %3426 = vmatpush1.msra.mxu0 0.0
        %3427 = vmatprep.subr.mxu0 0.0
        %3428 = vmatpush1.msra.mxu0 0.0
        %3429 = vmatprep.subr.mxu0 0.0
        %3430 = vmatpush1.msra.mxu0 0.0
        %3431 = vmatprep.subr.mxu0 0.0
        %3432 = vmatpush1.msra.mxu0 0.0
        %3433 = vmatprep.subr.mxu0 0.0
        %3434 = vmatpush1.msra.mxu0 0.0
        %3435 = vmatprep.subr.mxu0 0.0
        %3436 = vmatpush1.msra.mxu0 0.0
        %3437 = vmatprep.subr.mxu0 0.0
        %3438 = vmatpush1.msra.mxu0 0.0
        %3439 = vmatprep.subr.mxu0 0.0
        %3440 = vmatpush1.msra.mxu0 0.0
        %3441 = vmatprep.subr.mxu0 0.0
        %3442 = vmatpush1.msra.mxu0 0.0
        %3443 = vmatprep.subr.mxu0 0.0
        %3444 = vmatpush1.msra.mxu0 0.0
        %3445 = vmatprep.subr.mxu0 0.0
        %3446 = vmatpush1.msra.mxu0 0.0
        %3447 = vmatprep.subr.mxu0 0.0
        %3448 = vmatpush1.msra.mxu0 0.0
        %3449 = vmatprep.subr.mxu0 0.0
        %3450 = vmatpush1.msra.mxu0 0.0
        %3451 = vmatprep.subr.mxu0 0.0
        %3452 = vmatpush1.msra.mxu0 0.0
        %3453 = vmatprep.subr.mxu0 0.0
        %3454 = vmatpush1.msra.mxu0 0.0
        %3455 = vmatprep.mubr.f32.mxu0 0.0
        %3456 = vmatmul.mubr.f32.gmra.mrb[0].mxu0 %v3389
        %v3457 = vpop.f32.mrb[0].mxu0
        %v3458 = vadd.f32 0.0, %v3457
        %v3459 = vpop.f32.mrb[0].mxu0
        %3460 = vdwg.mxu0
        %v3461 = vadd.f32 %v3371, %v3458
        %s3462 = scalar_lea.vmem [#allocation13], 2688
        %v3463 = vld [vmem:[%s3462] sm:$0xff]
        %v3464 = vld [vmem:[%s3462 + $0x8] sm:$0xff]
        %v3465 = vld [vmem:[%s3462 + $0x10] sm:$0xff]
        %v3466 = vld [vmem:[%s3462 + $0x18] sm:$0xff]
        %v3467 = vld [vmem:[%s3462 + $0x20] sm:$0xff]
        %v3468 = vld [vmem:[%s3462 + $0x28] sm:$0xff]
        %v3469 = vld [vmem:[%s3462 + $0x30] sm:$0xff]
        %v3470 = vld [vmem:[%s3462 + $0x38] sm:$0xff]
        %v3471 = vld [vmem:[%s3462 + $0x40] sm:$0xff]
        %v3472 = vld [vmem:[%s3462 + $0x48] sm:$0xff]
        %v3473 = vld [vmem:[%s3462 + $0x50] sm:$0xff]
        %v3474 = vld [vmem:[%s3462 + $0x58] sm:$0xff]
        %v3475 = vld [vmem:[%s3462 + $0x60] sm:$0xff]
        %v3476 = vld [vmem:[%s3462 + $0x68] sm:$0xff]
        %v3477 = vld [vmem:[%s3462 + $0x70] sm:$0xff]
        %v3478 = vld [vmem:[%s3462 + $0x78] sm:$0xff]
        %v3479 = vrot.slane %v1574, 5
        %3481 = vmatprep.subr.mxu0 0.0
        %3482 = vmatpush1.msra.mxu0 %v3463
        %3483 = vmatprep.subr.mxu0 0.0
        %3484 = vmatpush1.msra.mxu0 %v3464
        %3485 = vmatprep.subr.mxu0 0.0
        %3486 = vmatpush1.msra.mxu0 %v3465
        %3487 = vmatprep.subr.mxu0 0.0
        %3488 = vmatpush1.msra.mxu0 %v3466
        %3489 = vmatprep.subr.mxu0 0.0
        %3490 = vmatpush1.msra.mxu0 %v3467
        %3491 = vmatprep.subr.mxu0 0.0
        %3492 = vmatpush1.msra.mxu0 %v3468
        %3493 = vmatprep.subr.mxu0 0.0
        %3494 = vmatpush1.msra.mxu0 %v3469
        %3495 = vmatprep.subr.mxu0 0.0
        %3496 = vmatpush1.msra.mxu0 %v3470
        %3497 = vmatprep.subr.mxu0 0.0
        %3498 = vmatpush1.msra.mxu0 %v3471
        %3499 = vmatprep.subr.mxu0 0.0
        %3500 = vmatpush1.msra.mxu0 %v3472
        %3501 = vmatprep.subr.mxu0 0.0
        %3502 = vmatpush1.msra.mxu0 %v3473
        %3503 = vmatprep.subr.mxu0 0.0
        %3504 = vmatpush1.msra.mxu0 %v3474
        %3505 = vmatprep.subr.mxu0 0.0
        %3506 = vmatpush1.msra.mxu0 %v3475
        %3507 = vmatprep.subr.mxu0 0.0
        %3508 = vmatpush1.msra.mxu0 %v3476
        %3509 = vmatprep.subr.mxu0 0.0
        %3510 = vmatpush1.msra.mxu0 %v3477
        %3511 = vmatprep.subr.mxu0 0.0
        %3512 = vmatpush1.msra.mxu0 %v3478
        %3513 = vmatprep.subr.mxu0 0.0
        %3514 = vmatpush1.msra.mxu0 0.0
        %3515 = vmatprep.subr.mxu0 0.0
        %3516 = vmatpush1.msra.mxu0 0.0
        %3517 = vmatprep.subr.mxu0 0.0
        %3518 = vmatpush1.msra.mxu0 0.0
        %3519 = vmatprep.subr.mxu0 0.0
        %3520 = vmatpush1.msra.mxu0 0.0
        %3521 = vmatprep.subr.mxu0 0.0
        %3522 = vmatpush1.msra.mxu0 0.0
        %3523 = vmatprep.subr.mxu0 0.0
        %3524 = vmatpush1.msra.mxu0 0.0
        %3525 = vmatprep.subr.mxu0 0.0
        %3526 = vmatpush1.msra.mxu0 0.0
        %3527 = vmatprep.subr.mxu0 0.0
        %3528 = vmatpush1.msra.mxu0 0.0
        %3529 = vmatprep.subr.mxu0 0.0
        %3530 = vmatpush1.msra.mxu0 0.0
        %3531 = vmatprep.subr.mxu0 0.0
        %3532 = vmatpush1.msra.mxu0 0.0
        %3533 = vmatprep.subr.mxu0 0.0
        %3534 = vmatpush1.msra.mxu0 0.0
        %3535 = vmatprep.subr.mxu0 0.0
        %3536 = vmatpush1.msra.mxu0 0.0
        %3537 = vmatprep.subr.mxu0 0.0
        %3538 = vmatpush1.msra.mxu0 0.0
        %3539 = vmatprep.subr.mxu0 0.0
        %3540 = vmatpush1.msra.mxu0 0.0
        %3541 = vmatprep.subr.mxu0 0.0
        %3542 = vmatpush1.msra.mxu0 0.0
        %3543 = vmatprep.subr.mxu0 0.0
        %3544 = vmatpush1.msra.mxu0 0.0
        %3545 = vmatprep.mubr.f32.mxu0 0.0
        %3546 = vmatmul.mubr.f32.gmra.mrb[0].mxu0 %v3479
        %v3547 = vpop.f32.mrb[0].mxu0
        %v3548 = vadd.f32 0.0, %v3547
        %v3549 = vpop.f32.mrb[0].mxu0
        %3550 = vdwg.mxu0
        %v3551 = vadd.f32 %v3461, %v3548
        %s3552 = scalar_lea.vmem [#allocation13], 2816
        %v3553 = vld [vmem:[%s3552] sm:$0xff]
        %v3554 = vld [vmem:[%s3552 + $0x8] sm:$0xff]
        %v3555 = vld [vmem:[%s3552 + $0x10] sm:$0xff]
        %v3556 = vld [vmem:[%s3552 + $0x18] sm:$0xff]
        %v3557 = vld [vmem:[%s3552 + $0x20] sm:$0xff]
        %v3558 = vld [vmem:[%s3552 + $0x28] sm:$0xff]
        %v3559 = vld [vmem:[%s3552 + $0x30] sm:$0xff]
        %v3560 = vld [vmem:[%s3552 + $0x38] sm:$0xff]
        %v3561 = vld [vmem:[%s3552 + $0x40] sm:$0xff]
        %v3562 = vld [vmem:[%s3552 + $0x48] sm:$0xff]
        %v3563 = vld [vmem:[%s3552 + $0x50] sm:$0xff]
        %v3564 = vld [vmem:[%s3552 + $0x58] sm:$0xff]
        %v3565 = vld [vmem:[%s3552 + $0x60] sm:$0xff]
        %v3566 = vld [vmem:[%s3552 + $0x68] sm:$0xff]
        %v3567 = vld [vmem:[%s3552 + $0x70] sm:$0xff]
        %v3568 = vld [vmem:[%s3552 + $0x78] sm:$0xff]
        %v3569 = vrot.slane %v1574, 6
        %3571 = vmatprep.subr.mxu0 0.0
        %3572 = vmatpush1.msra.mxu0 %v3553
        %3573 = vmatprep.subr.mxu0 0.0
        %3574 = vmatpush1.msra.mxu0 %v3554
        %3575 = vmatprep.subr.mxu0 0.0
        %3576 = vmatpush1.msra.mxu0 %v3555
        %3577 = vmatprep.subr.mxu0 0.0
        %3578 = vmatpush1.msra.mxu0 %v3556
        %3579 = vmatprep.subr.mxu0 0.0
        %3580 = vmatpush1.msra.mxu0 %v3557
        %3581 = vmatprep.subr.mxu0 0.0
        %3582 = vmatpush1.msra.mxu0 %v3558
        %3583 = vmatprep.subr.mxu0 0.0
        %3584 = vmatpush1.msra.mxu0 %v3559
        %3585 = vmatprep.subr.mxu0 0.0
        %3586 = vmatpush1.msra.mxu0 %v3560
        %3587 = vmatprep.subr.mxu0 0.0
        %3588 = vmatpush1.msra.mxu0 %v3561
        %3589 = vmatprep.subr.mxu0 0.0
        %3590 = vmatpush1.msra.mxu0 %v3562
        %3591 = vmatprep.subr.mxu0 0.0
        %3592 = vmatpush1.msra.mxu0 %v3563
        %3593 = vmatprep.subr.mxu0 0.0
        %3594 = vmatpush1.msra.mxu0 %v3564
        %3595 = vmatprep.subr.mxu0 0.0
        %3596 = vmatpush1.msra.mxu0 %v3565
        %3597 = vmatprep.subr.mxu0 0.0
        %3598 = vmatpush1.msra.mxu0 %v3566
        %3599 = vmatprep.subr.mxu0 0.0
        %3600 = vmatpush1.msra.mxu0 %v3567
        %3601 = vmatprep.subr.mxu0 0.0
        %3602 = vmatpush1.msra.mxu0 %v3568
        %3603 = vmatprep.subr.mxu0 0.0
        %3604 = vmatpush1.msra.mxu0 0.0
        %3605 = vmatprep.subr.mxu0 0.0
        %3606 = vmatpush1.msra.mxu0 0.0
        %3607 = vmatprep.subr.mxu0 0.0
        %3608 = vmatpush1.msra.mxu0 0.0
        %3609 = vmatprep.subr.mxu0 0.0
        %3610 = vmatpush1.msra.mxu0 0.0
        %3611 = vmatprep.subr.mxu0 0.0
        %3612 = vmatpush1.msra.mxu0 0.0
        %3613 = vmatprep.subr.mxu0 0.0
        %3614 = vmatpush1.msra.mxu0 0.0
        %3615 = vmatprep.subr.mxu0 0.0
        %3616 = vmatpush1.msra.mxu0 0.0
        %3617 = vmatprep.subr.mxu0 0.0
        %3618 = vmatpush1.msra.mxu0 0.0
        %3619 = vmatprep.subr.mxu0 0.0
        %3620 = vmatpush1.msra.mxu0 0.0
        %3621 = vmatprep.subr.mxu0 0.0
        %3622 = vmatpush1.msra.mxu0 0.0
        %3623 = vmatprep.subr.mxu0 0.0
        %3624 = vmatpush1.msra.mxu0 0.0
        %3625 = vmatprep.subr.mxu0 0.0
        %3626 = vmatpush1.msra.mxu0 0.0
        %3627 = vmatprep.subr.mxu0 0.0
        %3628 = vmatpush1.msra.mxu0 0.0
        %3629 = vmatprep.subr.mxu0 0.0
        %3630 = vmatpush1.msra.mxu0 0.0
        %3631 = vmatprep.subr.mxu0 0.0
        %3632 = vmatpush1.msra.mxu0 0.0
        %3633 = vmatprep.subr.mxu0 0.0
        %3634 = vmatpush1.msra.mxu0 0.0
        %3635 = vmatprep.mubr.f32.mxu0 0.0
        %3636 = vmatmul.mubr.f32.gmra.mrb[0].mxu0 %v3569
        %v3637 = vpop.f32.mrb[0].mxu0
        %v3638 = vadd.f32 0.0, %v3637
        %v3639 = vpop.f32.mrb[0].mxu0
        %3640 = vdwg.mxu0
        %v3641 = vadd.f32 %v3551, %v3638
        %s3642 = scalar_lea.vmem [#allocation13], 2944
        %v3643 = vld [vmem:[%s3642] sm:$0xff]
        %v3644 = vld [vmem:[%s3642 + $0x8] sm:$0xff]
        %v3645 = vld [vmem:[%s3642 + $0x10] sm:$0xff]
        %v3646 = vld [vmem:[%s3642 + $0x18] sm:$0xff]
        %v3647 = vld [vmem:[%s3642 + $0x20] sm:$0xff]
        %v3648 = vld [vmem:[%s3642 + $0x28] sm:$0xff]
        %v3649 = vld [vmem:[%s3642 + $0x30] sm:$0xff]
        %v3650 = vld [vmem:[%s3642 + $0x38] sm:$0xff]
        %v3651 = vld [vmem:[%s3642 + $0x40] sm:$0xff]
        %v3652 = vld [vmem:[%s3642 + $0x48] sm:$0xff]
        %v3653 = vld [vmem:[%s3642 + $0x50] sm:$0xff]
        %v3654 = vld [vmem:[%s3642 + $0x58] sm:$0xff]
        %v3655 = vld [vmem:[%s3642 + $0x60] sm:$0xff]
        %v3656 = vld [vmem:[%s3642 + $0x68] sm:$0xff]
        %v3657 = vld [vmem:[%s3642 + $0x70] sm:$0xff]
        %v3658 = vld [vmem:[%s3642 + $0x78] sm:$0xff]
        %v3659 = vrot.slane %v1574, 7
        %3661 = vmatprep.subr.mxu0 0.0
        %3662 = vmatpush1.msra.mxu0 %v3643
        %3663 = vmatprep.subr.mxu0 0.0
        %3664 = vmatpush1.msra.mxu0 %v3644
        %3665 = vmatprep.subr.mxu0 0.0
        %3666 = vmatpush1.msra.mxu0 %v3645
        %3667 = vmatprep.subr.mxu0 0.0
        %3668 = vmatpush1.msra.mxu0 %v3646
        %3669 = vmatprep.subr.mxu0 0.0
        %3670 = vmatpush1.msra.mxu0 %v3647
        %3671 = vmatprep.subr.mxu0 0.0
        %3672 = vmatpush1.msra.mxu0 %v3648
        %3673 = vmatprep.subr.mxu0 0.0
        %3674 = vmatpush1.msra.mxu0 %v3649
        %3675 = vmatprep.subr.mxu0 0.0
        %3676 = vmatpush1.msra.mxu0 %v3650
        %3677 = vmatprep.subr.mxu0 0.0
        %3678 = vmatpush1.msra.mxu0 %v3651
        %3679 = vmatprep.subr.mxu0 0.0
        %3680 = vmatpush1.msra.mxu0 %v3652
        %3681 = vmatprep.subr.mxu0 0.0
        %3682 = vmatpush1.msra.mxu0 %v3653
        %3683 = vmatprep.subr.mxu0 0.0
        %3684 = vmatpush1.msra.mxu0 %v3654
        %3685 = vmatprep.subr.mxu0 0.0
        %3686 = vmatpush1.msra.mxu0 %v3655
        %3687 = vmatprep.subr.mxu0 0.0
        %3688 = vmatpush1.msra.mxu0 %v3656
        %3689 = vmatprep.subr.mxu0 0.0
        %3690 = vmatpush1.msra.mxu0 %v3657
        %3691 = vmatprep.subr.mxu0 0.0
        %3692 = vmatpush1.msra.mxu0 %v3658
        %3693 = vmatprep.subr.mxu0 0.0
        %3694 = vmatpush1.msra.mxu0 0.0
        %3695 = vmatprep.subr.mxu0 0.0
        %3696 = vmatpush1.msra.mxu0 0.0
        %3697 = vmatprep.subr.mxu0 0.0
        %3698 = vmatpush1.msra.mxu0 0.0
        %3699 = vmatprep.subr.mxu0 0.0
        %3700 = vmatpush1.msra.mxu0 0.0
        %3701 = vmatprep.subr.mxu0 0.0
        %3702 = vmatpush1.msra.mxu0 0.0
        %3703 = vmatprep.subr.mxu0 0.0
        %3704 = vmatpush1.msra.mxu0 0.0
        %3705 = vmatprep.subr.mxu0 0.0
        %3706 = vmatpush1.msra.mxu0 0.0
        %3707 = vmatprep.subr.mxu0 0.0
        %3708 = vmatpush1.msra.mxu0 0.0
        %3709 = vmatprep.subr.mxu0 0.0
        %3710 = vmatpush1.msra.mxu0 0.0
        %3711 = vmatprep.subr.mxu0 0.0
        %3712 = vmatpush1.msra.mxu0 0.0
        %3713 = vmatprep.subr.mxu0 0.0
        %3714 = vmatpush1.msra.mxu0 0.0
        %3715 = vmatprep.subr.mxu0 0.0
        %3716 = vmatpush1.msra.mxu0 0.0
        %3717 = vmatprep.subr.mxu0 0.0
        %3718 = vmatpush1.msra.mxu0 0.0
        %3719 = vmatprep.subr.mxu0 0.0
        %3720 = vmatpush1.msra.mxu0 0.0
        %3721 = vmatprep.subr.mxu0 0.0
        %3722 = vmatpush1.msra.mxu0 0.0
        %3723 = vmatprep.subr.mxu0 0.0
        %3724 = vmatpush1.msra.mxu0 0.0
        %3725 = vmatprep.mubr.f32.mxu0 0.0
        %3726 = vmatmul.mubr.f32.gmra.mrb[0].mxu0 %v3659
        %v3727 = vpop.f32.mrb[0].mxu0
        %v3728 = vadd.f32 0.0, %v3727
        %v3729 = vpop.f32.mrb[0].mxu0
        %3730 = vdwg.mxu0
        %v3731 = vadd.f32 %v3641, %v3728
        %s3732 = scalar_lea.vmem [#allocation13], 3072
        %v3733 = vld [vmem:[%s3732] sm:$0xff]
        %v3734 = vld [vmem:[%s3732 + $0x8] sm:$0xff]
        %v3735 = vld [vmem:[%s3732 + $0x10] sm:$0xff]
        %v3736 = vld [vmem:[%s3732 + $0x18] sm:$0xff]
        %v3737 = vld [vmem:[%s3732 + $0x20] sm:$0xff]
        %v3738 = vld [vmem:[%s3732 + $0x28] sm:$0xff]
        %v3739 = vld [vmem:[%s3732 + $0x30] sm:$0xff]
        %v3740 = vld [vmem:[%s3732 + $0x38] sm:$0xff]
        %v3741 = vld [vmem:[%s3732 + $0x40] sm:$0xff]
        %v3742 = vld [vmem:[%s3732 + $0x48] sm:$0xff]
        %v3743 = vld [vmem:[%s3732 + $0x50] sm:$0xff]
        %v3744 = vld [vmem:[%s3732 + $0x58] sm:$0xff]
        %v3745 = vld [vmem:[%s3732 + $0x60] sm:$0xff]
        %v3746 = vld [vmem:[%s3732 + $0x68] sm:$0xff]
        %v3747 = vld [vmem:[%s3732 + $0x70] sm:$0xff]
        %v3748 = vld [vmem:[%s3732 + $0x78] sm:$0xff]
        %3749 = vmatprep.subr.mxu0 0.0
        %3750 = vmatpush1.msra.mxu0 %v3733
        %3751 = vmatprep.subr.mxu0 0.0
        %3752 = vmatpush1.msra.mxu0 %v3734
        %3753 = vmatprep.subr.mxu0 0.0
        %3754 = vmatpush1.msra.mxu0 %v3735
        %3755 = vmatprep.subr.mxu0 0.0
        %3756 = vmatpush1.msra.mxu0 %v3736
        %3757 = vmatprep.subr.mxu0 0.0
        %3758 = vmatpush1.msra.mxu0 %v3737
        %3759 = vmatprep.subr.mxu0 0.0
        %3760 = vmatpush1.msra.mxu0 %v3738
        %3761 = vmatprep.subr.mxu0 0.0
        %3762 = vmatpush1.msra.mxu0 %v3739
        %3763 = vmatprep.subr.mxu0 0.0
        %3764 = vmatpush1.msra.mxu0 %v3740
        %3765 = vmatprep.subr.mxu0 0.0
        %3766 = vmatpush1.msra.mxu0 %v3741
        %3767 = vmatprep.subr.mxu0 0.0
        %3768 = vmatpush1.msra.mxu0 %v3742
        %3769 = vmatprep.subr.mxu0 0.0
        %3770 = vmatpush1.msra.mxu0 %v3743
        %3771 = vmatprep.subr.mxu0 0.0
        %3772 = vmatpush1.msra.mxu0 %v3744
        %3773 = vmatprep.subr.mxu0 0.0
        %3774 = vmatpush1.msra.mxu0 %v3745
        %3775 = vmatprep.subr.mxu0 0.0
        %3776 = vmatpush1.msra.mxu0 %v3746
        %3777 = vmatprep.subr.mxu0 0.0
        %3778 = vmatpush1.msra.mxu0 %v3747
        %3779 = vmatprep.subr.mxu0 0.0
        %3780 = vmatpush1.msra.mxu0 %v3748
        %3781 = vmatprep.subr.mxu0 0.0
        %3782 = vmatpush1.msra.mxu0 0.0
        %3783 = vmatprep.subr.mxu0 0.0
        %3784 = vmatpush1.msra.mxu0 0.0
        %3785 = vmatprep.subr.mxu0 0.0
        %3786 = vmatpush1.msra.mxu0 0.0
        %3787 = vmatprep.subr.mxu0 0.0
        %3788 = vmatpush1.msra.mxu0 0.0
        %3789 = vmatprep.subr.mxu0 0.0
        %3790 = vmatpush1.msra.mxu0 0.0
        %3791 = vmatprep.subr.mxu0 0.0
        %3792 = vmatpush1.msra.mxu0 0.0
        %3793 = vmatprep.subr.mxu0 0.0
        %3794 = vmatpush1.msra.mxu0 0.0
        %3795 = vmatprep.subr.mxu0 0.0
        %3796 = vmatpush1.msra.mxu0 0.0
        %3797 = vmatprep.subr.mxu0 0.0
        %3798 = vmatpush1.msra.mxu0 0.0
        %3799 = vmatprep.subr.mxu0 0.0
        %3800 = vmatpush1.msra.mxu0 0.0
        %3801 = vmatprep.subr.mxu0 0.0
        %3802 = vmatpush1.msra.mxu0 0.0
        %3803 = vmatprep.subr.mxu0 0.0
        %3804 = vmatpush1.msra.mxu0 0.0
        %3805 = vmatprep.subr.mxu0 0.0
        %3806 = vmatpush1.msra.mxu0 0.0
        %3807 = vmatprep.subr.mxu0 0.0
        %3808 = vmatpush1.msra.mxu0 0.0
        %3809 = vmatprep.subr.mxu0 0.0
        %3810 = vmatpush1.msra.mxu0 0.0
        %3811 = vmatprep.subr.mxu0 0.0
        %3812 = vmatpush1.msra.mxu0 0.0
        %3813 = vmatprep.mubr.f32.mxu0 0.0
        %3814 = vmatmul.mubr.f32.gmra.mrb[0].mxu0 %v1575
        %v3815 = vpop.f32.mrb[0].mxu0
        %v3816 = vadd.f32 0.0, %v3815
        %v3817 = vpop.f32.mrb[0].mxu0
        %3818 = vdwg.mxu0
        %v3819 = vadd.f32 %v3731, %v3816
        %s3820 = scalar_lea.vmem [#allocation13], 3200
        %v3821 = vld [vmem:[%s3820] sm:$0xff]
        %v3822 = vld [vmem:[%s3820 + $0x8] sm:$0xff]
        %v3823 = vld [vmem:[%s3820 + $0x10] sm:$0xff]
        %v3824 = vld [vmem:[%s3820 + $0x18] sm:$0xff]
        %v3825 = vld [vmem:[%s3820 + $0x20] sm:$0xff]
        %v3826 = vld [vmem:[%s3820 + $0x28] sm:$0xff]
        %v3827 = vld [vmem:[%s3820 + $0x30] sm:$0xff]
        %v3828 = vld [vmem:[%s3820 + $0x38] sm:$0xff]
        %v3829 = vld [vmem:[%s3820 + $0x40] sm:$0xff]
        %v3830 = vld [vmem:[%s3820 + $0x48] sm:$0xff]
        %v3831 = vld [vmem:[%s3820 + $0x50] sm:$0xff]
        %v3832 = vld [vmem:[%s3820 + $0x58] sm:$0xff]
        %v3833 = vld [vmem:[%s3820 + $0x60] sm:$0xff]
        %v3834 = vld [vmem:[%s3820 + $0x68] sm:$0xff]
        %v3835 = vld [vmem:[%s3820 + $0x70] sm:$0xff]
        %v3836 = vld [vmem:[%s3820 + $0x78] sm:$0xff]
        %v3838 = vrot.slane %v1575, 1
        %3840 = vmatprep.subr.mxu0 0.0
        %3841 = vmatpush1.msra.mxu0 %v3821
        %3842 = vmatprep.subr.mxu0 0.0
        %3843 = vmatpush1.msra.mxu0 %v3822
        %3844 = vmatprep.subr.mxu0 0.0
        %3845 = vmatpush1.msra.mxu0 %v3823
        %3846 = vmatprep.subr.mxu0 0.0
        %3847 = vmatpush1.msra.mxu0 %v3824
        %3848 = vmatprep.subr.mxu0 0.0
        %3849 = vmatpush1.msra.mxu0 %v3825
        %3850 = vmatprep.subr.mxu0 0.0
        %3851 = vmatpush1.msra.mxu0 %v3826
        %3852 = vmatprep.subr.mxu0 0.0
        %3853 = vmatpush1.msra.mxu0 %v3827
        %3854 = vmatprep.subr.mxu0 0.0
        %3855 = vmatpush1.msra.mxu0 %v3828
        %3856 = vmatprep.subr.mxu0 0.0
        %3857 = vmatpush1.msra.mxu0 %v3829
        %3858 = vmatprep.subr.mxu0 0.0
        %3859 = vmatpush1.msra.mxu0 %v3830
        %3860 = vmatprep.subr.mxu0 0.0
        %3861 = vmatpush1.msra.mxu0 %v3831
        %3862 = vmatprep.subr.mxu0 0.0
        %3863 = vmatpush1.msra.mxu0 %v3832
        %3864 = vmatprep.subr.mxu0 0.0
        %3865 = vmatpush1.msra.mxu0 %v3833
        %3866 = vmatprep.subr.mxu0 0.0
        %3867 = vmatpush1.msra.mxu0 %v3834
        %3868 = vmatprep.subr.mxu0 0.0
        %3869 = vmatpush1.msra.mxu0 %v3835
        %3870 = vmatprep.subr.mxu0 0.0
        %3871 = vmatpush1.msra.mxu0 %v3836
        %3872 = vmatprep.subr.mxu0 0.0
        %3873 = vmatpush1.msra.mxu0 0.0
        %3874 = vmatprep.subr.mxu0 0.0
        %3875 = vmatpush1.msra.mxu0 0.0
        %3876 = vmatprep.subr.mxu0 0.0
        %3877 = vmatpush1.msra.mxu0 0.0
        %3878 = vmatprep.subr.mxu0 0.0
        %3879 = vmatpush1.msra.mxu0 0.0
        %3880 = vmatprep.subr.mxu0 0.0
        %3881 = vmatpush1.msra.mxu0 0.0
        %3882 = vmatprep.subr.mxu0 0.0
        %3883 = vmatpush1.msra.mxu0 0.0
        %3884 = vmatprep.subr.mxu0 0.0
        %3885 = vmatpush1.msra.mxu0 0.0
        %3886 = vmatprep.subr.mxu0 0.0
        %3887 = vmatpush1.msra.mxu0 0.0
        %3888 = vmatprep.subr.mxu0 0.0
        %3889 = vmatpush1.msra.mxu0 0.0
        %3890 = vmatprep.subr.mxu0 0.0
        %3891 = vmatpush1.msra.mxu0 0.0
        %3892 = vmatprep.subr.mxu0 0.0
        %3893 = vmatpush1.msra.mxu0 0.0
        %3894 = vmatprep.subr.mxu0 0.0
        %3895 = vmatpush1.msra.mxu0 0.0
        %3896 = vmatprep.subr.mxu0 0.0
        %3897 = vmatpush1.msra.mxu0 0.0
        %3898 = vmatprep.subr.mxu0 0.0
        %3899 = vmatpush1.msra.mxu0 0.0
        %3900 = vmatprep.subr.mxu0 0.0
        %3901 = vmatpush1.msra.mxu0 0.0
        %3902 = vmatprep.subr.mxu0 0.0
        %3903 = vmatpush1.msra.mxu0 0.0
        %3904 = vmatprep.mubr.f32.mxu0 0.0
        %3905 = vmatmul.mubr.f32.gmra.mrb[0].mxu0 %v3838
        %v3906 = vpop.f32.mrb[0].mxu0
        %v3907 = vadd.f32 0.0, %v3906
        %v3908 = vpop.f32.mrb[0].mxu0
        %3909 = vdwg.mxu0
        %v3910 = vadd.f32 %v3819, %v3907
        %s3911 = scalar_lea.vmem [#allocation13], 3328
        %v3912 = vld [vmem:[%s3911] sm:$0xff]
        %v3913 = vld [vmem:[%s3911 + $0x8] sm:$0xff]
        %v3914 = vld [vmem:[%s3911 + $0x10] sm:$0xff]
        %v3915 = vld [vmem:[%s3911 + $0x18] sm:$0xff]
        %v3916 = vld [vmem:[%s3911 + $0x20] sm:$0xff]
        %v3917 = vld [vmem:[%s3911 + $0x28] sm:$0xff]
        %v3918 = vld [vmem:[%s3911 + $0x30] sm:$0xff]
        %v3919 = vld [vmem:[%s3911 + $0x38] sm:$0xff]
        %v3920 = vld [vmem:[%s3911 + $0x40] sm:$0xff]
        %v3921 = vld [vmem:[%s3911 + $0x48] sm:$0xff]
        %v3922 = vld [vmem:[%s3911 + $0x50] sm:$0xff]
        %v3923 = vld [vmem:[%s3911 + $0x58] sm:$0xff]
        %v3924 = vld [vmem:[%s3911 + $0x60] sm:$0xff]
        %v3925 = vld [vmem:[%s3911 + $0x68] sm:$0xff]
        %v3926 = vld [vmem:[%s3911 + $0x70] sm:$0xff]
        %v3927 = vld [vmem:[%s3911 + $0x78] sm:$0xff]
        %v3928 = vrot.slane %v1575, 2
        %3930 = vmatprep.subr.mxu0 0.0
        %3931 = vmatpush1.msra.mxu0 %v3912
        %3932 = vmatprep.subr.mxu0 0.0
        %3933 = vmatpush1.msra.mxu0 %v3913
        %3934 = vmatprep.subr.mxu0 0.0
        %3935 = vmatpush1.msra.mxu0 %v3914
        %3936 = vmatprep.subr.mxu0 0.0
        %3937 = vmatpush1.msra.mxu0 %v3915
        %3938 = vmatprep.subr.mxu0 0.0
        %3939 = vmatpush1.msra.mxu0 %v3916
        %3940 = vmatprep.subr.mxu0 0.0
        %3941 = vmatpush1.msra.mxu0 %v3917
        %3942 = vmatprep.subr.mxu0 0.0
        %3943 = vmatpush1.msra.mxu0 %v3918
        %3944 = vmatprep.subr.mxu0 0.0
        %3945 = vmatpush1.msra.mxu0 %v3919
        %3946 = vmatprep.subr.mxu0 0.0
        %3947 = vmatpush1.msra.mxu0 %v3920
        %3948 = vmatprep.subr.mxu0 0.0
        %3949 = vmatpush1.msra.mxu0 %v3921
        %3950 = vmatprep.subr.mxu0 0.0
        %3951 = vmatpush1.msra.mxu0 %v3922
        %3952 = vmatprep.subr.mxu0 0.0
        %3953 = vmatpush1.msra.mxu0 %v3923
        %3954 = vmatprep.subr.mxu0 0.0
        %3955 = vmatpush1.msra.mxu0 %v3924
        %3956 = vmatprep.subr.mxu0 0.0
        %3957 = vmatpush1.msra.mxu0 %v3925
        %3958 = vmatprep.subr.mxu0 0.0
        %3959 = vmatpush1.msra.mxu0 %v3926
        %3960 = vmatprep.subr.mxu0 0.0
        %3961 = vmatpush1.msra.mxu0 %v3927
        %3962 = vmatprep.subr.mxu0 0.0
        %3963 = vmatpush1.msra.mxu0 0.0
        %3964 = vmatprep.subr.mxu0 0.0
        %3965 = vmatpush1.msra.mxu0 0.0
        %3966 = vmatprep.subr.mxu0 0.0
        %3967 = vmatpush1.msra.mxu0 0.0
        %3968 = vmatprep.subr.mxu0 0.0
        %3969 = vmatpush1.msra.mxu0 0.0
        %3970 = vmatprep.subr.mxu0 0.0
        %3971 = vmatpush1.msra.mxu0 0.0
        %3972 = vmatprep.subr.mxu0 0.0
        %3973 = vmatpush1.msra.mxu0 0.0
        %3974 = vmatprep.subr.mxu0 0.0
        %3975 = vmatpush1.msra.mxu0 0.0
        %3976 = vmatprep.subr.mxu0 0.0
        %3977 = vmatpush1.msra.mxu0 0.0
        %3978 = vmatprep.subr.mxu0 0.0
        %3979 = vmatpush1.msra.mxu0 0.0
        %3980 = vmatprep.subr.mxu0 0.0
        %3981 = vmatpush1.msra.mxu0 0.0
        %3982 = vmatprep.subr.mxu0 0.0
        %3983 = vmatpush1.msra.mxu0 0.0
        %3984 = vmatprep.subr.mxu0 0.0
        %3985 = vmatpush1.msra.mxu0 0.0
        %3986 = vmatprep.subr.mxu0 0.0
        %3987 = vmatpush1.msra.mxu0 0.0
        %3988 = vmatprep.subr.mxu0 0.0
        %3989 = vmatpush1.msra.mxu0 0.0
        %3990 = vmatprep.subr.mxu0 0.0
        %3991 = vmatpush1.msra.mxu0 0.0
        %3992 = vmatprep.subr.mxu0 0.0
        %3993 = vmatpush1.msra.mxu0 0.0
        %3994 = vmatprep.mubr.f32.mxu0 0.0
        %3995 = vmatmul.mubr.f32.gmra.mrb[0].mxu0 %v3928
        %v3996 = vpop.f32.mrb[0].mxu0
        %v3997 = vadd.f32 0.0, %v3996
        %v3998 = vpop.f32.mrb[0].mxu0
        %3999 = vdwg.mxu0
        %v4000 = vadd.f32 %v3910, %v3997
        %s4001 = scalar_lea.vmem [#allocation13], 3456
        %v4002 = vld [vmem:[%s4001] sm:$0xff]
        %v4003 = vld [vmem:[%s4001 + $0x8] sm:$0xff]
        %v4004 = vld [vmem:[%s4001 + $0x10] sm:$0xff]
        %v4005 = vld [vmem:[%s4001 + $0x18] sm:$0xff]
        %v4006 = vld [vmem:[%s4001 + $0x20] sm:$0xff]
        %v4007 = vld [vmem:[%s4001 + $0x28] sm:$0xff]
        %v4008 = vld [vmem:[%s4001 + $0x30] sm:$0xff]
        %v4009 = vld [vmem:[%s4001 + $0x38] sm:$0xff]
        %v4010 = vld [vmem:[%s4001 + $0x40] sm:$0xff]
        %v4011 = vld [vmem:[%s4001 + $0x48] sm:$0xff]
        %v4012 = vld [vmem:[%s4001 + $0x50] sm:$0xff]
        %v4013 = vld [vmem:[%s4001 + $0x58] sm:$0xff]
        %v4014 = vld [vmem:[%s4001 + $0x60] sm:$0xff]
        %v4015 = vld [vmem:[%s4001 + $0x68] sm:$0xff]
        %v4016 = vld [vmem:[%s4001 + $0x70] sm:$0xff]
        %v4017 = vld [vmem:[%s4001 + $0x78] sm:$0xff]
        %v4018 = vrot.slane %v1575, 3
        %4020 = vmatprep.subr.mxu0 0.0
        %4021 = vmatpush1.msra.mxu0 %v4002
        %4022 = vmatprep.subr.mxu0 0.0
        %4023 = vmatpush1.msra.mxu0 %v4003
        %4024 = vmatprep.subr.mxu0 0.0
        %4025 = vmatpush1.msra.mxu0 %v4004
        %4026 = vmatprep.subr.mxu0 0.0
        %4027 = vmatpush1.msra.mxu0 %v4005
        %4028 = vmatprep.subr.mxu0 0.0
        %4029 = vmatpush1.msra.mxu0 %v4006
        %4030 = vmatprep.subr.mxu0 0.0
        %4031 = vmatpush1.msra.mxu0 %v4007
        %4032 = vmatprep.subr.mxu0 0.0
        %4033 = vmatpush1.msra.mxu0 %v4008
        %4034 = vmatprep.subr.mxu0 0.0
        %4035 = vmatpush1.msra.mxu0 %v4009
        %4036 = vmatprep.subr.mxu0 0.0
        %4037 = vmatpush1.msra.mxu0 %v4010
        %4038 = vmatprep.subr.mxu0 0.0
        %4039 = vmatpush1.msra.mxu0 %v4011
        %4040 = vmatprep.subr.mxu0 0.0
        %4041 = vmatpush1.msra.mxu0 %v4012
        %4042 = vmatprep.subr.mxu0 0.0
        %4043 = vmatpush1.msra.mxu0 %v4013
        %4044 = vmatprep.subr.mxu0 0.0
        %4045 = vmatpush1.msra.mxu0 %v4014
        %4046 = vmatprep.subr.mxu0 0.0
        %4047 = vmatpush1.msra.mxu0 %v4015
        %4048 = vmatprep.subr.mxu0 0.0
        %4049 = vmatpush1.msra.mxu0 %v4016
        %4050 = vmatprep.subr.mxu0 0.0
        %4051 = vmatpush1.msra.mxu0 %v4017
        %4052 = vmatprep.subr.mxu0 0.0
        %4053 = vmatpush1.msra.mxu0 0.0
        %4054 = vmatprep.subr.mxu0 0.0
        %4055 = vmatpush1.msra.mxu0 0.0
        %4056 = vmatprep.subr.mxu0 0.0
        %4057 = vmatpush1.msra.mxu0 0.0
        %4058 = vmatprep.subr.mxu0 0.0
        %4059 = vmatpush1.msra.mxu0 0.0
        %4060 = vmatprep.subr.mxu0 0.0
        %4061 = vmatpush1.msra.mxu0 0.0
        %4062 = vmatprep.subr.mxu0 0.0
        %4063 = vmatpush1.msra.mxu0 0.0
        %4064 = vmatprep.subr.mxu0 0.0
        %4065 = vmatpush1.msra.mxu0 0.0
        %4066 = vmatprep.subr.mxu0 0.0
        %4067 = vmatpush1.msra.mxu0 0.0
        %4068 = vmatprep.subr.mxu0 0.0
        %4069 = vmatpush1.msra.mxu0 0.0
        %4070 = vmatprep.subr.mxu0 0.0
        %4071 = vmatpush1.msra.mxu0 0.0
        %4072 = vmatprep.subr.mxu0 0.0
        %4073 = vmatpush1.msra.mxu0 0.0
        %4074 = vmatprep.subr.mxu0 0.0
        %4075 = vmatpush1.msra.mxu0 0.0
        %4076 = vmatprep.subr.mxu0 0.0
        %4077 = vmatpush1.msra.mxu0 0.0
        %4078 = vmatprep.subr.mxu0 0.0
        %4079 = vmatpush1.msra.mxu0 0.0
        %4080 = vmatprep.subr.mxu0 0.0
        %4081 = vmatpush1.msra.mxu0 0.0
        %4082 = vmatprep.subr.mxu0 0.0
        %4083 = vmatpush1.msra.mxu0 0.0
        %4084 = vmatprep.mubr.f32.mxu0 0.0
        %4085 = vmatmul.mubr.f32.gmra.mrb[0].mxu0 %v4018
        %v4086 = vpop.f32.mrb[0].mxu0
        %v4087 = vadd.f32 0.0, %v4086
        %v4088 = vpop.f32.mrb[0].mxu0
        %4089 = vdwg.mxu0
        %v4090 = vadd.f32 %v4000, %v4087
        %s4091 = scalar_lea.vmem [#allocation13], 3584
        %v4092 = vld [vmem:[%s4091] sm:$0xff]
        %v4093 = vld [vmem:[%s4091 + $0x8] sm:$0xff]
        %v4094 = vld [vmem:[%s4091 + $0x10] sm:$0xff]
        %v4095 = vld [vmem:[%s4091 + $0x18] sm:$0xff]
        %v4096 = vld [vmem:[%s4091 + $0x20] sm:$0xff]
        %v4097 = vld [vmem:[%s4091 + $0x28] sm:$0xff]
        %v4098 = vld [vmem:[%s4091 + $0x30] sm:$0xff]
        %v4099 = vld [vmem:[%s4091 + $0x38] sm:$0xff]
        %v4100 = vld [vmem:[%s4091 + $0x40] sm:$0xff]
        %v4101 = vld [vmem:[%s4091 + $0x48] sm:$0xff]
        %v4102 = vld [vmem:[%s4091 + $0x50] sm:$0xff]
        %v4103 = vld [vmem:[%s4091 + $0x58] sm:$0xff]
        %v4104 = vld [vmem:[%s4091 + $0x60] sm:$0xff]
        %v4105 = vld [vmem:[%s4091 + $0x68] sm:$0xff]
        %v4106 = vld [vmem:[%s4091 + $0x70] sm:$0xff]
        %v4107 = vld [vmem:[%s4091 + $0x78] sm:$0xff]
        %v4108 = vrot.slane %v1575, 4
        %4110 = vmatprep.subr.mxu0 0.0
        %4111 = vmatpush1.msra.mxu0 %v4092
        %4112 = vmatprep.subr.mxu0 0.0
        %4113 = vmatpush1.msra.mxu0 %v4093
        %4114 = vmatprep.subr.mxu0 0.0
        %4115 = vmatpush1.msra.mxu0 %v4094
        %4116 = vmatprep.subr.mxu0 0.0
        %4117 = vmatpush1.msra.mxu0 %v4095
        %4118 = vmatprep.subr.mxu0 0.0
        %4119 = vmatpush1.msra.mxu0 %v4096
        %4120 = vmatprep.subr.mxu0 0.0
        %4121 = vmatpush1.msra.mxu0 %v4097
        %4122 = vmatprep.subr.mxu0 0.0
        %4123 = vmatpush1.msra.mxu0 %v4098
        %4124 = vmatprep.subr.mxu0 0.0
        %4125 = vmatpush1.msra.mxu0 %v4099
        %4126 = vmatprep.subr.mxu0 0.0
        %4127 = vmatpush1.msra.mxu0 %v4100
        %4128 = vmatprep.subr.mxu0 0.0
        %4129 = vmatpush1.msra.mxu0 %v4101
        %4130 = vmatprep.subr.mxu0 0.0
        %4131 = vmatpush1.msra.mxu0 %v4102
        %4132 = vmatprep.subr.mxu0 0.0
        %4133 = vmatpush1.msra.mxu0 %v4103
        %4134 = vmatprep.subr.mxu0 0.0
        %4135 = vmatpush1.msra.mxu0 %v4104
        %4136 = vmatprep.subr.mxu0 0.0
        %4137 = vmatpush1.msra.mxu0 %v4105
        %4138 = vmatprep.subr.mxu0 0.0
        %4139 = vmatpush1.msra.mxu0 %v4106
        %4140 = vmatprep.subr.mxu0 0.0
        %4141 = vmatpush1.msra.mxu0 %v4107
        %4142 = vmatprep.subr.mxu0 0.0
        %4143 = vmatpush1.msra.mxu0 0.0
        %4144 = vmatprep.subr.mxu0 0.0
        %4145 = vmatpush1.msra.mxu0 0.0
        %4146 = vmatprep.subr.mxu0 0.0
        %4147 = vmatpush1.msra.mxu0 0.0
        %4148 = vmatprep.subr.mxu0 0.0
        %4149 = vmatpush1.msra.mxu0 0.0
        %4150 = vmatprep.subr.mxu0 0.0
        %4151 = vmatpush1.msra.mxu0 0.0
        %4152 = vmatprep.subr.mxu0 0.0
        %4153 = vmatpush1.msra.mxu0 0.0
        %4154 = vmatprep.subr.mxu0 0.0
        %4155 = vmatpush1.msra.mxu0 0.0
        %4156 = vmatprep.subr.mxu0 0.0
        %4157 = vmatpush1.msra.mxu0 0.0
        %4158 = vmatprep.subr.mxu0 0.0
        %4159 = vmatpush1.msra.mxu0 0.0
        %4160 = vmatprep.subr.mxu0 0.0
        %4161 = vmatpush1.msra.mxu0 0.0
        %4162 = vmatprep.subr.mxu0 0.0
        %4163 = vmatpush1.msra.mxu0 0.0
        %4164 = vmatprep.subr.mxu0 0.0
        %4165 = vmatpush1.msra.mxu0 0.0
        %4166 = vmatprep.subr.mxu0 0.0
        %4167 = vmatpush1.msra.mxu0 0.0
        %4168 = vmatprep.subr.mxu0 0.0
        %4169 = vmatpush1.msra.mxu0 0.0
        %4170 = vmatprep.subr.mxu0 0.0
        %4171 = vmatpush1.msra.mxu0 0.0
        %4172 = vmatprep.subr.mxu0 0.0
        %4173 = vmatpush1.msra.mxu0 0.0
        %4174 = vmatprep.mubr.f32.mxu0 0.0
        %4175 = vmatmul.mubr.f32.gmra.mrb[0].mxu0 %v4108
        %v4176 = vpop.f32.mrb[0].mxu0
        %v4177 = vadd.f32 0.0, %v4176
        %v4178 = vpop.f32.mrb[0].mxu0
        %4179 = vdwg.mxu0
        %v4180 = vadd.f32 %v4090, %v4177
        %s4181 = scalar_lea.vmem [#allocation13], 3712
        %v4182 = vld [vmem:[%s4181] sm:$0xff]
        %v4183 = vld [vmem:[%s4181 + $0x8] sm:$0xff]
        %v4184 = vld [vmem:[%s4181 + $0x10] sm:$0xff]
        %v4185 = vld [vmem:[%s4181 + $0x18] sm:$0xff]
        %v4186 = vld [vmem:[%s4181 + $0x20] sm:$0xff]
        %v4187 = vld [vmem:[%s4181 + $0x28] sm:$0xff]
        %v4188 = vld [vmem:[%s4181 + $0x30] sm:$0xff]
        %v4189 = vld [vmem:[%s4181 + $0x38] sm:$0xff]
        %v4190 = vld [vmem:[%s4181 + $0x40] sm:$0xff]
        %v4191 = vld [vmem:[%s4181 + $0x48] sm:$0xff]
        %v4192 = vld [vmem:[%s4181 + $0x50] sm:$0xff]
        %v4193 = vld [vmem:[%s4181 + $0x58] sm:$0xff]
        %v4194 = vld [vmem:[%s4181 + $0x60] sm:$0xff]
        %v4195 = vld [vmem:[%s4181 + $0x68] sm:$0xff]
        %v4196 = vld [vmem:[%s4181 + $0x70] sm:$0xff]
        %v4197 = vld [vmem:[%s4181 + $0x78] sm:$0xff]
        %v4198 = vrot.slane %v1575, 5
        %4200 = vmatprep.subr.mxu0 0.0
        %4201 = vmatpush1.msra.mxu0 %v4182
        %4202 = vmatprep.subr.mxu0 0.0
        %4203 = vmatpush1.msra.mxu0 %v4183
        %4204 = vmatprep.subr.mxu0 0.0
        %4205 = vmatpush1.msra.mxu0 %v4184
        %4206 = vmatprep.subr.mxu0 0.0
        %4207 = vmatpush1.msra.mxu0 %v4185
        %4208 = vmatprep.subr.mxu0 0.0
        %4209 = vmatpush1.msra.mxu0 %v4186
        %4210 = vmatprep.subr.mxu0 0.0
        %4211 = vmatpush1.msra.mxu0 %v4187
        %4212 = vmatprep.subr.mxu0 0.0
        %4213 = vmatpush1.msra.mxu0 %v4188
        %4214 = vmatprep.subr.mxu0 0.0
        %4215 = vmatpush1.msra.mxu0 %v4189
        %4216 = vmatprep.subr.mxu0 0.0
        %4217 = vmatpush1.msra.mxu0 %v4190
        %4218 = vmatprep.subr.mxu0 0.0
        %4219 = vmatpush1.msra.mxu0 %v4191
        %4220 = vmatprep.subr.mxu0 0.0
        %4221 = vmatpush1.msra.mxu0 %v4192
        %4222 = vmatprep.subr.mxu0 0.0
        %4223 = vmatpush1.msra.mxu0 %v4193
        %4224 = vmatprep.subr.mxu0 0.0
        %4225 = vmatpush1.msra.mxu0 %v4194
        %4226 = vmatprep.subr.mxu0 0.0
        %4227 = vmatpush1.msra.mxu0 %v4195
        %4228 = vmatprep.subr.mxu0 0.0
        %4229 = vmatpush1.msra.mxu0 %v4196
        %4230 = vmatprep.subr.mxu0 0.0
        %4231 = vmatpush1.msra.mxu0 %v4197
        %4232 = vmatprep.subr.mxu0 0.0
        %4233 = vmatpush1.msra.mxu0 0.0
        %4234 = vmatprep.subr.mxu0 0.0
        %4235 = vmatpush1.msra.mxu0 0.0
        %4236 = vmatprep.subr.mxu0 0.0
        %4237 = vmatpush1.msra.mxu0 0.0
        %4238 = vmatprep.subr.mxu0 0.0
        %4239 = vmatpush1.msra.mxu0 0.0
        %4240 = vmatprep.subr.mxu0 0.0
        %4241 = vmatpush1.msra.mxu0 0.0
        %4242 = vmatprep.subr.mxu0 0.0
        %4243 = vmatpush1.msra.mxu0 0.0
        %4244 = vmatprep.subr.mxu0 0.0
        %4245 = vmatpush1.msra.mxu0 0.0
        %4246 = vmatprep.subr.mxu0 0.0
        %4247 = vmatpush1.msra.mxu0 0.0
        %4248 = vmatprep.subr.mxu0 0.0
        %4249 = vmatpush1.msra.mxu0 0.0
        %4250 = vmatprep.subr.mxu0 0.0
        %4251 = vmatpush1.msra.mxu0 0.0
        %4252 = vmatprep.subr.mxu0 0.0
        %4253 = vmatpush1.msra.mxu0 0.0
        %4254 = vmatprep.subr.mxu0 0.0
        %4255 = vmatpush1.msra.mxu0 0.0
        %4256 = vmatprep.subr.mxu0 0.0
        %4257 = vmatpush1.msra.mxu0 0.0
        %4258 = vmatprep.subr.mxu0 0.0
        %4259 = vmatpush1.msra.mxu0 0.0
        %4260 = vmatprep.subr.mxu0 0.0
        %4261 = vmatpush1.msra.mxu0 0.0
        %4262 = vmatprep.subr.mxu0 0.0
        %4263 = vmatpush1.msra.mxu0 0.0
        %4264 = vmatprep.mubr.f32.mxu0 0.0
        %4265 = vmatmul.mubr.f32.gmra.mrb[0].mxu0 %v4198
        %v4266 = vpop.f32.mrb[0].mxu0
        %v4267 = vadd.f32 0.0, %v4266
        %v4268 = vpop.f32.mrb[0].mxu0
        %4269 = vdwg.mxu0
        %v4270 = vadd.f32 %v4180, %v4267
        %s4271 = scalar_lea.vmem [#allocation13], 3840
        %v4272 = vld [vmem:[%s4271] sm:$0xff]
        %v4273 = vld [vmem:[%s4271 + $0x8] sm:$0xff]
        %v4274 = vld [vmem:[%s4271 + $0x10] sm:$0xff]
        %v4275 = vld [vmem:[%s4271 + $0x18] sm:$0xff]
        %v4276 = vld [vmem:[%s4271 + $0x20] sm:$0xff]
        %v4277 = vld [vmem:[%s4271 + $0x28] sm:$0xff]
        %v4278 = vld [vmem:[%s4271 + $0x30] sm:$0xff]
        %v4279 = vld [vmem:[%s4271 + $0x38] sm:$0xff]
        %v4280 = vld [vmem:[%s4271 + $0x40] sm:$0xff]
        %v4281 = vld [vmem:[%s4271 + $0x48] sm:$0xff]
        %v4282 = vld [vmem:[%s4271 + $0x50] sm:$0xff]
        %v4283 = vld [vmem:[%s4271 + $0x58] sm:$0xff]
        %v4284 = vld [vmem:[%s4271 + $0x60] sm:$0xff]
        %v4285 = vld [vmem:[%s4271 + $0x68] sm:$0xff]
        %v4286 = vld [vmem:[%s4271 + $0x70] sm:$0xff]
        %v4287 = vld [vmem:[%s4271 + $0x78] sm:$0xff]
        %v4288 = vrot.slane %v1575, 6
        %4290 = vmatprep.subr.mxu0 0.0
        %4291 = vmatpush1.msra.mxu0 %v4272
        %4292 = vmatprep.subr.mxu0 0.0
        %4293 = vmatpush1.msra.mxu0 %v4273
        %4294 = vmatprep.subr.mxu0 0.0
        %4295 = vmatpush1.msra.mxu0 %v4274
        %4296 = vmatprep.subr.mxu0 0.0
        %4297 = vmatpush1.msra.mxu0 %v4275
        %4298 = vmatprep.subr.mxu0 0.0
        %4299 = vmatpush1.msra.mxu0 %v4276
        %4300 = vmatprep.subr.mxu0 0.0
        %4301 = vmatpush1.msra.mxu0 %v4277
        %4302 = vmatprep.subr.mxu0 0.0
        %4303 = vmatpush1.msra.mxu0 %v4278
        %4304 = vmatprep.subr.mxu0 0.0
        %4305 = vmatpush1.msra.mxu0 %v4279
        %4306 = vmatprep.subr.mxu0 0.0
        %4307 = vmatpush1.msra.mxu0 %v4280
        %4308 = vmatprep.subr.mxu0 0.0
        %4309 = vmatpush1.msra.mxu0 %v4281
        %4310 = vmatprep.subr.mxu0 0.0
        %4311 = vmatpush1.msra.mxu0 %v4282
        %4312 = vmatprep.subr.mxu0 0.0
        %4313 = vmatpush1.msra.mxu0 %v4283
        %4314 = vmatprep.subr.mxu0 0.0
        %4315 = vmatpush1.msra.mxu0 %v4284
        %4316 = vmatprep.subr.mxu0 0.0
        %4317 = vmatpush1.msra.mxu0 %v4285
        %4318 = vmatprep.subr.mxu0 0.0
        %4319 = vmatpush1.msra.mxu0 %v4286
        %4320 = vmatprep.subr.mxu0 0.0
        %4321 = vmatpush1.msra.mxu0 %v4287
        %4322 = vmatprep.subr.mxu0 0.0
        %4323 = vmatpush1.msra.mxu0 0.0
        %4324 = vmatprep.subr.mxu0 0.0
        %4325 = vmatpush1.msra.mxu0 0.0
        %4326 = vmatprep.subr.mxu0 0.0
        %4327 = vmatpush1.msra.mxu0 0.0
        %4328 = vmatprep.subr.mxu0 0.0
        %4329 = vmatpush1.msra.mxu0 0.0
        %4330 = vmatprep.subr.mxu0 0.0
        %4331 = vmatpush1.msra.mxu0 0.0
        %4332 = vmatprep.subr.mxu0 0.0
        %4333 = vmatpush1.msra.mxu0 0.0
        %4334 = vmatprep.subr.mxu0 0.0
        %4335 = vmatpush1.msra.mxu0 0.0
        %4336 = vmatprep.subr.mxu0 0.0
        %4337 = vmatpush1.msra.mxu0 0.0
        %4338 = vmatprep.subr.mxu0 0.0
        %4339 = vmatpush1.msra.mxu0 0.0
        %4340 = vmatprep.subr.mxu0 0.0
        %4341 = vmatpush1.msra.mxu0 0.0
        %4342 = vmatprep.subr.mxu0 0.0
        %4343 = vmatpush1.msra.mxu0 0.0
        %4344 = vmatprep.subr.mxu0 0.0
        %4345 = vmatpush1.msra.mxu0 0.0
        %4346 = vmatprep.subr.mxu0 0.0
        %4347 = vmatpush1.msra.mxu0 0.0
        %4348 = vmatprep.subr.mxu0 0.0
        %4349 = vmatpush1.msra.mxu0 0.0
        %4350 = vmatprep.subr.mxu0 0.0
        %4351 = vmatpush1.msra.mxu0 0.0
        %4352 = vmatprep.subr.mxu0 0.0
        %4353 = vmatpush1.msra.mxu0 0.0
        %4354 = vmatprep.mubr.f32.mxu0 0.0
        %4355 = vmatmul.mubr.f32.gmra.mrb[0].mxu0 %v4288
        %v4356 = vpop.f32.mrb[0].mxu0
        %v4357 = vadd.f32 0.0, %v4356
        %v4358 = vpop.f32.mrb[0].mxu0
        %4359 = vdwg.mxu0
        %v4360 = vadd.f32 %v4270, %v4357
        %s4361 = scalar_lea.vmem [#allocation13], 3968
        %v4362 = vld [vmem:[%s4361] sm:$0xff]
        %v4363 = vld [vmem:[%s4361 + $0x8] sm:$0xff]
        %v4364 = vld [vmem:[%s4361 + $0x10] sm:$0xff]
        %v4365 = vld [vmem:[%s4361 + $0x18] sm:$0xff]
        %v4366 = vld [vmem:[%s4361 + $0x20] sm:$0xff]
        %v4367 = vld [vmem:[%s4361 + $0x28] sm:$0xff]
        %v4368 = vld [vmem:[%s4361 + $0x30] sm:$0xff]
        %v4369 = vld [vmem:[%s4361 + $0x38] sm:$0xff]
        %v4370 = vld [vmem:[%s4361 + $0x40] sm:$0xff]
        %v4371 = vld [vmem:[%s4361 + $0x48] sm:$0xff]
        %v4372 = vld [vmem:[%s4361 + $0x50] sm:$0xff]
        %v4373 = vld [vmem:[%s4361 + $0x58] sm:$0xff]
        %v4374 = vld [vmem:[%s4361 + $0x60] sm:$0xff]
        %v4375 = vld [vmem:[%s4361 + $0x68] sm:$0xff]
        %v4376 = vld [vmem:[%s4361 + $0x70] sm:$0xff]
        %v4377 = vld [vmem:[%s4361 + $0x78] sm:$0xff]
        %v4378 = vrot.slane %v1575, 7
        %4380 = vmatprep.subr.mxu0 0.0
        %4381 = vmatpush1.msra.mxu0 %v4362
        %4382 = vmatprep.subr.mxu0 0.0
        %4383 = vmatpush1.msra.mxu0 %v4363
        %4384 = vmatprep.subr.mxu0 0.0
        %4385 = vmatpush1.msra.mxu0 %v4364
        %4386 = vmatprep.subr.mxu0 0.0
        %4387 = vmatpush1.msra.mxu0 %v4365
        %4388 = vmatprep.subr.mxu0 0.0
        %4389 = vmatpush1.msra.mxu0 %v4366
        %4390 = vmatprep.subr.mxu0 0.0
        %4391 = vmatpush1.msra.mxu0 %v4367
        %4392 = vmatprep.subr.mxu0 0.0
        %4393 = vmatpush1.msra.mxu0 %v4368
        %4394 = vmatprep.subr.mxu0 0.0
        %4395 = vmatpush1.msra.mxu0 %v4369
        %4396 = vmatprep.subr.mxu0 0.0
        %4397 = vmatpush1.msra.mxu0 %v4370
        %4398 = vmatprep.subr.mxu0 0.0
        %4399 = vmatpush1.msra.mxu0 %v4371
        %4400 = vmatprep.subr.mxu0 0.0
        %4401 = vmatpush1.msra.mxu0 %v4372
        %4402 = vmatprep.subr.mxu0 0.0
        %4403 = vmatpush1.msra.mxu0 %v4373
        %4404 = vmatprep.subr.mxu0 0.0
        %4405 = vmatpush1.msra.mxu0 %v4374
        %4406 = vmatprep.subr.mxu0 0.0
        %4407 = vmatpush1.msra.mxu0 %v4375
        %4408 = vmatprep.subr.mxu0 0.0
        %4409 = vmatpush1.msra.mxu0 %v4376
        %4410 = vmatprep.subr.mxu0 0.0
        %4411 = vmatpush1.msra.mxu0 %v4377
        %4412 = vmatprep.subr.mxu0 0.0
        %4413 = vmatpush1.msra.mxu0 0.0
        %4414 = vmatprep.subr.mxu0 0.0
        %4415 = vmatpush1.msra.mxu0 0.0
        %4416 = vmatprep.subr.mxu0 0.0
        %4417 = vmatpush1.msra.mxu0 0.0
        %4418 = vmatprep.subr.mxu0 0.0
        %4419 = vmatpush1.msra.mxu0 0.0
        %4420 = vmatprep.subr.mxu0 0.0
        %4421 = vmatpush1.msra.mxu0 0.0
        %4422 = vmatprep.subr.mxu0 0.0
        %4423 = vmatpush1.msra.mxu0 0.0
        %4424 = vmatprep.subr.mxu0 0.0
        %4425 = vmatpush1.msra.mxu0 0.0
        %4426 = vmatprep.subr.mxu0 0.0
        %4427 = vmatpush1.msra.mxu0 0.0
        %4428 = vmatprep.subr.mxu0 0.0
        %4429 = vmatpush1.msra.mxu0 0.0
        %4430 = vmatprep.subr.mxu0 0.0
        %4431 = vmatpush1.msra.mxu0 0.0
        %4432 = vmatprep.subr.mxu0 0.0
        %4433 = vmatpush1.msra.mxu0 0.0
        %4434 = vmatprep.subr.mxu0 0.0
        %4435 = vmatpush1.msra.mxu0 0.0
        %4436 = vmatprep.subr.mxu0 0.0
        %4437 = vmatpush1.msra.mxu0 0.0
        %4438 = vmatprep.subr.mxu0 0.0
        %4439 = vmatpush1.msra.mxu0 0.0
        %4440 = vmatprep.subr.mxu0 0.0
        %4441 = vmatpush1.msra.mxu0 0.0
        %4442 = vmatprep.subr.mxu0 0.0
        %4443 = vmatpush1.msra.mxu0 0.0
        %4444 = vmatprep.mubr.f32.mxu0 0.0
        %4445 = vmatmul.mubr.f32.gmra.mrb[0].mxu0 %v4378
        %v4446 = vpop.f32.mrb[0].mxu0
        %v4447 = vadd.f32 0.0, %v4446
        %v4448 = vpop.f32.mrb[0].mxu0
        %4449 = vdwg.mxu0
        %v4450 = vadd.f32 %v4360, %v4447
        %s4451 = scalar_lea.vmem [#allocation13], 4096
        %v4452 = vld [vmem:[%s4451] sm:$0xff]
        %v4453 = vld [vmem:[%s4451 + $0x8] sm:$0xff]
        %v4454 = vld [vmem:[%s4451 + $0x10] sm:$0xff]
        %v4455 = vld [vmem:[%s4451 + $0x18] sm:$0xff]
        %v4456 = vld [vmem:[%s4451 + $0x20] sm:$0xff]
        %v4457 = vld [vmem:[%s4451 + $0x28] sm:$0xff]
        %v4458 = vld [vmem:[%s4451 + $0x30] sm:$0xff]
        %v4459 = vld [vmem:[%s4451 + $0x38] sm:$0xff]
        %v4460 = vld [vmem:[%s4451 + $0x40] sm:$0xff]
        %v4461 = vld [vmem:[%s4451 + $0x48] sm:$0xff]
        %v4462 = vld [vmem:[%s4451 + $0x50] sm:$0xff]
        %v4463 = vld [vmem:[%s4451 + $0x58] sm:$0xff]
        %v4464 = vld [vmem:[%s4451 + $0x60] sm:$0xff]
        %v4465 = vld [vmem:[%s4451 + $0x68] sm:$0xff]
        %v4466 = vld [vmem:[%s4451 + $0x70] sm:$0xff]
        %v4467 = vld [vmem:[%s4451 + $0x78] sm:$0xff]
        %4468 = vmatprep.subr.mxu0 0.0
        %4469 = vmatpush1.msra.mxu0 %v4452
        %4470 = vmatprep.subr.mxu0 0.0
        %4471 = vmatpush1.msra.mxu0 %v4453
        %4472 = vmatprep.subr.mxu0 0.0
        %4473 = vmatpush1.msra.mxu0 %v4454
        %4474 = vmatprep.subr.mxu0 0.0
        %4475 = vmatpush1.msra.mxu0 %v4455
        %4476 = vmatprep.subr.mxu0 0.0
        %4477 = vmatpush1.msra.mxu0 %v4456
        %4478 = vmatprep.subr.mxu0 0.0
        %4479 = vmatpush1.msra.mxu0 %v4457
        %4480 = vmatprep.subr.mxu0 0.0
        %4481 = vmatpush1.msra.mxu0 %v4458
        %4482 = vmatprep.subr.mxu0 0.0
        %4483 = vmatpush1.msra.mxu0 %v4459
        %4484 = vmatprep.subr.mxu0 0.0
        %4485 = vmatpush1.msra.mxu0 %v4460
        %4486 = vmatprep.subr.mxu0 0.0
        %4487 = vmatpush1.msra.mxu0 %v4461
        %4488 = vmatprep.subr.mxu0 0.0
        %4489 = vmatpush1.msra.mxu0 %v4462
        %4490 = vmatprep.subr.mxu0 0.0
        %4491 = vmatpush1.msra.mxu0 %v4463
        %4492 = vmatprep.subr.mxu0 0.0
        %4493 = vmatpush1.msra.mxu0 %v4464
        %4494 = vmatprep.subr.mxu0 0.0
        %4495 = vmatpush1.msra.mxu0 %v4465
        %4496 = vmatprep.subr.mxu0 0.0
        %4497 = vmatpush1.msra.mxu0 %v4466
        %4498 = vmatprep.subr.mxu0 0.0
        %4499 = vmatpush1.msra.mxu0 %v4467
        %4500 = vmatprep.subr.mxu0 0.0
        %4501 = vmatpush1.msra.mxu0 0.0
        %4502 = vmatprep.subr.mxu0 0.0
        %4503 = vmatpush1.msra.mxu0 0.0
        %4504 = vmatprep.subr.mxu0 0.0
        %4505 = vmatpush1.msra.mxu0 0.0
        %4506 = vmatprep.subr.mxu0 0.0
        %4507 = vmatpush1.msra.mxu0 0.0
        %4508 = vmatprep.subr.mxu0 0.0
        %4509 = vmatpush1.msra.mxu0 0.0
        %4510 = vmatprep.subr.mxu0 0.0
        %4511 = vmatpush1.msra.mxu0 0.0
        %4512 = vmatprep.subr.mxu0 0.0
        %4513 = vmatpush1.msra.mxu0 0.0
        %4514 = vmatprep.subr.mxu0 0.0
        %4515 = vmatpush1.msra.mxu0 0.0
        %4516 = vmatprep.subr.mxu0 0.0
        %4517 = vmatpush1.msra.mxu0 0.0
        %4518 = vmatprep.subr.mxu0 0.0
        %4519 = vmatpush1.msra.mxu0 0.0
        %4520 = vmatprep.subr.mxu0 0.0
        %4521 = vmatpush1.msra.mxu0 0.0
        %4522 = vmatprep.subr.mxu0 0.0
        %4523 = vmatpush1.msra.mxu0 0.0
        %4524 = vmatprep.subr.mxu0 0.0
        %4525 = vmatpush1.msra.mxu0 0.0
        %4526 = vmatprep.subr.mxu0 0.0
        %4527 = vmatpush1.msra.mxu0 0.0
        %4528 = vmatprep.subr.mxu0 0.0
        %4529 = vmatpush1.msra.mxu0 0.0
        %4530 = vmatprep.subr.mxu0 0.0
        %4531 = vmatpush1.msra.mxu0 0.0
        %4532 = vmatprep.mubr.f32.mxu0 0.0
        %4533 = vmatmul.mubr.f32.gmra.mrb[0].mxu0 %v1576
        %v4534 = vpop.f32.mrb[0].mxu0
        %v4535 = vadd.f32 0.0, %v4534
        %v4536 = vpop.f32.mrb[0].mxu0
        %4537 = vdwg.mxu0
        %v4538 = vadd.f32 %v4450, %v4535
        %s4539 = scalar_lea.vmem [#allocation13], 4224
        %v4540 = vld [vmem:[%s4539] sm:$0xff]
        %v4541 = vld [vmem:[%s4539 + $0x8] sm:$0xff]
        %v4542 = vld [vmem:[%s4539 + $0x10] sm:$0xff]
        %v4543 = vld [vmem:[%s4539 + $0x18] sm:$0xff]
        %v4544 = vld [vmem:[%s4539 + $0x20] sm:$0xff]
        %v4545 = vld [vmem:[%s4539 + $0x28] sm:$0xff]
        %v4546 = vld [vmem:[%s4539 + $0x30] sm:$0xff]
        %v4547 = vld [vmem:[%s4539 + $0x38] sm:$0xff]
        %v4548 = vld [vmem:[%s4539 + $0x40] sm:$0xff]
        %v4549 = vld [vmem:[%s4539 + $0x48] sm:$0xff]
        %v4550 = vld [vmem:[%s4539 + $0x50] sm:$0xff]
        %v4551 = vld [vmem:[%s4539 + $0x58] sm:$0xff]
        %v4552 = vld [vmem:[%s4539 + $0x60] sm:$0xff]
        %v4553 = vld [vmem:[%s4539 + $0x68] sm:$0xff]
        %v4554 = vld [vmem:[%s4539 + $0x70] sm:$0xff]
        %v4555 = vld [vmem:[%s4539 + $0x78] sm:$0xff]
        %v4557 = vrot.slane %v1576, 1
        %4559 = vmatprep.subr.mxu0 0.0
        %4560 = vmatpush1.msra.mxu0 %v4540
        %4561 = vmatprep.subr.mxu0 0.0
        %4562 = vmatpush1.msra.mxu0 %v4541
        %4563 = vmatprep.subr.mxu0 0.0
        %4564 = vmatpush1.msra.mxu0 %v4542
        %4565 = vmatprep.subr.mxu0 0.0
        %4566 = vmatpush1.msra.mxu0 %v4543
        %4567 = vmatprep.subr.mxu0 0.0
        %4568 = vmatpush1.msra.mxu0 %v4544
        %4569 = vmatprep.subr.mxu0 0.0
        %4570 = vmatpush1.msra.mxu0 %v4545
        %4571 = vmatprep.subr.mxu0 0.0
        %4572 = vmatpush1.msra.mxu0 %v4546
        %4573 = vmatprep.subr.mxu0 0.0
        %4574 = vmatpush1.msra.mxu0 %v4547
        %4575 = vmatprep.subr.mxu0 0.0
        %4576 = vmatpush1.msra.mxu0 %v4548
        %4577 = vmatprep.subr.mxu0 0.0
        %4578 = vmatpush1.msra.mxu0 %v4549
        %4579 = vmatprep.subr.mxu0 0.0
        %4580 = vmatpush1.msra.mxu0 %v4550
        %4581 = vmatprep.subr.mxu0 0.0
        %4582 = vmatpush1.msra.mxu0 %v4551
        %4583 = vmatprep.subr.mxu0 0.0
        %4584 = vmatpush1.msra.mxu0 %v4552
        %4585 = vmatprep.subr.mxu0 0.0
        %4586 = vmatpush1.msra.mxu0 %v4553
        %4587 = vmatprep.subr.mxu0 0.0
        %4588 = vmatpush1.msra.mxu0 %v4554
        %4589 = vmatprep.subr.mxu0 0.0
        %4590 = vmatpush1.msra.mxu0 %v4555
        %4591 = vmatprep.subr.mxu0 0.0
        %4592 = vmatpush1.msra.mxu0 0.0
        %4593 = vmatprep.subr.mxu0 0.0
        %4594 = vmatpush1.msra.mxu0 0.0
        %4595 = vmatprep.subr.mxu0 0.0
        %4596 = vmatpush1.msra.mxu0 0.0
        %4597 = vmatprep.subr.mxu0 0.0
        %4598 = vmatpush1.msra.mxu0 0.0
        %4599 = vmatprep.subr.mxu0 0.0
        %4600 = vmatpush1.msra.mxu0 0.0
        %4601 = vmatprep.subr.mxu0 0.0
        %4602 = vmatpush1.msra.mxu0 0.0
        %4603 = vmatprep.subr.mxu0 0.0
        %4604 = vmatpush1.msra.mxu0 0.0
        %4605 = vmatprep.subr.mxu0 0.0
        %4606 = vmatpush1.msra.mxu0 0.0
        %4607 = vmatprep.subr.mxu0 0.0
        %4608 = vmatpush1.msra.mxu0 0.0
        %4609 = vmatprep.subr.mxu0 0.0
        %4610 = vmatpush1.msra.mxu0 0.0
        %4611 = vmatprep.subr.mxu0 0.0
        %4612 = vmatpush1.msra.mxu0 0.0
        %4613 = vmatprep.subr.mxu0 0.0
        %4614 = vmatpush1.msra.mxu0 0.0
        %4615 = vmatprep.subr.mxu0 0.0
        %4616 = vmatpush1.msra.mxu0 0.0
        %4617 = vmatprep.subr.mxu0 0.0
        %4618 = vmatpush1.msra.mxu0 0.0
        %4619 = vmatprep.subr.mxu0 0.0
        %4620 = vmatpush1.msra.mxu0 0.0
        %4621 = vmatprep.subr.mxu0 0.0
        %4622 = vmatpush1.msra.mxu0 0.0
        %4623 = vmatprep.mubr.f32.mxu0 0.0
        %4624 = vmatmul.mubr.f32.gmra.mrb[0].mxu0 %v4557
        %v4625 = vpop.f32.mrb[0].mxu0
        %v4626 = vadd.f32 0.0, %v4625
        %v4627 = vpop.f32.mrb[0].mxu0
        %4628 = vdwg.mxu0
        %v4629 = vadd.f32 %v4538, %v4626
        %s4630 = scalar_lea.vmem [#allocation13], 4352
        %v4631 = vld [vmem:[%s4630] sm:$0xff]
        %v4632 = vld [vmem:[%s4630 + $0x8] sm:$0xff]
        %v4633 = vld [vmem:[%s4630 + $0x10] sm:$0xff]
        %v4634 = vld [vmem:[%s4630 + $0x18] sm:$0xff]
        %v4635 = vld [vmem:[%s4630 + $0x20] sm:$0xff]
        %v4636 = vld [vmem:[%s4630 + $0x28] sm:$0xff]
        %v4637 = vld [vmem:[%s4630 + $0x30] sm:$0xff]
        %v4638 = vld [vmem:[%s4630 + $0x38] sm:$0xff]
        %v4639 = vld [vmem:[%s4630 + $0x40] sm:$0xff]
        %v4640 = vld [vmem:[%s4630 + $0x48] sm:$0xff]
        %v4641 = vld [vmem:[%s4630 + $0x50] sm:$0xff]
        %v4642 = vld [vmem:[%s4630 + $0x58] sm:$0xff]
        %v4643 = vld [vmem:[%s4630 + $0x60] sm:$0xff]
        %v4644 = vld [vmem:[%s4630 + $0x68] sm:$0xff]
        %v4645 = vld [vmem:[%s4630 + $0x70] sm:$0xff]
        %v4646 = vld [vmem:[%s4630 + $0x78] sm:$0xff]
        %v4647 = vrot.slane %v1576, 2
        %4649 = vmatprep.subr.mxu0 0.0
        %4650 = vmatpush1.msra.mxu0 %v4631
        %4651 = vmatprep.subr.mxu0 0.0
        %4652 = vmatpush1.msra.mxu0 %v4632
        %4653 = vmatprep.subr.mxu0 0.0
        %4654 = vmatpush1.msra.mxu0 %v4633
        %4655 = vmatprep.subr.mxu0 0.0
        %4656 = vmatpush1.msra.mxu0 %v4634
        %4657 = vmatprep.subr.mxu0 0.0
        %4658 = vmatpush1.msra.mxu0 %v4635
        %4659 = vmatprep.subr.mxu0 0.0
        %4660 = vmatpush1.msra.mxu0 %v4636
        %4661 = vmatprep.subr.mxu0 0.0
        %4662 = vmatpush1.msra.mxu0 %v4637
        %4663 = vmatprep.subr.mxu0 0.0
        %4664 = vmatpush1.msra.mxu0 %v4638
        %4665 = vmatprep.subr.mxu0 0.0
        %4666 = vmatpush1.msra.mxu0 %v4639
        %4667 = vmatprep.subr.mxu0 0.0
        %4668 = vmatpush1.msra.mxu0 %v4640
        %4669 = vmatprep.subr.mxu0 0.0
        %4670 = vmatpush1.msra.mxu0 %v4641
        %4671 = vmatprep.subr.mxu0 0.0
        %4672 = vmatpush1.msra.mxu0 %v4642
        %4673 = vmatprep.subr.mxu0 0.0
        %4674 = vmatpush1.msra.mxu0 %v4643
        %4675 = vmatprep.subr.mxu0 0.0
        %4676 = vmatpush1.msra.mxu0 %v4644
        %4677 = vmatprep.subr.mxu0 0.0
        %4678 = vmatpush1.msra.mxu0 %v4645
        %4679 = vmatprep.subr.mxu0 0.0
        %4680 = vmatpush1.msra.mxu0 %v4646
        %4681 = vmatprep.subr.mxu0 0.0
        %4682 = vmatpush1.msra.mxu0 0.0
        %4683 = vmatprep.subr.mxu0 0.0
        %4684 = vmatpush1.msra.mxu0 0.0
        %4685 = vmatprep.subr.mxu0 0.0
        %4686 = vmatpush1.msra.mxu0 0.0
        %4687 = vmatprep.subr.mxu0 0.0
        %4688 = vmatpush1.msra.mxu0 0.0
        %4689 = vmatprep.subr.mxu0 0.0
        %4690 = vmatpush1.msra.mxu0 0.0
        %4691 = vmatprep.subr.mxu0 0.0
        %4692 = vmatpush1.msra.mxu0 0.0
        %4693 = vmatprep.subr.mxu0 0.0
        %4694 = vmatpush1.msra.mxu0 0.0
        %4695 = vmatprep.subr.mxu0 0.0
        %4696 = vmatpush1.msra.mxu0 0.0
        %4697 = vmatprep.subr.mxu0 0.0
        %4698 = vmatpush1.msra.mxu0 0.0
        %4699 = vmatprep.subr.mxu0 0.0
        %4700 = vmatpush1.msra.mxu0 0.0
        %4701 = vmatprep.subr.mxu0 0.0
        %4702 = vmatpush1.msra.mxu0 0.0
        %4703 = vmatprep.subr.mxu0 0.0
        %4704 = vmatpush1.msra.mxu0 0.0
        %4705 = vmatprep.subr.mxu0 0.0
        %4706 = vmatpush1.msra.mxu0 0.0
        %4707 = vmatprep.subr.mxu0 0.0
        %4708 = vmatpush1.msra.mxu0 0.0
        %4709 = vmatprep.subr.mxu0 0.0
        %4710 = vmatpush1.msra.mxu0 0.0
        %4711 = vmatprep.subr.mxu0 0.0
        %4712 = vmatpush1.msra.mxu0 0.0
        %4713 = vmatprep.mubr.f32.mxu0 0.0
        %4714 = vmatmul.mubr.f32.gmra.mrb[0].mxu0 %v4647
        %v4715 = vpop.f32.mrb[0].mxu0
        %v4716 = vadd.f32 0.0, %v4715
        %v4717 = vpop.f32.mrb[0].mxu0
        %4718 = vdwg.mxu0
        %v4719 = vadd.f32 %v4629, %v4716
        %s4720 = scalar_lea.vmem [#allocation13], 4480
        %v4721 = vld [vmem:[%s4720] sm:$0xff]
        %v4722 = vld [vmem:[%s4720 + $0x8] sm:$0xff]
        %v4723 = vld [vmem:[%s4720 + $0x10] sm:$0xff]
        %v4724 = vld [vmem:[%s4720 + $0x18] sm:$0xff]
        %v4725 = vld [vmem:[%s4720 + $0x20] sm:$0xff]
        %v4726 = vld [vmem:[%s4720 + $0x28] sm:$0xff]
        %v4727 = vld [vmem:[%s4720 + $0x30] sm:$0xff]
        %v4728 = vld [vmem:[%s4720 + $0x38] sm:$0xff]
        %v4729 = vld [vmem:[%s4720 + $0x40] sm:$0xff]
        %v4730 = vld [vmem:[%s4720 + $0x48] sm:$0xff]
        %v4731 = vld [vmem:[%s4720 + $0x50] sm:$0xff]
        %v4732 = vld [vmem:[%s4720 + $0x58] sm:$0xff]
        %v4733 = vld [vmem:[%s4720 + $0x60] sm:$0xff]
        %v4734 = vld [vmem:[%s4720 + $0x68] sm:$0xff]
        %v4735 = vld [vmem:[%s4720 + $0x70] sm:$0xff]
        %v4736 = vld [vmem:[%s4720 + $0x78] sm:$0xff]
        %v4737 = vrot.slane %v1576, 3
        %4739 = vmatprep.subr.mxu0 0.0
        %4740 = vmatpush1.msra.mxu0 %v4721
        %4741 = vmatprep.subr.mxu0 0.0
        %4742 = vmatpush1.msra.mxu0 %v4722
        %4743 = vmatprep.subr.mxu0 0.0
        %4744 = vmatpush1.msra.mxu0 %v4723
        %4745 = vmatprep.subr.mxu0 0.0
        %4746 = vmatpush1.msra.mxu0 %v4724
        %4747 = vmatprep.subr.mxu0 0.0
        %4748 = vmatpush1.msra.mxu0 %v4725
        %4749 = vmatprep.subr.mxu0 0.0
        %4750 = vmatpush1.msra.mxu0 %v4726
        %4751 = vmatprep.subr.mxu0 0.0
        %4752 = vmatpush1.msra.mxu0 %v4727
        %4753 = vmatprep.subr.mxu0 0.0
        %4754 = vmatpush1.msra.mxu0 %v4728
        %4755 = vmatprep.subr.mxu0 0.0
        %4756 = vmatpush1.msra.mxu0 %v4729
        %4757 = vmatprep.subr.mxu0 0.0
        %4758 = vmatpush1.msra.mxu0 %v4730
        %4759 = vmatprep.subr.mxu0 0.0
        %4760 = vmatpush1.msra.mxu0 %v4731
        %4761 = vmatprep.subr.mxu0 0.0
        %4762 = vmatpush1.msra.mxu0 %v4732
        %4763 = vmatprep.subr.mxu0 0.0
        %4764 = vmatpush1.msra.mxu0 %v4733
        %4765 = vmatprep.subr.mxu0 0.0
        %4766 = vmatpush1.msra.mxu0 %v4734
        %4767 = vmatprep.subr.mxu0 0.0
        %4768 = vmatpush1.msra.mxu0 %v4735
        %4769 = vmatprep.subr.mxu0 0.0
        %4770 = vmatpush1.msra.mxu0 %v4736
        %4771 = vmatprep.subr.mxu0 0.0
        %4772 = vmatpush1.msra.mxu0 0.0
        %4773 = vmatprep.subr.mxu0 0.0
        %4774 = vmatpush1.msra.mxu0 0.0
        %4775 = vmatprep.subr.mxu0 0.0
        %4776 = vmatpush1.msra.mxu0 0.0
        %4777 = vmatprep.subr.mxu0 0.0
        %4778 = vmatpush1.msra.mxu0 0.0
        %4779 = vmatprep.subr.mxu0 0.0
        %4780 = vmatpush1.msra.mxu0 0.0
        %4781 = vmatprep.subr.mxu0 0.0
        %4782 = vmatpush1.msra.mxu0 0.0
        %4783 = vmatprep.subr.mxu0 0.0
        %4784 = vmatpush1.msra.mxu0 0.0
        %4785 = vmatprep.subr.mxu0 0.0
        %4786 = vmatpush1.msra.mxu0 0.0
        %4787 = vmatprep.subr.mxu0 0.0
        %4788 = vmatpush1.msra.mxu0 0.0
        %4789 = vmatprep.subr.mxu0 0.0
        %4790 = vmatpush1.msra.mxu0 0.0
        %4791 = vmatprep.subr.mxu0 0.0
        %4792 = vmatpush1.msra.mxu0 0.0
        %4793 = vmatprep.subr.mxu0 0.0
        %4794 = vmatpush1.msra.mxu0 0.0
        %4795 = vmatprep.subr.mxu0 0.0
        %4796 = vmatpush1.msra.mxu0 0.0
        %4797 = vmatprep.subr.mxu0 0.0
        %4798 = vmatpush1.msra.mxu0 0.0
        %4799 = vmatprep.subr.mxu0 0.0
        %4800 = vmatpush1.msra.mxu0 0.0
        %4801 = vmatprep.subr.mxu0 0.0
        %4802 = vmatpush1.msra.mxu0 0.0
        %4803 = vmatprep.mubr.f32.mxu0 0.0
        %4804 = vmatmul.mubr.f32.gmra.mrb[0].mxu0 %v4737
        %v4805 = vpop.f32.mrb[0].mxu0
        %v4806 = vadd.f32 0.0, %v4805
        %v4807 = vpop.f32.mrb[0].mxu0
        %4808 = vdwg.mxu0
        %v4809 = vadd.f32 %v4719, %v4806
        %s4810 = scalar_lea.vmem [#allocation13], 4608
        %v4811 = vld [vmem:[%s4810] sm:$0xff]
        %v4812 = vld [vmem:[%s4810 + $0x8] sm:$0xff]
        %v4813 = vld [vmem:[%s4810 + $0x10] sm:$0xff]
        %v4814 = vld [vmem:[%s4810 + $0x18] sm:$0xff]
        %v4815 = vld [vmem:[%s4810 + $0x20] sm:$0xff]
        %v4816 = vld [vmem:[%s4810 + $0x28] sm:$0xff]
        %v4817 = vld [vmem:[%s4810 + $0x30] sm:$0xff]
        %v4818 = vld [vmem:[%s4810 + $0x38] sm:$0xff]
        %v4819 = vld [vmem:[%s4810 + $0x40] sm:$0xff]
        %v4820 = vld [vmem:[%s4810 + $0x48] sm:$0xff]
        %v4821 = vld [vmem:[%s4810 + $0x50] sm:$0xff]
        %v4822 = vld [vmem:[%s4810 + $0x58] sm:$0xff]
        %v4823 = vld [vmem:[%s4810 + $0x60] sm:$0xff]
        %v4824 = vld [vmem:[%s4810 + $0x68] sm:$0xff]
        %v4825 = vld [vmem:[%s4810 + $0x70] sm:$0xff]
        %v4826 = vld [vmem:[%s4810 + $0x78] sm:$0xff]
        %v4827 = vrot.slane %v1576, 4
        %4829 = vmatprep.subr.mxu0 0.0
        %4830 = vmatpush1.msra.mxu0 %v4811
        %4831 = vmatprep.subr.mxu0 0.0
        %4832 = vmatpush1.msra.mxu0 %v4812
        %4833 = vmatprep.subr.mxu0 0.0
        %4834 = vmatpush1.msra.mxu0 %v4813
        %4835 = vmatprep.subr.mxu0 0.0
        %4836 = vmatpush1.msra.mxu0 %v4814
        %4837 = vmatprep.subr.mxu0 0.0
        %4838 = vmatpush1.msra.mxu0 %v4815
        %4839 = vmatprep.subr.mxu0 0.0
        %4840 = vmatpush1.msra.mxu0 %v4816
        %4841 = vmatprep.subr.mxu0 0.0
        %4842 = vmatpush1.msra.mxu0 %v4817
        %4843 = vmatprep.subr.mxu0 0.0
        %4844 = vmatpush1.msra.mxu0 %v4818
        %4845 = vmatprep.subr.mxu0 0.0
        %4846 = vmatpush1.msra.mxu0 %v4819
        %4847 = vmatprep.subr.mxu0 0.0
        %4848 = vmatpush1.msra.mxu0 %v4820
        %4849 = vmatprep.subr.mxu0 0.0
        %4850 = vmatpush1.msra.mxu0 %v4821
        %4851 = vmatprep.subr.mxu0 0.0
        %4852 = vmatpush1.msra.mxu0 %v4822
        %4853 = vmatprep.subr.mxu0 0.0
        %4854 = vmatpush1.msra.mxu0 %v4823
        %4855 = vmatprep.subr.mxu0 0.0
        %4856 = vmatpush1.msra.mxu0 %v4824
        %4857 = vmatprep.subr.mxu0 0.0
        %4858 = vmatpush1.msra.mxu0 %v4825
        %4859 = vmatprep.subr.mxu0 0.0
        %4860 = vmatpush1.msra.mxu0 %v4826
        %4861 = vmatprep.subr.mxu0 0.0
        %4862 = vmatpush1.msra.mxu0 0.0
        %4863 = vmatprep.subr.mxu0 0.0
        %4864 = vmatpush1.msra.mxu0 0.0
        %4865 = vmatprep.subr.mxu0 0.0
        %4866 = vmatpush1.msra.mxu0 0.0
        %4867 = vmatprep.subr.mxu0 0.0
        %4868 = vmatpush1.msra.mxu0 0.0
        %4869 = vmatprep.subr.mxu0 0.0
        %4870 = vmatpush1.msra.mxu0 0.0
        %4871 = vmatprep.subr.mxu0 0.0
        %4872 = vmatpush1.msra.mxu0 0.0
        %4873 = vmatprep.subr.mxu0 0.0
        %4874 = vmatpush1.msra.mxu0 0.0
        %4875 = vmatprep.subr.mxu0 0.0
        %4876 = vmatpush1.msra.mxu0 0.0
        %4877 = vmatprep.subr.mxu0 0.0
        %4878 = vmatpush1.msra.mxu0 0.0
        %4879 = vmatprep.subr.mxu0 0.0
        %4880 = vmatpush1.msra.mxu0 0.0
        %4881 = vmatprep.subr.mxu0 0.0
        %4882 = vmatpush1.msra.mxu0 0.0
        %4883 = vmatprep.subr.mxu0 0.0
        %4884 = vmatpush1.msra.mxu0 0.0
        %4885 = vmatprep.subr.mxu0 0.0
        %4886 = vmatpush1.msra.mxu0 0.0
        %4887 = vmatprep.subr.mxu0 0.0
        %4888 = vmatpush1.msra.mxu0 0.0
        %4889 = vmatprep.subr.mxu0 0.0
        %4890 = vmatpush1.msra.mxu0 0.0
        %4891 = vmatprep.subr.mxu0 0.0
        %4892 = vmatpush1.msra.mxu0 0.0
        %4893 = vmatprep.mubr.f32.mxu0 0.0
        %4894 = vmatmul.mubr.f32.gmra.mrb[0].mxu0 %v4827
        %v4895 = vpop.f32.mrb[0].mxu0
        %v4896 = vadd.f32 0.0, %v4895
        %v4897 = vpop.f32.mrb[0].mxu0
        %4898 = vdwg.mxu0
        %v4899 = vadd.f32 %v4809, %v4896
        %s4900 = scalar_lea.vmem [#allocation13], 4736
        %v4901 = vld [vmem:[%s4900] sm:$0xff]
        %v4902 = vld [vmem:[%s4900 + $0x8] sm:$0xff]
        %v4903 = vld [vmem:[%s4900 + $0x10] sm:$0xff]
        %v4904 = vld [vmem:[%s4900 + $0x18] sm:$0xff]
        %v4905 = vld [vmem:[%s4900 + $0x20] sm:$0xff]
        %v4906 = vld [vmem:[%s4900 + $0x28] sm:$0xff]
        %v4907 = vld [vmem:[%s4900 + $0x30] sm:$0xff]
        %v4908 = vld [vmem:[%s4900 + $0x38] sm:$0xff]
        %v4909 = vld [vmem:[%s4900 + $0x40] sm:$0xff]
        %v4910 = vld [vmem:[%s4900 + $0x48] sm:$0xff]
        %v4911 = vld [vmem:[%s4900 + $0x50] sm:$0xff]
        %v4912 = vld [vmem:[%s4900 + $0x58] sm:$0xff]
        %v4913 = vld [vmem:[%s4900 + $0x60] sm:$0xff]
        %v4914 = vld [vmem:[%s4900 + $0x68] sm:$0xff]
        %v4915 = vld [vmem:[%s4900 + $0x70] sm:$0xff]
        %v4916 = vld [vmem:[%s4900 + $0x78] sm:$0xff]
        %v4917 = vrot.slane %v1576, 5
        %4919 = vmatprep.subr.mxu0 0.0
        %4920 = vmatpush1.msra.mxu0 %v4901
        %4921 = vmatprep.subr.mxu0 0.0
        %4922 = vmatpush1.msra.mxu0 %v4902
        %4923 = vmatprep.subr.mxu0 0.0
        %4924 = vmatpush1.msra.mxu0 %v4903
        %4925 = vmatprep.subr.mxu0 0.0
        %4926 = vmatpush1.msra.mxu0 %v4904
        %4927 = vmatprep.subr.mxu0 0.0
        %4928 = vmatpush1.msra.mxu0 %v4905
        %4929 = vmatprep.subr.mxu0 0.0
        %4930 = vmatpush1.msra.mxu0 %v4906
        %4931 = vmatprep.subr.mxu0 0.0
        %4932 = vmatpush1.msra.mxu0 %v4907
        %4933 = vmatprep.subr.mxu0 0.0
        %4934 = vmatpush1.msra.mxu0 %v4908
        %4935 = vmatprep.subr.mxu0 0.0
        %4936 = vmatpush1.msra.mxu0 %v4909
        %4937 = vmatprep.subr.mxu0 0.0
        %4938 = vmatpush1.msra.mxu0 %v4910
        %4939 = vmatprep.subr.mxu0 0.0
        %4940 = vmatpush1.msra.mxu0 %v4911
        %4941 = vmatprep.subr.mxu0 0.0
        %4942 = vmatpush1.msra.mxu0 %v4912
        %4943 = vmatprep.subr.mxu0 0.0
        %4944 = vmatpush1.msra.mxu0 %v4913
        %4945 = vmatprep.subr.mxu0 0.0
        %4946 = vmatpush1.msra.mxu0 %v4914
        %4947 = vmatprep.subr.mxu0 0.0
        %4948 = vmatpush1.msra.mxu0 %v4915
        %4949 = vmatprep.subr.mxu0 0.0
        %4950 = vmatpush1.msra.mxu0 %v4916
        %4951 = vmatprep.subr.mxu0 0.0
        %4952 = vmatpush1.msra.mxu0 0.0
        %4953 = vmatprep.subr.mxu0 0.0
        %4954 = vmatpush1.msra.mxu0 0.0
        %4955 = vmatprep.subr.mxu0 0.0
        %4956 = vmatpush1.msra.mxu0 0.0
        %4957 = vmatprep.subr.mxu0 0.0
        %4958 = vmatpush1.msra.mxu0 0.0
        %4959 = vmatprep.subr.mxu0 0.0
        %4960 = vmatpush1.msra.mxu0 0.0
        %4961 = vmatprep.subr.mxu0 0.0
        %4962 = vmatpush1.msra.mxu0 0.0
        %4963 = vmatprep.subr.mxu0 0.0
        %4964 = vmatpush1.msra.mxu0 0.0
        %4965 = vmatprep.subr.mxu0 0.0
        %4966 = vmatpush1.msra.mxu0 0.0
        %4967 = vmatprep.subr.mxu0 0.0
        %4968 = vmatpush1.msra.mxu0 0.0
        %4969 = vmatprep.subr.mxu0 0.0
        %4970 = vmatpush1.msra.mxu0 0.0
        %4971 = vmatprep.subr.mxu0 0.0
        %4972 = vmatpush1.msra.mxu0 0.0
        %4973 = vmatprep.subr.mxu0 0.0
        %4974 = vmatpush1.msra.mxu0 0.0
        %4975 = vmatprep.subr.mxu0 0.0
        %4976 = vmatpush1.msra.mxu0 0.0
        %4977 = vmatprep.subr.mxu0 0.0
        %4978 = vmatpush1.msra.mxu0 0.0
        %4979 = vmatprep.subr.mxu0 0.0
        %4980 = vmatpush1.msra.mxu0 0.0
        %4981 = vmatprep.subr.mxu0 0.0
        %4982 = vmatpush1.msra.mxu0 0.0
        %4983 = vmatprep.mubr.f32.mxu0 0.0
        %4984 = vmatmul.mubr.f32.gmra.mrb[0].mxu0 %v4917
        %v4985 = vpop.f32.mrb[0].mxu0
        %v4986 = vadd.f32 0.0, %v4985
        %v4987 = vpop.f32.mrb[0].mxu0
        %4988 = vdwg.mxu0
        %v4989 = vadd.f32 %v4899, %v4986
        %s4990 = scalar_lea.vmem [#allocation13], 4864
        %v4991 = vld [vmem:[%s4990] sm:$0xff]
        %v4992 = vld [vmem:[%s4990 + $0x8] sm:$0xff]
        %v4993 = vld [vmem:[%s4990 + $0x10] sm:$0xff]
        %v4994 = vld [vmem:[%s4990 + $0x18] sm:$0xff]
        %v4995 = vld [vmem:[%s4990 + $0x20] sm:$0xff]
        %v4996 = vld [vmem:[%s4990 + $0x28] sm:$0xff]
        %v4997 = vld [vmem:[%s4990 + $0x30] sm:$0xff]
        %v4998 = vld [vmem:[%s4990 + $0x38] sm:$0xff]
        %v4999 = vld [vmem:[%s4990 + $0x40] sm:$0xff]
        %v5000 = vld [vmem:[%s4990 + $0x48] sm:$0xff]
        %v5001 = vld [vmem:[%s4990 + $0x50] sm:$0xff]
        %v5002 = vld [vmem:[%s4990 + $0x58] sm:$0xff]
        %v5003 = vld [vmem:[%s4990 + $0x60] sm:$0xff]
        %v5004 = vld [vmem:[%s4990 + $0x68] sm:$0xff]
        %v5005 = vld [vmem:[%s4990 + $0x70] sm:$0xff]
        %v5006 = vld [vmem:[%s4990 + $0x78] sm:$0xff]
        %v5007 = vrot.slane %v1576, 6
        %5009 = vmatprep.subr.mxu0 0.0
        %5010 = vmatpush1.msra.mxu0 %v4991
        %5011 = vmatprep.subr.mxu0 0.0
        %5012 = vmatpush1.msra.mxu0 %v4992
        %5013 = vmatprep.subr.mxu0 0.0
        %5014 = vmatpush1.msra.mxu0 %v4993
        %5015 = vmatprep.subr.mxu0 0.0
        %5016 = vmatpush1.msra.mxu0 %v4994
        %5017 = vmatprep.subr.mxu0 0.0
        %5018 = vmatpush1.msra.mxu0 %v4995
        %5019 = vmatprep.subr.mxu0 0.0
        %5020 = vmatpush1.msra.mxu0 %v4996
        %5021 = vmatprep.subr.mxu0 0.0
        %5022 = vmatpush1.msra.mxu0 %v4997
        %5023 = vmatprep.subr.mxu0 0.0
        %5024 = vmatpush1.msra.mxu0 %v4998
        %5025 = vmatprep.subr.mxu0 0.0
        %5026 = vmatpush1.msra.mxu0 %v4999
        %5027 = vmatprep.subr.mxu0 0.0
        %5028 = vmatpush1.msra.mxu0 %v5000
        %5029 = vmatprep.subr.mxu0 0.0
        %5030 = vmatpush1.msra.mxu0 %v5001
        %5031 = vmatprep.subr.mxu0 0.0
        %5032 = vmatpush1.msra.mxu0 %v5002
        %5033 = vmatprep.subr.mxu0 0.0
        %5034 = vmatpush1.msra.mxu0 %v5003
        %5035 = vmatprep.subr.mxu0 0.0
        %5036 = vmatpush1.msra.mxu0 %v5004
        %5037 = vmatprep.subr.mxu0 0.0
        %5038 = vmatpush1.msra.mxu0 %v5005
        %5039 = vmatprep.subr.mxu0 0.0
        %5040 = vmatpush1.msra.mxu0 %v5006
        %5041 = vmatprep.subr.mxu0 0.0
        %5042 = vmatpush1.msra.mxu0 0.0
        %5043 = vmatprep.subr.mxu0 0.0
        %5044 = vmatpush1.msra.mxu0 0.0
        %5045 = vmatprep.subr.mxu0 0.0
        %5046 = vmatpush1.msra.mxu0 0.0
        %5047 = vmatprep.subr.mxu0 0.0
        %5048 = vmatpush1.msra.mxu0 0.0
        %5049 = vmatprep.subr.mxu0 0.0
        %5050 = vmatpush1.msra.mxu0 0.0
        %5051 = vmatprep.subr.mxu0 0.0
        %5052 = vmatpush1.msra.mxu0 0.0
        %5053 = vmatprep.subr.mxu0 0.0
        %5054 = vmatpush1.msra.mxu0 0.0
        %5055 = vmatprep.subr.mxu0 0.0
        %5056 = vmatpush1.msra.mxu0 0.0
        %5057 = vmatprep.subr.mxu0 0.0
        %5058 = vmatpush1.msra.mxu0 0.0
        %5059 = vmatprep.subr.mxu0 0.0
        %5060 = vmatpush1.msra.mxu0 0.0
        %5061 = vmatprep.subr.mxu0 0.0
        %5062 = vmatpush1.msra.mxu0 0.0
        %5063 = vmatprep.subr.mxu0 0.0
        %5064 = vmatpush1.msra.mxu0 0.0
        %5065 = vmatprep.subr.mxu0 0.0
        %5066 = vmatpush1.msra.mxu0 0.0
        %5067 = vmatprep.subr.mxu0 0.0
        %5068 = vmatpush1.msra.mxu0 0.0
        %5069 = vmatprep.subr.mxu0 0.0
        %5070 = vmatpush1.msra.mxu0 0.0
        %5071 = vmatprep.subr.mxu0 0.0
        %5072 = vmatpush1.msra.mxu0 0.0
        %5073 = vmatprep.mubr.f32.mxu0 0.0
        %5074 = vmatmul.mubr.f32.gmra.mrb[0].mxu0 %v5007
        %v5075 = vpop.f32.mrb[0].mxu0
        %v5076 = vadd.f32 0.0, %v5075
        %v5077 = vpop.f32.mrb[0].mxu0
        %5078 = vdwg.mxu0
        %v5079 = vadd.f32 %v4989, %v5076
        %s5080 = scalar_lea.vmem [#allocation13], 4992
        %v5081 = vld [vmem:[%s5080] sm:$0xff]
        %v5082 = vld [vmem:[%s5080 + $0x8] sm:$0xff]
        %v5083 = vld [vmem:[%s5080 + $0x10] sm:$0xff]
        %v5084 = vld [vmem:[%s5080 + $0x18] sm:$0xff]
        %v5085 = vld [vmem:[%s5080 + $0x20] sm:$0xff]
        %v5086 = vld [vmem:[%s5080 + $0x28] sm:$0xff]
        %v5087 = vld [vmem:[%s5080 + $0x30] sm:$0xff]
        %v5088 = vld [vmem:[%s5080 + $0x38] sm:$0xff]
        %v5089 = vld [vmem:[%s5080 + $0x40] sm:$0xff]
        %v5090 = vld [vmem:[%s5080 + $0x48] sm:$0xff]
        %v5091 = vld [vmem:[%s5080 + $0x50] sm:$0xff]
        %v5092 = vld [vmem:[%s5080 + $0x58] sm:$0xff]
        %v5093 = vld [vmem:[%s5080 + $0x60] sm:$0xff]
        %v5094 = vld [vmem:[%s5080 + $0x68] sm:$0xff]
        %v5095 = vld [vmem:[%s5080 + $0x70] sm:$0xff]
        %v5096 = vld [vmem:[%s5080 + $0x78] sm:$0xff]
        %v5097 = vrot.slane %v1576, 7
        %5099 = vmatprep.subr.mxu0 0.0
        %5100 = vmatpush1.msra.mxu0 %v5081
        %5101 = vmatprep.subr.mxu0 0.0
        %5102 = vmatpush1.msra.mxu0 %v5082
        %5103 = vmatprep.subr.mxu0 0.0
        %5104 = vmatpush1.msra.mxu0 %v5083
        %5105 = vmatprep.subr.mxu0 0.0
        %5106 = vmatpush1.msra.mxu0 %v5084
        %5107 = vmatprep.subr.mxu0 0.0
        %5108 = vmatpush1.msra.mxu0 %v5085
        %5109 = vmatprep.subr.mxu0 0.0
        %5110 = vmatpush1.msra.mxu0 %v5086
        %5111 = vmatprep.subr.mxu0 0.0
        %5112 = vmatpush1.msra.mxu0 %v5087
        %5113 = vmatprep.subr.mxu0 0.0
        %5114 = vmatpush1.msra.mxu0 %v5088
        %5115 = vmatprep.subr.mxu0 0.0
        %5116 = vmatpush1.msra.mxu0 %v5089
        %5117 = vmatprep.subr.mxu0 0.0
        %5118 = vmatpush1.msra.mxu0 %v5090
        %5119 = vmatprep.subr.mxu0 0.0
        %5120 = vmatpush1.msra.mxu0 %v5091
        %5121 = vmatprep.subr.mxu0 0.0
        %5122 = vmatpush1.msra.mxu0 %v5092
        %5123 = vmatprep.subr.mxu0 0.0
        %5124 = vmatpush1.msra.mxu0 %v5093
        %5125 = vmatprep.subr.mxu0 0.0
        %5126 = vmatpush1.msra.mxu0 %v5094
        %5127 = vmatprep.subr.mxu0 0.0
        %5128 = vmatpush1.msra.mxu0 %v5095
        %5129 = vmatprep.subr.mxu0 0.0
        %5130 = vmatpush1.msra.mxu0 %v5096
        %5131 = vmatprep.subr.mxu0 0.0
        %5132 = vmatpush1.msra.mxu0 0.0
        %5133 = vmatprep.subr.mxu0 0.0
        %5134 = vmatpush1.msra.mxu0 0.0
        %5135 = vmatprep.subr.mxu0 0.0
        %5136 = vmatpush1.msra.mxu0 0.0
        %5137 = vmatprep.subr.mxu0 0.0
        %5138 = vmatpush1.msra.mxu0 0.0
        %5139 = vmatprep.subr.mxu0 0.0
        %5140 = vmatpush1.msra.mxu0 0.0
        %5141 = vmatprep.subr.mxu0 0.0
        %5142 = vmatpush1.msra.mxu0 0.0
        %5143 = vmatprep.subr.mxu0 0.0
        %5144 = vmatpush1.msra.mxu0 0.0
        %5145 = vmatprep.subr.mxu0 0.0
        %5146 = vmatpush1.msra.mxu0 0.0
        %5147 = vmatprep.subr.mxu0 0.0
        %5148 = vmatpush1.msra.mxu0 0.0
        %5149 = vmatprep.subr.mxu0 0.0
        %5150 = vmatpush1.msra.mxu0 0.0
        %5151 = vmatprep.subr.mxu0 0.0
        %5152 = vmatpush1.msra.mxu0 0.0
        %5153 = vmatprep.subr.mxu0 0.0
        %5154 = vmatpush1.msra.mxu0 0.0
        %5155 = vmatprep.subr.mxu0 0.0
        %5156 = vmatpush1.msra.mxu0 0.0
        %5157 = vmatprep.subr.mxu0 0.0
        %5158 = vmatpush1.msra.mxu0 0.0
        %5159 = vmatprep.subr.mxu0 0.0
        %5160 = vmatpush1.msra.mxu0 0.0
        %5161 = vmatprep.subr.mxu0 0.0
        %5162 = vmatpush1.msra.mxu0 0.0
        %5163 = vmatprep.mubr.f32.mxu0 0.0
        %5164 = vmatmul.mubr.f32.gmra.mrb[0].mxu0 %v5097
        %v5165 = vpop.f32.mrb[0].mxu0
        %v5166 = vadd.f32 0.0, %v5165
        %v5167 = vpop.f32.mrb[0].mxu0
        %5168 = vdwg.mxu0
        %v5169 = vadd.f32 %v5079, %v5166
        %s5170 = scalar_lea.vmem [#allocation13], 5120
        %v5171 = vld [vmem:[%s5170] sm:$0xff]
        %v5172 = vld [vmem:[%s5170 + $0x8] sm:$0xff]
        %v5173 = vld [vmem:[%s5170 + $0x10] sm:$0xff]
        %v5174 = vld [vmem:[%s5170 + $0x18] sm:$0xff]
        %v5175 = vld [vmem:[%s5170 + $0x20] sm:$0xff]
        %v5176 = vld [vmem:[%s5170 + $0x28] sm:$0xff]
        %v5177 = vld [vmem:[%s5170 + $0x30] sm:$0xff]
        %v5178 = vld [vmem:[%s5170 + $0x38] sm:$0xff]
        %v5179 = vld [vmem:[%s5170 + $0x40] sm:$0xff]
        %v5180 = vld [vmem:[%s5170 + $0x48] sm:$0xff]
        %v5181 = vld [vmem:[%s5170 + $0x50] sm:$0xff]
        %v5182 = vld [vmem:[%s5170 + $0x58] sm:$0xff]
        %v5183 = vld [vmem:[%s5170 + $0x60] sm:$0xff]
        %v5184 = vld [vmem:[%s5170 + $0x68] sm:$0xff]
        %v5185 = vld [vmem:[%s5170 + $0x70] sm:$0xff]
        %v5186 = vld [vmem:[%s5170 + $0x78] sm:$0xff]
        %5187 = vmatprep.subr.mxu0 0.0
        %5188 = vmatpush1.msra.mxu0 %v5171
        %5189 = vmatprep.subr.mxu0 0.0
        %5190 = vmatpush1.msra.mxu0 %v5172
        %5191 = vmatprep.subr.mxu0 0.0
        %5192 = vmatpush1.msra.mxu0 %v5173
        %5193 = vmatprep.subr.mxu0 0.0
        %5194 = vmatpush1.msra.mxu0 %v5174
        %5195 = vmatprep.subr.mxu0 0.0
        %5196 = vmatpush1.msra.mxu0 %v5175
        %5197 = vmatprep.subr.mxu0 0.0
        %5198 = vmatpush1.msra.mxu0 %v5176
        %5199 = vmatprep.subr.mxu0 0.0
        %5200 = vmatpush1.msra.mxu0 %v5177
        %5201 = vmatprep.subr.mxu0 0.0
        %5202 = vmatpush1.msra.mxu0 %v5178
        %5203 = vmatprep.subr.mxu0 0.0
        %5204 = vmatpush1.msra.mxu0 %v5179
        %5205 = vmatprep.subr.mxu0 0.0
        %5206 = vmatpush1.msra.mxu0 %v5180
        %5207 = vmatprep.subr.mxu0 0.0
        %5208 = vmatpush1.msra.mxu0 %v5181
        %5209 = vmatprep.subr.mxu0 0.0
        %5210 = vmatpush1.msra.mxu0 %v5182
        %5211 = vmatprep.subr.mxu0 0.0
        %5212 = vmatpush1.msra.mxu0 %v5183
        %5213 = vmatprep.subr.mxu0 0.0
        %5214 = vmatpush1.msra.mxu0 %v5184
        %5215 = vmatprep.subr.mxu0 0.0
        %5216 = vmatpush1.msra.mxu0 %v5185
        %5217 = vmatprep.subr.mxu0 0.0
        %5218 = vmatpush1.msra.mxu0 %v5186
        %5219 = vmatprep.subr.mxu0 0.0
        %5220 = vmatpush1.msra.mxu0 0.0
        %5221 = vmatprep.subr.mxu0 0.0
        %5222 = vmatpush1.msra.mxu0 0.0
        %5223 = vmatprep.subr.mxu0 0.0
        %5224 = vmatpush1.msra.mxu0 0.0
        %5225 = vmatprep.subr.mxu0 0.0
        %5226 = vmatpush1.msra.mxu0 0.0
        %5227 = vmatprep.subr.mxu0 0.0
        %5228 = vmatpush1.msra.mxu0 0.0
        %5229 = vmatprep.subr.mxu0 0.0
        %5230 = vmatpush1.msra.mxu0 0.0
        %5231 = vmatprep.subr.mxu0 0.0
        %5232 = vmatpush1.msra.mxu0 0.0
        %5233 = vmatprep.subr.mxu0 0.0
        %5234 = vmatpush1.msra.mxu0 0.0
        %5235 = vmatprep.subr.mxu0 0.0
        %5236 = vmatpush1.msra.mxu0 0.0
        %5237 = vmatprep.subr.mxu0 0.0
        %5238 = vmatpush1.msra.mxu0 0.0
        %5239 = vmatprep.subr.mxu0 0.0
        %5240 = vmatpush1.msra.mxu0 0.0
        %5241 = vmatprep.subr.mxu0 0.0
        %5242 = vmatpush1.msra.mxu0 0.0
        %5243 = vmatprep.subr.mxu0 0.0
        %5244 = vmatpush1.msra.mxu0 0.0
        %5245 = vmatprep.subr.mxu0 0.0
        %5246 = vmatpush1.msra.mxu0 0.0
        %5247 = vmatprep.subr.mxu0 0.0
        %5248 = vmatpush1.msra.mxu0 0.0
        %5249 = vmatprep.subr.mxu0 0.0
        %5250 = vmatpush1.msra.mxu0 0.0
        %5251 = vmatprep.mubr.f32.mxu0 0.0
        %5252 = vmatmul.mubr.f32.gmra.mrb[0].mxu0 %v1577
        %v5253 = vpop.f32.mrb[0].mxu0
        %v5254 = vadd.f32 0.0, %v5253
        %v5255 = vpop.f32.mrb[0].mxu0
        %5256 = vdwg.mxu0
        %v5257 = vadd.f32 %v5169, %v5254
        %s5258 = scalar_lea.vmem [#allocation13], 5248
        %v5259 = vld [vmem:[%s5258] sm:$0xff]
        %v5260 = vld [vmem:[%s5258 + $0x8] sm:$0xff]
        %v5261 = vld [vmem:[%s5258 + $0x10] sm:$0xff]
        %v5262 = vld [vmem:[%s5258 + $0x18] sm:$0xff]
        %v5263 = vld [vmem:[%s5258 + $0x20] sm:$0xff]
        %v5264 = vld [vmem:[%s5258 + $0x28] sm:$0xff]
        %v5265 = vld [vmem:[%s5258 + $0x30] sm:$0xff]
        %v5266 = vld [vmem:[%s5258 + $0x38] sm:$0xff]
        %v5267 = vld [vmem:[%s5258 + $0x40] sm:$0xff]
        %v5268 = vld [vmem:[%s5258 + $0x48] sm:$0xff]
        %v5269 = vld [vmem:[%s5258 + $0x50] sm:$0xff]
        %v5270 = vld [vmem:[%s5258 + $0x58] sm:$0xff]
        %v5271 = vld [vmem:[%s5258 + $0x60] sm:$0xff]
        %v5272 = vld [vmem:[%s5258 + $0x68] sm:$0xff]
        %v5273 = vld [vmem:[%s5258 + $0x70] sm:$0xff]
        %v5274 = vld [vmem:[%s5258 + $0x78] sm:$0xff]
        %v5276 = vrot.slane %v1577, 1
        %5278 = vmatprep.subr.mxu0 0.0
        %5279 = vmatpush1.msra.mxu0 %v5259
        %5280 = vmatprep.subr.mxu0 0.0
        %5281 = vmatpush1.msra.mxu0 %v5260
        %5282 = vmatprep.subr.mxu0 0.0
        %5283 = vmatpush1.msra.mxu0 %v5261
        %5284 = vmatprep.subr.mxu0 0.0
        %5285 = vmatpush1.msra.mxu0 %v5262
        %5286 = vmatprep.subr.mxu0 0.0
        %5287 = vmatpush1.msra.mxu0 %v5263
        %5288 = vmatprep.subr.mxu0 0.0
        %5289 = vmatpush1.msra.mxu0 %v5264
        %5290 = vmatprep.subr.mxu0 0.0
        %5291 = vmatpush1.msra.mxu0 %v5265
        %5292 = vmatprep.subr.mxu0 0.0
        %5293 = vmatpush1.msra.mxu0 %v5266
        %5294 = vmatprep.subr.mxu0 0.0
        %5295 = vmatpush1.msra.mxu0 %v5267
        %5296 = vmatprep.subr.mxu0 0.0
        %5297 = vmatpush1.msra.mxu0 %v5268
        %5298 = vmatprep.subr.mxu0 0.0
        %5299 = vmatpush1.msra.mxu0 %v5269
        %5300 = vmatprep.subr.mxu0 0.0
        %5301 = vmatpush1.msra.mxu0 %v5270
        %5302 = vmatprep.subr.mxu0 0.0
        %5303 = vmatpush1.msra.mxu0 %v5271
        %5304 = vmatprep.subr.mxu0 0.0
        %5305 = vmatpush1.msra.mxu0 %v5272
        %5306 = vmatprep.subr.mxu0 0.0
        %5307 = vmatpush1.msra.mxu0 %v5273
        %5308 = vmatprep.subr.mxu0 0.0
        %5309 = vmatpush1.msra.mxu0 %v5274
        %5310 = vmatprep.subr.mxu0 0.0
        %5311 = vmatpush1.msra.mxu0 0.0
        %5312 = vmatprep.subr.mxu0 0.0
        %5313 = vmatpush1.msra.mxu0 0.0
        %5314 = vmatprep.subr.mxu0 0.0
        %5315 = vmatpush1.msra.mxu0 0.0
        %5316 = vmatprep.subr.mxu0 0.0
        %5317 = vmatpush1.msra.mxu0 0.0
        %5318 = vmatprep.subr.mxu0 0.0
        %5319 = vmatpush1.msra.mxu0 0.0
        %5320 = vmatprep.subr.mxu0 0.0
        %5321 = vmatpush1.msra.mxu0 0.0
        %5322 = vmatprep.subr.mxu0 0.0
        %5323 = vmatpush1.msra.mxu0 0.0
        %5324 = vmatprep.subr.mxu0 0.0
        %5325 = vmatpush1.msra.mxu0 0.0
        %5326 = vmatprep.subr.mxu0 0.0
        %5327 = vmatpush1.msra.mxu0 0.0
        %5328 = vmatprep.subr.mxu0 0.0
        %5329 = vmatpush1.msra.mxu0 0.0
        %5330 = vmatprep.subr.mxu0 0.0
        %5331 = vmatpush1.msra.mxu0 0.0
        %5332 = vmatprep.subr.mxu0 0.0
        %5333 = vmatpush1.msra.mxu0 0.0
        %5334 = vmatprep.subr.mxu0 0.0
        %5335 = vmatpush1.msra.mxu0 0.0
        %5336 = vmatprep.subr.mxu0 0.0
        %5337 = vmatpush1.msra.mxu0 0.0
        %5338 = vmatprep.subr.mxu0 0.0
        %5339 = vmatpush1.msra.mxu0 0.0
        %5340 = vmatprep.subr.mxu0 0.0
        %5341 = vmatpush1.msra.mxu0 0.0
        %5342 = vmatprep.mubr.f32.mxu0 0.0
        %5343 = vmatmul.mubr.f32.gmra.mrb[0].mxu0 %v5276
        %v5344 = vpop.f32.mrb[0].mxu0
        %v5345 = vadd.f32 0.0, %v5344
        %v5346 = vpop.f32.mrb[0].mxu0
        %5347 = vdwg.mxu0
        %v5348 = vadd.f32 %v5257, %v5345
        %s5349 = scalar_lea.vmem [#allocation13], 5376
        %v5350 = vld [vmem:[%s5349] sm:$0xff]
        %v5351 = vld [vmem:[%s5349 + $0x8] sm:$0xff]
        %v5352 = vld [vmem:[%s5349 + $0x10] sm:$0xff]
        %v5353 = vld [vmem:[%s5349 + $0x18] sm:$0xff]
        %v5354 = vld [vmem:[%s5349 + $0x20] sm:$0xff]
        %v5355 = vld [vmem:[%s5349 + $0x28] sm:$0xff]
        %v5356 = vld [vmem:[%s5349 + $0x30] sm:$0xff]
        %v5357 = vld [vmem:[%s5349 + $0x38] sm:$0xff]
        %v5358 = vld [vmem:[%s5349 + $0x40] sm:$0xff]
        %v5359 = vld [vmem:[%s5349 + $0x48] sm:$0xff]
        %v5360 = vld [vmem:[%s5349 + $0x50] sm:$0xff]
        %v5361 = vld [vmem:[%s5349 + $0x58] sm:$0xff]
        %v5362 = vld [vmem:[%s5349 + $0x60] sm:$0xff]
        %v5363 = vld [vmem:[%s5349 + $0x68] sm:$0xff]
        %v5364 = vld [vmem:[%s5349 + $0x70] sm:$0xff]
        %v5365 = vld [vmem:[%s5349 + $0x78] sm:$0xff]
        %v5366 = vrot.slane %v1577, 2
        %5368 = vmatprep.subr.mxu0 0.0
        %5369 = vmatpush1.msra.mxu0 %v5350
        %5370 = vmatprep.subr.mxu0 0.0
        %5371 = vmatpush1.msra.mxu0 %v5351
        %5372 = vmatprep.subr.mxu0 0.0
        %5373 = vmatpush1.msra.mxu0 %v5352
        %5374 = vmatprep.subr.mxu0 0.0
        %5375 = vmatpush1.msra.mxu0 %v5353
        %5376 = vmatprep.subr.mxu0 0.0
        %5377 = vmatpush1.msra.mxu0 %v5354
        %5378 = vmatprep.subr.mxu0 0.0
        %5379 = vmatpush1.msra.mxu0 %v5355
        %5380 = vmatprep.subr.mxu0 0.0
        %5381 = vmatpush1.msra.mxu0 %v5356
        %5382 = vmatprep.subr.mxu0 0.0
        %5383 = vmatpush1.msra.mxu0 %v5357
        %5384 = vmatprep.subr.mxu0 0.0
        %5385 = vmatpush1.msra.mxu0 %v5358
        %5386 = vmatprep.subr.mxu0 0.0
        %5387 = vmatpush1.msra.mxu0 %v5359
        %5388 = vmatprep.subr.mxu0 0.0
        %5389 = vmatpush1.msra.mxu0 %v5360
        %5390 = vmatprep.subr.mxu0 0.0
        %5391 = vmatpush1.msra.mxu0 %v5361
        %5392 = vmatprep.subr.mxu0 0.0
        %5393 = vmatpush1.msra.mxu0 %v5362
        %5394 = vmatprep.subr.mxu0 0.0
        %5395 = vmatpush1.msra.mxu0 %v5363
        %5396 = vmatprep.subr.mxu0 0.0
        %5397 = vmatpush1.msra.mxu0 %v5364
        %5398 = vmatprep.subr.mxu0 0.0
        %5399 = vmatpush1.msra.mxu0 %v5365
        %5400 = vmatprep.subr.mxu0 0.0
        %5401 = vmatpush1.msra.mxu0 0.0
        %5402 = vmatprep.subr.mxu0 0.0
        %5403 = vmatpush1.msra.mxu0 0.0
        %5404 = vmatprep.subr.mxu0 0.0
        %5405 = vmatpush1.msra.mxu0 0.0
        %5406 = vmatprep.subr.mxu0 0.0
        %5407 = vmatpush1.msra.mxu0 0.0
        %5408 = vmatprep.subr.mxu0 0.0
        %5409 = vmatpush1.msra.mxu0 0.0
        %5410 = vmatprep.subr.mxu0 0.0
        %5411 = vmatpush1.msra.mxu0 0.0
        %5412 = vmatprep.subr.mxu0 0.0
        %5413 = vmatpush1.msra.mxu0 0.0
        %5414 = vmatprep.subr.mxu0 0.0
        %5415 = vmatpush1.msra.mxu0 0.0
        %5416 = vmatprep.subr.mxu0 0.0
        %5417 = vmatpush1.msra.mxu0 0.0
        %5418 = vmatprep.subr.mxu0 0.0
        %5419 = vmatpush1.msra.mxu0 0.0
        %5420 = vmatprep.subr.mxu0 0.0
        %5421 = vmatpush1.msra.mxu0 0.0
        %5422 = vmatprep.subr.mxu0 0.0
        %5423 = vmatpush1.msra.mxu0 0.0
        %5424 = vmatprep.subr.mxu0 0.0
        %5425 = vmatpush1.msra.mxu0 0.0
        %5426 = vmatprep.subr.mxu0 0.0
        %5427 = vmatpush1.msra.mxu0 0.0
        %5428 = vmatprep.subr.mxu0 0.0
        %5429 = vmatpush1.msra.mxu0 0.0
        %5430 = vmatprep.subr.mxu0 0.0
        %5431 = vmatpush1.msra.mxu0 0.0
        %5432 = vmatprep.mubr.f32.mxu0 0.0
        %5433 = vmatmul.mubr.f32.gmra.mrb[0].mxu0 %v5366
        %v5434 = vpop.f32.mrb[0].mxu0
        %v5435 = vadd.f32 0.0, %v5434
        %v5436 = vpop.f32.mrb[0].mxu0
        %5437 = vdwg.mxu0
        %v5438 = vadd.f32 %v5348, %v5435
        %s5439 = scalar_lea.vmem [#allocation13], 5504
        %v5440 = vld [vmem:[%s5439] sm:$0xff]
        %v5441 = vld [vmem:[%s5439 + $0x8] sm:$0xff]
        %v5442 = vld [vmem:[%s5439 + $0x10] sm:$0xff]
        %v5443 = vld [vmem:[%s5439 + $0x18] sm:$0xff]
        %v5444 = vld [vmem:[%s5439 + $0x20] sm:$0xff]
        %v5445 = vld [vmem:[%s5439 + $0x28] sm:$0xff]
        %v5446 = vld [vmem:[%s5439 + $0x30] sm:$0xff]
        %v5447 = vld [vmem:[%s5439 + $0x38] sm:$0xff]
        %v5448 = vld [vmem:[%s5439 + $0x40] sm:$0xff]
        %v5449 = vld [vmem:[%s5439 + $0x48] sm:$0xff]
        %v5450 = vld [vmem:[%s5439 + $0x50] sm:$0xff]
        %v5451 = vld [vmem:[%s5439 + $0x58] sm:$0xff]
        %v5452 = vld [vmem:[%s5439 + $0x60] sm:$0xff]
        %v5453 = vld [vmem:[%s5439 + $0x68] sm:$0xff]
        %v5454 = vld [vmem:[%s5439 + $0x70] sm:$0xff]
        %v5455 = vld [vmem:[%s5439 + $0x78] sm:$0xff]
        %v5456 = vrot.slane %v1577, 3
        %5458 = vmatprep.subr.mxu0 0.0
        %5459 = vmatpush1.msra.mxu0 %v5440
        %5460 = vmatprep.subr.mxu0 0.0
        %5461 = vmatpush1.msra.mxu0 %v5441
        %5462 = vmatprep.subr.mxu0 0.0
        %5463 = vmatpush1.msra.mxu0 %v5442
        %5464 = vmatprep.subr.mxu0 0.0
        %5465 = vmatpush1.msra.mxu0 %v5443
        %5466 = vmatprep.subr.mxu0 0.0
        %5467 = vmatpush1.msra.mxu0 %v5444
        %5468 = vmatprep.subr.mxu0 0.0
        %5469 = vmatpush1.msra.mxu0 %v5445
        %5470 = vmatprep.subr.mxu0 0.0
        %5471 = vmatpush1.msra.mxu0 %v5446
        %5472 = vmatprep.subr.mxu0 0.0
        %5473 = vmatpush1.msra.mxu0 %v5447
        %5474 = vmatprep.subr.mxu0 0.0
        %5475 = vmatpush1.msra.mxu0 %v5448
        %5476 = vmatprep.subr.mxu0 0.0
        %5477 = vmatpush1.msra.mxu0 %v5449
        %5478 = vmatprep.subr.mxu0 0.0
        %5479 = vmatpush1.msra.mxu0 %v5450
        %5480 = vmatprep.subr.mxu0 0.0
        %5481 = vmatpush1.msra.mxu0 %v5451
        %5482 = vmatprep.subr.mxu0 0.0
        %5483 = vmatpush1.msra.mxu0 %v5452
        %5484 = vmatprep.subr.mxu0 0.0
        %5485 = vmatpush1.msra.mxu0 %v5453
        %5486 = vmatprep.subr.mxu0 0.0
        %5487 = vmatpush1.msra.mxu0 %v5454
        %5488 = vmatprep.subr.mxu0 0.0
        %5489 = vmatpush1.msra.mxu0 %v5455
        %5490 = vmatprep.subr.mxu0 0.0
        %5491 = vmatpush1.msra.mxu0 0.0
        %5492 = vmatprep.subr.mxu0 0.0
        %5493 = vmatpush1.msra.mxu0 0.0
        %5494 = vmatprep.subr.mxu0 0.0
        %5495 = vmatpush1.msra.mxu0 0.0
        %5496 = vmatprep.subr.mxu0 0.0
        %5497 = vmatpush1.msra.mxu0 0.0
        %5498 = vmatprep.subr.mxu0 0.0
        %5499 = vmatpush1.msra.mxu0 0.0
        %5500 = vmatprep.subr.mxu0 0.0
        %5501 = vmatpush1.msra.mxu0 0.0
        %5502 = vmatprep.subr.mxu0 0.0
        %5503 = vmatpush1.msra.mxu0 0.0
        %5504 = vmatprep.subr.mxu0 0.0
        %5505 = vmatpush1.msra.mxu0 0.0
        %5506 = vmatprep.subr.mxu0 0.0
        %5507 = vmatpush1.msra.mxu0 0.0
        %5508 = vmatprep.subr.mxu0 0.0
        %5509 = vmatpush1.msra.mxu0 0.0
        %5510 = vmatprep.subr.mxu0 0.0
        %5511 = vmatpush1.msra.mxu0 0.0
        %5512 = vmatprep.subr.mxu0 0.0
        %5513 = vmatpush1.msra.mxu0 0.0
        %5514 = vmatprep.subr.mxu0 0.0
        %5515 = vmatpush1.msra.mxu0 0.0
        %5516 = vmatprep.subr.mxu0 0.0
        %5517 = vmatpush1.msra.mxu0 0.0
        %5518 = vmatprep.subr.mxu0 0.0
        %5519 = vmatpush1.msra.mxu0 0.0
        %5520 = vmatprep.subr.mxu0 0.0
        %5521 = vmatpush1.msra.mxu0 0.0
        %5522 = vmatprep.mubr.f32.mxu0 0.0
        %5523 = vmatmul.mubr.f32.gmra.mrb[0].mxu0 %v5456
        %v5524 = vpop.f32.mrb[0].mxu0
        %v5525 = vadd.f32 0.0, %v5524
        %v5526 = vpop.f32.mrb[0].mxu0
        %5527 = vdwg.mxu0
        %v5528 = vadd.f32 %v5438, %v5525
        %s5529 = scalar_lea.vmem [#allocation13], 5632
        %v5530 = vld [vmem:[%s5529] sm:$0xff]
        %v5531 = vld [vmem:[%s5529 + $0x8] sm:$0xff]
        %v5532 = vld [vmem:[%s5529 + $0x10] sm:$0xff]
        %v5533 = vld [vmem:[%s5529 + $0x18] sm:$0xff]
        %v5534 = vld [vmem:[%s5529 + $0x20] sm:$0xff]
        %v5535 = vld [vmem:[%s5529 + $0x28] sm:$0xff]
        %v5536 = vld [vmem:[%s5529 + $0x30] sm:$0xff]
        %v5537 = vld [vmem:[%s5529 + $0x38] sm:$0xff]
        %v5538 = vld [vmem:[%s5529 + $0x40] sm:$0xff]
        %v5539 = vld [vmem:[%s5529 + $0x48] sm:$0xff]
        %v5540 = vld [vmem:[%s5529 + $0x50] sm:$0xff]
        %v5541 = vld [vmem:[%s5529 + $0x58] sm:$0xff]
        %v5542 = vld [vmem:[%s5529 + $0x60] sm:$0xff]
        %v5543 = vld [vmem:[%s5529 + $0x68] sm:$0xff]
        %v5544 = vld [vmem:[%s5529 + $0x70] sm:$0xff]
        %v5545 = vld [vmem:[%s5529 + $0x78] sm:$0xff]
        %v5546 = vrot.slane %v1577, 4
        %5548 = vmatprep.subr.mxu0 0.0
        %5549 = vmatpush1.msra.mxu0 %v5530
        %5550 = vmatprep.subr.mxu0 0.0
        %5551 = vmatpush1.msra.mxu0 %v5531
        %5552 = vmatprep.subr.mxu0 0.0
        %5553 = vmatpush1.msra.mxu0 %v5532
        %5554 = vmatprep.subr.mxu0 0.0
        %5555 = vmatpush1.msra.mxu0 %v5533
        %5556 = vmatprep.subr.mxu0 0.0
        %5557 = vmatpush1.msra.mxu0 %v5534
        %5558 = vmatprep.subr.mxu0 0.0
        %5559 = vmatpush1.msra.mxu0 %v5535
        %5560 = vmatprep.subr.mxu0 0.0
        %5561 = vmatpush1.msra.mxu0 %v5536
        %5562 = vmatprep.subr.mxu0 0.0
        %5563 = vmatpush1.msra.mxu0 %v5537
        %5564 = vmatprep.subr.mxu0 0.0
        %5565 = vmatpush1.msra.mxu0 %v5538
        %5566 = vmatprep.subr.mxu0 0.0
        %5567 = vmatpush1.msra.mxu0 %v5539
        %5568 = vmatprep.subr.mxu0 0.0
        %5569 = vmatpush1.msra.mxu0 %v5540
        %5570 = vmatprep.subr.mxu0 0.0
        %5571 = vmatpush1.msra.mxu0 %v5541
        %5572 = vmatprep.subr.mxu0 0.0
        %5573 = vmatpush1.msra.mxu0 %v5542
        %5574 = vmatprep.subr.mxu0 0.0
        %5575 = vmatpush1.msra.mxu0 %v5543
        %5576 = vmatprep.subr.mxu0 0.0
        %5577 = vmatpush1.msra.mxu0 %v5544
        %5578 = vmatprep.subr.mxu0 0.0
        %5579 = vmatpush1.msra.mxu0 %v5545
        %5580 = vmatprep.subr.mxu0 0.0
        %5581 = vmatpush1.msra.mxu0 0.0
        %5582 = vmatprep.subr.mxu0 0.0
        %5583 = vmatpush1.msra.mxu0 0.0
        %5584 = vmatprep.subr.mxu0 0.0
        %5585 = vmatpush1.msra.mxu0 0.0
        %5586 = vmatprep.subr.mxu0 0.0
        %5587 = vmatpush1.msra.mxu0 0.0
        %5588 = vmatprep.subr.mxu0 0.0
        %5589 = vmatpush1.msra.mxu0 0.0
        %5590 = vmatprep.subr.mxu0 0.0
        %5591 = vmatpush1.msra.mxu0 0.0
        %5592 = vmatprep.subr.mxu0 0.0
        %5593 = vmatpush1.msra.mxu0 0.0
        %5594 = vmatprep.subr.mxu0 0.0
        %5595 = vmatpush1.msra.mxu0 0.0
        %5596 = vmatprep.subr.mxu0 0.0
        %5597 = vmatpush1.msra.mxu0 0.0
        %5598 = vmatprep.subr.mxu0 0.0
        %5599 = vmatpush1.msra.mxu0 0.0
        %5600 = vmatprep.subr.mxu0 0.0
        %5601 = vmatpush1.msra.mxu0 0.0
        %5602 = vmatprep.subr.mxu0 0.0
        %5603 = vmatpush1.msra.mxu0 0.0
        %5604 = vmatprep.subr.mxu0 0.0
        %5605 = vmatpush1.msra.mxu0 0.0
        %5606 = vmatprep.subr.mxu0 0.0
        %5607 = vmatpush1.msra.mxu0 0.0
        %5608 = vmatprep.subr.mxu0 0.0
        %5609 = vmatpush1.msra.mxu0 0.0
        %5610 = vmatprep.subr.mxu0 0.0
        %5611 = vmatpush1.msra.mxu0 0.0
        %5612 = vmatprep.mubr.f32.mxu0 0.0
        %5613 = vmatmul.mubr.f32.gmra.mrb[0].mxu0 %v5546
        %v5614 = vpop.f32.mrb[0].mxu0
        %v5615 = vadd.f32 0.0, %v5614
        %v5616 = vpop.f32.mrb[0].mxu0
        %5617 = vdwg.mxu0
        %v5618 = vadd.f32 %v5528, %v5615
        %s5619 = scalar_lea.vmem [#allocation13], 5760
        %v5620 = vld [vmem:[%s5619] sm:$0xff]
        %v5621 = vld [vmem:[%s5619 + $0x8] sm:$0xff]
        %v5622 = vld [vmem:[%s5619 + $0x10] sm:$0xff]
        %v5623 = vld [vmem:[%s5619 + $0x18] sm:$0xff]
        %v5624 = vld [vmem:[%s5619 + $0x20] sm:$0xff]
        %v5625 = vld [vmem:[%s5619 + $0x28] sm:$0xff]
        %v5626 = vld [vmem:[%s5619 + $0x30] sm:$0xff]
        %v5627 = vld [vmem:[%s5619 + $0x38] sm:$0xff]
        %v5628 = vld [vmem:[%s5619 + $0x40] sm:$0xff]
        %v5629 = vld [vmem:[%s5619 + $0x48] sm:$0xff]
        %v5630 = vld [vmem:[%s5619 + $0x50] sm:$0xff]
        %v5631 = vld [vmem:[%s5619 + $0x58] sm:$0xff]
        %v5632 = vld [vmem:[%s5619 + $0x60] sm:$0xff]
        %v5633 = vld [vmem:[%s5619 + $0x68] sm:$0xff]
        %v5634 = vld [vmem:[%s5619 + $0x70] sm:$0xff]
        %v5635 = vld [vmem:[%s5619 + $0x78] sm:$0xff]
        %v5636 = vrot.slane %v1577, 5
        %5638 = vmatprep.subr.mxu0 0.0
        %5639 = vmatpush1.msra.mxu0 %v5620
        %5640 = vmatprep.subr.mxu0 0.0
        %5641 = vmatpush1.msra.mxu0 %v5621
        %5642 = vmatprep.subr.mxu0 0.0
        %5643 = vmatpush1.msra.mxu0 %v5622
        %5644 = vmatprep.subr.mxu0 0.0
        %5645 = vmatpush1.msra.mxu0 %v5623
        %5646 = vmatprep.subr.mxu0 0.0
        %5647 = vmatpush1.msra.mxu0 %v5624
        %5648 = vmatprep.subr.mxu0 0.0
        %5649 = vmatpush1.msra.mxu0 %v5625
        %5650 = vmatprep.subr.mxu0 0.0
        %5651 = vmatpush1.msra.mxu0 %v5626
        %5652 = vmatprep.subr.mxu0 0.0
        %5653 = vmatpush1.msra.mxu0 %v5627
        %5654 = vmatprep.subr.mxu0 0.0
        %5655 = vmatpush1.msra.mxu0 %v5628
        %5656 = vmatprep.subr.mxu0 0.0
        %5657 = vmatpush1.msra.mxu0 %v5629
        %5658 = vmatprep.subr.mxu0 0.0
        %5659 = vmatpush1.msra.mxu0 %v5630
        %5660 = vmatprep.subr.mxu0 0.0
        %5661 = vmatpush1.msra.mxu0 %v5631
        %5662 = vmatprep.subr.mxu0 0.0
        %5663 = vmatpush1.msra.mxu0 %v5632
        %5664 = vmatprep.subr.mxu0 0.0
        %5665 = vmatpush1.msra.mxu0 %v5633
        %5666 = vmatprep.subr.mxu0 0.0
        %5667 = vmatpush1.msra.mxu0 %v5634
        %5668 = vmatprep.subr.mxu0 0.0
        %5669 = vmatpush1.msra.mxu0 %v5635
        %5670 = vmatprep.subr.mxu0 0.0
        %5671 = vmatpush1.msra.mxu0 0.0
        %5672 = vmatprep.subr.mxu0 0.0
        %5673 = vmatpush1.msra.mxu0 0.0
        %5674 = vmatprep.subr.mxu0 0.0
        %5675 = vmatpush1.msra.mxu0 0.0
        %5676 = vmatprep.subr.mxu0 0.0
        %5677 = vmatpush1.msra.mxu0 0.0
        %5678 = vmatprep.subr.mxu0 0.0
        %5679 = vmatpush1.msra.mxu0 0.0
        %5680 = vmatprep.subr.mxu0 0.0
        %5681 = vmatpush1.msra.mxu0 0.0
        %5682 = vmatprep.subr.mxu0 0.0
        %5683 = vmatpush1.msra.mxu0 0.0
        %5684 = vmatprep.subr.mxu0 0.0
        %5685 = vmatpush1.msra.mxu0 0.0
        %5686 = vmatprep.subr.mxu0 0.0
        %5687 = vmatpush1.msra.mxu0 0.0
        %5688 = vmatprep.subr.mxu0 0.0
        %5689 = vmatpush1.msra.mxu0 0.0
        %5690 = vmatprep.subr.mxu0 0.0
        %5691 = vmatpush1.msra.mxu0 0.0
        %5692 = vmatprep.subr.mxu0 0.0
        %5693 = vmatpush1.msra.mxu0 0.0
        %5694 = vmatprep.subr.mxu0 0.0
        %5695 = vmatpush1.msra.mxu0 0.0
        %5696 = vmatprep.subr.mxu0 0.0
        %5697 = vmatpush1.msra.mxu0 0.0
        %5698 = vmatprep.subr.mxu0 0.0
        %5699 = vmatpush1.msra.mxu0 0.0
        %5700 = vmatprep.subr.mxu0 0.0
        %5701 = vmatpush1.msra.mxu0 0.0
        %5702 = vmatprep.mubr.f32.mxu0 0.0
        %5703 = vmatmul.mubr.f32.gmra.mrb[0].mxu0 %v5636
        %v5704 = vpop.f32.mrb[0].mxu0
        %v5705 = vadd.f32 0.0, %v5704
        %v5706 = vpop.f32.mrb[0].mxu0
        %5707 = vdwg.mxu0
        %v5708 = vadd.f32 %v5618, %v5705
        %s5709 = scalar_lea.vmem [#allocation13], 5888
        %v5710 = vld [vmem:[%s5709] sm:$0xff]
        %v5711 = vld [vmem:[%s5709 + $0x8] sm:$0xff]
        %v5712 = vld [vmem:[%s5709 + $0x10] sm:$0xff]
        %v5713 = vld [vmem:[%s5709 + $0x18] sm:$0xff]
        %v5714 = vld [vmem:[%s5709 + $0x20] sm:$0xff]
        %v5715 = vld [vmem:[%s5709 + $0x28] sm:$0xff]
        %v5716 = vld [vmem:[%s5709 + $0x30] sm:$0xff]
        %v5717 = vld [vmem:[%s5709 + $0x38] sm:$0xff]
        %v5718 = vld [vmem:[%s5709 + $0x40] sm:$0xff]
        %v5719 = vld [vmem:[%s5709 + $0x48] sm:$0xff]
        %v5720 = vld [vmem:[%s5709 + $0x50] sm:$0xff]
        %v5721 = vld [vmem:[%s5709 + $0x58] sm:$0xff]
        %v5722 = vld [vmem:[%s5709 + $0x60] sm:$0xff]
        %v5723 = vld [vmem:[%s5709 + $0x68] sm:$0xff]
        %v5724 = vld [vmem:[%s5709 + $0x70] sm:$0xff]
        %v5725 = vld [vmem:[%s5709 + $0x78] sm:$0xff]
        %v5726 = vrot.slane %v1577, 6
        %5728 = vmatprep.subr.mxu0 0.0
        %5729 = vmatpush1.msra.mxu0 %v5710
        %5730 = vmatprep.subr.mxu0 0.0
        %5731 = vmatpush1.msra.mxu0 %v5711
        %5732 = vmatprep.subr.mxu0 0.0
        %5733 = vmatpush1.msra.mxu0 %v5712
        %5734 = vmatprep.subr.mxu0 0.0
        %5735 = vmatpush1.msra.mxu0 %v5713
        %5736 = vmatprep.subr.mxu0 0.0
        %5737 = vmatpush1.msra.mxu0 %v5714
        %5738 = vmatprep.subr.mxu0 0.0
        %5739 = vmatpush1.msra.mxu0 %v5715
        %5740 = vmatprep.subr.mxu0 0.0
        %5741 = vmatpush1.msra.mxu0 %v5716
        %5742 = vmatprep.subr.mxu0 0.0
        %5743 = vmatpush1.msra.mxu0 %v5717
        %5744 = vmatprep.subr.mxu0 0.0
        %5745 = vmatpush1.msra.mxu0 %v5718
        %5746 = vmatprep.subr.mxu0 0.0
        %5747 = vmatpush1.msra.mxu0 %v5719
        %5748 = vmatprep.subr.mxu0 0.0
        %5749 = vmatpush1.msra.mxu0 %v5720
        %5750 = vmatprep.subr.mxu0 0.0
        %5751 = vmatpush1.msra.mxu0 %v5721
        %5752 = vmatprep.subr.mxu0 0.0
        %5753 = vmatpush1.msra.mxu0 %v5722
        %5754 = vmatprep.subr.mxu0 0.0
        %5755 = vmatpush1.msra.mxu0 %v5723
        %5756 = vmatprep.subr.mxu0 0.0
        %5757 = vmatpush1.msra.mxu0 %v5724
        %5758 = vmatprep.subr.mxu0 0.0
        %5759 = vmatpush1.msra.mxu0 %v5725
        %5760 = vmatprep.subr.mxu0 0.0
        %5761 = vmatpush1.msra.mxu0 0.0
        %5762 = vmatprep.subr.mxu0 0.0
        %5763 = vmatpush1.msra.mxu0 0.0
        %5764 = vmatprep.subr.mxu0 0.0
        %5765 = vmatpush1.msra.mxu0 0.0
        %5766 = vmatprep.subr.mxu0 0.0
        %5767 = vmatpush1.msra.mxu0 0.0
        %5768 = vmatprep.subr.mxu0 0.0
        %5769 = vmatpush1.msra.mxu0 0.0
        %5770 = vmatprep.subr.mxu0 0.0
        %5771 = vmatpush1.msra.mxu0 0.0
        %5772 = vmatprep.subr.mxu0 0.0
        %5773 = vmatpush1.msra.mxu0 0.0
        %5774 = vmatprep.subr.mxu0 0.0
        %5775 = vmatpush1.msra.mxu0 0.0
        %5776 = vmatprep.subr.mxu0 0.0
        %5777 = vmatpush1.msra.mxu0 0.0
        %5778 = vmatprep.subr.mxu0 0.0
        %5779 = vmatpush1.msra.mxu0 0.0
        %5780 = vmatprep.subr.mxu0 0.0
        %5781 = vmatpush1.msra.mxu0 0.0
        %5782 = vmatprep.subr.mxu0 0.0
        %5783 = vmatpush1.msra.mxu0 0.0
        %5784 = vmatprep.subr.mxu0 0.0
        %5785 = vmatpush1.msra.mxu0 0.0
        %5786 = vmatprep.subr.mxu0 0.0
        %5787 = vmatpush1.msra.mxu0 0.0
        %5788 = vmatprep.subr.mxu0 0.0
        %5789 = vmatpush1.msra.mxu0 0.0
        %5790 = vmatprep.subr.mxu0 0.0
        %5791 = vmatpush1.msra.mxu0 0.0
        %5792 = vmatprep.mubr.f32.mxu0 0.0
        %5793 = vmatmul.mubr.f32.gmra.mrb[0].mxu0 %v5726
        %v5794 = vpop.f32.mrb[0].mxu0
        %v5795 = vadd.f32 0.0, %v5794
        %v5796 = vpop.f32.mrb[0].mxu0
        %5797 = vdwg.mxu0
        %v5798 = vadd.f32 %v5708, %v5795
        %s5799 = scalar_lea.vmem [#allocation13], 6016
        %v5800 = vld [vmem:[%s5799] sm:$0xff]
        %v5801 = vld [vmem:[%s5799 + $0x8] sm:$0xff]
        %v5802 = vld [vmem:[%s5799 + $0x10] sm:$0xff]
        %v5803 = vld [vmem:[%s5799 + $0x18] sm:$0xff]
        %v5804 = vld [vmem:[%s5799 + $0x20] sm:$0xff]
        %v5805 = vld [vmem:[%s5799 + $0x28] sm:$0xff]
        %v5806 = vld [vmem:[%s5799 + $0x30] sm:$0xff]
        %v5807 = vld [vmem:[%s5799 + $0x38] sm:$0xff]
        %v5808 = vld [vmem:[%s5799 + $0x40] sm:$0xff]
        %v5809 = vld [vmem:[%s5799 + $0x48] sm:$0xff]
        %v5810 = vld [vmem:[%s5799 + $0x50] sm:$0xff]
        %v5811 = vld [vmem:[%s5799 + $0x58] sm:$0xff]
        %v5812 = vld [vmem:[%s5799 + $0x60] sm:$0xff]
        %v5813 = vld [vmem:[%s5799 + $0x68] sm:$0xff]
        %v5814 = vld [vmem:[%s5799 + $0x70] sm:$0xff]
        %v5815 = vld [vmem:[%s5799 + $0x78] sm:$0xff]
        %v5816 = vrot.slane %v1577, 7
        %5818 = vmatprep.subr.mxu0 0.0
        %5819 = vmatpush1.msra.mxu0 %v5800
        %5820 = vmatprep.subr.mxu0 0.0
        %5821 = vmatpush1.msra.mxu0 %v5801
        %5822 = vmatprep.subr.mxu0 0.0
        %5823 = vmatpush1.msra.mxu0 %v5802
        %5824 = vmatprep.subr.mxu0 0.0
        %5825 = vmatpush1.msra.mxu0 %v5803
        %5826 = vmatprep.subr.mxu0 0.0
        %5827 = vmatpush1.msra.mxu0 %v5804
        %5828 = vmatprep.subr.mxu0 0.0
        %5829 = vmatpush1.msra.mxu0 %v5805
        %5830 = vmatprep.subr.mxu0 0.0
        %5831 = vmatpush1.msra.mxu0 %v5806
        %5832 = vmatprep.subr.mxu0 0.0
        %5833 = vmatpush1.msra.mxu0 %v5807
        %5834 = vmatprep.subr.mxu0 0.0
        %5835 = vmatpush1.msra.mxu0 %v5808
        %5836 = vmatprep.subr.mxu0 0.0
        %5837 = vmatpush1.msra.mxu0 %v5809
        %5838 = vmatprep.subr.mxu0 0.0
        %5839 = vmatpush1.msra.mxu0 %v5810
        %5840 = vmatprep.subr.mxu0 0.0
        %5841 = vmatpush1.msra.mxu0 %v5811
        %5842 = vmatprep.subr.mxu0 0.0
        %5843 = vmatpush1.msra.mxu0 %v5812
        %5844 = vmatprep.subr.mxu0 0.0
        %5845 = vmatpush1.msra.mxu0 %v5813
        %5846 = vmatprep.subr.mxu0 0.0
        %5847 = vmatpush1.msra.mxu0 %v5814
        %5848 = vmatprep.subr.mxu0 0.0
        %5849 = vmatpush1.msra.mxu0 %v5815
        %5850 = vmatprep.subr.mxu0 0.0
        %5851 = vmatpush1.msra.mxu0 0.0
        %5852 = vmatprep.subr.mxu0 0.0
        %5853 = vmatpush1.msra.mxu0 0.0
        %5854 = vmatprep.subr.mxu0 0.0
        %5855 = vmatpush1.msra.mxu0 0.0
        %5856 = vmatprep.subr.mxu0 0.0
        %5857 = vmatpush1.msra.mxu0 0.0
        %5858 = vmatprep.subr.mxu0 0.0
        %5859 = vmatpush1.msra.mxu0 0.0
        %5860 = vmatprep.subr.mxu0 0.0
        %5861 = vmatpush1.msra.mxu0 0.0
        %5862 = vmatprep.subr.mxu0 0.0
        %5863 = vmatpush1.msra.mxu0 0.0
        %5864 = vmatprep.subr.mxu0 0.0
        %5865 = vmatpush1.msra.mxu0 0.0
        %5866 = vmatprep.subr.mxu0 0.0
        %5867 = vmatpush1.msra.mxu0 0.0
        %5868 = vmatprep.subr.mxu0 0.0
        %5869 = vmatpush1.msra.mxu0 0.0
        %5870 = vmatprep.subr.mxu0 0.0
        %5871 = vmatpush1.msra.mxu0 0.0
        %5872 = vmatprep.subr.mxu0 0.0
        %5873 = vmatpush1.msra.mxu0 0.0
        %5874 = vmatprep.subr.mxu0 0.0
        %5875 = vmatpush1.msra.mxu0 0.0
        %5876 = vmatprep.subr.mxu0 0.0
        %5877 = vmatpush1.msra.mxu0 0.0
        %5878 = vmatprep.subr.mxu0 0.0
        %5879 = vmatpush1.msra.mxu0 0.0
        %5880 = vmatprep.subr.mxu0 0.0
        %5881 = vmatpush1.msra.mxu0 0.0
        %5882 = vmatprep.mubr.f32.mxu0 0.0
        %5883 = vmatmul.mubr.f32.gmra.mrb[0].mxu0 %v5816
        %v5884 = vpop.f32.mrb[0].mxu0
        %v5885 = vadd.f32 0.0, %v5884
        %v5886 = vpop.f32.mrb[0].mxu0
        %5887 = vdwg.mxu0
        %v5888 = vadd.f32 %v5798, %v5885
        %v5889 = vld [vmem:[#allocation14] sm:$0x1]
        %v5890 = vadd.f32 %v5888, %v5889
        %v5891 = vmax.f32 %v5890, 0.0
        %v5892 = vld [vmem:[#allocation16] sm:$0xff]
        %v5893 = vld [vmem:[#allocation16 + $0x8] sm:$0xff]
        %v5894 = vld [vmem:[#allocation16 + $0x10] sm:$0xff]
        %v5895 = vld [vmem:[#allocation16 + $0x18] sm:$0xff]
        %v5896 = vld [vmem:[#allocation16 + $0x20] sm:$0xff]
        %v5897 = vld [vmem:[#allocation16 + $0x28] sm:$0xff]
        %v5898 = vld [vmem:[#allocation16 + $0x30] sm:$0xff]
        %v5899 = vld [vmem:[#allocation16 + $0x38] sm:$0xff]
        %v5900 = vld [vmem:[#allocation16 + $0x40] sm:$0xff]
        %v5901 = vld [vmem:[#allocation16 + $0x48] sm:$0xff]
        %v5902 = vld [vmem:[#allocation16 + $0x50] sm:$0xff]
        %v5903 = vld [vmem:[#allocation16 + $0x58] sm:$0xff]
        %v5904 = vld [vmem:[#allocation16 + $0x60] sm:$0xff]
        %v5905 = vld [vmem:[#allocation16 + $0x68] sm:$0xff]
        %v5906 = vld [vmem:[#allocation16 + $0x70] sm:$0xff]
        %v5907 = vld [vmem:[#allocation16 + $0x78] sm:$0xff]
        %v5908 = vld [vmem:[#allocation17] sm:$0x1]
        %5909 = vmatprep.subr.mxu0 0.0
        %5910 = vmatpush1.msra.mxu0 %v5892
        %5911 = vmatprep.subr.mxu0 0.0
        %5912 = vmatpush1.msra.mxu0 %v5893
        %5913 = vmatprep.subr.mxu0 0.0
        %5914 = vmatpush1.msra.mxu0 %v5894
        %5915 = vmatprep.subr.mxu0 0.0
        %5916 = vmatpush1.msra.mxu0 %v5895
        %5917 = vmatprep.subr.mxu0 0.0
        %5918 = vmatpush1.msra.mxu0 %v5896
        %5919 = vmatprep.subr.mxu0 0.0
        %5920 = vmatpush1.msra.mxu0 %v5897
        %5921 = vmatprep.subr.mxu0 0.0
        %5922 = vmatpush1.msra.mxu0 %v5898
        %5923 = vmatprep.subr.mxu0 0.0
        %5924 = vmatpush1.msra.mxu0 %v5899
        %5925 = vmatprep.subr.mxu0 0.0
        %5926 = vmatpush1.msra.mxu0 %v5900
        %5927 = vmatprep.subr.mxu0 0.0
        %5928 = vmatpush1.msra.mxu0 %v5901
        %5929 = vmatprep.subr.mxu0 0.0
        %5930 = vmatpush1.msra.mxu0 %v5902
        %5931 = vmatprep.subr.mxu0 0.0
        %5932 = vmatpush1.msra.mxu0 %v5903
        %5933 = vmatprep.subr.mxu0 0.0
        %5934 = vmatpush1.msra.mxu0 %v5904
        %5935 = vmatprep.subr.mxu0 0.0
        %5936 = vmatpush1.msra.mxu0 %v5905
        %5937 = vmatprep.subr.mxu0 0.0
        %5938 = vmatpush1.msra.mxu0 %v5906
        %5939 = vmatprep.subr.mxu0 0.0
        %5940 = vmatpush1.msra.mxu0 %v5907
        %5941 = vmatprep.subr.mxu0 0.0
        %5942 = vmatpush1.msra.mxu0 0.0
        %5943 = vmatprep.subr.mxu0 0.0
        %5944 = vmatpush1.msra.mxu0 0.0
        %5945 = vmatprep.subr.mxu0 0.0
        %5946 = vmatpush1.msra.mxu0 0.0
        %5947 = vmatprep.subr.mxu0 0.0
        %5948 = vmatpush1.msra.mxu0 0.0
        %5949 = vmatprep.subr.mxu0 0.0
        %5950 = vmatpush1.msra.mxu0 0.0
        %5951 = vmatprep.subr.mxu0 0.0
        %5952 = vmatpush1.msra.mxu0 0.0
        %5953 = vmatprep.subr.mxu0 0.0
        %5954 = vmatpush1.msra.mxu0 0.0
        %5955 = vmatprep.subr.mxu0 0.0
        %5956 = vmatpush1.msra.mxu0 0.0
        %5957 = vmatprep.subr.mxu0 0.0
        %5958 = vmatpush1.msra.mxu0 0.0
        %5959 = vmatprep.subr.mxu0 0.0
        %5960 = vmatpush1.msra.mxu0 0.0
        %5961 = vmatprep.subr.mxu0 0.0
        %5962 = vmatpush1.msra.mxu0 0.0
        %5963 = vmatprep.subr.mxu0 0.0
        %5964 = vmatpush1.msra.mxu0 0.0
        %5965 = vmatprep.subr.mxu0 0.0
        %5966 = vmatpush1.msra.mxu0 0.0
        %5967 = vmatprep.subr.mxu0 0.0
        %5968 = vmatpush1.msra.mxu0 0.0
        %5969 = vmatprep.subr.mxu0 0.0
        %5970 = vmatpush1.msra.mxu0 0.0
        %5971 = vmatprep.subr.mxu0 0.0
        %5972 = vmatpush1.msra.mxu0 0.0
        %5973 = vmatprep.mubr.f32.mxu0 0.0
        %5974 = vmatmul.mubr.f32.gmra.mrb[0].mxu0 %v5891
        %v5975 = vpop.f32.mrb[0].mxu0
        %v5976 = vadd.f32 %v5908, %v5975
        %v5977 = vpop.f32.mrb[0].mxu0
        %5978 = vdwg.mxu0
        %5979 = vst [vmem:[%s599] sm:$0x1] %v5976
        %s5980 = sand.u32 %s329, 1
        %s5981 = scalar_lea.sflag [#allocation4], %s5980
        %s5982 = sand.u32 %s329, 1
        %s5983 = scalar_lea.vmem [#allocation19], %s5982
        // Predicated region
        $region113: #{keypoint_cnn1d_forward.1} parent=71 // pred_check
          %p5984 = pneg %p339
        $region114: #{keypoint_cnn1d_forward.1} parent=71 // pred_check_branch
          %5986 = sbr.rel (%p5984) target = $region116
        $region115: #{keypoint_cnn1d_forward.1} parent=71 // pred_region
          %s5988 = ssub.s32 16, 16
          %5989 = vsyncadd %s5981, %s5988
          %s5990 = smul.addr %s33, 16
          %s5991 = scalar_lea.hbm %s13, %s5990
          %s5993 = sshll.u32 %s5983, 4
          %s5994 = int_to_ptr.vmem [resolvable:$true] %s5993
          %5996 = dma.vmem_to_hbm [thread:$0]  %s5994, 16, %s5991, %s5981
        $region116: #{keypoint_cnn1d_forward.1} parent=71 // pred_fallthru
          _
      $region72: #{keypoint_cnn1d_forward.1} parent=5 // pred_fallthru
        _
      %p5997 = scmp.le.s32.totalorder 2, %s28
      // Predicated region
      $region117: #{keypoint_cnn1d_forward.1} parent=5 // pred_check
        %p5998 = pneg %p5997
      $region118: #{keypoint_cnn1d_forward.1} parent=5 // pred_check_branch
        %6000 = sbr.rel (%p5998) target = $region120
      $region119: #{keypoint_cnn1d_forward.1} parent=5 // pred_region
        %s6001 = ssub.s32 %s28, 2
        // Predicated region
        $region121: #{keypoint_cnn1d_forward.1} parent=119 // pred_check
          %p6002 = pneg %p345
        $region122: #{keypoint_cnn1d_forward.1} parent=119 // pred_check_branch
          %6004 = sbr.rel (%p6002) target = $region124
        $region123: #{keypoint_cnn1d_forward.1} parent=119 // pred_region
          %s6005 = sand.u32 %s330, 1
          %s6006 = scalar_lea.sflag [#allocation4], %s6005
          %s6007 = sand.u32 %s330, 1
          %s6008 = scalar_lea.vmem [#allocation19], %s6007
          %6009 = dma.done %s6006, 16
        $region124: #{keypoint_cnn1d_forward.1} parent=119 // pred_fallthru
          _
      $region120: #{keypoint_cnn1d_forward.1} parent=5 // pred_fallthru
        _
    $region6: #{keypoint_cnn1d_forward.1} parent=1 // loop_footer
      %s32 = sadd.s32 1, %s28
    $region7: #{keypoint_cnn1d_forward.1} parent=1 // loop_footer_branch
      %27 = sbr.rel target = $region3
    $region8: #{keypoint_cnn1d_forward.1} parent=1 // loop_exit
      _
    %6010 = vsyncpa [#allocation3], 1
    %s6011 = scalar_lea.sflag [#allocation3], 1
    %6012 = vsyncpa %s6011, 1
    %6013 = vsyncpa [#allocation6], 1
    %6014 = vsyncpa [#allocation9], 1
    %6015 = vsyncpa [#allocation12], 1
    %6016 = vsyncpa [#allocation15], 1
    %6017 = vsyncpa [#allocation18], 1
    %6018 = vsyncpa [#allocation4], 1
    %s6019 = scalar_lea.sflag [#allocation4], 1
    %6020 = vsyncpa %s6019, 1

</llo_original>
